<compile_context>
chip_gen: v5e
topology: v5e:2x2
jax: 0.10.0
libtpu: 0.0.40
codegen_flags: <defaults>
</compile_context>

<pallas_src>
import functools

import jax
import jax.numpy as jnp
from jax.experimental import pallas as pl
from jax.experimental.pallas import tpu as pltpu


# ----------------------------------------------------------------------------
# Fused Pallas kernel: encoder -> VQ quantize -> decoder -> code/batch reduce
# ----------------------------------------------------------------------------
def _vqvae_fwd_kernel(x_ref, w0_ref, b0_ref, w1_ref, b1_ref, w2_ref, b2_ref,
                      embd_ref, d0_ref, c0_ref, d1_ref, c1_ref, d2_ref, c2_ref,
                      xr_ref, zenc_ref, zdec_ref, zembd_ref,
                      mind_ref, *, batch, tm):
    """One batch tile, fully in VMEM.  The Z_enc_for_embd output is a running
    reduction across batch tiles (accumulator in `zembd_ref`/`mind_ref`)."""
    f32, bf16 = jnp.float32, jnp.bfloat16
    i = pl.program_id(0)

    @pl.when(i == 0)
    def _init():
        mind_ref[...] = jnp.full_like(mind_ref, jnp.inf)
        zembd_ref[...] = jnp.zeros_like(zembd_ref)

    # ---- encoder: 784 -> 512 -> 256 -> z_dim (bf16 matmul, f32 accum) ------
    x = x_ref[...].astype(bf16)
    h = jnp.dot(x, w0_ref[...], preferred_element_type=f32) + b0_ref[...]
    h = jnp.maximum(h, 0.0).astype(bf16)
    h = jnp.dot(h, w1_ref[...], preferred_element_type=f32) + b1_ref[...]
    h = jnp.maximum(h, 0.0).astype(bf16)
    z_enc = jnp.dot(h, w2_ref[...], preferred_element_type=f32) + b2_ref[...]
    zenc_ref[...] = z_enc

    # ---- quantize: nearest codebook row (L2, first-index ties) -------------
    e = embd_ref[...]                                              # (K, D) f32
    k_dim = e.shape[0]
    # ||e_j||^2 on the lane axis as (1, K); ||q||^2 is constant per query row
    # and cannot change the argmin over K, so it is dropped.
    esq = jnp.sum(e[None, :, :] * e[None, :, :], axis=-1)          # (1, K)
    gram = jax.lax.dot_general(z_enc, e, (((1,), (1,)), ((), ())),
                               preferred_element_type=f32)         # (TM, K)
    d = esq - 2.0 * gram                                           # (TM, K)
    min_d = jnp.min(d, axis=1, keepdims=True)                      # (TM, 1)
    lane = jax.lax.broadcasted_iota(jnp.int32, d.shape, 1)         # (TM, K)
    first = jnp.min(jnp.where(d == min_d, lane, k_dim),
                    axis=1, keepdims=True)                         # (TM, 1)
    onehot = (lane == first).astype(f32)                           # (TM, K)
    z_dec = jnp.dot(onehot, e, preferred_element_type=f32)         # exact rows
    zdec_ref[...] = z_dec

    # ---- decoder: z_dim -> 256 -> 512 -> 784, ReLU then Sigmoid ------------
    h = jnp.dot(z_dec.astype(bf16), d0_ref[...],
                preferred_element_type=f32) + c0_ref[...]
    h = jnp.maximum(h, 0.0).astype(bf16)
    h = jnp.dot(h, d1_ref[...], preferred_element_type=f32) + c1_ref[...]
    h = jnp.maximum(h, 0.0).astype(bf16)
    y = jnp.dot(h, d2_ref[...], preferred_element_type=f32) + c2_ref[...]
    y = jnp.maximum(y, 0.0)                       # last mlp_block's ReLU
    # Sigmoid with exp + approx reciprocal: both land on the EUP slot.  The
    # minimum() keeps the approx reciprocal from overshooting 1.0.
    xr_ref[...] = jnp.minimum(pl.reciprocal(1.0 + jnp.exp(-y), approx=True),
                              1.0)

    # ---- find_nearest(embd, Z_enc): running reduction over batch tiles -----
    # ||z_i||^2 on the lane axis; ||e_j||^2 is constant per codebook row and
    # is dropped (cannot change the argmin over the batch).
    zsq = jnp.sum(z_enc[None, :, :] * z_enc[None, :, :], axis=-1)  # (1, TM)
    gram_ez = jax.lax.dot_general(e, z_enc, (((1,), (1,)), ((), ())),
                                  preferred_element_type=f32)      # (K, TM)
    dzt = zsq - 2.0 * gram_ez                                      # (K, TM)
    col = jax.lax.broadcasted_iota(jnp.int32, dzt.shape, 1)        # (K, TM)
    dzt = jnp.where(col + i * tm < batch, dzt, jnp.inf)            # mask pad rows

    tile_min = jnp.min(dzt, axis=1, keepdims=True)                 # (K, 1)
    firstc = jnp.min(jnp.where(dzt == tile_min, col, tm),
                     axis=1, keepdims=True)                        # (K, 1)
    onehot2 = (col == firstc).astype(f32)                          # (K, TM)
    cand = jnp.dot(onehot2, z_enc, preferred_element_type=f32)     # (K, D)

    better = tile_min < mind_ref[...]    # strict '<' keeps the earliest index
    zembd_ref[...] = jnp.where(better, cand, zembd_ref[...])
    mind_ref[...] = jnp.where(better, tile_min, mind_ref[...])


# ----------------------------------------------------------------------------
# Parameter init (deterministic, PyTorch-default-style)
# ----------------------------------------------------------------------------
def _init_linear(key, fan_in, fan_out):
    kw, kb = jax.random.split(key)
    bound = 1.0 / jnp.sqrt(jnp.float32(fan_in))
    w = jax.random.uniform(kw, (fan_in, fan_out), jnp.float32, -bound, bound)
    b = jax.random.uniform(kb, (fan_out,), jnp.float32, -bound, bound)
    return w, b


def init_params(key, z_dim=128, k_dim=64):
    keys = jax.random.split(key, 7)
    return {
        # EncoderMLP(784, hidden=[512, 256], latent_size=z_dim)
        "enc": [
            _init_linear(keys[0], 784, 512),
            _init_linear(keys[1], 512, 256),
            _init_linear(keys[2], 256, z_dim),
        ],
        # DecoderMLP(hidden=[256, 512, 784], latent_size=z_dim, sigmoid)
        "dec": [
            _init_linear(keys[3], z_dim, 256),
            _init_linear(keys[4], 256, 512),
            _init_linear(keys[5], 512, 784),
        ],
        # nn.Embedding(k_dim, z_dim) default init: N(0, 1)
        "embd": jax.random.normal(keys[6], (k_dim, z_dim), jnp.float32),
    }


# ----------------------------------------------------------------------------
# Forward pass
# ----------------------------------------------------------------------------
def vqvae_mlp_forward(params, X, *, tm=128):
    x = X.reshape(-1, 784).astype(jnp.float32)        # X.view(-1, 784)
    B = x.shape[0]

    (w0, b0), (w1, b1), (w2, b2) = params["enc"]
    (d0, c0), (d1, c1), (d2, c2) = params["dec"]
    embd = params["embd"].astype(jnp.float32)
    k_dim, z_dim = embd.shape

    in_size, h1 = w0.shape            # 784, 512
    h2 = w1.shape[1]                  # 256
    dh1 = d0.shape[1]                 # 256
    dh2 = d1.shape[1]                 # 512
    out_size = d2.shape[1]            # 784

    bf16 = jnp.bfloat16
    tm = B if B <= tm else tm         # small batches: one full-extent block
    grid = (pl.cdiv(B, tm),)

    kernel = functools.partial(_vqvae_fwd_kernel, batch=B, tm=tm)

    fused = pl.pallas_call(
        kernel,
        out_shape=(
            jax.ShapeDtypeStruct((B, out_size), jnp.float32),   # X_recon flat
            jax.ShapeDtypeStruct((B, z_dim), jnp.float32),      # Z_enc
            jax.ShapeDtypeStruct((B, z_dim), jnp.float32),      # Z_dec
            jax.ShapeDtypeStruct((k_dim, z_dim), jnp.float32),  # Z_enc_for_embd
        ),
        grid=grid,
        in_specs=[
            pl.BlockSpec((tm, in_size), lambda i: (i, 0)),      # x tile
            pl.BlockSpec((in_size, h1), lambda i: (0, 0)),      # w0 (resident)
            pl.BlockSpec((1, h1), lambda i: (0, 0)),            # b0
            pl.BlockSpec((h1, h2), lambda i: (0, 0)),           # w1
            pl.BlockSpec((1, h2), lambda i: (0, 0)),            # b1
            pl.BlockSpec((h2, z_dim), lambda i: (0, 0)),        # w2
            pl.BlockSpec((1, z_dim), lambda i: (0, 0)),         # b2
            pl.BlockSpec((k_dim, z_dim), lambda i: (0, 0)),     # embd
            pl.BlockSpec((z_dim, dh1), lambda i: (0, 0)),       # d0
            pl.BlockSpec((1, dh1), lambda i: (0, 0)),           # c0
            pl.BlockSpec((dh1, dh2), lambda i: (0, 0)),         # d1
            pl.BlockSpec((1, dh2), lambda i: (0, 0)),           # c1
            pl.BlockSpec((dh2, out_size), lambda i: (0, 0)),    # d2
            pl.BlockSpec((1, out_size), lambda i: (0, 0)),      # c2
        ],
        out_specs=(
            pl.BlockSpec((tm, out_size), lambda i: (i, 0)),
            pl.BlockSpec((tm, z_dim), lambda i: (i, 0)),
            pl.BlockSpec((tm, z_dim), lambda i: (i, 0)),
            pl.BlockSpec((k_dim, z_dim), lambda i: (0, 0)),     # accumulator
        ),
        scratch_shapes=[pltpu.VMEM((k_dim, 1), jnp.float32)],   # running min dist
        compiler_params=pltpu.CompilerParams(
            # Batch axis carries a cross-tile reduction (Z_enc_for_embd
            # accumulator) so it must be sequential.
            dimension_semantics=("arbitrary",)),
    )
    x_flat, Z_enc, Z_dec, Z_enc_for_embd = fused(
        x,
        w0.astype(bf16), b0.reshape(1, -1),
        w1.astype(bf16), b1.reshape(1, -1),
        w2.astype(bf16), b2.reshape(1, -1),
        embd,
        d0.astype(bf16), c0.reshape(1, -1),
        d1.astype(bf16), c1.reshape(1, -1),
        d2.astype(bf16), c2.reshape(1, -1),
    )

    X_recon = x_flat.reshape(-1, 1, 28, 28)
    return X_recon, Z_enc, Z_dec, Z_enc_for_embd


if __name__ == "__main__":
    B, z_dim, k_dim = 16, 128, 64
    key = jax.random.PRNGKey(0)
    kx, kp = jax.random.split(key)

    X = jax.random.normal(kx, (B, 1, 28, 28), jnp.float32)   # NCHW like PyTorch
    params = init_params(kp, z_dim=z_dim, k_dim=k_dim)

    fwd = jax.jit(vqvae_mlp_forward)
    outs = jax.block_until_ready(fwd(params, X))
    X_recon, Z_enc, Z_dec, Z_enc_for_embd = outs

    # shape / sanity checks
    assert X_recon.shape == (B, 1, 28, 28)
    assert Z_enc.shape == (B, z_dim)
    assert Z_dec.shape == (B, z_dim)
    assert Z_enc_for_embd.shape == (k_dim, z_dim)
    assert bool(jnp.all(jnp.isfinite(X_recon)))
    assert bool(jnp.all((X_recon >= 0.0) & (X_recon <= 1.0)))

    # Z_dec rows must be (exact) codebook rows; Z_enc_for_embd rows must be
    # (exact) Z_enc rows.
    embd = params["embd"]
    err_dec = jnp.abs(Z_dec[:, None, :] - embd[None, :, :]).max(-1).min(-1).max()
    err_emb = jnp.abs(Z_enc_for_embd[:, None, :] - Z_enc[None, :, :]).max(-1).min(-1).max()
    assert float(err_dec) < 1e-5, float(err_dec)
    assert float(err_emb) < 1e-5, float(err_emb)

    # Encoder output vs. a bf16-matched pure-JAX reference.
    (w0, b0), (w1, b1), (w2, b2) = params["enc"]
    bf16 = jnp.bfloat16
    xr = X.reshape(-1, 784)
    h = jnp.maximum(jnp.dot(xr.astype(bf16), w0.astype(bf16),
                            preferred_element_type=jnp.float32) + b0, 0.0)
    h = jnp.maximum(jnp.dot(h.astype(bf16), w1.astype(bf16),
                            preferred_element_type=jnp.float32) + b1, 0.0)
    z_ref = jnp.dot(h.astype(bf16), w2.astype(bf16),
                    preferred_element_type=jnp.float32) + b2
    assert bool(jnp.allclose(Z_enc, z_ref, atol=3e-2, rtol=3e-2))

    print("KERNEL_OK")
</pallas_src>

<mosaic_0001>
module attributes {stable_mosaic.version = 11 : i64} {
  func.func @_vqvae_fwd_kernel(%arg0: i32, %arg1: memref<16x784xf32, #tpu.memory_space<vmem>>, %arg2: memref<784x512xbf16, #tpu.memory_space<vmem>>, %arg3: memref<1x512xf32, #tpu.memory_space<vmem>>, %arg4: memref<512x256xbf16, #tpu.memory_space<vmem>>, %arg5: memref<1x256xf32, #tpu.memory_space<vmem>>, %arg6: memref<256x128xbf16, #tpu.memory_space<vmem>>, %arg7: memref<1x128xf32, #tpu.memory_space<vmem>>, %arg8: memref<64x128xf32, #tpu.memory_space<vmem>>, %arg9: memref<128x256xbf16, #tpu.memory_space<vmem>>, %arg10: memref<1x256xf32, #tpu.memory_space<vmem>>, %arg11: memref<256x512xbf16, #tpu.memory_space<vmem>>, %arg12: memref<1x512xf32, #tpu.memory_space<vmem>>, %arg13: memref<512x784xbf16, #tpu.memory_space<vmem>>, %arg14: memref<1x784xf32, #tpu.memory_space<vmem>>, %arg15: memref<16x784xf32, #tpu.memory_space<vmem>>, %arg16: memref<16x128xf32, #tpu.memory_space<vmem>>, %arg17: memref<16x128xf32, #tpu.memory_space<vmem>>, %arg18: memref<64x128xf32, #tpu.memory_space<vmem>>, %arg19: memref<64x1xf32, #tpu.memory_space<vmem>>) attributes {dimension_semantics = [#tpu.dimension_semantics<arbitrary>], iteration_bounds = array<i64: 1>, scalar_prefetch = 0 : i64, scratch_operands = 1 : i64, tpu.core_type = #tpu.core_type<tc>, window_params = [{transform_indices = @transform_0, window_bounds = array<i64: 16, 784>}, {pipeline_mode = #tpu.pipeline_mode<synchronous>, transform_indices = @transform_1, window_bounds = array<i64: 784, 512>}, {pipeline_mode = #tpu.pipeline_mode<synchronous>, transform_indices = @transform_2, window_bounds = array<i64: 1, 512>}, {pipeline_mode = #tpu.pipeline_mode<synchronous>, transform_indices = @transform_3, window_bounds = array<i64: 512, 256>}, {pipeline_mode = #tpu.pipeline_mode<synchronous>, transform_indices = @transform_4, window_bounds = array<i64: 1, 256>}, {pipeline_mode = #tpu.pipeline_mode<synchronous>, transform_indices = @transform_5, window_bounds = array<i64: 256, 128>}, {pipeline_mode = #tpu.pipeline_mode<synchronous>, transform_indices = @transform_6, window_bounds = array<i64: 1, 128>}, {pipeline_mode = #tpu.pipeline_mode<synchronous>, transform_indices = @transform_7, window_bounds = array<i64: 64, 128>}, {pipeline_mode = #tpu.pipeline_mode<synchronous>, transform_indices = @transform_8, window_bounds = array<i64: 128, 256>}, {pipeline_mode = #tpu.pipeline_mode<synchronous>, transform_indices = @transform_9, window_bounds = array<i64: 1, 256>}, {pipeline_mode = #tpu.pipeline_mode<synchronous>, transform_indices = @transform_10, window_bounds = array<i64: 256, 512>}, {pipeline_mode = #tpu.pipeline_mode<synchronous>, transform_indices = @transform_11, window_bounds = array<i64: 1, 512>}, {pipeline_mode = #tpu.pipeline_mode<synchronous>, transform_indices = @transform_12, window_bounds = array<i64: 512, 784>}, {pipeline_mode = #tpu.pipeline_mode<synchronous>, transform_indices = @transform_13, window_bounds = array<i64: 1, 784>}, {transform_indices = @transform_14, window_bounds = array<i64: 16, 784>}, {transform_indices = @transform_15, window_bounds = array<i64: 16, 128>}, {transform_indices = @transform_16, window_bounds = array<i64: 16, 128>}, {pipeline_mode = #tpu.pipeline_mode<synchronous>, transform_indices = @transform_17, window_bounds = array<i64: 64, 128>}]} {
    %c0_i32 = arith.constant 0 : i32
    %0 = arith.cmpi eq, %arg0, %c0_i32 : i32
    %1 = arith.extui %0 : i1 to i32
    %c0_i32_0 = arith.constant 0 : i32
    %2 = arith.cmpi ne, %1, %c0_i32_0 : i32
    scf.if %2 {
      %cst_72 = arith.constant 0x7F800000 : f32
      %125 = vector.broadcast %cst_72 : f32 to vector<64x1xf32>
      %c0_73 = arith.constant 0 : index
      %c0_74 = arith.constant 0 : index
      %126 = vector.load %arg19[%c0_73, %c0_74] : memref<64x1xf32, #tpu.memory_space<vmem>>, vector<64x1xf32>
      tpu.vector_store %arg19[%c0_73, %c0_74], %125 {strides = array<i32>} : memref<64x1xf32, #tpu.memory_space<vmem>>, vector<64x1xf32>,
      %cst_75 = arith.constant 0.000000e+00 : f32
      %127 = vector.broadcast %cst_75 : f32 to vector<64x128xf32>
      %c0_76 = arith.constant 0 : index
      %c0_77 = arith.constant 0 : index
      %128 = vector.load %arg18[%c0_76, %c0_77] : memref<64x128xf32, #tpu.memory_space<vmem>>, vector<64x128xf32>
      tpu.vector_store %arg18[%c0_76, %c0_77], %127 {strides = array<i32>} : memref<64x128xf32, #tpu.memory_space<vmem>>, vector<64x128xf32>,
    } else {
    }
    %c0 = arith.constant 0 : index
    %c0_1 = arith.constant 0 : index
    %3 = vector.load %arg1[%c0, %c0_1] : memref<16x784xf32, #tpu.memory_space<vmem>>, vector<16x784xf32>
    %4 = arith.truncf %3 : vector<16x784xf32> to vector<16x784xbf16>
    %c0_2 = arith.constant 0 : index
    %c0_3 = arith.constant 0 : index
    %5 = vector.load %arg2[%c0_2, %c0_3] : memref<784x512xbf16, #tpu.memory_space<vmem>>, vector<784x512xbf16>
    %cst = arith.constant dense<0.000000e+00> : vector<16x512xf32>
    %6 = tpu.matmul %4, %5, %cst {dimension_numbers = #tpu.dot_dimension_numbers<[1], [0], [0], [1], [0, 0, 1, 1], [], []>} : vector<16x784xbf16>, vector<784x512xbf16>, vector<16x512xf32> -> vector<16x512xf32>
    %c0_4 = arith.constant 0 : index
    %c0_5 = arith.constant 0 : index
    %7 = vector.load %arg3[%c0_4, %c0_5] : memref<1x512xf32, #tpu.memory_space<vmem>>, vector<1x512xf32>
    %8 = vector.broadcast %7 : vector<1x512xf32> to vector<16x512xf32>
    %9 = arith.addf %6, %8 : vector<16x512xf32>
    %cst_6 = arith.constant 0.000000e+00 : f32
    %10 = vector.broadcast %cst_6 : f32 to vector<16x512xf32>
    %11 = arith.maximumf %9, %10 : vector<16x512xf32>
    %12 = arith.truncf %11 : vector<16x512xf32> to vector<16x512xbf16>
    %c0_7 = arith.constant 0 : index
    %c0_8 = arith.constant 0 : index
    %13 = vector.load %arg4[%c0_7, %c0_8] : memref<512x256xbf16, #tpu.memory_space<vmem>>, vector<512x256xbf16>
    %cst_9 = arith.constant dense<0.000000e+00> : vector<16x256xf32>
    %14 = tpu.matmul %12, %13, %cst_9 {dimension_numbers = #tpu.dot_dimension_numbers<[1], [0], [0], [1], [0, 0, 1, 1], [], []>} : vector<16x512xbf16>, vector<512x256xbf16>, vector<16x256xf32> -> vector<16x256xf32>
    %c0_10 = arith.constant 0 : index
    %c0_11 = arith.constant 0 : index
    %15 = vector.load %arg5[%c0_10, %c0_11] : memref<1x256xf32, #tpu.memory_space<vmem>>, vector<1x256xf32>
    %16 = vector.broadcast %15 : vector<1x256xf32> to vector<16x256xf32>
    %17 = arith.addf %14, %16 : vector<16x256xf32>
    %cst_12 = arith.constant 0.000000e+00 : f32
    %18 = vector.broadcast %cst_12 : f32 to vector<16x256xf32>
    %19 = arith.maximumf %17, %18 : vector<16x256xf32>
    %20 = arith.truncf %19 : vector<16x256xf32> to vector<16x256xbf16>
    %c0_13 = arith.constant 0 : index
    %c0_14 = arith.constant 0 : index
    %21 = vector.load %arg6[%c0_13, %c0_14] : memref<256x128xbf16, #tpu.memory_space<vmem>>, vector<256x128xbf16>
    %cst_15 = arith.constant dense<0.000000e+00> : vector<16x128xf32>
    %22 = tpu.matmul %20, %21, %cst_15 {dimension_numbers = #tpu.dot_dimension_numbers<[1], [0], [0], [1], [0, 0, 1, 1], [], []>} : vector<16x256xbf16>, vector<256x128xbf16>, vector<16x128xf32> -> vector<16x128xf32>
    %c0_16 = arith.constant 0 : index
    %c0_17 = arith.constant 0 : index
    %23 = vector.load %arg7[%c0_16, %c0_17] : memref<1x128xf32, #tpu.memory_space<vmem>>, vector<1x128xf32>
    %24 = vector.broadcast %23 : vector<1x128xf32> to vector<16x128xf32>
    %25 = arith.addf %22, %24 : vector<16x128xf32>
    %c0_18 = arith.constant 0 : index
    %c0_19 = arith.constant 0 : index
    %26 = vector.load %arg16[%c0_18, %c0_19] : memref<16x128xf32, #tpu.memory_space<vmem>>, vector<16x128xf32>
    tpu.vector_store %arg16[%c0_18, %c0_19], %25 {strides = array<i32>} : memref<16x128xf32, #tpu.memory_space<vmem>>, vector<16x128xf32>,
    %c0_20 = arith.constant 0 : index
    %c0_21 = arith.constant 0 : index
    %27 = vector.load %arg8[%c0_20, %c0_21] : memref<64x128xf32, #tpu.memory_space<vmem>>, vector<64x128xf32>
    %28 = vector.shape_cast %27 : vector<64x128xf32> to vector<1x64x128xf32>
    %29 = vector.shape_cast %27 : vector<64x128xf32> to vector<1x64x128xf32>
    %30 = arith.mulf %28, %29 : vector<1x64x128xf32>
    %cst_22 = arith.constant dense<0.000000e+00> : vector<1x64xf32>
    %31 = vector.multi_reduction <add>, %30, %cst_22 [2] : vector<1x64x128xf32> to vector<1x64xf32>
    %cst_23 = arith.constant dense<0.000000e+00> : vector<16x64xf32>
    %32 = tpu.matmul %25, %27, %cst_23 {dimension_numbers = #tpu.dot_dimension_numbers<[1], [1], [0], [0], [0, 0, 1, 0], [], []>} : vector<16x128xf32>, vector<64x128xf32>, vector<16x64xf32> -> vector<16x64xf32>
    %cst_24 = arith.constant 2.000000e+00 : f32
    %33 = vector.broadcast %cst_24 : f32 to vector<16x64xf32>
    %34 = arith.mulf %33, %32 : vector<16x64xf32>
    %35 = vector.broadcast %31 : vector<1x64xf32> to vector<16x64xf32>
    %36 = arith.subf %35, %34 : vector<16x64xf32>
    %cst_25 = arith.constant dense<0x7F800000> : vector<16xf32>
    %37 = vector.multi_reduction <minimumf>, %36, %cst_25 [1] : vector<16x64xf32> to vector<16xf32>
    %38 = vector.shape_cast %37 : vector<16xf32> to vector<16x1xf32>
    %39 = tpu.iota {dimensions = array<i32: 1>} : vector<16x64xi32>
    %40 = vector.broadcast %38 : vector<16x1xf32> to vector<16x64xf32>
    %41 = arith.cmpf oeq, %36, %40 : vector<16x64xf32>
    %c64_i32 = arith.constant 64 : i32
    %42 = vector.broadcast %c64_i32 : i32 to vector<16x64xi32>
    %43 = arith.select %41, %39, %42 : vector<16x64xi1>, vector<16x64xi32>
    %cst_26 = arith.constant dense<2147483647> : vector<16xi32>
    %44 = vector.multi_reduction <minsi>, %43, %cst_26 [1] : vector<16x64xi32> to vector<16xi32>
    %45 = vector.shape_cast %44 : vector<16xi32> to vector<16x1xi32>
    %46 = vector.broadcast %45 : vector<16x1xi32> to vector<16x64xi32>
    %47 = arith.cmpi eq, %39, %46 : vector<16x64xi32>
    %48 = arith.extui %47 : vector<16x64xi1> to vector<16x64xi32>
    %49 = arith.sitofp %48 : vector<16x64xi32> to vector<16x64xf32>
    %cst_27 = arith.constant dense<0.000000e+00> : vector<16x128xf32>
    %50 = tpu.matmul %49, %27, %cst_27 {dimension_numbers = #tpu.dot_dimension_numbers<[1], [0], [0], [1], [0, 0, 1, 1], [], []>} : vector<16x64xf32>, vector<64x128xf32>, vector<16x128xf32> -> vector<16x128xf32>
    %c0_28 = arith.constant 0 : index
    %c0_29 = arith.constant 0 : index
    %51 = vector.load %arg17[%c0_28, %c0_29] : memref<16x128xf32, #tpu.memory_space<vmem>>, vector<16x128xf32>
    tpu.vector_store %arg17[%c0_28, %c0_29], %50 {strides = array<i32>} : memref<16x128xf32, #tpu.memory_space<vmem>>, vector<16x128xf32>,
    %52 = arith.truncf %50 : vector<16x128xf32> to vector<16x128xbf16>
    %c0_30 = arith.constant 0 : index
    %c0_31 = arith.constant 0 : index
    %53 = vector.load %arg9[%c0_30, %c0_31] : memref<128x256xbf16, #tpu.memory_space<vmem>>, vector<128x256xbf16>
    %cst_32 = arith.constant dense<0.000000e+00> : vector<16x256xf32>
    %54 = tpu.matmul %52, %53, %cst_32 {dimension_numbers = #tpu.dot_dimension_numbers<[1], [0], [0], [1], [0, 0, 1, 1], [], []>} : vector<16x128xbf16>, vector<128x256xbf16>, vector<16x256xf32> -> vector<16x256xf32>
    %c0_33 = arith.constant 0 : index
    %c0_34 = arith.constant 0 : index
    %55 = vector.load %arg10[%c0_33, %c0_34] : memref<1x256xf32, #tpu.memory_space<vmem>>, vector<1x256xf32>
    %56 = vector.broadcast %55 : vector<1x256xf32> to vector<16x256xf32>
    %57 = arith.addf %54, %56 : vector<16x256xf32>
    %cst_35 = arith.constant 0.000000e+00 : f32
    %58 = vector.broadcast %cst_35 : f32 to vector<16x256xf32>
    %59 = arith.maximumf %57, %58 : vector<16x256xf32>
    %60 = arith.truncf %59 : vector<16x256xf32> to vector<16x256xbf16>
    %c0_36 = arith.constant 0 : index
    %c0_37 = arith.constant 0 : index
    %61 = vector.load %arg11[%c0_36, %c0_37] : memref<256x512xbf16, #tpu.memory_space<vmem>>, vector<256x512xbf16>
    %cst_38 = arith.constant dense<0.000000e+00> : vector<16x512xf32>
    %62 = tpu.matmul %60, %61, %cst_38 {dimension_numbers = #tpu.dot_dimension_numbers<[1], [0], [0], [1], [0, 0, 1, 1], [], []>} : vector<16x256xbf16>, vector<256x512xbf16>, vector<16x512xf32> -> vector<16x512xf32>
    %c0_39 = arith.constant 0 : index
    %c0_40 = arith.constant 0 : index
    %63 = vector.load %arg12[%c0_39, %c0_40] : memref<1x512xf32, #tpu.memory_space<vmem>>, vector<1x512xf32>
    %64 = vector.broadcast %63 : vector<1x512xf32> to vector<16x512xf32>
    %65 = arith.addf %62, %64 : vector<16x512xf32>
    %cst_41 = arith.constant 0.000000e+00 : f32
    %66 = vector.broadcast %cst_41 : f32 to vector<16x512xf32>
    %67 = arith.maximumf %65, %66 : vector<16x512xf32>
    %68 = arith.truncf %67 : vector<16x512xf32> to vector<16x512xbf16>
    %c0_42 = arith.constant 0 : index
    %c0_43 = arith.constant 0 : index
    %69 = vector.load %arg13[%c0_42, %c0_43] : memref<512x784xbf16, #tpu.memory_space<vmem>>, vector<512x784xbf16>
    %cst_44 = arith.constant dense<0.000000e+00> : vector<16x784xf32>
    %70 = tpu.matmul %68, %69, %cst_44 {dimension_numbers = #tpu.dot_dimension_numbers<[1], [0], [0], [1], [0, 0, 1, 1], [], []>} : vector<16x512xbf16>, vector<512x784xbf16>, vector<16x784xf32> -> vector<16x784xf32>
    %c0_45 = arith.constant 0 : index
    %c0_46 = arith.constant 0 : index
    %71 = vector.load %arg14[%c0_45, %c0_46] : memref<1x784xf32, #tpu.memory_space<vmem>>, vector<1x784xf32>
    %72 = vector.broadcast %71 : vector<1x784xf32> to vector<16x784xf32>
    %73 = arith.addf %70, %72 : vector<16x784xf32>
    %cst_47 = arith.constant 0.000000e+00 : f32
    %74 = vector.broadcast %cst_47 : f32 to vector<16x784xf32>
    %75 = arith.maximumf %73, %74 : vector<16x784xf32>
    %cst_48 = arith.constant 0.000000e+00 : f32
    %76 = vector.broadcast %cst_48 : f32 to vector<16x784xf32>
    %77 = arith.subf %76, %75 : vector<16x784xf32>
    %78 = math.exp %77 : vector<16x784xf32>
    %cst_49 = arith.constant 1.000000e+00 : f32
    %79 = vector.broadcast %cst_49 : f32 to vector<16x784xf32>
    %80 = arith.addf %79, %78 : vector<16x784xf32>
    %81 = tpu.reciprocal %80 {approx = true} : vector<16x784xf32> -> vector<16x784xf32>
    %cst_50 = arith.constant 1.000000e+00 : f32
    %82 = vector.broadcast %cst_50 : f32 to vector<16x784xf32>
    %83 = arith.minimumf %81, %82 : vector<16x784xf32>
    %c0_51 = arith.constant 0 : index
    %c0_52 = arith.constant 0 : index
    %84 = vector.load %arg15[%c0_51, %c0_52] : memref<16x784xf32, #tpu.memory_space<vmem>>, vector<16x784xf32>
    tpu.vector_store %arg15[%c0_51, %c0_52], %83 {strides = array<i32>} : memref<16x784xf32, #tpu.memory_space<vmem>>, vector<16x784xf32>,
    %85 = vector.shape_cast %25 : vector<16x128xf32> to vector<1x16x128xf32>
    %86 = vector.shape_cast %25 : vector<16x128xf32> to vector<1x16x128xf32>
    %87 = arith.mulf %85, %86 : vector<1x16x128xf32>
    %cst_53 = arith.constant dense<0.000000e+00> : vector<1x16xf32>
    %88 = vector.multi_reduction <add>, %87, %cst_53 [2] : vector<1x16x128xf32> to vector<1x16xf32>
    %cst_54 = arith.constant dense<0.000000e+00> : vector<64x16xf32>
    %89 = tpu.matmul %27, %25, %cst_54 {dimension_numbers = #tpu.dot_dimension_numbers<[1], [1], [0], [0], [0, 0, 1, 0], [], []>} : vector<64x128xf32>, vector<16x128xf32>, vector<64x16xf32> -> vector<64x16xf32>
    %cst_55 = arith.constant 2.000000e+00 : f32
    %90 = vector.broadcast %cst_55 : f32 to vector<64x16xf32>
    %91 = arith.mulf %90, %89 : vector<64x16xf32>
    %92 = vector.broadcast %88 : vector<1x16xf32> to vector<64x16xf32>
    %93 = arith.subf %92, %91 : vector<64x16xf32>
    %94 = tpu.iota {dimensions = array<i32: 1>} : vector<64x16xi32>
    %c16_i32 = arith.constant 16 : i32
    %95 = arith.muli %arg0, %c16_i32 : i32
    %96 = vector.broadcast %95 : i32 to vector<64x16xi32>
    %97 = arith.addi %94, %96 : vector<64x16xi32>
    %c16_i32_56 = arith.constant 16 : i32
    %98 = vector.broadcast %c16_i32_56 : i32 to vector<64x16xi32>
    %99 = arith.cmpi slt, %97, %98 : vector<64x16xi32>
    %cst_57 = arith.constant 0x7F800000 : f32
    %100 = vector.broadcast %cst_57 : f32 to vector<64x16xf32>
    %101 = arith.select %99, %93, %100 : vector<64x16xi1>, vector<64x16xf32>
    %cst_58 = arith.constant dense<0x7F800000> : vector<64xf32>
    %102 = vector.multi_reduction <minimumf>, %101, %cst_58 [1] : vector<64x16xf32> to vector<64xf32>
    %103 = vector.shape_cast %102 : vector<64xf32> to vector<64x1xf32>
    %104 = vector.broadcast %103 : vector<64x1xf32> to vector<64x16xf32>
    %105 = arith.cmpf oeq, %101, %104 : vector<64x16xf32>
    %c16_i32_59 = arith.constant 16 : i32
    %106 = vector.broadcast %c16_i32_59 : i32 to vector<64x16xi32>
    %107 = arith.select %105, %94, %106 : vector<64x16xi1>, vector<64x16xi32>
    %cst_60 = arith.constant dense<2147483647> : vector<64xi32>
    %108 = vector.multi_reduction <minsi>, %107, %cst_60 [1] : vector<64x16xi32> to vector<64xi32>
    %109 = vector.shape_cast %108 : vector<64xi32> to vector<64x1xi32>
    %110 = vector.broadcast %109 : vector<64x1xi32> to vector<64x16xi32>
    %111 = arith.cmpi eq, %94, %110 : vector<64x16xi32>
    %112 = arith.extui %111 : vector<64x16xi1> to vector<64x16xi32>
    %113 = arith.sitofp %112 : vector<64x16xi32> to vector<64x16xf32>
    %cst_61 = arith.constant dense<0.000000e+00> : vector<64x128xf32>
    %114 = tpu.matmul %113, %25, %cst_61 {dimension_numbers = #tpu.dot_dimension_numbers<[1], [0], [0], [1], [0, 0, 1, 1], [], []>} : vector<64x16xf32>, vector<16x128xf32>, vector<64x128xf32> -> vector<64x128xf32>
    %c0_62 = arith.constant 0 : index
    %c0_63 = arith.constant 0 : index
    %115 = vector.load %arg19[%c0_62, %c0_63] : memref<64x1xf32, #tpu.memory_space<vmem>>, vector<64x1xf32>
    %116 = arith.cmpf olt, %103, %115 : vector<64x1xf32>
    %c0_64 = arith.constant 0 : index
    %c0_65 = arith.constant 0 : index
    %117 = vector.load %arg18[%c0_64, %c0_65] : memref<64x128xf32, #tpu.memory_space<vmem>>, vector<64x128xf32>
    %118 = vector.shape_cast %116 : vector<64x1xi1> to vector<64x1xi1>
    %119 = vector.broadcast %118 : vector<64x1xi1> to vector<64x128xi1>
    %120 = arith.select %119, %114, %117 : vector<64x128xi1>, vector<64x128xf32>
    %c0_66 = arith.constant 0 : index
    %c0_67 = arith.constant 0 : index
    %121 = vector.load %arg18[%c0_66, %c0_67] : memref<64x128xf32, #tpu.memory_space<vmem>>, vector<64x128xf32>
    tpu.vector_store %arg18[%c0_66, %c0_67], %120 {strides = array<i32>} : memref<64x128xf32, #tpu.memory_space<vmem>>, vector<64x128xf32>,
    %c0_68 = arith.constant 0 : index
    %c0_69 = arith.constant 0 : index
    %122 = vector.load %arg19[%c0_68, %c0_69] : memref<64x1xf32, #tpu.memory_space<vmem>>, vector<64x1xf32>
    %123 = arith.select %116, %103, %122 : vector<64x1xi1>, vector<64x1xf32>
    %c0_70 = arith.constant 0 : index
    %c0_71 = arith.constant 0 : index
    %124 = vector.load %arg19[%c0_70, %c0_71] : memref<64x1xf32, #tpu.memory_space<vmem>>, vector<64x1xf32>
    tpu.vector_store %arg19[%c0_70, %c0_71], %123 {strides = array<i32>} : memref<64x1xf32, #tpu.memory_space<vmem>>, vector<64x1xf32>,
    return
  }
  func.func @transform_0(%arg0: i32) -> (i32, i32) {
    %c0_i32 = arith.constant 0 : i32
    %c0_i32_0 = arith.constant 0 : i32
    return %arg0, %c0_i32 : i32, i32
  }
  func.func @transform_1(%arg0: i32) -> (i32, i32) {
    %c0_i32 = arith.constant 0 : i32
    %c0_i32_0 = arith.constant 0 : i32
    %c0_i32_1 = arith.constant 0 : i32
    return %c0_i32, %c0_i32_0 : i32, i32
  }
  func.func @transform_2(%arg0: i32) -> (i32, i32) {
    %c0_i32 = arith.constant 0 : i32
    %c0_i32_0 = arith.constant 0 : i32
    %c0_i32_1 = arith.constant 0 : i32
    return %c0_i32, %c0_i32_0 : i32, i32
  }
  func.func @transform_3(%arg0: i32) -> (i32, i32) {
    %c0_i32 = arith.constant 0 : i32
    %c0_i32_0 = arith.constant 0 : i32
    %c0_i32_1 = arith.constant 0 : i32
    return %c0_i32, %c0_i32_0 : i32, i32
  }
  func.func @transform_4(%arg0: i32) -> (i32, i32) {
    %c0_i32 = arith.constant 0 : i32
    %c0_i32_0 = arith.constant 0 : i32
    %c0_i32_1 = arith.constant 0 : i32
    return %c0_i32, %c0_i32_0 : i32, i32
  }
  func.func @transform_5(%arg0: i32) -> (i32, i32) {
    %c0_i32 = arith.constant 0 : i32
    %c0_i32_0 = arith.constant 0 : i32
    %c0_i32_1 = arith.constant 0 : i32
    return %c0_i32, %c0_i32_0 : i32, i32
  }
  func.func @transform_6(%arg0: i32) -> (i32, i32) {
    %c0_i32 = arith.constant 0 : i32
    %c0_i32_0 = arith.constant 0 : i32
    %c0_i32_1 = arith.constant 0 : i32
    return %c0_i32, %c0_i32_0 : i32, i32
  }
  func.func @transform_7(%arg0: i32) -> (i32, i32) {
    %c0_i32 = arith.constant 0 : i32
    %c0_i32_0 = arith.constant 0 : i32
    %c0_i32_1 = arith.constant 0 : i32
    return %c0_i32, %c0_i32_0 : i32, i32
  }
  func.func @transform_8(%arg0: i32) -> (i32, i32) {
    %c0_i32 = arith.constant 0 : i32
    %c0_i32_0 = arith.constant 0 : i32
    %c0_i32_1 = arith.constant 0 : i32
    return %c0_i32, %c0_i32_0 : i32, i32
  }
  func.func @transform_9(%arg0: i32) -> (i32, i32) {
    %c0_i32 = arith.constant 0 : i32
    %c0_i32_0 = arith.constant 0 : i32
    %c0_i32_1 = arith.constant 0 : i32
    return %c0_i32, %c0_i32_0 : i32, i32
  }
  func.func @transform_10(%arg0: i32) -> (i32, i32) {
    %c0_i32 = arith.constant 0 : i32
    %c0_i32_0 = arith.constant 0 : i32
    %c0_i32_1 = arith.constant 0 : i32
    return %c0_i32, %c0_i32_0 : i32, i32
  }
  func.func @transform_11(%arg0: i32) -> (i32, i32) {
    %c0_i32 = arith.constant 0 : i32
    %c0_i32_0 = arith.constant 0 : i32
    %c0_i32_1 = arith.constant 0 : i32
    return %c0_i32, %c0_i32_0 : i32, i32
  }
  func.func @transform_12(%arg0: i32) -> (i32, i32) {
    %c0_i32 = arith.constant 0 : i32
    %c0_i32_0 = arith.constant 0 : i32
    %c0_i32_1 = arith.constant 0 : i32
    return %c0_i32, %c0_i32_0 : i32, i32
  }
  func.func @transform_13(%arg0: i32) -> (i32, i32) {
    %c0_i32 = arith.constant 0 : i32
    %c0_i32_0 = arith.constant 0 : i32
    %c0_i32_1 = arith.constant 0 : i32
    return %c0_i32, %c0_i32_0 : i32, i32
  }
  func.func @transform_14(%arg0: i32) -> (i32, i32) {
    %c0_i32 = arith.constant 0 : i32
    %c0_i32_0 = arith.constant 0 : i32
    return %arg0, %c0_i32 : i32, i32
  }
  func.func @transform_15(%arg0: i32) -> (i32, i32) {
    %c0_i32 = arith.constant 0 : i32
    %c0_i32_0 = arith.constant 0 : i32
    return %arg0, %c0_i32 : i32, i32
  }
  func.func @transform_16(%arg0: i32) -> (i32, i32) {
    %c0_i32 = arith.constant 0 : i32
    %c0_i32_0 = arith.constant 0 : i32
    return %arg0, %c0_i32 : i32, i32
  }
  func.func @transform_17(%arg0: i32) -> (i32, i32) {
    %c0_i32 = arith.constant 0 : i32
    %c0_i32_0 = arith.constant 0 : i32
    %c0_i32_1 = arith.constant 0 : i32
    return %c0_i32, %c0_i32_0 : i32, i32
  }
}

</mosaic_0001>

<llo_original>
// kernel: vqvae_mlp_forward.1
$region0: #{vqvae_mlp_forward.1}
  #allocation0 [shape = 'u32[]', space=smem, size = 0x4, offset = 0x4, fixed_abs, tag = 'smem constant byte address 0x4 - core index']
  #allocation1 [shape = 'u32[72,128]{1,0:T(1,128)}', space=vmem, size = 0x9000, scoped, tag = 'internal scratch']
  #allocation2 [shape = 'f32[64,1]{1,0:T(8,128)}', space=vmem, size = 0x8000, scoped, tag = 'scratch operand']
  %s0 = inlined_call_operand.vmem [shape: f32[16,784], index: 0, kind: input, shape index: {}]
  %s1 = inlined_call_operand.vmem [shape: bf16[784,512], index: 1, kind: input, shape index: {}]
  %s2 = inlined_call_operand.vmem [shape: f32[1,512], index: 2, kind: input, shape index: {}]
  %s3 = inlined_call_operand.vmem [shape: bf16[512,256], index: 3, kind: input, shape index: {}]
  %s4 = inlined_call_operand.vmem [shape: f32[1,256], index: 4, kind: input, shape index: {}]
  %s5 = inlined_call_operand.vmem [shape: bf16[256,128], index: 5, kind: input, shape index: {}]
  %s6 = inlined_call_operand.vmem [shape: f32[1,128], index: 6, kind: input, shape index: {}]
  %s7 = inlined_call_operand.vmem [shape: f32[64,128], index: 7, kind: input, shape index: {}]
  %s8 = inlined_call_operand.vmem [shape: bf16[128,256], index: 8, kind: input, shape index: {}]
  %s9 = inlined_call_operand.vmem [shape: f32[1,256], index: 9, kind: input, shape index: {}]
  %s10 = inlined_call_operand.vmem [shape: bf16[256,512], index: 10, kind: input, shape index: {}]
  %s11 = inlined_call_operand.vmem [shape: f32[1,512], index: 11, kind: input, shape index: {}]
  %s12 = inlined_call_operand.vmem [shape: bf16[512,784], index: 12, kind: input, shape index: {}]
  %s13 = inlined_call_operand.vmem [shape: f32[1,784], index: 13, kind: input, shape index: {}]
  %s14 = inlined_call_operand.vmem [shape: f32[16,784], index: 14, kind: output, shape index: {0}]
  %s15 = inlined_call_operand.hbm [shape: f32[16,128], index: 15, kind: output, shape index: {1}]
  %s16 = inlined_call_operand.hbm [shape: f32[16,128], index: 16, kind: output, shape index: {2}]
  %s17 = inlined_call_operand.hbm [shape: f32[64,128], index: 17, kind: output, shape index: {3}]
  %18 = xla_tuple %s14, %s15, %s16, %s17
  %s19 = sld [smem:[#allocation0]]
  $region94: #{vqvae_mlp_forward.1} parent=0
    _
  %s21 = ssub.s32 1, %s19
  %s22 = scalar_select 0, %s21, %s19
  $region1: #{vqvae_mlp_forward.1} parent=0
    #allocation3 [shape = 'u8[8192]{0}', space=vmem, size = 0x2000, scoped, tag = 'output window, operand 1, single buffered']
    #allocation4 [shape = 's32[1]{0}', space=sflag, size = 0x4, scoped, tag = 'scoped memory for vqvae_mlp_forward.1']
    #allocation5 [shape = 'u8[8192]{0}', space=vmem, size = 0x2000, scoped, tag = 'output window, operand 2, single buffered']
    #allocation6 [shape = 's32[1]{0}', space=sflag, size = 0x4, scoped, tag = 'scoped memory for vqvae_mlp_forward.1']
    #allocation7 [shape = 'u8[32768]{0}', space=vmem, size = 0x8000, scoped, tag = 'output window, operand 3, single buffered']
    %23 = vsyncpa [#allocation4], 0
    %24 = vsyncpa [#allocation6], 0
    // Predicated region
    $region2: #{vqvae_mlp_forward.1} parent=1 // pred_check
      _
    $region3: #{vqvae_mlp_forward.1} parent=1 // pred_check_branch
      %26 = sbr.rel (0) target = $region5
    $region4: #{vqvae_mlp_forward.1} parent=1 // pred_region
      _
    $region5: #{vqvae_mlp_forward.1} parent=1 // pred_fallthru
      _
    // Predicated region
    $region6: #{vqvae_mlp_forward.1} parent=1 // pred_check
      _
    $region7: #{vqvae_mlp_forward.1} parent=1 // pred_check_branch
      %28 = sbr.rel (0) target = $region9
    $region8: #{vqvae_mlp_forward.1} parent=1 // pred_region
      _
    $region9: #{vqvae_mlp_forward.1} parent=1 // pred_fallthru
      _
    // Predicated region
    $region10: #{vqvae_mlp_forward.1} parent=1 // pred_check
      _
    $region11: #{vqvae_mlp_forward.1} parent=1 // pred_check_branch
      %30 = sbr.rel (0) target = $region13
    $region12: #{vqvae_mlp_forward.1} parent=1 // pred_region
      _
    $region13: #{vqvae_mlp_forward.1} parent=1 // pred_fallthru
      _
    // Predicated region
    $region14: #{vqvae_mlp_forward.1} parent=1 // pred_check
      _
    $region15: #{vqvae_mlp_forward.1} parent=1 // pred_check_branch
      %32 = sbr.rel (0) target = $region17
    $region16: #{vqvae_mlp_forward.1} parent=1 // pred_region
      _
    $region17: #{vqvae_mlp_forward.1} parent=1 // pred_fallthru
      _
    // Predicated region
    $region18: #{vqvae_mlp_forward.1} parent=1 // pred_check
      _
    $region19: #{vqvae_mlp_forward.1} parent=1 // pred_check_branch
      %34 = sbr.rel (0) target = $region21
    $region20: #{vqvae_mlp_forward.1} parent=1 // pred_region
      _
    $region21: #{vqvae_mlp_forward.1} parent=1 // pred_fallthru
      _
    // Predicated region
    $region22: #{vqvae_mlp_forward.1} parent=1 // pred_check
      _
    $region23: #{vqvae_mlp_forward.1} parent=1 // pred_check_branch
      %36 = sbr.rel (0) target = $region25
    $region24: #{vqvae_mlp_forward.1} parent=1 // pred_region
      _
    $region25: #{vqvae_mlp_forward.1} parent=1 // pred_fallthru
      _
    // Predicated region
    $region26: #{vqvae_mlp_forward.1} parent=1 // pred_check
      _
    $region27: #{vqvae_mlp_forward.1} parent=1 // pred_check_branch
      %38 = sbr.rel (0) target = $region29
    $region28: #{vqvae_mlp_forward.1} parent=1 // pred_region
      _
    $region29: #{vqvae_mlp_forward.1} parent=1 // pred_fallthru
      _
    // Predicated region
    $region30: #{vqvae_mlp_forward.1} parent=1 // pred_check
      _
    $region31: #{vqvae_mlp_forward.1} parent=1 // pred_check_branch
      %40 = sbr.rel (0) target = $region33
    $region32: #{vqvae_mlp_forward.1} parent=1 // pred_region
      _
    $region33: #{vqvae_mlp_forward.1} parent=1 // pred_fallthru
      _
    // Predicated region
    $region34: #{vqvae_mlp_forward.1} parent=1 // pred_check
      _
    $region35: #{vqvae_mlp_forward.1} parent=1 // pred_check_branch
      %42 = sbr.rel (0) target = $region37
    $region36: #{vqvae_mlp_forward.1} parent=1 // pred_region
      _
    $region37: #{vqvae_mlp_forward.1} parent=1 // pred_fallthru
      _
    // Predicated region
    $region38: #{vqvae_mlp_forward.1} parent=1 // pred_check
      _
    $region39: #{vqvae_mlp_forward.1} parent=1 // pred_check_branch
      %44 = sbr.rel (0) target = $region41
    $region40: #{vqvae_mlp_forward.1} parent=1 // pred_region
      _
    $region41: #{vqvae_mlp_forward.1} parent=1 // pred_fallthru
      _
    // Predicated region
    $region42: #{vqvae_mlp_forward.1} parent=1 // pred_check
      _
    $region43: #{vqvae_mlp_forward.1} parent=1 // pred_check_branch
      %46 = sbr.rel (0) target = $region45
    $region44: #{vqvae_mlp_forward.1} parent=1 // pred_region
      _
    $region45: #{vqvae_mlp_forward.1} parent=1 // pred_fallthru
      _
    // Predicated region
    $region46: #{vqvae_mlp_forward.1} parent=1 // pred_check
      _
    $region47: #{vqvae_mlp_forward.1} parent=1 // pred_check_branch
      %48 = sbr.rel (0) target = $region49
    $region48: #{vqvae_mlp_forward.1} parent=1 // pred_region
      _
    $region49: #{vqvae_mlp_forward.1} parent=1 // pred_fallthru
      _
    // Predicated region
    $region50: #{vqvae_mlp_forward.1} parent=1 // pred_check
      _
    $region51: #{vqvae_mlp_forward.1} parent=1 // pred_check_branch
      %50 = sbr.rel (0) target = $region53
    $region52: #{vqvae_mlp_forward.1} parent=1 // pred_region
      _
    $region53: #{vqvae_mlp_forward.1} parent=1 // pred_fallthru
      _
    // Predicated region
    $region54: #{vqvae_mlp_forward.1} parent=1 // pred_check
      _
    $region55: #{vqvae_mlp_forward.1} parent=1 // pred_check_branch
      %52 = sbr.rel (0) target = $region57
    $region56: #{vqvae_mlp_forward.1} parent=1 // pred_region
      _
    $region57: #{vqvae_mlp_forward.1} parent=1 // pred_fallthru
      _
    %p54 = scmp.eq.s32.totalorder 0, 0
    // Predicated region
    $region58: #{vqvae_mlp_forward.1} parent=1 // pred_check
      %p55 = pneg %p54
    $region59: #{vqvae_mlp_forward.1} parent=1 // pred_check_branch
      %57 = sbr.rel (%p55) target = $region61
    $region60: #{vqvae_mlp_forward.1} parent=1 // pred_region
      %vm58 = vcmask 7168
      %59 = vst.msk [vmem:[#allocation2] sm:$0xff] %vm58, inf
      %60 = vst.msk [vmem:[#allocation2 + $0x8] sm:$0xff] %vm58, inf
      %61 = vst.msk [vmem:[#allocation2 + $0x10] sm:$0xff] %vm58, inf
      %62 = vst.msk [vmem:[#allocation2 + $0x18] sm:$0xff] %vm58, inf
      %63 = vst.msk [vmem:[#allocation2 + $0x20] sm:$0xff] %vm58, inf
      %64 = vst.msk [vmem:[#allocation2 + $0x28] sm:$0xff] %vm58, inf
      %65 = vst.msk [vmem:[#allocation2 + $0x30] sm:$0xff] %vm58, inf
      %66 = vst.msk [vmem:[#allocation2 + $0x38] sm:$0xff] %vm58, inf
      %67 = vst [vmem:[#allocation7] sm:$0xff] 0.0
      %68 = vst [vmem:[#allocation7 + $0x8] sm:$0xff] 0.0
      %69 = vst [vmem:[#allocation7 + $0x10] sm:$0xff] 0.0
      %70 = vst [vmem:[#allocation7 + $0x18] sm:$0xff] 0.0
      %71 = vst [vmem:[#allocation7 + $0x20] sm:$0xff] 0.0
      %72 = vst [vmem:[#allocation7 + $0x28] sm:$0xff] 0.0
      %73 = vst [vmem:[#allocation7 + $0x30] sm:$0xff] 0.0
      %74 = vst [vmem:[#allocation7 + $0x38] sm:$0xff] 0.0
    $region61: #{vqvae_mlp_forward.1} parent=1 // pred_fallthru
      _
    %v75 = vld [vmem:[%s0] sm:$0xff]
    %v76 = vld [vmem:[%s0 + $0x8] sm:$0xff]
    %v77 = vld [vmem:[%s0 + $0x10] sm:$0xff]
    %v78 = vld [vmem:[%s0 + $0x18] sm:$0xff]
    %v79 = vld [vmem:[%s0 + $0x20] sm:$0xff]
    %v80 = vld [vmem:[%s0 + $0x28] sm:$0xff]
    %v81 = vld [vmem:[%s0 + $0x30] sm:$0xff]
    %v82 = vld [vmem:[%s0 + $0x38] sm:$0xff]
    %v83 = vld [vmem:[%s0 + $0x40] sm:$0xff]
    %v84 = vld [vmem:[%s0 + $0x48] sm:$0xff]
    %v85 = vld [vmem:[%s0 + $0x50] sm:$0xff]
    %v86 = vld [vmem:[%s0 + $0x58] sm:$0xff]
    %v87 = vld [vmem:[%s0 + $0x60] sm:$0xff]
    %v88 = vld [vmem:[%s0 + $0x68] sm:$0xff]
    %v89 = vpack.c.bf16 %v82, %v75
    %v90 = vpack.c.bf16 %v83, %v76
    %v91 = vpack.c.bf16 %v84, %v77
    %v92 = vpack.c.bf16 %v85, %v78
    %v93 = vpack.c.bf16 %v86, %v79
    %v94 = vpack.c.bf16 %v87, %v80
    %v95 = vpack.c.bf16 %v88, %v81
    %v96 = vld [vmem:[%s1] sm:$0xff]
    %v97 = vld [vmem:[%s1 + $0x8] sm:$0xff]
    %v98 = vld [vmem:[%s1 + $0x10] sm:$0xff]
    %v99 = vld [vmem:[%s1 + $0x18] sm:$0xff]
    %v100 = vld [vmem:[%s1 + $0x20] sm:$0xff]
    %v101 = vld [vmem:[%s1 + $0x28] sm:$0xff]
    %v102 = vld [vmem:[%s1 + $0x30] sm:$0xff]
    %v103 = vld [vmem:[%s1 + $0x38] sm:$0xff]
    %v104 = vld [vmem:[%s1 + $0x40] sm:$0xff]
    %v105 = vld [vmem:[%s1 + $0x48] sm:$0xff]
    %v106 = vld [vmem:[%s1 + $0x50] sm:$0xff]
    %v107 = vld [vmem:[%s1 + $0x58] sm:$0xff]
    %v108 = vld [vmem:[%s1 + $0x60] sm:$0xff]
    %v109 = vld [vmem:[%s1 + $0x68] sm:$0xff]
    %v110 = vld [vmem:[%s1 + $0x70] sm:$0xff]
    %v111 = vld [vmem:[%s1 + $0x78] sm:$0xff]
    %v112 = vld [vmem:[%s1 + $0x80] sm:$0xff]
    %v113 = vld [vmem:[%s1 + $0x88] sm:$0xff]
    %v114 = vld [vmem:[%s1 + $0x90] sm:$0xff]
    %v115 = vld [vmem:[%s1 + $0x98] sm:$0xff]
    %v116 = vld [vmem:[%s1 + $0xa0] sm:$0xff]
    %v117 = vld [vmem:[%s1 + $0xa8] sm:$0xff]
    %v118 = vld [vmem:[%s1 + $0xb0] sm:$0xff]
    %v119 = vld [vmem:[%s1 + $0xb8] sm:$0xff]
    %v120 = vld [vmem:[%s1 + $0xc0] sm:$0xff]
    %v121 = vld [vmem:[%s1 + $0xc8] sm:$0xff]
    %v122 = vld [vmem:[%s1 + $0xd0] sm:$0xff]
    %v123 = vld [vmem:[%s1 + $0xd8] sm:$0xff]
    %v124 = vld [vmem:[%s1 + $0xe0] sm:$0xff]
    %v125 = vld [vmem:[%s1 + $0xe8] sm:$0xff]
    %v126 = vld [vmem:[%s1 + $0xf0] sm:$0xff]
    %v127 = vld [vmem:[%s1 + $0xf8] sm:$0xff]
    %v128 = vld [vmem:[%s1 + $0x100] sm:$0xff]
    %v129 = vld [vmem:[%s1 + $0x108] sm:$0xff]
    %v130 = vld [vmem:[%s1 + $0x110] sm:$0xff]
    %v131 = vld [vmem:[%s1 + $0x118] sm:$0xff]
    %v132 = vld [vmem:[%s1 + $0x120] sm:$0xff]
    %v133 = vld [vmem:[%s1 + $0x128] sm:$0xff]
    %v134 = vld [vmem:[%s1 + $0x130] sm:$0xff]
    %v135 = vld [vmem:[%s1 + $0x138] sm:$0xff]
    %v136 = vld [vmem:[%s1 + $0x140] sm:$0xff]
    %v137 = vld [vmem:[%s1 + $0x148] sm:$0xff]
    %v138 = vld [vmem:[%s1 + $0x150] sm:$0xff]
    %v139 = vld [vmem:[%s1 + $0x158] sm:$0xff]
    %v140 = vld [vmem:[%s1 + $0x160] sm:$0xff]
    %v141 = vld [vmem:[%s1 + $0x168] sm:$0xff]
    %v142 = vld [vmem:[%s1 + $0x170] sm:$0xff]
    %v143 = vld [vmem:[%s1 + $0x178] sm:$0xff]
    %v144 = vld [vmem:[%s1 + $0x180] sm:$0xff]
    %v145 = vld [vmem:[%s1 + $0x188] sm:$0xff]
    %v146 = vld [vmem:[%s1 + $0x190] sm:$0xff]
    %v147 = vld [vmem:[%s1 + $0x198] sm:$0xff]
    %v148 = vld [vmem:[%s1 + $0x1a0] sm:$0xff]
    %v149 = vld [vmem:[%s1 + $0x1a8] sm:$0xff]
    %v150 = vld [vmem:[%s1 + $0x1b0] sm:$0xff]
    %v151 = vld [vmem:[%s1 + $0x1b8] sm:$0xff]
    %v152 = vld [vmem:[%s1 + $0x1c0] sm:$0xff]
    %v153 = vld [vmem:[%s1 + $0x1c8] sm:$0xff]
    %v154 = vld [vmem:[%s1 + $0x1d0] sm:$0xff]
    %v155 = vld [vmem:[%s1 + $0x1d8] sm:$0xff]
    %v156 = vld [vmem:[%s1 + $0x1e0] sm:$0xff]
    %v157 = vld [vmem:[%s1 + $0x1e8] sm:$0xff]
    %v158 = vld [vmem:[%s1 + $0x1f0] sm:$0xff]
    %v159 = vld [vmem:[%s1 + $0x1f8] sm:$0xff]
    %v160 = vld [vmem:[%s1 + $0x200] sm:$0xff]
    %v161 = vld [vmem:[%s1 + $0x208] sm:$0xff]
    %v162 = vld [vmem:[%s1 + $0x210] sm:$0xff]
    %v163 = vld [vmem:[%s1 + $0x218] sm:$0xff]
    %v164 = vld [vmem:[%s1 + $0x220] sm:$0xff]
    %v165 = vld [vmem:[%s1 + $0x228] sm:$0xff]
    %v166 = vld [vmem:[%s1 + $0x230] sm:$0xff]
    %v167 = vld [vmem:[%s1 + $0x238] sm:$0xff]
    %v168 = vld [vmem:[%s1 + $0x240] sm:$0xff]
    %v169 = vld [vmem:[%s1 + $0x248] sm:$0xff]
    %v170 = vld [vmem:[%s1 + $0x250] sm:$0xff]
    %v171 = vld [vmem:[%s1 + $0x258] sm:$0xff]
    %v172 = vld [vmem:[%s1 + $0x260] sm:$0xff]
    %v173 = vld [vmem:[%s1 + $0x268] sm:$0xff]
    %v174 = vld [vmem:[%s1 + $0x270] sm:$0xff]
    %v175 = vld [vmem:[%s1 + $0x278] sm:$0xff]
    %v176 = vld [vmem:[%s1 + $0x280] sm:$0xff]
    %v177 = vld [vmem:[%s1 + $0x288] sm:$0xff]
    %v178 = vld [vmem:[%s1 + $0x290] sm:$0xff]
    %v179 = vld [vmem:[%s1 + $0x298] sm:$0xff]
    %v180 = vld [vmem:[%s1 + $0x2a0] sm:$0xff]
    %v181 = vld [vmem:[%s1 + $0x2a8] sm:$0xff]
    %v182 = vld [vmem:[%s1 + $0x2b0] sm:$0xff]
    %v183 = vld [vmem:[%s1 + $0x2b8] sm:$0xff]
    %v184 = vld [vmem:[%s1 + $0x2c0] sm:$0xff]
    %v185 = vld [vmem:[%s1 + $0x2c8] sm:$0xff]
    %v186 = vld [vmem:[%s1 + $0x2d0] sm:$0xff]
    %v187 = vld [vmem:[%s1 + $0x2d8] sm:$0xff]
    %v188 = vld [vmem:[%s1 + $0x2e0] sm:$0xff]
    %v189 = vld [vmem:[%s1 + $0x2e8] sm:$0xff]
    %v190 = vld [vmem:[%s1 + $0x2f0] sm:$0xff]
    %v191 = vld [vmem:[%s1 + $0x2f8] sm:$0xff]
    %v192 = vld [vmem:[%s1 + $0x300] sm:$0xff]
    %v193 = vld [vmem:[%s1 + $0x308] sm:$0xff]
    %v194 = vld [vmem:[%s1 + $0x310] sm:$0xff]
    %v195 = vld [vmem:[%s1 + $0x318] sm:$0xff]
    %v196 = vld [vmem:[%s1 + $0x320] sm:$0xff]
    %v197 = vld [vmem:[%s1 + $0x328] sm:$0xff]
    %v198 = vld [vmem:[%s1 + $0x330] sm:$0xff]
    %v199 = vld [vmem:[%s1 + $0x338] sm:$0xff]
    %v200 = vld [vmem:[%s1 + $0x340] sm:$0xff]
    %v201 = vld [vmem:[%s1 + $0x348] sm:$0xff]
    %v202 = vld [vmem:[%s1 + $0x350] sm:$0xff]
    %v203 = vld [vmem:[%s1 + $0x358] sm:$0xff]
    %v204 = vld [vmem:[%s1 + $0x360] sm:$0xff]
    %v205 = vld [vmem:[%s1 + $0x368] sm:$0xff]
    %v206 = vld [vmem:[%s1 + $0x370] sm:$0xff]
    %v207 = vld [vmem:[%s1 + $0x378] sm:$0xff]
    %v208 = vld [vmem:[%s1 + $0x380] sm:$0xff]
    %v209 = vld [vmem:[%s1 + $0x388] sm:$0xff]
    %v210 = vld [vmem:[%s1 + $0x390] sm:$0xff]
    %v211 = vld [vmem:[%s1 + $0x398] sm:$0xff]
    %v212 = vld [vmem:[%s1 + $0x3a0] sm:$0xff]
    %v213 = vld [vmem:[%s1 + $0x3a8] sm:$0xff]
    %v214 = vld [vmem:[%s1 + $0x3b0] sm:$0xff]
    %v215 = vld [vmem:[%s1 + $0x3b8] sm:$0xff]
    %v216 = vld [vmem:[%s1 + $0x3c0] sm:$0xff]
    %v217 = vld [vmem:[%s1 + $0x3c8] sm:$0xff]
    %v218 = vld [vmem:[%s1 + $0x3d0] sm:$0xff]
    %v219 = vld [vmem:[%s1 + $0x3d8] sm:$0xff]
    %v220 = vld [vmem:[%s1 + $0x3e0] sm:$0xff]
    %v221 = vld [vmem:[%s1 + $0x3e8] sm:$0xff]
    %v222 = vld [vmem:[%s1 + $0x3f0] sm:$0xff]
    %v223 = vld [vmem:[%s1 + $0x3f8] sm:$0xff]
    %v224 = vld [vmem:[%s1 + $0x400] sm:$0xff]
    %v225 = vld [vmem:[%s1 + $0x408] sm:$0xff]
    %v226 = vld [vmem:[%s1 + $0x410] sm:$0xff]
    %v227 = vld [vmem:[%s1 + $0x418] sm:$0xff]
    %v228 = vld [vmem:[%s1 + $0x420] sm:$0xff]
    %v229 = vld [vmem:[%s1 + $0x428] sm:$0xff]
    %v230 = vld [vmem:[%s1 + $0x430] sm:$0xff]
    %v231 = vld [vmem:[%s1 + $0x438] sm:$0xff]
    %v232 = vld [vmem:[%s1 + $0x440] sm:$0xff]
    %v233 = vld [vmem:[%s1 + $0x448] sm:$0xff]
    %v234 = vld [vmem:[%s1 + $0x450] sm:$0xff]
    %v235 = vld [vmem:[%s1 + $0x458] sm:$0xff]
    %v236 = vld [vmem:[%s1 + $0x460] sm:$0xff]
    %v237 = vld [vmem:[%s1 + $0x468] sm:$0xff]
    %v238 = vld [vmem:[%s1 + $0x470] sm:$0xff]
    %v239 = vld [vmem:[%s1 + $0x478] sm:$0xff]
    %v240 = vld [vmem:[%s1 + $0x480] sm:$0xff]
    %v241 = vld [vmem:[%s1 + $0x488] sm:$0xff]
    %v242 = vld [vmem:[%s1 + $0x490] sm:$0xff]
    %v243 = vld [vmem:[%s1 + $0x498] sm:$0xff]
    %v244 = vld [vmem:[%s1 + $0x4a0] sm:$0xff]
    %v245 = vld [vmem:[%s1 + $0x4a8] sm:$0xff]
    %v246 = vld [vmem:[%s1 + $0x4b0] sm:$0xff]
    %v247 = vld [vmem:[%s1 + $0x4b8] sm:$0xff]
    %v248 = vld [vmem:[%s1 + $0x4c0] sm:$0xff]
    %v249 = vld [vmem:[%s1 + $0x4c8] sm:$0xff]
    %v250 = vld [vmem:[%s1 + $0x4d0] sm:$0xff]
    %v251 = vld [vmem:[%s1 + $0x4d8] sm:$0xff]
    %v252 = vld [vmem:[%s1 + $0x4e0] sm:$0xff]
    %v253 = vld [vmem:[%s1 + $0x4e8] sm:$0xff]
    %v254 = vld [vmem:[%s1 + $0x4f0] sm:$0xff]
    %v255 = vld [vmem:[%s1 + $0x4f8] sm:$0xff]
    %v256 = vld [vmem:[%s1 + $0x500] sm:$0xff]
    %v257 = vld [vmem:[%s1 + $0x508] sm:$0xff]
    %v258 = vld [vmem:[%s1 + $0x510] sm:$0xff]
    %v259 = vld [vmem:[%s1 + $0x518] sm:$0xff]
    %v260 = vld [vmem:[%s1 + $0x520] sm:$0xff]
    %v261 = vld [vmem:[%s1 + $0x528] sm:$0xff]
    %v262 = vld [vmem:[%s1 + $0x530] sm:$0xff]
    %v263 = vld [vmem:[%s1 + $0x538] sm:$0xff]
    %v264 = vld [vmem:[%s1 + $0x540] sm:$0xff]
    %v265 = vld [vmem:[%s1 + $0x548] sm:$0xff]
    %v266 = vld [vmem:[%s1 + $0x550] sm:$0xff]
    %v267 = vld [vmem:[%s1 + $0x558] sm:$0xff]
    %v268 = vld [vmem:[%s1 + $0x560] sm:$0xff]
    %v269 = vld [vmem:[%s1 + $0x568] sm:$0xff]
    %v270 = vld [vmem:[%s1 + $0x570] sm:$0xff]
    %v271 = vld [vmem:[%s1 + $0x578] sm:$0xff]
    %v272 = vld [vmem:[%s1 + $0x580] sm:$0xff]
    %v273 = vld [vmem:[%s1 + $0x588] sm:$0xff]
    %v274 = vld [vmem:[%s1 + $0x590] sm:$0xff]
    %v275 = vld [vmem:[%s1 + $0x598] sm:$0xff]
    %v276 = vld [vmem:[%s1 + $0x5a0] sm:$0xff]
    %v277 = vld [vmem:[%s1 + $0x5a8] sm:$0xff]
    %v278 = vld [vmem:[%s1 + $0x5b0] sm:$0xff]
    %v279 = vld [vmem:[%s1 + $0x5b8] sm:$0xff]
    %v280 = vld [vmem:[%s1 + $0x5c0] sm:$0xff]
    %v281 = vld [vmem:[%s1 + $0x5c8] sm:$0xff]
    %v282 = vld [vmem:[%s1 + $0x5d0] sm:$0xff]
    %v283 = vld [vmem:[%s1 + $0x5d8] sm:$0xff]
    %v284 = vld [vmem:[%s1 + $0x5e0] sm:$0xff]
    %v285 = vld [vmem:[%s1 + $0x5e8] sm:$0xff]
    %v286 = vld [vmem:[%s1 + $0x5f0] sm:$0xff]
    %v287 = vld [vmem:[%s1 + $0x5f8] sm:$0xff]
    %v288 = vld [vmem:[%s1 + $0x600] sm:$0xff]
    %v289 = vld [vmem:[%s1 + $0x608] sm:$0xff]
    %v290 = vld [vmem:[%s1 + $0x610] sm:$0xff]
    %v291 = vld [vmem:[%s1 + $0x618] sm:$0xff]
    %v292 = vld [vmem:[%s2] sm:$0xf]
    %v294 = vperm.slane %v292, 0
    %v295 = vperm.slane %v292, 1
    %v296 = vperm.slane %v292, 2
    %v297 = vperm.slane %v292, 3
    %v498 = vunpack.c.l.b16 %v96
    %v499 = vunpack.c.h.b16 %v96
    %v500 = vunpack.c.l.b16 %v97
    %v501 = vunpack.c.h.b16 %v97
    %v502 = vunpack.c.l.b16 %v98
    %v503 = vunpack.c.h.b16 %v98
    %v504 = vunpack.c.l.b16 %v99
    %v505 = vunpack.c.h.b16 %v99
    %v506 = vunpack.c.l.b16 %v100
    %v507 = vunpack.c.h.b16 %v100
    %v508 = vunpack.c.l.b16 %v101
    %v509 = vunpack.c.h.b16 %v101
    %v510 = vunpack.c.l.b16 %v102
    %v511 = vunpack.c.h.b16 %v102
    %v512 = vunpack.c.l.b16 %v103
    %v513 = vunpack.c.h.b16 %v103
    %v514 = vunpack.c.l.b16 %v104
    %v515 = vunpack.c.h.b16 %v104
    %v516 = vunpack.c.l.b16 %v105
    %v517 = vunpack.c.h.b16 %v105
    %v518 = vunpack.c.l.b16 %v106
    %v519 = vunpack.c.h.b16 %v106
    %v520 = vunpack.c.l.b16 %v107
    %v521 = vunpack.c.h.b16 %v107
    %v522 = vunpack.c.l.b16 %v108
    %v523 = vunpack.c.h.b16 %v108
    %v524 = vunpack.c.l.b16 %v109
    %v525 = vunpack.c.h.b16 %v109
    %v526 = vunpack.c.l.b16 %v110
    %v527 = vunpack.c.h.b16 %v110
    %v528 = vunpack.c.l.b16 %v111
    %v529 = vunpack.c.h.b16 %v111
    %v530 = vunpack.c.l.b16 %v112
    %v531 = vunpack.c.h.b16 %v112
    %v532 = vunpack.c.l.b16 %v113
    %v533 = vunpack.c.h.b16 %v113
    %v534 = vunpack.c.l.b16 %v114
    %v535 = vunpack.c.h.b16 %v114
    %v536 = vunpack.c.l.b16 %v115
    %v537 = vunpack.c.h.b16 %v115
    %v538 = vunpack.c.l.b16 %v116
    %v539 = vunpack.c.h.b16 %v116
    %v540 = vunpack.c.l.b16 %v117
    %v541 = vunpack.c.h.b16 %v117
    %v542 = vunpack.c.l.b16 %v118
    %v543 = vunpack.c.h.b16 %v118
    %v544 = vunpack.c.l.b16 %v119
    %v545 = vunpack.c.h.b16 %v119
    %v546 = vunpack.c.l.b16 %v120
    %v547 = vunpack.c.h.b16 %v120
    %v548 = vunpack.c.l.b16 %v121
    %v549 = vunpack.c.h.b16 %v121
    %v550 = vunpack.c.l.b16 %v122
    %v551 = vunpack.c.h.b16 %v122
    %v552 = vunpack.c.l.b16 %v123
    %v553 = vunpack.c.h.b16 %v123
    %v554 = vunpack.c.l.b16 %v124
    %v555 = vunpack.c.h.b16 %v124
    %v556 = vunpack.c.l.b16 %v125
    %v557 = vunpack.c.h.b16 %v125
    %v558 = vunpack.c.l.b16 %v126
    %v559 = vunpack.c.h.b16 %v126
    %v560 = vunpack.c.l.b16 %v127
    %v561 = vunpack.c.h.b16 %v127
    %v562 = vunpack.c.l.b16 %v128
    %v563 = vunpack.c.h.b16 %v128
    %v564 = vunpack.c.l.b16 %v129
    %v565 = vunpack.c.h.b16 %v129
    %v566 = vunpack.c.l.b16 %v130
    %v567 = vunpack.c.h.b16 %v130
    %v568 = vunpack.c.l.b16 %v131
    %v569 = vunpack.c.h.b16 %v131
    %v570 = vunpack.c.l.b16 %v132
    %v571 = vunpack.c.h.b16 %v132
    %v572 = vunpack.c.l.b16 %v133
    %v573 = vunpack.c.h.b16 %v133
    %v574 = vunpack.c.l.b16 %v134
    %v575 = vunpack.c.h.b16 %v134
    %v576 = vunpack.c.l.b16 %v135
    %v577 = vunpack.c.h.b16 %v135
    %v578 = vunpack.c.l.b16 %v136
    %v579 = vunpack.c.h.b16 %v136
    %v580 = vunpack.c.l.b16 %v137
    %v581 = vunpack.c.h.b16 %v137
    %v582 = vunpack.c.l.b16 %v138
    %v583 = vunpack.c.h.b16 %v138
    %v584 = vunpack.c.l.b16 %v139
    %v585 = vunpack.c.h.b16 %v139
    %v586 = vunpack.c.l.b16 %v140
    %v587 = vunpack.c.h.b16 %v140
    %v588 = vunpack.c.l.b16 %v141
    %v589 = vunpack.c.h.b16 %v141
    %v590 = vunpack.c.l.b16 %v142
    %v591 = vunpack.c.h.b16 %v142
    %v592 = vunpack.c.l.b16 %v143
    %v593 = vunpack.c.h.b16 %v143
    %v594 = vunpack.c.l.b16 %v144
    %v595 = vunpack.c.h.b16 %v144
    %v596 = vunpack.c.l.b16 %v145
    %v597 = vunpack.c.h.b16 %v145
    %v598 = vunpack.c.l.b16 %v146
    %v599 = vunpack.c.h.b16 %v146
    %v600 = vunpack.c.l.b16 %v147
    %v601 = vunpack.c.h.b16 %v147
    %v602 = vunpack.c.l.b16 %v148
    %v603 = vunpack.c.h.b16 %v148
    %v604 = vunpack.c.l.b16 %v149
    %v605 = vunpack.c.h.b16 %v149
    %v606 = vunpack.c.l.b16 %v150
    %v607 = vunpack.c.h.b16 %v150
    %v608 = vunpack.c.l.b16 %v151
    %v609 = vunpack.c.h.b16 %v151
    %v610 = vunpack.c.l.b16 %v152
    %v611 = vunpack.c.h.b16 %v152
    %v612 = vunpack.c.l.b16 %v153
    %v613 = vunpack.c.h.b16 %v153
    %v614 = vunpack.c.l.b16 %v154
    %v615 = vunpack.c.h.b16 %v154
    %v616 = vunpack.c.l.b16 %v155
    %v617 = vunpack.c.h.b16 %v155
    %v618 = vunpack.c.l.b16 %v156
    %v619 = vunpack.c.h.b16 %v156
    %v620 = vunpack.c.l.b16 %v157
    %v621 = vunpack.c.h.b16 %v157
    %v622 = vunpack.c.l.b16 %v158
    %v623 = vunpack.c.h.b16 %v158
    %v624 = vunpack.c.l.b16 %v159
    %v625 = vunpack.c.h.b16 %v159
    %v626 = vunpack.c.l.b16 %v160
    %v627 = vunpack.c.h.b16 %v160
    %v628 = vunpack.c.l.b16 %v161
    %v629 = vunpack.c.h.b16 %v161
    %v630 = vunpack.c.l.b16 %v162
    %v631 = vunpack.c.h.b16 %v162
    %v632 = vunpack.c.l.b16 %v163
    %v633 = vunpack.c.h.b16 %v163
    %v634 = vunpack.c.l.b16 %v164
    %v635 = vunpack.c.h.b16 %v164
    %v636 = vunpack.c.l.b16 %v165
    %v637 = vunpack.c.h.b16 %v165
    %v638 = vunpack.c.l.b16 %v166
    %v639 = vunpack.c.h.b16 %v166
    %v640 = vunpack.c.l.b16 %v167
    %v641 = vunpack.c.h.b16 %v167
    %v642 = vunpack.c.l.b16 %v168
    %v643 = vunpack.c.h.b16 %v168
    %v644 = vunpack.c.l.b16 %v169
    %v645 = vunpack.c.h.b16 %v169
    %v646 = vunpack.c.l.b16 %v170
    %v647 = vunpack.c.h.b16 %v170
    %v648 = vunpack.c.l.b16 %v171
    %v649 = vunpack.c.h.b16 %v171
    %v650 = vunpack.c.l.b16 %v172
    %v651 = vunpack.c.h.b16 %v172
    %v652 = vunpack.c.l.b16 %v173
    %v653 = vunpack.c.h.b16 %v173
    %v654 = vunpack.c.l.b16 %v174
    %v655 = vunpack.c.h.b16 %v174
    %v656 = vunpack.c.l.b16 %v175
    %v657 = vunpack.c.h.b16 %v175
    %v658 = vunpack.c.l.b16 %v176
    %v659 = vunpack.c.h.b16 %v176
    %v660 = vunpack.c.l.b16 %v177
    %v661 = vunpack.c.h.b16 %v177
    %v662 = vunpack.c.l.b16 %v178
    %v663 = vunpack.c.h.b16 %v178
    %v664 = vunpack.c.l.b16 %v179
    %v665 = vunpack.c.h.b16 %v179
    %v666 = vunpack.c.l.b16 %v180
    %v667 = vunpack.c.h.b16 %v180
    %v668 = vunpack.c.l.b16 %v181
    %v669 = vunpack.c.h.b16 %v181
    %v670 = vunpack.c.l.b16 %v182
    %v671 = vunpack.c.h.b16 %v182
    %v672 = vunpack.c.l.b16 %v183
    %v673 = vunpack.c.h.b16 %v183
    %v674 = vunpack.c.l.b16 %v184
    %v675 = vunpack.c.h.b16 %v184
    %v676 = vunpack.c.l.b16 %v185
    %v677 = vunpack.c.h.b16 %v185
    %v678 = vunpack.c.l.b16 %v186
    %v679 = vunpack.c.h.b16 %v186
    %v680 = vunpack.c.l.b16 %v187
    %v681 = vunpack.c.h.b16 %v187
    %v682 = vunpack.c.l.b16 %v188
    %v683 = vunpack.c.h.b16 %v188
    %v684 = vunpack.c.l.b16 %v189
    %v685 = vunpack.c.h.b16 %v189
    %v686 = vunpack.c.l.b16 %v190
    %v687 = vunpack.c.h.b16 %v190
    %v688 = vunpack.c.l.b16 %v191
    %v689 = vunpack.c.h.b16 %v191
    %v690 = vunpack.c.l.b16 %v192
    %v691 = vunpack.c.h.b16 %v192
    %v692 = vunpack.c.l.b16 %v193
    %v693 = vunpack.c.h.b16 %v193
    %v694 = vunpack.c.l.b16 %v194
    %v695 = vunpack.c.h.b16 %v194
    %v696 = vunpack.c.l.b16 %v195
    %v697 = vunpack.c.h.b16 %v195
    %v698 = vunpack.c.l.b16 %v196
    %v699 = vunpack.c.h.b16 %v196
    %v700 = vunpack.c.l.b16 %v197
    %v701 = vunpack.c.h.b16 %v197
    %v702 = vunpack.c.l.b16 %v198
    %v703 = vunpack.c.h.b16 %v198
    %v704 = vunpack.c.l.b16 %v199
    %v705 = vunpack.c.h.b16 %v199
    %v706 = vunpack.c.l.b16 %v200
    %v707 = vunpack.c.h.b16 %v200
    %v708 = vunpack.c.l.b16 %v201
    %v709 = vunpack.c.h.b16 %v201
    %v710 = vunpack.c.l.b16 %v202
    %v711 = vunpack.c.h.b16 %v202
    %v712 = vunpack.c.l.b16 %v203
    %v713 = vunpack.c.h.b16 %v203
    %v714 = vunpack.c.l.b16 %v204
    %v715 = vunpack.c.h.b16 %v204
    %v716 = vunpack.c.l.b16 %v205
    %v717 = vunpack.c.h.b16 %v205
    %v718 = vunpack.c.l.b16 %v206
    %v719 = vunpack.c.h.b16 %v206
    %v720 = vunpack.c.l.b16 %v207
    %v721 = vunpack.c.h.b16 %v207
    %v722 = vunpack.c.l.b16 %v208
    %v723 = vunpack.c.h.b16 %v208
    %v724 = vunpack.c.l.b16 %v209
    %v725 = vunpack.c.h.b16 %v209
    %v726 = vunpack.c.l.b16 %v210
    %v727 = vunpack.c.h.b16 %v210
    %v728 = vunpack.c.l.b16 %v211
    %v729 = vunpack.c.h.b16 %v211
    %v730 = vunpack.c.l.b16 %v212
    %v731 = vunpack.c.h.b16 %v212
    %v732 = vunpack.c.l.b16 %v213
    %v733 = vunpack.c.h.b16 %v213
    %v734 = vunpack.c.l.b16 %v214
    %v735 = vunpack.c.h.b16 %v214
    %v736 = vunpack.c.l.b16 %v215
    %v737 = vunpack.c.h.b16 %v215
    %v738 = vunpack.c.l.b16 %v216
    %v739 = vunpack.c.h.b16 %v216
    %v740 = vunpack.c.l.b16 %v217
    %v741 = vunpack.c.h.b16 %v217
    %v742 = vunpack.c.l.b16 %v218
    %v743 = vunpack.c.h.b16 %v218
    %v744 = vunpack.c.l.b16 %v219
    %v745 = vunpack.c.h.b16 %v219
    %v746 = vunpack.c.l.b16 %v220
    %v747 = vunpack.c.h.b16 %v220
    %v748 = vunpack.c.l.b16 %v221
    %v749 = vunpack.c.h.b16 %v221
    %v750 = vunpack.c.l.b16 %v222
    %v751 = vunpack.c.h.b16 %v222
    %v752 = vunpack.c.l.b16 %v223
    %v753 = vunpack.c.h.b16 %v223
    %v754 = vunpack.c.l.b16 %v224
    %v755 = vunpack.c.h.b16 %v224
    %v756 = vunpack.c.l.b16 %v225
    %v757 = vunpack.c.h.b16 %v225
    %v758 = vunpack.c.l.b16 %v226
    %v759 = vunpack.c.h.b16 %v226
    %v760 = vunpack.c.l.b16 %v227
    %v761 = vunpack.c.h.b16 %v227
    %v762 = vunpack.c.l.b16 %v228
    %v763 = vunpack.c.h.b16 %v228
    %v764 = vunpack.c.l.b16 %v229
    %v765 = vunpack.c.h.b16 %v229
    %v766 = vunpack.c.l.b16 %v230
    %v767 = vunpack.c.h.b16 %v230
    %v768 = vunpack.c.l.b16 %v231
    %v769 = vunpack.c.h.b16 %v231
    %v770 = vunpack.c.l.b16 %v232
    %v771 = vunpack.c.h.b16 %v232
    %v772 = vunpack.c.l.b16 %v233
    %v773 = vunpack.c.h.b16 %v233
    %v774 = vunpack.c.l.b16 %v234
    %v775 = vunpack.c.h.b16 %v234
    %v776 = vunpack.c.l.b16 %v235
    %v777 = vunpack.c.h.b16 %v235
    %v778 = vunpack.c.l.b16 %v236
    %v779 = vunpack.c.h.b16 %v236
    %v780 = vunpack.c.l.b16 %v237
    %v781 = vunpack.c.h.b16 %v237
    %v782 = vunpack.c.l.b16 %v238
    %v783 = vunpack.c.h.b16 %v238
    %v784 = vunpack.c.l.b16 %v239
    %v785 = vunpack.c.h.b16 %v239
    %v786 = vunpack.c.l.b16 %v240
    %v787 = vunpack.c.h.b16 %v240
    %v788 = vunpack.c.l.b16 %v241
    %v789 = vunpack.c.h.b16 %v241
    %v790 = vunpack.c.l.b16 %v242
    %v791 = vunpack.c.h.b16 %v242
    %v792 = vunpack.c.l.b16 %v243
    %v793 = vunpack.c.h.b16 %v243
    %v794 = vunpack.c.l.b16 %v244
    %v795 = vunpack.c.h.b16 %v244
    %v796 = vunpack.c.l.b16 %v245
    %v797 = vunpack.c.h.b16 %v245
    %v798 = vunpack.c.l.b16 %v246
    %v799 = vunpack.c.h.b16 %v246
    %v800 = vunpack.c.l.b16 %v247
    %v801 = vunpack.c.h.b16 %v247
    %v802 = vunpack.c.l.b16 %v248
    %v803 = vunpack.c.h.b16 %v248
    %v804 = vunpack.c.l.b16 %v249
    %v805 = vunpack.c.h.b16 %v249
    %v806 = vunpack.c.l.b16 %v250
    %v807 = vunpack.c.h.b16 %v250
    %v808 = vunpack.c.l.b16 %v251
    %v809 = vunpack.c.h.b16 %v251
    %v810 = vunpack.c.l.b16 %v252
    %v811 = vunpack.c.h.b16 %v252
    %v812 = vunpack.c.l.b16 %v253
    %v813 = vunpack.c.h.b16 %v253
    %v814 = vunpack.c.l.b16 %v254
    %v815 = vunpack.c.h.b16 %v254
    %v816 = vunpack.c.l.b16 %v255
    %v817 = vunpack.c.h.b16 %v255
    %v818 = vunpack.c.l.b16 %v256
    %v819 = vunpack.c.h.b16 %v256
    %v820 = vunpack.c.l.b16 %v257
    %v821 = vunpack.c.h.b16 %v257
    %v822 = vunpack.c.l.b16 %v258
    %v823 = vunpack.c.h.b16 %v258
    %v824 = vunpack.c.l.b16 %v259
    %v825 = vunpack.c.h.b16 %v259
    %v826 = vunpack.c.l.b16 %v260
    %v827 = vunpack.c.h.b16 %v260
    %v828 = vunpack.c.l.b16 %v261
    %v829 = vunpack.c.h.b16 %v261
    %v830 = vunpack.c.l.b16 %v262
    %v831 = vunpack.c.h.b16 %v262
    %v832 = vunpack.c.l.b16 %v263
    %v833 = vunpack.c.h.b16 %v263
    %v834 = vunpack.c.l.b16 %v264
    %v835 = vunpack.c.h.b16 %v264
    %v836 = vunpack.c.l.b16 %v265
    %v837 = vunpack.c.h.b16 %v265
    %v838 = vunpack.c.l.b16 %v266
    %v839 = vunpack.c.h.b16 %v266
    %v840 = vunpack.c.l.b16 %v267
    %v841 = vunpack.c.h.b16 %v267
    %v842 = vunpack.c.l.b16 %v268
    %v843 = vunpack.c.h.b16 %v268
    %v844 = vunpack.c.l.b16 %v269
    %v845 = vunpack.c.h.b16 %v269
    %v846 = vunpack.c.l.b16 %v270
    %v847 = vunpack.c.h.b16 %v270
    %v848 = vunpack.c.l.b16 %v271
    %v849 = vunpack.c.h.b16 %v271
    %v850 = vunpack.c.l.b16 %v272
    %v851 = vunpack.c.h.b16 %v272
    %v852 = vunpack.c.l.b16 %v273
    %v853 = vunpack.c.h.b16 %v273
    %v854 = vunpack.c.l.b16 %v274
    %v855 = vunpack.c.h.b16 %v274
    %v856 = vunpack.c.l.b16 %v275
    %v857 = vunpack.c.h.b16 %v275
    %v858 = vunpack.c.l.b16 %v276
    %v859 = vunpack.c.h.b16 %v276
    %v860 = vunpack.c.l.b16 %v277
    %v861 = vunpack.c.h.b16 %v277
    %v862 = vunpack.c.l.b16 %v278
    %v863 = vunpack.c.h.b16 %v278
    %v864 = vunpack.c.l.b16 %v279
    %v865 = vunpack.c.h.b16 %v279
    %v866 = vunpack.c.l.b16 %v280
    %v867 = vunpack.c.h.b16 %v280
    %v868 = vunpack.c.l.b16 %v281
    %v869 = vunpack.c.h.b16 %v281
    %v870 = vunpack.c.l.b16 %v282
    %v871 = vunpack.c.h.b16 %v282
    %v872 = vunpack.c.l.b16 %v283
    %v873 = vunpack.c.h.b16 %v283
    %v874 = vunpack.c.l.b16 %v284
    %v875 = vunpack.c.h.b16 %v284
    %v876 = vunpack.c.l.b16 %v285
    %v877 = vunpack.c.h.b16 %v285
    %v878 = vunpack.c.l.b16 %v286
    %v879 = vunpack.c.h.b16 %v286
    %v880 = vunpack.c.l.b16 %v287
    %v881 = vunpack.c.h.b16 %v287
    %v882 = vunpack.c.l.b16 %v288
    %v883 = vunpack.c.h.b16 %v288
    %v884 = vunpack.c.l.b16 %v289
    %v885 = vunpack.c.h.b16 %v289
    %v886 = vunpack.c.l.b16 %v290
    %v887 = vunpack.c.h.b16 %v290
    %v888 = vunpack.c.l.b16 %v291
    %v889 = vunpack.c.h.b16 %v291
    %v890 = vpack.c.b16 %v502, %v498
    %v891 = vpack.c.b16 %v503, %v499
    %v892 = vpack.c.b16 %v504, %v500
    %v893 = vpack.c.b16 %v505, %v501
    %v894 = vpack.c.b16 %v510, %v506
    %v895 = vpack.c.b16 %v511, %v507
    %v896 = vpack.c.b16 %v512, %v508
    %v897 = vpack.c.b16 %v513, %v509
    %v898 = vpack.c.b16 %v518, %v514
    %v899 = vpack.c.b16 %v519, %v515
    %v900 = vpack.c.b16 %v520, %v516
    %v901 = vpack.c.b16 %v521, %v517
    %v902 = vpack.c.b16 %v526, %v522
    %v903 = vpack.c.b16 %v527, %v523
    %v904 = vpack.c.b16 %v528, %v524
    %v905 = vpack.c.b16 %v529, %v525
    %v906 = vpack.c.b16 %v534, %v530
    %v907 = vpack.c.b16 %v535, %v531
    %v908 = vpack.c.b16 %v536, %v532
    %v909 = vpack.c.b16 %v537, %v533
    %v910 = vpack.c.b16 %v542, %v538
    %v911 = vpack.c.b16 %v543, %v539
    %v912 = vpack.c.b16 %v544, %v540
    %v913 = vpack.c.b16 %v545, %v541
    %v914 = vpack.c.b16 %v550, %v546
    %v915 = vpack.c.b16 %v551, %v547
    %v916 = vpack.c.b16 %v552, %v548
    %v917 = vpack.c.b16 %v553, %v549
    %v918 = vpack.c.b16 %v558, %v554
    %v919 = vpack.c.b16 %v559, %v555
    %v920 = vpack.c.b16 %v560, %v556
    %v921 = vpack.c.b16 %v561, %v557
    %v922 = vpack.c.b16 %v566, %v562
    %v923 = vpack.c.b16 %v567, %v563
    %v924 = vpack.c.b16 %v568, %v564
    %v925 = vpack.c.b16 %v569, %v565
    %v926 = vpack.c.b16 %v574, %v570
    %v927 = vpack.c.b16 %v575, %v571
    %v928 = vpack.c.b16 %v576, %v572
    %v929 = vpack.c.b16 %v577, %v573
    %v930 = vpack.c.b16 %v582, %v578
    %v931 = vpack.c.b16 %v583, %v579
    %v932 = vpack.c.b16 %v584, %v580
    %v933 = vpack.c.b16 %v585, %v581
    %v934 = vpack.c.b16 %v590, %v586
    %v935 = vpack.c.b16 %v591, %v587
    %v936 = vpack.c.b16 %v592, %v588
    %v937 = vpack.c.b16 %v593, %v589
    %v938 = vpack.c.b16 %v598, %v594
    %v939 = vpack.c.b16 %v599, %v595
    %v940 = vpack.c.b16 %v600, %v596
    %v941 = vpack.c.b16 %v601, %v597
    %v942 = vpack.c.b16 %v606, %v602
    %v943 = vpack.c.b16 %v607, %v603
    %v944 = vpack.c.b16 %v608, %v604
    %v945 = vpack.c.b16 %v609, %v605
    %v946 = vpack.c.b16 %v614, %v610
    %v947 = vpack.c.b16 %v615, %v611
    %v948 = vpack.c.b16 %v616, %v612
    %v949 = vpack.c.b16 %v617, %v613
    %v950 = vpack.c.b16 %v622, %v618
    %v951 = vpack.c.b16 %v623, %v619
    %v952 = vpack.c.b16 %v624, %v620
    %v953 = vpack.c.b16 %v625, %v621
    %v954 = vpack.c.b16 %v630, %v626
    %v955 = vpack.c.b16 %v631, %v627
    %v956 = vpack.c.b16 %v632, %v628
    %v957 = vpack.c.b16 %v633, %v629
    %v958 = vpack.c.b16 %v638, %v634
    %v959 = vpack.c.b16 %v639, %v635
    %v960 = vpack.c.b16 %v640, %v636
    %v961 = vpack.c.b16 %v641, %v637
    %v962 = vpack.c.b16 %v646, %v642
    %v963 = vpack.c.b16 %v647, %v643
    %v964 = vpack.c.b16 %v648, %v644
    %v965 = vpack.c.b16 %v649, %v645
    %v966 = vpack.c.b16 %v654, %v650
    %v967 = vpack.c.b16 %v655, %v651
    %v968 = vpack.c.b16 %v656, %v652
    %v969 = vpack.c.b16 %v657, %v653
    %v970 = vpack.c.b16 %v662, %v658
    %v971 = vpack.c.b16 %v663, %v659
    %v972 = vpack.c.b16 %v664, %v660
    %v973 = vpack.c.b16 %v665, %v661
    %v974 = vpack.c.b16 %v670, %v666
    %v975 = vpack.c.b16 %v671, %v667
    %v976 = vpack.c.b16 %v672, %v668
    %v977 = vpack.c.b16 %v673, %v669
    %v978 = vpack.c.b16 %v678, %v674
    %v979 = vpack.c.b16 %v679, %v675
    %v980 = vpack.c.b16 %v680, %v676
    %v981 = vpack.c.b16 %v681, %v677
    %v982 = vpack.c.b16 %v686, %v682
    %v983 = vpack.c.b16 %v687, %v683
    %v984 = vpack.c.b16 %v688, %v684
    %v985 = vpack.c.b16 %v689, %v685
    %v986 = vpack.c.b16 %v694, %v690
    %v987 = vpack.c.b16 %v695, %v691
    %v988 = vpack.c.b16 %v696, %v692
    %v989 = vpack.c.b16 %v697, %v693
    %v990 = vpack.c.b16 %v702, %v698
    %v991 = vpack.c.b16 %v703, %v699
    %v992 = vpack.c.b16 %v704, %v700
    %v993 = vpack.c.b16 %v705, %v701
    %v994 = vpack.c.b16 %v710, %v706
    %v995 = vpack.c.b16 %v711, %v707
    %v996 = vpack.c.b16 %v712, %v708
    %v997 = vpack.c.b16 %v713, %v709
    %v998 = vpack.c.b16 %v718, %v714
    %v999 = vpack.c.b16 %v719, %v715
    %v1000 = vpack.c.b16 %v720, %v716
    %v1001 = vpack.c.b16 %v721, %v717
    %v1002 = vpack.c.b16 %v726, %v722
    %v1003 = vpack.c.b16 %v727, %v723
    %v1004 = vpack.c.b16 %v728, %v724
    %v1005 = vpack.c.b16 %v729, %v725
    %v1006 = vpack.c.b16 %v734, %v730
    %v1007 = vpack.c.b16 %v735, %v731
    %v1008 = vpack.c.b16 %v736, %v732
    %v1009 = vpack.c.b16 %v737, %v733
    %v1010 = vpack.c.b16 %v742, %v738
    %v1011 = vpack.c.b16 %v743, %v739
    %v1012 = vpack.c.b16 %v744, %v740
    %v1013 = vpack.c.b16 %v745, %v741
    %v1014 = vpack.c.b16 %v750, %v746
    %v1015 = vpack.c.b16 %v751, %v747
    %v1016 = vpack.c.b16 %v752, %v748
    %v1017 = vpack.c.b16 %v753, %v749
    %v1018 = vpack.c.b16 %v758, %v754
    %v1019 = vpack.c.b16 %v759, %v755
    %v1020 = vpack.c.b16 %v760, %v756
    %v1021 = vpack.c.b16 %v761, %v757
    %v1022 = vpack.c.b16 %v766, %v762
    %v1023 = vpack.c.b16 %v767, %v763
    %v1024 = vpack.c.b16 %v768, %v764
    %v1025 = vpack.c.b16 %v769, %v765
    %v1026 = vpack.c.b16 %v774, %v770
    %v1027 = vpack.c.b16 %v775, %v771
    %v1028 = vpack.c.b16 %v776, %v772
    %v1029 = vpack.c.b16 %v777, %v773
    %v1030 = vpack.c.b16 %v782, %v778
    %v1031 = vpack.c.b16 %v783, %v779
    %v1032 = vpack.c.b16 %v784, %v780
    %v1033 = vpack.c.b16 %v785, %v781
    %v1034 = vpack.c.b16 %v790, %v786
    %v1035 = vpack.c.b16 %v791, %v787
    %v1036 = vpack.c.b16 %v792, %v788
    %v1037 = vpack.c.b16 %v793, %v789
    %v1038 = vpack.c.b16 %v798, %v794
    %v1039 = vpack.c.b16 %v799, %v795
    %v1040 = vpack.c.b16 %v800, %v796
    %v1041 = vpack.c.b16 %v801, %v797
    %v1042 = vpack.c.b16 %v806, %v802
    %v1043 = vpack.c.b16 %v807, %v803
    %v1044 = vpack.c.b16 %v808, %v804
    %v1045 = vpack.c.b16 %v809, %v805
    %v1046 = vpack.c.b16 %v814, %v810
    %v1047 = vpack.c.b16 %v815, %v811
    %v1048 = vpack.c.b16 %v816, %v812
    %v1049 = vpack.c.b16 %v817, %v813
    %v1050 = vpack.c.b16 %v822, %v818
    %v1051 = vpack.c.b16 %v823, %v819
    %v1052 = vpack.c.b16 %v824, %v820
    %v1053 = vpack.c.b16 %v825, %v821
    %v1054 = vpack.c.b16 %v830, %v826
    %v1055 = vpack.c.b16 %v831, %v827
    %v1056 = vpack.c.b16 %v832, %v828
    %v1057 = vpack.c.b16 %v833, %v829
    %v1058 = vpack.c.b16 %v838, %v834
    %v1059 = vpack.c.b16 %v839, %v835
    %v1060 = vpack.c.b16 %v840, %v836
    %v1061 = vpack.c.b16 %v841, %v837
    %v1062 = vpack.c.b16 %v846, %v842
    %v1063 = vpack.c.b16 %v847, %v843
    %v1064 = vpack.c.b16 %v848, %v844
    %v1065 = vpack.c.b16 %v849, %v845
    %v1066 = vpack.c.b16 %v854, %v850
    %v1067 = vpack.c.b16 %v855, %v851
    %v1068 = vpack.c.b16 %v856, %v852
    %v1069 = vpack.c.b16 %v857, %v853
    %v1070 = vpack.c.b16 %v862, %v858
    %v1071 = vpack.c.b16 %v863, %v859
    %v1072 = vpack.c.b16 %v864, %v860
    %v1073 = vpack.c.b16 %v865, %v861
    %v1074 = vpack.c.b16 %v870, %v866
    %v1075 = vpack.c.b16 %v871, %v867
    %v1076 = vpack.c.b16 %v872, %v868
    %v1077 = vpack.c.b16 %v873, %v869
    %v1078 = vpack.c.b16 %v878, %v874
    %v1079 = vpack.c.b16 %v879, %v875
    %v1080 = vpack.c.b16 %v880, %v876
    %v1081 = vpack.c.b16 %v881, %v877
    %v1082 = vpack.c.b16 %v886, %v882
    %v1083 = vpack.c.b16 %v887, %v883
    %v1084 = vpack.c.b16 %v888, %v884
    %v1085 = vpack.c.b16 %v889, %v885
    %vm1282 = vcmask 130048
    %v1284 = vsel %vm1282, %v95, 0
    %1286 = vmatpush.bf16.msra.mxu0 %v918
    %1287 = vmatpush.bf16.msra.mxu0 %v914
    %1288 = vmatpush.bf16.msra.mxu0 %v910
    %1289 = vmatpush.bf16.msra.mxu0 %v906
    %1290 = vmatpush.bf16.msra.mxu0 %v902
    %1291 = vmatpush.bf16.msra.mxu0 %v898
    %1292 = vmatpush.bf16.msra.mxu0 %v894
    %1293 = vmatpush.bf16.msra.mxu0 %v890
    %1294 = vmatmul.bf16.gmra.mxu0 %v89
    %v1295 = vpop.f32.mrf.mxu0
    %v1296 = vadd.f32 %v294, %v1295
    %v1297 = vpop.f32.mrf.mxu0
    %v1298 = vadd.f32 %v294, %v1297
    %1299 = vdwg.mxu0
    %1300 = vmatpush.bf16.msra.mxu0 %v950
    %1301 = vmatpush.bf16.msra.mxu0 %v946
    %1302 = vmatpush.bf16.msra.mxu0 %v942
    %1303 = vmatpush.bf16.msra.mxu0 %v938
    %1304 = vmatpush.bf16.msra.mxu0 %v934
    %1305 = vmatpush.bf16.msra.mxu0 %v930
    %1306 = vmatpush.bf16.msra.mxu0 %v926
    %1307 = vmatpush.bf16.msra.mxu0 %v922
    %1308 = vmatmul.bf16.gmra.mxu0 %v90
    %v1309 = vpop.f32.mrf.mxu0
    %v1310 = vadd.f32 %v1296, %v1309
    %v1311 = vpop.f32.mrf.mxu0
    %v1312 = vadd.f32 %v1298, %v1311
    %1313 = vdwg.mxu0
    %1314 = vmatpush.bf16.msra.mxu0 %v982
    %1315 = vmatpush.bf16.msra.mxu0 %v978
    %1316 = vmatpush.bf16.msra.mxu0 %v974
    %1317 = vmatpush.bf16.msra.mxu0 %v970
    %1318 = vmatpush.bf16.msra.mxu0 %v966
    %1319 = vmatpush.bf16.msra.mxu0 %v962
    %1320 = vmatpush.bf16.msra.mxu0 %v958
    %1321 = vmatpush.bf16.msra.mxu0 %v954
    %1322 = vmatmul.bf16.gmra.mxu0 %v91
    %v1323 = vpop.f32.mrf.mxu0
    %v1324 = vadd.f32 %v1310, %v1323
    %v1325 = vpop.f32.mrf.mxu0
    %v1326 = vadd.f32 %v1312, %v1325
    %1327 = vdwg.mxu0
    %1328 = vmatpush.bf16.msra.mxu0 %v1014
    %1329 = vmatpush.bf16.msra.mxu0 %v1010
    %1330 = vmatpush.bf16.msra.mxu0 %v1006
    %1331 = vmatpush.bf16.msra.mxu0 %v1002
    %1332 = vmatpush.bf16.msra.mxu0 %v998
    %1333 = vmatpush.bf16.msra.mxu0 %v994
    %1334 = vmatpush.bf16.msra.mxu0 %v990
    %1335 = vmatpush.bf16.msra.mxu0 %v986
    %1336 = vmatmul.bf16.gmra.mxu0 %v92
    %v1337 = vpop.f32.mrf.mxu0
    %v1338 = vadd.f32 %v1324, %v1337
    %v1339 = vpop.f32.mrf.mxu0
    %v1340 = vadd.f32 %v1326, %v1339
    %1341 = vdwg.mxu0
    %1342 = vmatpush.bf16.msra.mxu0 %v1046
    %1343 = vmatpush.bf16.msra.mxu0 %v1042
    %1344 = vmatpush.bf16.msra.mxu0 %v1038
    %1345 = vmatpush.bf16.msra.mxu0 %v1034
    %1346 = vmatpush.bf16.msra.mxu0 %v1030
    %1347 = vmatpush.bf16.msra.mxu0 %v1026
    %1348 = vmatpush.bf16.msra.mxu0 %v1022
    %1349 = vmatpush.bf16.msra.mxu0 %v1018
    %1350 = vmatmul.bf16.gmra.mxu0 %v93
    %v1351 = vpop.f32.mrf.mxu0
    %v1352 = vadd.f32 %v1338, %v1351
    %v1353 = vpop.f32.mrf.mxu0
    %v1354 = vadd.f32 %v1340, %v1353
    %1355 = vdwg.mxu0
    %1356 = vmatpush.bf16.msra.mxu0 %v1078
    %1357 = vmatpush.bf16.msra.mxu0 %v1074
    %1358 = vmatpush.bf16.msra.mxu0 %v1070
    %1359 = vmatpush.bf16.msra.mxu0 %v1066
    %1360 = vmatpush.bf16.msra.mxu0 %v1062
    %1361 = vmatpush.bf16.msra.mxu0 %v1058
    %1362 = vmatpush.bf16.msra.mxu0 %v1054
    %1363 = vmatpush.bf16.msra.mxu0 %v1050
    %1364 = vmatmul.bf16.gmra.mxu0 %v94
    %v1365 = vpop.f32.mrf.mxu0
    %v1366 = vadd.f32 %v1352, %v1365
    %v1367 = vpop.f32.mrf.mxu0
    %v1368 = vadd.f32 %v1354, %v1367
    %1369 = vdwg.mxu0
    %1370 = vmatpush.bf16.msra.mxu0 0
    %1371 = vmatpush.bf16.msra.mxu0 0
    %1372 = vmatpush.bf16.msra.mxu0 0
    %1373 = vmatpush.bf16.msra.mxu0 0
    %1374 = vmatpush.bf16.msra.mxu0 0
    %1375 = vmatpush.bf16.msra.mxu0 0
    %1376 = vmatpush.bf16.msra.mxu0 0
    %1377 = vmatpush.bf16.msra.mxu0 %v1082
    %1378 = vmatmul.bf16.gmra.mxu0 %v1284
    %v1379 = vpop.f32.mrf.mxu0
    %v1380 = vadd.f32 %v1366, %v1379
    %v1381 = vpop.f32.mrf.mxu0
    %v1382 = vadd.f32 %v1368, %v1381
    %1383 = vdwg.mxu0
    %1384 = vmatpush.bf16.msra.mxu0 %v919
    %1385 = vmatpush.bf16.msra.mxu0 %v915
    %1386 = vmatpush.bf16.msra.mxu0 %v911
    %1387 = vmatpush.bf16.msra.mxu0 %v907
    %1388 = vmatpush.bf16.msra.mxu0 %v903
    %1389 = vmatpush.bf16.msra.mxu0 %v899
    %1390 = vmatpush.bf16.msra.mxu0 %v895
    %1391 = vmatpush.bf16.msra.mxu0 %v891
    %1392 = vmatmul.bf16.gmra.mxu0 %v89
    %v1393 = vpop.f32.mrf.mxu0
    %v1394 = vadd.f32 %v295, %v1393
    %v1395 = vpop.f32.mrf.mxu0
    %v1396 = vadd.f32 %v295, %v1395
    %1397 = vdwg.mxu0
    %1398 = vmatpush.bf16.msra.mxu0 %v951
    %1399 = vmatpush.bf16.msra.mxu0 %v947
    %1400 = vmatpush.bf16.msra.mxu0 %v943
    %1401 = vmatpush.bf16.msra.mxu0 %v939
    %1402 = vmatpush.bf16.msra.mxu0 %v935
    %1403 = vmatpush.bf16.msra.mxu0 %v931
    %1404 = vmatpush.bf16.msra.mxu0 %v927
    %1405 = vmatpush.bf16.msra.mxu0 %v923
    %1406 = vmatmul.bf16.gmra.mxu0 %v90
    %v1407 = vpop.f32.mrf.mxu0
    %v1408 = vadd.f32 %v1394, %v1407
    %v1409 = vpop.f32.mrf.mxu0
    %v1410 = vadd.f32 %v1396, %v1409
    %1411 = vdwg.mxu0
    %1412 = vmatpush.bf16.msra.mxu0 %v983
    %1413 = vmatpush.bf16.msra.mxu0 %v979
    %1414 = vmatpush.bf16.msra.mxu0 %v975
    %1415 = vmatpush.bf16.msra.mxu0 %v971
    %1416 = vmatpush.bf16.msra.mxu0 %v967
    %1417 = vmatpush.bf16.msra.mxu0 %v963
    %1418 = vmatpush.bf16.msra.mxu0 %v959
    %1419 = vmatpush.bf16.msra.mxu0 %v955
    %1420 = vmatmul.bf16.gmra.mxu0 %v91
    %v1421 = vpop.f32.mrf.mxu0
    %v1422 = vadd.f32 %v1408, %v1421
    %v1423 = vpop.f32.mrf.mxu0
    %v1424 = vadd.f32 %v1410, %v1423
    %1425 = vdwg.mxu0
    %1426 = vmatpush.bf16.msra.mxu0 %v1015
    %1427 = vmatpush.bf16.msra.mxu0 %v1011
    %1428 = vmatpush.bf16.msra.mxu0 %v1007
    %1429 = vmatpush.bf16.msra.mxu0 %v1003
    %1430 = vmatpush.bf16.msra.mxu0 %v999
    %1431 = vmatpush.bf16.msra.mxu0 %v995
    %1432 = vmatpush.bf16.msra.mxu0 %v991
    %1433 = vmatpush.bf16.msra.mxu0 %v987
    %1434 = vmatmul.bf16.gmra.mxu0 %v92
    %v1435 = vpop.f32.mrf.mxu0
    %v1436 = vadd.f32 %v1422, %v1435
    %v1437 = vpop.f32.mrf.mxu0
    %v1438 = vadd.f32 %v1424, %v1437
    %1439 = vdwg.mxu0
    %1440 = vmatpush.bf16.msra.mxu0 %v1047
    %1441 = vmatpush.bf16.msra.mxu0 %v1043
    %1442 = vmatpush.bf16.msra.mxu0 %v1039
    %1443 = vmatpush.bf16.msra.mxu0 %v1035
    %1444 = vmatpush.bf16.msra.mxu0 %v1031
    %1445 = vmatpush.bf16.msra.mxu0 %v1027
    %1446 = vmatpush.bf16.msra.mxu0 %v1023
    %1447 = vmatpush.bf16.msra.mxu0 %v1019
    %1448 = vmatmul.bf16.gmra.mxu0 %v93
    %v1449 = vpop.f32.mrf.mxu0
    %v1450 = vadd.f32 %v1436, %v1449
    %v1451 = vpop.f32.mrf.mxu0
    %v1452 = vadd.f32 %v1438, %v1451
    %1453 = vdwg.mxu0
    %1454 = vmatpush.bf16.msra.mxu0 %v1079
    %1455 = vmatpush.bf16.msra.mxu0 %v1075
    %1456 = vmatpush.bf16.msra.mxu0 %v1071
    %1457 = vmatpush.bf16.msra.mxu0 %v1067
    %1458 = vmatpush.bf16.msra.mxu0 %v1063
    %1459 = vmatpush.bf16.msra.mxu0 %v1059
    %1460 = vmatpush.bf16.msra.mxu0 %v1055
    %1461 = vmatpush.bf16.msra.mxu0 %v1051
    %1462 = vmatmul.bf16.gmra.mxu0 %v94
    %v1463 = vpop.f32.mrf.mxu0
    %v1464 = vadd.f32 %v1450, %v1463
    %v1465 = vpop.f32.mrf.mxu0
    %v1466 = vadd.f32 %v1452, %v1465
    %1467 = vdwg.mxu0
    %1468 = vmatpush.bf16.msra.mxu0 0
    %1469 = vmatpush.bf16.msra.mxu0 0
    %1470 = vmatpush.bf16.msra.mxu0 0
    %1471 = vmatpush.bf16.msra.mxu0 0
    %1472 = vmatpush.bf16.msra.mxu0 0
    %1473 = vmatpush.bf16.msra.mxu0 0
    %1474 = vmatpush.bf16.msra.mxu0 0
    %1475 = vmatpush.bf16.msra.mxu0 %v1083
    %1476 = vmatmul.bf16.gmra.mxu0 %v1284
    %v1477 = vpop.f32.mrf.mxu0
    %v1478 = vadd.f32 %v1464, %v1477
    %v1479 = vpop.f32.mrf.mxu0
    %v1480 = vadd.f32 %v1466, %v1479
    %1481 = vdwg.mxu0
    %1482 = vmatpush.bf16.msra.mxu0 %v920
    %1483 = vmatpush.bf16.msra.mxu0 %v916
    %1484 = vmatpush.bf16.msra.mxu0 %v912
    %1485 = vmatpush.bf16.msra.mxu0 %v908
    %1486 = vmatpush.bf16.msra.mxu0 %v904
    %1487 = vmatpush.bf16.msra.mxu0 %v900
    %1488 = vmatpush.bf16.msra.mxu0 %v896
    %1489 = vmatpush.bf16.msra.mxu0 %v892
    %1490 = vmatmul.bf16.gmra.mxu0 %v89
    %v1491 = vpop.f32.mrf.mxu0
    %v1492 = vadd.f32 %v296, %v1491
    %v1493 = vpop.f32.mrf.mxu0
    %v1494 = vadd.f32 %v296, %v1493
    %1495 = vdwg.mxu0
    %1496 = vmatpush.bf16.msra.mxu0 %v952
    %1497 = vmatpush.bf16.msra.mxu0 %v948
    %1498 = vmatpush.bf16.msra.mxu0 %v944
    %1499 = vmatpush.bf16.msra.mxu0 %v940
    %1500 = vmatpush.bf16.msra.mxu0 %v936
    %1501 = vmatpush.bf16.msra.mxu0 %v932
    %1502 = vmatpush.bf16.msra.mxu0 %v928
    %1503 = vmatpush.bf16.msra.mxu0 %v924
    %1504 = vmatmul.bf16.gmra.mxu0 %v90
    %v1505 = vpop.f32.mrf.mxu0
    %v1506 = vadd.f32 %v1492, %v1505
    %v1507 = vpop.f32.mrf.mxu0
    %v1508 = vadd.f32 %v1494, %v1507
    %1509 = vdwg.mxu0
    %1510 = vmatpush.bf16.msra.mxu0 %v984
    %1511 = vmatpush.bf16.msra.mxu0 %v980
    %1512 = vmatpush.bf16.msra.mxu0 %v976
    %1513 = vmatpush.bf16.msra.mxu0 %v972
    %1514 = vmatpush.bf16.msra.mxu0 %v968
    %1515 = vmatpush.bf16.msra.mxu0 %v964
    %1516 = vmatpush.bf16.msra.mxu0 %v960
    %1517 = vmatpush.bf16.msra.mxu0 %v956
    %1518 = vmatmul.bf16.gmra.mxu0 %v91
    %v1519 = vpop.f32.mrf.mxu0
    %v1520 = vadd.f32 %v1506, %v1519
    %v1521 = vpop.f32.mrf.mxu0
    %v1522 = vadd.f32 %v1508, %v1521
    %1523 = vdwg.mxu0
    %1524 = vmatpush.bf16.msra.mxu0 %v1016
    %1525 = vmatpush.bf16.msra.mxu0 %v1012
    %1526 = vmatpush.bf16.msra.mxu0 %v1008
    %1527 = vmatpush.bf16.msra.mxu0 %v1004
    %1528 = vmatpush.bf16.msra.mxu0 %v1000
    %1529 = vmatpush.bf16.msra.mxu0 %v996
    %1530 = vmatpush.bf16.msra.mxu0 %v992
    %1531 = vmatpush.bf16.msra.mxu0 %v988
    %1532 = vmatmul.bf16.gmra.mxu0 %v92
    %v1533 = vpop.f32.mrf.mxu0
    %v1534 = vadd.f32 %v1520, %v1533
    %v1535 = vpop.f32.mrf.mxu0
    %v1536 = vadd.f32 %v1522, %v1535
    %1537 = vdwg.mxu0
    %1538 = vmatpush.bf16.msra.mxu0 %v1048
    %1539 = vmatpush.bf16.msra.mxu0 %v1044
    %1540 = vmatpush.bf16.msra.mxu0 %v1040
    %1541 = vmatpush.bf16.msra.mxu0 %v1036
    %1542 = vmatpush.bf16.msra.mxu0 %v1032
    %1543 = vmatpush.bf16.msra.mxu0 %v1028
    %1544 = vmatpush.bf16.msra.mxu0 %v1024
    %1545 = vmatpush.bf16.msra.mxu0 %v1020
    %1546 = vmatmul.bf16.gmra.mxu0 %v93
    %v1547 = vpop.f32.mrf.mxu0
    %v1548 = vadd.f32 %v1534, %v1547
    %v1549 = vpop.f32.mrf.mxu0
    %v1550 = vadd.f32 %v1536, %v1549
    %1551 = vdwg.mxu0
    %1552 = vmatpush.bf16.msra.mxu0 %v1080
    %1553 = vmatpush.bf16.msra.mxu0 %v1076
    %1554 = vmatpush.bf16.msra.mxu0 %v1072
    %1555 = vmatpush.bf16.msra.mxu0 %v1068
    %1556 = vmatpush.bf16.msra.mxu0 %v1064
    %1557 = vmatpush.bf16.msra.mxu0 %v1060
    %1558 = vmatpush.bf16.msra.mxu0 %v1056
    %1559 = vmatpush.bf16.msra.mxu0 %v1052
    %1560 = vmatmul.bf16.gmra.mxu0 %v94
    %v1561 = vpop.f32.mrf.mxu0
    %v1562 = vadd.f32 %v1548, %v1561
    %v1563 = vpop.f32.mrf.mxu0
    %v1564 = vadd.f32 %v1550, %v1563
    %1565 = vdwg.mxu0
    %1566 = vmatpush.bf16.msra.mxu0 0
    %1567 = vmatpush.bf16.msra.mxu0 0
    %1568 = vmatpush.bf16.msra.mxu0 0
    %1569 = vmatpush.bf16.msra.mxu0 0
    %1570 = vmatpush.bf16.msra.mxu0 0
    %1571 = vmatpush.bf16.msra.mxu0 0
    %1572 = vmatpush.bf16.msra.mxu0 0
    %1573 = vmatpush.bf16.msra.mxu0 %v1084
    %1574 = vmatmul.bf16.gmra.mxu0 %v1284
    %v1575 = vpop.f32.mrf.mxu0
    %v1576 = vadd.f32 %v1562, %v1575
    %v1577 = vpop.f32.mrf.mxu0
    %v1578 = vadd.f32 %v1564, %v1577
    %1579 = vdwg.mxu0
    %1580 = vmatpush.bf16.msra.mxu0 %v921
    %1581 = vmatpush.bf16.msra.mxu0 %v917
    %1582 = vmatpush.bf16.msra.mxu0 %v913
    %1583 = vmatpush.bf16.msra.mxu0 %v909
    %1584 = vmatpush.bf16.msra.mxu0 %v905
    %1585 = vmatpush.bf16.msra.mxu0 %v901
    %1586 = vmatpush.bf16.msra.mxu0 %v897
    %1587 = vmatpush.bf16.msra.mxu0 %v893
    %1588 = vmatmul.bf16.gmra.mxu0 %v89
    %v1589 = vpop.f32.mrf.mxu0
    %v1590 = vadd.f32 %v297, %v1589
    %v1591 = vpop.f32.mrf.mxu0
    %v1592 = vadd.f32 %v297, %v1591
    %1593 = vdwg.mxu0
    %1594 = vmatpush.bf16.msra.mxu0 %v953
    %1595 = vmatpush.bf16.msra.mxu0 %v949
    %1596 = vmatpush.bf16.msra.mxu0 %v945
    %1597 = vmatpush.bf16.msra.mxu0 %v941
    %1598 = vmatpush.bf16.msra.mxu0 %v937
    %1599 = vmatpush.bf16.msra.mxu0 %v933
    %1600 = vmatpush.bf16.msra.mxu0 %v929
    %1601 = vmatpush.bf16.msra.mxu0 %v925
    %1602 = vmatmul.bf16.gmra.mxu0 %v90
    %v1603 = vpop.f32.mrf.mxu0
    %v1604 = vadd.f32 %v1590, %v1603
    %v1605 = vpop.f32.mrf.mxu0
    %v1606 = vadd.f32 %v1592, %v1605
    %1607 = vdwg.mxu0
    %1608 = vmatpush.bf16.msra.mxu0 %v985
    %1609 = vmatpush.bf16.msra.mxu0 %v981
    %1610 = vmatpush.bf16.msra.mxu0 %v977
    %1611 = vmatpush.bf16.msra.mxu0 %v973
    %1612 = vmatpush.bf16.msra.mxu0 %v969
    %1613 = vmatpush.bf16.msra.mxu0 %v965
    %1614 = vmatpush.bf16.msra.mxu0 %v961
    %1615 = vmatpush.bf16.msra.mxu0 %v957
    %1616 = vmatmul.bf16.gmra.mxu0 %v91
    %v1617 = vpop.f32.mrf.mxu0
    %v1618 = vadd.f32 %v1604, %v1617
    %v1619 = vpop.f32.mrf.mxu0
    %v1620 = vadd.f32 %v1606, %v1619
    %1621 = vdwg.mxu0
    %1622 = vmatpush.bf16.msra.mxu0 %v1017
    %1623 = vmatpush.bf16.msra.mxu0 %v1013
    %1624 = vmatpush.bf16.msra.mxu0 %v1009
    %1625 = vmatpush.bf16.msra.mxu0 %v1005
    %1626 = vmatpush.bf16.msra.mxu0 %v1001
    %1627 = vmatpush.bf16.msra.mxu0 %v997
    %1628 = vmatpush.bf16.msra.mxu0 %v993
    %1629 = vmatpush.bf16.msra.mxu0 %v989
    %1630 = vmatmul.bf16.gmra.mxu0 %v92
    %v1631 = vpop.f32.mrf.mxu0
    %v1632 = vadd.f32 %v1618, %v1631
    %v1633 = vpop.f32.mrf.mxu0
    %v1634 = vadd.f32 %v1620, %v1633
    %1635 = vdwg.mxu0
    %1636 = vmatpush.bf16.msra.mxu0 %v1049
    %1637 = vmatpush.bf16.msra.mxu0 %v1045
    %1638 = vmatpush.bf16.msra.mxu0 %v1041
    %1639 = vmatpush.bf16.msra.mxu0 %v1037
    %1640 = vmatpush.bf16.msra.mxu0 %v1033
    %1641 = vmatpush.bf16.msra.mxu0 %v1029
    %1642 = vmatpush.bf16.msra.mxu0 %v1025
    %1643 = vmatpush.bf16.msra.mxu0 %v1021
    %1644 = vmatmul.bf16.gmra.mxu0 %v93
    %v1645 = vpop.f32.mrf.mxu0
    %v1646 = vadd.f32 %v1632, %v1645
    %v1647 = vpop.f32.mrf.mxu0
    %v1648 = vadd.f32 %v1634, %v1647
    %1649 = vdwg.mxu0
    %1650 = vmatpush.bf16.msra.mxu0 %v1081
    %1651 = vmatpush.bf16.msra.mxu0 %v1077
    %1652 = vmatpush.bf16.msra.mxu0 %v1073
    %1653 = vmatpush.bf16.msra.mxu0 %v1069
    %1654 = vmatpush.bf16.msra.mxu0 %v1065
    %1655 = vmatpush.bf16.msra.mxu0 %v1061
    %1656 = vmatpush.bf16.msra.mxu0 %v1057
    %1657 = vmatpush.bf16.msra.mxu0 %v1053
    %1658 = vmatmul.bf16.gmra.mxu0 %v94
    %v1659 = vpop.f32.mrf.mxu0
    %v1660 = vadd.f32 %v1646, %v1659
    %v1661 = vpop.f32.mrf.mxu0
    %v1662 = vadd.f32 %v1648, %v1661
    %1663 = vdwg.mxu0
    %1664 = vmatpush.bf16.msra.mxu0 0
    %1665 = vmatpush.bf16.msra.mxu0 0
    %1666 = vmatpush.bf16.msra.mxu0 0
    %1667 = vmatpush.bf16.msra.mxu0 0
    %1668 = vmatpush.bf16.msra.mxu0 0
    %1669 = vmatpush.bf16.msra.mxu0 0
    %1670 = vmatpush.bf16.msra.mxu0 0
    %1671 = vmatpush.bf16.msra.mxu0 %v1085
    %1672 = vmatmul.bf16.gmra.mxu0 %v1284
    %v1673 = vpop.f32.mrf.mxu0
    %v1674 = vadd.f32 %v1660, %v1673
    %v1675 = vpop.f32.mrf.mxu0
    %v1676 = vadd.f32 %v1662, %v1675
    %1677 = vdwg.mxu0
    %v1678 = vmax.f32 %v1380, 0.0
    %v1679 = vmax.f32 %v1478, 0.0
    %v1680 = vmax.f32 %v1576, 0.0
    %v1681 = vmax.f32 %v1674, 0.0
    %v1682 = vmax.f32 %v1382, 0.0
    %v1683 = vmax.f32 %v1480, 0.0
    %v1684 = vmax.f32 %v1578, 0.0
    %v1685 = vmax.f32 %v1676, 0.0
    %v1686 = vpack.c.bf16 %v1682, %v1678
    %v1687 = vpack.c.bf16 %v1683, %v1679
    %v1688 = vpack.c.bf16 %v1684, %v1680
    %v1689 = vpack.c.bf16 %v1685, %v1681
    %v1690 = vld [vmem:[%s3] sm:$0xff]
    %v1691 = vld [vmem:[%s3 + $0x8] sm:$0xff]
    %v1692 = vld [vmem:[%s3 + $0x10] sm:$0xff]
    %v1693 = vld [vmem:[%s3 + $0x18] sm:$0xff]
    %v1694 = vld [vmem:[%s3 + $0x20] sm:$0xff]
    %v1695 = vld [vmem:[%s3 + $0x28] sm:$0xff]
    %v1696 = vld [vmem:[%s3 + $0x30] sm:$0xff]
    %v1697 = vld [vmem:[%s3 + $0x38] sm:$0xff]
    %v1698 = vld [vmem:[%s3 + $0x40] sm:$0xff]
    %v1699 = vld [vmem:[%s3 + $0x48] sm:$0xff]
    %v1700 = vld [vmem:[%s3 + $0x50] sm:$0xff]
    %v1701 = vld [vmem:[%s3 + $0x58] sm:$0xff]
    %v1702 = vld [vmem:[%s3 + $0x60] sm:$0xff]
    %v1703 = vld [vmem:[%s3 + $0x68] sm:$0xff]
    %v1704 = vld [vmem:[%s3 + $0x70] sm:$0xff]
    %v1705 = vld [vmem:[%s3 + $0x78] sm:$0xff]
    %v1706 = vld [vmem:[%s3 + $0x80] sm:$0xff]
    %v1707 = vld [vmem:[%s3 + $0x88] sm:$0xff]
    %v1708 = vld [vmem:[%s3 + $0x90] sm:$0xff]
    %v1709 = vld [vmem:[%s3 + $0x98] sm:$0xff]
    %v1710 = vld [vmem:[%s3 + $0xa0] sm:$0xff]
    %v1711 = vld [vmem:[%s3 + $0xa8] sm:$0xff]
    %v1712 = vld [vmem:[%s3 + $0xb0] sm:$0xff]
    %v1713 = vld [vmem:[%s3 + $0xb8] sm:$0xff]
    %v1714 = vld [vmem:[%s3 + $0xc0] sm:$0xff]
    %v1715 = vld [vmem:[%s3 + $0xc8] sm:$0xff]
    %v1716 = vld [vmem:[%s3 + $0xd0] sm:$0xff]
    %v1717 = vld [vmem:[%s3 + $0xd8] sm:$0xff]
    %v1718 = vld [vmem:[%s3 + $0xe0] sm:$0xff]
    %v1719 = vld [vmem:[%s3 + $0xe8] sm:$0xff]
    %v1720 = vld [vmem:[%s3 + $0xf0] sm:$0xff]
    %v1721 = vld [vmem:[%s3 + $0xf8] sm:$0xff]
    %v1722 = vld [vmem:[%s3 + $0x100] sm:$0xff]
    %v1723 = vld [vmem:[%s3 + $0x108] sm:$0xff]
    %v1724 = vld [vmem:[%s3 + $0x110] sm:$0xff]
    %v1725 = vld [vmem:[%s3 + $0x118] sm:$0xff]
    %v1726 = vld [vmem:[%s3 + $0x120] sm:$0xff]
    %v1727 = vld [vmem:[%s3 + $0x128] sm:$0xff]
    %v1728 = vld [vmem:[%s3 + $0x130] sm:$0xff]
    %v1729 = vld [vmem:[%s3 + $0x138] sm:$0xff]
    %v1730 = vld [vmem:[%s3 + $0x140] sm:$0xff]
    %v1731 = vld [vmem:[%s3 + $0x148] sm:$0xff]
    %v1732 = vld [vmem:[%s3 + $0x150] sm:$0xff]
    %v1733 = vld [vmem:[%s3 + $0x158] sm:$0xff]
    %v1734 = vld [vmem:[%s3 + $0x160] sm:$0xff]
    %v1735 = vld [vmem:[%s3 + $0x168] sm:$0xff]
    %v1736 = vld [vmem:[%s3 + $0x170] sm:$0xff]
    %v1737 = vld [vmem:[%s3 + $0x178] sm:$0xff]
    %v1738 = vld [vmem:[%s3 + $0x180] sm:$0xff]
    %v1739 = vld [vmem:[%s3 + $0x188] sm:$0xff]
    %v1740 = vld [vmem:[%s3 + $0x190] sm:$0xff]
    %v1741 = vld [vmem:[%s3 + $0x198] sm:$0xff]
    %v1742 = vld [vmem:[%s3 + $0x1a0] sm:$0xff]
    %v1743 = vld [vmem:[%s3 + $0x1a8] sm:$0xff]
    %v1744 = vld [vmem:[%s3 + $0x1b0] sm:$0xff]
    %v1745 = vld [vmem:[%s3 + $0x1b8] sm:$0xff]
    %v1746 = vld [vmem:[%s3 + $0x1c0] sm:$0xff]
    %v1747 = vld [vmem:[%s3 + $0x1c8] sm:$0xff]
    %v1748 = vld [vmem:[%s3 + $0x1d0] sm:$0xff]
    %v1749 = vld [vmem:[%s3 + $0x1d8] sm:$0xff]
    %v1750 = vld [vmem:[%s3 + $0x1e0] sm:$0xff]
    %v1751 = vld [vmem:[%s3 + $0x1e8] sm:$0xff]
    %v1752 = vld [vmem:[%s3 + $0x1f0] sm:$0xff]
    %v1753 = vld [vmem:[%s3 + $0x1f8] sm:$0xff]
    %v1754 = vld [vmem:[%s4] sm:$0x3]
    %v1756 = vperm.slane %v1754, 0
    %v1757 = vperm.slane %v1754, 1
    %v1824 = vunpack.c.l.b16 %v1690
    %v1825 = vunpack.c.h.b16 %v1690
    %v1826 = vunpack.c.l.b16 %v1691
    %v1827 = vunpack.c.h.b16 %v1691
    %v1828 = vunpack.c.l.b16 %v1692
    %v1829 = vunpack.c.h.b16 %v1692
    %v1830 = vunpack.c.l.b16 %v1693
    %v1831 = vunpack.c.h.b16 %v1693
    %v1832 = vunpack.c.l.b16 %v1694
    %v1833 = vunpack.c.h.b16 %v1694
    %v1834 = vunpack.c.l.b16 %v1695
    %v1835 = vunpack.c.h.b16 %v1695
    %v1836 = vunpack.c.l.b16 %v1696
    %v1837 = vunpack.c.h.b16 %v1696
    %v1838 = vunpack.c.l.b16 %v1697
    %v1839 = vunpack.c.h.b16 %v1697
    %v1840 = vunpack.c.l.b16 %v1698
    %v1841 = vunpack.c.h.b16 %v1698
    %v1842 = vunpack.c.l.b16 %v1699
    %v1843 = vunpack.c.h.b16 %v1699
    %v1844 = vunpack.c.l.b16 %v1700
    %v1845 = vunpack.c.h.b16 %v1700
    %v1846 = vunpack.c.l.b16 %v1701
    %v1847 = vunpack.c.h.b16 %v1701
    %v1848 = vunpack.c.l.b16 %v1702
    %v1849 = vunpack.c.h.b16 %v1702
    %v1850 = vunpack.c.l.b16 %v1703
    %v1851 = vunpack.c.h.b16 %v1703
    %v1852 = vunpack.c.l.b16 %v1704
    %v1853 = vunpack.c.h.b16 %v1704
    %v1854 = vunpack.c.l.b16 %v1705
    %v1855 = vunpack.c.h.b16 %v1705
    %v1856 = vunpack.c.l.b16 %v1706
    %v1857 = vunpack.c.h.b16 %v1706
    %v1858 = vunpack.c.l.b16 %v1707
    %v1859 = vunpack.c.h.b16 %v1707
    %v1860 = vunpack.c.l.b16 %v1708
    %v1861 = vunpack.c.h.b16 %v1708
    %v1862 = vunpack.c.l.b16 %v1709
    %v1863 = vunpack.c.h.b16 %v1709
    %v1864 = vunpack.c.l.b16 %v1710
    %v1865 = vunpack.c.h.b16 %v1710
    %v1866 = vunpack.c.l.b16 %v1711
    %v1867 = vunpack.c.h.b16 %v1711
    %v1868 = vunpack.c.l.b16 %v1712
    %v1869 = vunpack.c.h.b16 %v1712
    %v1870 = vunpack.c.l.b16 %v1713
    %v1871 = vunpack.c.h.b16 %v1713
    %v1872 = vunpack.c.l.b16 %v1714
    %v1873 = vunpack.c.h.b16 %v1714
    %v1874 = vunpack.c.l.b16 %v1715
    %v1875 = vunpack.c.h.b16 %v1715
    %v1876 = vunpack.c.l.b16 %v1716
    %v1877 = vunpack.c.h.b16 %v1716
    %v1878 = vunpack.c.l.b16 %v1717
    %v1879 = vunpack.c.h.b16 %v1717
    %v1880 = vunpack.c.l.b16 %v1718
    %v1881 = vunpack.c.h.b16 %v1718
    %v1882 = vunpack.c.l.b16 %v1719
    %v1883 = vunpack.c.h.b16 %v1719
    %v1884 = vunpack.c.l.b16 %v1720
    %v1885 = vunpack.c.h.b16 %v1720
    %v1886 = vunpack.c.l.b16 %v1721
    %v1887 = vunpack.c.h.b16 %v1721
    %v1888 = vunpack.c.l.b16 %v1722
    %v1889 = vunpack.c.h.b16 %v1722
    %v1890 = vunpack.c.l.b16 %v1723
    %v1891 = vunpack.c.h.b16 %v1723
    %v1892 = vunpack.c.l.b16 %v1724
    %v1893 = vunpack.c.h.b16 %v1724
    %v1894 = vunpack.c.l.b16 %v1725
    %v1895 = vunpack.c.h.b16 %v1725
    %v1896 = vunpack.c.l.b16 %v1726
    %v1897 = vunpack.c.h.b16 %v1726
    %v1898 = vunpack.c.l.b16 %v1727
    %v1899 = vunpack.c.h.b16 %v1727
    %v1900 = vunpack.c.l.b16 %v1728
    %v1901 = vunpack.c.h.b16 %v1728
    %v1902 = vunpack.c.l.b16 %v1729
    %v1903 = vunpack.c.h.b16 %v1729
    %v1904 = vunpack.c.l.b16 %v1730
    %v1905 = vunpack.c.h.b16 %v1730
    %v1906 = vunpack.c.l.b16 %v1731
    %v1907 = vunpack.c.h.b16 %v1731
    %v1908 = vunpack.c.l.b16 %v1732
    %v1909 = vunpack.c.h.b16 %v1732
    %v1910 = vunpack.c.l.b16 %v1733
    %v1911 = vunpack.c.h.b16 %v1733
    %v1912 = vunpack.c.l.b16 %v1734
    %v1913 = vunpack.c.h.b16 %v1734
    %v1914 = vunpack.c.l.b16 %v1735
    %v1915 = vunpack.c.h.b16 %v1735
    %v1916 = vunpack.c.l.b16 %v1736
    %v1917 = vunpack.c.h.b16 %v1736
    %v1918 = vunpack.c.l.b16 %v1737
    %v1919 = vunpack.c.h.b16 %v1737
    %v1920 = vunpack.c.l.b16 %v1738
    %v1921 = vunpack.c.h.b16 %v1738
    %v1922 = vunpack.c.l.b16 %v1739
    %v1923 = vunpack.c.h.b16 %v1739
    %v1924 = vunpack.c.l.b16 %v1740
    %v1925 = vunpack.c.h.b16 %v1740
    %v1926 = vunpack.c.l.b16 %v1741
    %v1927 = vunpack.c.h.b16 %v1741
    %v1928 = vunpack.c.l.b16 %v1742
    %v1929 = vunpack.c.h.b16 %v1742
    %v1930 = vunpack.c.l.b16 %v1743
    %v1931 = vunpack.c.h.b16 %v1743
    %v1932 = vunpack.c.l.b16 %v1744
    %v1933 = vunpack.c.h.b16 %v1744
    %v1934 = vunpack.c.l.b16 %v1745
    %v1935 = vunpack.c.h.b16 %v1745
    %v1936 = vunpack.c.l.b16 %v1746
    %v1937 = vunpack.c.h.b16 %v1746
    %v1938 = vunpack.c.l.b16 %v1747
    %v1939 = vunpack.c.h.b16 %v1747
    %v1940 = vunpack.c.l.b16 %v1748
    %v1941 = vunpack.c.h.b16 %v1748
    %v1942 = vunpack.c.l.b16 %v1749
    %v1943 = vunpack.c.h.b16 %v1749
    %v1944 = vunpack.c.l.b16 %v1750
    %v1945 = vunpack.c.h.b16 %v1750
    %v1946 = vunpack.c.l.b16 %v1751
    %v1947 = vunpack.c.h.b16 %v1751
    %v1948 = vunpack.c.l.b16 %v1752
    %v1949 = vunpack.c.h.b16 %v1752
    %v1950 = vunpack.c.l.b16 %v1753
    %v1951 = vunpack.c.h.b16 %v1753
    %v1952 = vpack.c.b16 %v1826, %v1824
    %v1953 = vpack.c.b16 %v1827, %v1825
    %v1954 = vpack.c.b16 %v1830, %v1828
    %v1955 = vpack.c.b16 %v1831, %v1829
    %v1956 = vpack.c.b16 %v1834, %v1832
    %v1957 = vpack.c.b16 %v1835, %v1833
    %v1958 = vpack.c.b16 %v1838, %v1836
    %v1959 = vpack.c.b16 %v1839, %v1837
    %v1960 = vpack.c.b16 %v1842, %v1840
    %v1961 = vpack.c.b16 %v1843, %v1841
    %v1962 = vpack.c.b16 %v1846, %v1844
    %v1963 = vpack.c.b16 %v1847, %v1845
    %v1964 = vpack.c.b16 %v1850, %v1848
    %v1965 = vpack.c.b16 %v1851, %v1849
    %v1966 = vpack.c.b16 %v1854, %v1852
    %v1967 = vpack.c.b16 %v1855, %v1853
    %v1968 = vpack.c.b16 %v1858, %v1856
    %v1969 = vpack.c.b16 %v1859, %v1857
    %v1970 = vpack.c.b16 %v1862, %v1860
    %v1971 = vpack.c.b16 %v1863, %v1861
    %v1972 = vpack.c.b16 %v1866, %v1864
    %v1973 = vpack.c.b16 %v1867, %v1865
    %v1974 = vpack.c.b16 %v1870, %v1868
    %v1975 = vpack.c.b16 %v1871, %v1869
    %v1976 = vpack.c.b16 %v1874, %v1872
    %v1977 = vpack.c.b16 %v1875, %v1873
    %v1978 = vpack.c.b16 %v1878, %v1876
    %v1979 = vpack.c.b16 %v1879, %v1877
    %v1980 = vpack.c.b16 %v1882, %v1880
    %v1981 = vpack.c.b16 %v1883, %v1881
    %v1982 = vpack.c.b16 %v1886, %v1884
    %v1983 = vpack.c.b16 %v1887, %v1885
    %v1984 = vpack.c.b16 %v1890, %v1888
    %v1985 = vpack.c.b16 %v1891, %v1889
    %v1986 = vpack.c.b16 %v1894, %v1892
    %v1987 = vpack.c.b16 %v1895, %v1893
    %v1988 = vpack.c.b16 %v1898, %v1896
    %v1989 = vpack.c.b16 %v1899, %v1897
    %v1990 = vpack.c.b16 %v1902, %v1900
    %v1991 = vpack.c.b16 %v1903, %v1901
    %v1992 = vpack.c.b16 %v1906, %v1904
    %v1993 = vpack.c.b16 %v1907, %v1905
    %v1994 = vpack.c.b16 %v1910, %v1908
    %v1995 = vpack.c.b16 %v1911, %v1909
    %v1996 = vpack.c.b16 %v1914, %v1912
    %v1997 = vpack.c.b16 %v1915, %v1913
    %v1998 = vpack.c.b16 %v1918, %v1916
    %v1999 = vpack.c.b16 %v1919, %v1917
    %v2000 = vpack.c.b16 %v1922, %v1920
    %v2001 = vpack.c.b16 %v1923, %v1921
    %v2002 = vpack.c.b16 %v1926, %v1924
    %v2003 = vpack.c.b16 %v1927, %v1925
    %v2004 = vpack.c.b16 %v1930, %v1928
    %v2005 = vpack.c.b16 %v1931, %v1929
    %v2006 = vpack.c.b16 %v1934, %v1932
    %v2007 = vpack.c.b16 %v1935, %v1933
    %v2008 = vpack.c.b16 %v1938, %v1936
    %v2009 = vpack.c.b16 %v1939, %v1937
    %v2010 = vpack.c.b16 %v1942, %v1940
    %v2011 = vpack.c.b16 %v1943, %v1941
    %v2012 = vpack.c.b16 %v1946, %v1944
    %v2013 = vpack.c.b16 %v1947, %v1945
    %v2014 = vpack.c.b16 %v1950, %v1948
    %v2015 = vpack.c.b16 %v1951, %v1949
    %2080 = vmatpush.bf16.msra.mxu0 %v1966
    %2081 = vmatpush.bf16.msra.mxu0 %v1964
    %2082 = vmatpush.bf16.msra.mxu0 %v1962
    %2083 = vmatpush.bf16.msra.mxu0 %v1960
    %2084 = vmatpush.bf16.msra.mxu0 %v1958
    %2085 = vmatpush.bf16.msra.mxu0 %v1956
    %2086 = vmatpush.bf16.msra.mxu0 %v1954
    %2087 = vmatpush.bf16.msra.mxu0 %v1952
    %2088 = vmatmul.bf16.gmra.mxu0 %v1686
    %v2089 = vpop.f32.mrf.mxu0
    %v2090 = vadd.f32 %v1756, %v2089
    %v2091 = vpop.f32.mrf.mxu0
    %v2092 = vadd.f32 %v1756, %v2091
    %2093 = vdwg.mxu0
    %2094 = vmatpush.bf16.msra.mxu0 %v1982
    %2095 = vmatpush.bf16.msra.mxu0 %v1980
    %2096 = vmatpush.bf16.msra.mxu0 %v1978
    %2097 = vmatpush.bf16.msra.mxu0 %v1976
    %2098 = vmatpush.bf16.msra.mxu0 %v1974
    %2099 = vmatpush.bf16.msra.mxu0 %v1972
    %2100 = vmatpush.bf16.msra.mxu0 %v1970
    %2101 = vmatpush.bf16.msra.mxu0 %v1968
    %2102 = vmatmul.bf16.gmra.mxu0 %v1687
    %v2103 = vpop.f32.mrf.mxu0
    %v2104 = vadd.f32 %v2090, %v2103
    %v2105 = vpop.f32.mrf.mxu0
    %v2106 = vadd.f32 %v2092, %v2105
    %2107 = vdwg.mxu0
    %2108 = vmatpush.bf16.msra.mxu0 %v1998
    %2109 = vmatpush.bf16.msra.mxu0 %v1996
    %2110 = vmatpush.bf16.msra.mxu0 %v1994
    %2111 = vmatpush.bf16.msra.mxu0 %v1992
    %2112 = vmatpush.bf16.msra.mxu0 %v1990
    %2113 = vmatpush.bf16.msra.mxu0 %v1988
    %2114 = vmatpush.bf16.msra.mxu0 %v1986
    %2115 = vmatpush.bf16.msra.mxu0 %v1984
    %2116 = vmatmul.bf16.gmra.mxu0 %v1688
    %v2117 = vpop.f32.mrf.mxu0
    %v2118 = vadd.f32 %v2104, %v2117
    %v2119 = vpop.f32.mrf.mxu0
    %v2120 = vadd.f32 %v2106, %v2119
    %2121 = vdwg.mxu0
    %2122 = vmatpush.bf16.msra.mxu0 %v2014
    %2123 = vmatpush.bf16.msra.mxu0 %v2012
    %2124 = vmatpush.bf16.msra.mxu0 %v2010
    %2125 = vmatpush.bf16.msra.mxu0 %v2008
    %2126 = vmatpush.bf16.msra.mxu0 %v2006
    %2127 = vmatpush.bf16.msra.mxu0 %v2004
    %2128 = vmatpush.bf16.msra.mxu0 %v2002
    %2129 = vmatpush.bf16.msra.mxu0 %v2000
    %2130 = vmatmul.bf16.gmra.mxu0 %v1689
    %v2131 = vpop.f32.mrf.mxu0
    %v2132 = vadd.f32 %v2118, %v2131
    %v2133 = vpop.f32.mrf.mxu0
    %v2134 = vadd.f32 %v2120, %v2133
    %2135 = vdwg.mxu0
    %2136 = vmatpush.bf16.msra.mxu0 %v1967
    %2137 = vmatpush.bf16.msra.mxu0 %v1965
    %2138 = vmatpush.bf16.msra.mxu0 %v1963
    %2139 = vmatpush.bf16.msra.mxu0 %v1961
    %2140 = vmatpush.bf16.msra.mxu0 %v1959
    %2141 = vmatpush.bf16.msra.mxu0 %v1957
    %2142 = vmatpush.bf16.msra.mxu0 %v1955
    %2143 = vmatpush.bf16.msra.mxu0 %v1953
    %2144 = vmatmul.bf16.gmra.mxu0 %v1686
    %v2145 = vpop.f32.mrf.mxu0
    %v2146 = vadd.f32 %v1757, %v2145
    %v2147 = vpop.f32.mrf.mxu0
    %v2148 = vadd.f32 %v1757, %v2147
    %2149 = vdwg.mxu0
    %2150 = vmatpush.bf16.msra.mxu0 %v1983
    %2151 = vmatpush.bf16.msra.mxu0 %v1981
    %2152 = vmatpush.bf16.msra.mxu0 %v1979
    %2153 = vmatpush.bf16.msra.mxu0 %v1977
    %2154 = vmatpush.bf16.msra.mxu0 %v1975
    %2155 = vmatpush.bf16.msra.mxu0 %v1973
    %2156 = vmatpush.bf16.msra.mxu0 %v1971
    %2157 = vmatpush.bf16.msra.mxu0 %v1969
    %2158 = vmatmul.bf16.gmra.mxu0 %v1687
    %v2159 = vpop.f32.mrf.mxu0
    %v2160 = vadd.f32 %v2146, %v2159
    %v2161 = vpop.f32.mrf.mxu0
    %v2162 = vadd.f32 %v2148, %v2161
    %2163 = vdwg.mxu0
    %2164 = vmatpush.bf16.msra.mxu0 %v1999
    %2165 = vmatpush.bf16.msra.mxu0 %v1997
    %2166 = vmatpush.bf16.msra.mxu0 %v1995
    %2167 = vmatpush.bf16.msra.mxu0 %v1993
    %2168 = vmatpush.bf16.msra.mxu0 %v1991
    %2169 = vmatpush.bf16.msra.mxu0 %v1989
    %2170 = vmatpush.bf16.msra.mxu0 %v1987
    %2171 = vmatpush.bf16.msra.mxu0 %v1985
    %2172 = vmatmul.bf16.gmra.mxu0 %v1688
    %v2173 = vpop.f32.mrf.mxu0
    %v2174 = vadd.f32 %v2160, %v2173
    %v2175 = vpop.f32.mrf.mxu0
    %v2176 = vadd.f32 %v2162, %v2175
    %2177 = vdwg.mxu0
    %2178 = vmatpush.bf16.msra.mxu0 %v2015
    %2179 = vmatpush.bf16.msra.mxu0 %v2013
    %2180 = vmatpush.bf16.msra.mxu0 %v2011
    %2181 = vmatpush.bf16.msra.mxu0 %v2009
    %2182 = vmatpush.bf16.msra.mxu0 %v2007
    %2183 = vmatpush.bf16.msra.mxu0 %v2005
    %2184 = vmatpush.bf16.msra.mxu0 %v2003
    %2185 = vmatpush.bf16.msra.mxu0 %v2001
    %2186 = vmatmul.bf16.gmra.mxu0 %v1689
    %v2187 = vpop.f32.mrf.mxu0
    %v2188 = vadd.f32 %v2174, %v2187
    %v2189 = vpop.f32.mrf.mxu0
    %v2190 = vadd.f32 %v2176, %v2189
    %2191 = vdwg.mxu0
    %v2192 = vmax.f32 %v2132, 0.0
    %v2193 = vmax.f32 %v2188, 0.0
    %v2194 = vmax.f32 %v2134, 0.0
    %v2195 = vmax.f32 %v2190, 0.0
    %v2196 = vpack.c.bf16 %v2194, %v2192
    %v2197 = vpack.c.bf16 %v2195, %v2193
    %v2198 = vld [vmem:[%s5] sm:$0xf]
    %v2199 = vld [vmem:[%s5 + $0x4] sm:$0xf]
    %v2200 = vld [vmem:[%s5 + $0x8] sm:$0xf]
    %v2201 = vld [vmem:[%s5 + $0xc] sm:$0xf]
    %v2202 = vld [vmem:[%s5 + $0x10] sm:$0xf]
    %v2203 = vld [vmem:[%s5 + $0x14] sm:$0xf]
    %v2204 = vld [vmem:[%s5 + $0x18] sm:$0xf]
    %v2205 = vld [vmem:[%s5 + $0x1c] sm:$0xf]
    %v2206 = vld [vmem:[%s5 + $0x20] sm:$0xf]
    %v2207 = vld [vmem:[%s5 + $0x24] sm:$0xf]
    %v2208 = vld [vmem:[%s5 + $0x28] sm:$0xf]
    %v2209 = vld [vmem:[%s5 + $0x2c] sm:$0xf]
    %v2210 = vld [vmem:[%s5 + $0x30] sm:$0xf]
    %v2211 = vld [vmem:[%s5 + $0x34] sm:$0xf]
    %v2212 = vld [vmem:[%s5 + $0x38] sm:$0xf]
    %v2213 = vld [vmem:[%s5 + $0x3c] sm:$0xf]
    %v2214 = vld [vmem:[%s5 + $0x40] sm:$0xf]
    %v2215 = vld [vmem:[%s5 + $0x44] sm:$0xf]
    %v2216 = vld [vmem:[%s5 + $0x48] sm:$0xf]
    %v2217 = vld [vmem:[%s5 + $0x4c] sm:$0xf]
    %v2218 = vld [vmem:[%s5 + $0x50] sm:$0xf]
    %v2219 = vld [vmem:[%s5 + $0x54] sm:$0xf]
    %v2220 = vld [vmem:[%s5 + $0x58] sm:$0xf]
    %v2221 = vld [vmem:[%s5 + $0x5c] sm:$0xf]
    %v2222 = vld [vmem:[%s5 + $0x60] sm:$0xf]
    %v2223 = vld [vmem:[%s5 + $0x64] sm:$0xf]
    %v2224 = vld [vmem:[%s5 + $0x68] sm:$0xf]
    %v2225 = vld [vmem:[%s5 + $0x6c] sm:$0xf]
    %v2226 = vld [vmem:[%s5 + $0x70] sm:$0xf]
    %v2227 = vld [vmem:[%s5 + $0x74] sm:$0xf]
    %v2228 = vld [vmem:[%s5 + $0x78] sm:$0xf]
    %v2229 = vld [vmem:[%s5 + $0x7c] sm:$0xf]
    %v2230 = vld [vmem:[%s6] sm:$0x1]
    %v2232 = vperm.slane %v2230, 0
    %v2266 = vunpack.c.l.b16 %v2198
    %v2267 = vunpack.c.l.b16 %v2199
    %v2268 = vunpack.c.l.b16 %v2200
    %v2269 = vunpack.c.l.b16 %v2201
    %v2270 = vunpack.c.l.b16 %v2202
    %v2271 = vunpack.c.l.b16 %v2203
    %v2272 = vunpack.c.l.b16 %v2204
    %v2273 = vunpack.c.l.b16 %v2205
    %v2274 = vunpack.c.l.b16 %v2206
    %v2275 = vunpack.c.l.b16 %v2207
    %v2276 = vunpack.c.l.b16 %v2208
    %v2277 = vunpack.c.l.b16 %v2209
    %v2278 = vunpack.c.l.b16 %v2210
    %v2279 = vunpack.c.l.b16 %v2211
    %v2280 = vunpack.c.l.b16 %v2212
    %v2281 = vunpack.c.l.b16 %v2213
    %v2282 = vunpack.c.l.b16 %v2214
    %v2283 = vunpack.c.l.b16 %v2215
    %v2284 = vunpack.c.l.b16 %v2216
    %v2285 = vunpack.c.l.b16 %v2217
    %v2286 = vunpack.c.l.b16 %v2218
    %v2287 = vunpack.c.l.b16 %v2219
    %v2288 = vunpack.c.l.b16 %v2220
    %v2289 = vunpack.c.l.b16 %v2221
    %v2290 = vunpack.c.l.b16 %v2222
    %v2291 = vunpack.c.l.b16 %v2223
    %v2292 = vunpack.c.l.b16 %v2224
    %v2293 = vunpack.c.l.b16 %v2225
    %v2294 = vunpack.c.l.b16 %v2226
    %v2295 = vunpack.c.l.b16 %v2227
    %v2296 = vunpack.c.l.b16 %v2228
    %v2297 = vunpack.c.l.b16 %v2229
    %v2298 = vpack.c.b16 %v2267, %v2266
    %v2299 = vpack.c.b16 %v2269, %v2268
    %v2300 = vpack.c.b16 %v2271, %v2270
    %v2301 = vpack.c.b16 %v2273, %v2272
    %v2302 = vpack.c.b16 %v2275, %v2274
    %v2303 = vpack.c.b16 %v2277, %v2276
    %v2304 = vpack.c.b16 %v2279, %v2278
    %v2305 = vpack.c.b16 %v2281, %v2280
    %v2306 = vpack.c.b16 %v2283, %v2282
    %v2307 = vpack.c.b16 %v2285, %v2284
    %v2308 = vpack.c.b16 %v2287, %v2286
    %v2309 = vpack.c.b16 %v2289, %v2288
    %v2310 = vpack.c.b16 %v2291, %v2290
    %v2311 = vpack.c.b16 %v2293, %v2292
    %v2312 = vpack.c.b16 %v2295, %v2294
    %v2313 = vpack.c.b16 %v2297, %v2296
    %2330 = vmatpush.bf16.msra.mxu0 %v2305
    %2331 = vmatpush.bf16.msra.mxu0 %v2304
    %2332 = vmatpush.bf16.msra.mxu0 %v2303
    %2333 = vmatpush.bf16.msra.mxu0 %v2302
    %2334 = vmatpush.bf16.msra.mxu0 %v2301
    %2335 = vmatpush.bf16.msra.mxu0 %v2300
    %2336 = vmatpush.bf16.msra.mxu0 %v2299
    %2337 = vmatpush.bf16.msra.mxu0 %v2298
    %2338 = vmatmul.bf16.gmra.mxu0 %v2196
    %v2339 = vpop.f32.mrf.mxu0
    %v2340 = vadd.f32 %v2232, %v2339
    %v2341 = vpop.f32.mrf.mxu0
    %v2342 = vadd.f32 %v2232, %v2341
    %2343 = vdwg.mxu0
    %2344 = vmatpush.bf16.msra.mxu0 %v2313
    %2345 = vmatpush.bf16.msra.mxu0 %v2312
    %2346 = vmatpush.bf16.msra.mxu0 %v2311
    %2347 = vmatpush.bf16.msra.mxu0 %v2310
    %2348 = vmatpush.bf16.msra.mxu0 %v2309
    %2349 = vmatpush.bf16.msra.mxu0 %v2308
    %2350 = vmatpush.bf16.msra.mxu0 %v2307
    %2351 = vmatpush.bf16.msra.mxu0 %v2306
    %2352 = vmatmul.bf16.gmra.mxu0 %v2197
    %v2353 = vpop.f32.mrf.mxu0
    %v2354 = vadd.f32 %v2340, %v2353
    %v2355 = vpop.f32.mrf.mxu0
    %v2356 = vadd.f32 %v2342, %v2355
    %2357 = vdwg.mxu0
    %2358 = vst [vmem:[#allocation3] sm:$0xff] %v2354
    %2359 = vst [vmem:[#allocation3 + $0x8] sm:$0xff] %v2356
    %v2360 = vld [vmem:[%s7] sm:$0xff]
    %v2361 = vld [vmem:[%s7 + $0x8] sm:$0xff]
    %v2362 = vld [vmem:[%s7 + $0x10] sm:$0xff]
    %v2363 = vld [vmem:[%s7 + $0x18] sm:$0xff]
    %v2364 = vld [vmem:[%s7 + $0x20] sm:$0xff]
    %v2365 = vld [vmem:[%s7 + $0x28] sm:$0xff]
    %v2366 = vld [vmem:[%s7 + $0x30] sm:$0xff]
    %v2367 = vld [vmem:[%s7 + $0x38] sm:$0xff]
    %v2368 = vmul.f32 %v2360, %v2360
    %v2369 = vmul.f32 %v2361, %v2361
    %v2370 = vmul.f32 %v2362, %v2362
    %v2371 = vmul.f32 %v2363, %v2363
    %v2372 = vmul.f32 %v2364, %v2364
    %v2373 = vmul.f32 %v2365, %v2365
    %v2374 = vmul.f32 %v2366, %v2366
    %v2375 = vmul.f32 %v2367, %v2367
    %2376 = vadd.xlane.f32.xlu0 %v2368
    %v2377 = vpop.xlane.xlu0 %2376
    %2378 = vadd.xlane.f32.xlu0 %v2369
    %v2379 = vpop.xlane.xlu0 %2378
    %2380 = vadd.xlane.f32.xlu0 %v2370
    %v2381 = vpop.xlane.xlu0 %2380
    %2382 = vadd.xlane.f32.xlu0 %v2371
    %v2383 = vpop.xlane.xlu0 %2382
    %2384 = vadd.xlane.f32.xlu0 %v2372
    %v2385 = vpop.xlane.xlu0 %2384
    %2386 = vadd.xlane.f32.xlu0 %v2373
    %v2387 = vpop.xlane.xlu0 %2386
    %2388 = vadd.xlane.f32.xlu0 %v2374
    %v2389 = vpop.xlane.xlu0 %2388
    %2390 = vadd.xlane.f32.xlu0 %v2375
    %v2391 = vpop.xlane.xlu0 %2390
    %2392 = vmatpush.xpose.msra.mxu0 0.0
    %2393 = vmatpush.xpose.msra.mxu0 0.0
    %2394 = vmatpush.xpose.msra.mxu0 0.0
    %2395 = vmatpush.xpose.msra.mxu0 0.0
    %2396 = vmatpush.xpose.msra.mxu0 0.0
    %2397 = vmatpush.xpose.msra.mxu0 0.0
    %2398 = vmatpush.xpose.msra.mxu0 0.0
    %2399 = vmatpush.xpose.msra.mxu0 0.0
    %2400 = vmatpush.xpose.msra.mxu0 %v2367
    %2401 = vmatpush.xpose.msra.mxu0 %v2366
    %2402 = vmatpush.xpose.msra.mxu0 %v2365
    %2403 = vmatpush.xpose.msra.mxu0 %v2364
    %2404 = vmatpush.xpose.msra.mxu0 %v2363
    %2405 = vmatpush.xpose.msra.mxu0 %v2362
    %2406 = vmatpush.xpose.msra.mxu0 %v2361
    %2407 = vmatpush.xpose.msra.mxu0 %v2360
    %2408 = vmatmul.f32.gmra.mxu0 %v2354
    %v2409 = vpop.f32.mrf.mxu0
    %v2410 = vadd.f32 0.0, %v2409
    %2411 = vmatmul.f32.gmra.mxu0 %v2356
    %v2412 = vpop.f32.mrf.mxu0
    %v2413 = vadd.f32 0.0, %v2412
    %2414 = vdwg.mxu0
    %v2415 = vmul.f32 %v2410, 2.0
    %v2416 = vmul.f32 %v2413, 2.0
    %v2419 = vperm.slane %v2415, 0
    %v2420 = vlaneseq
    %v2421 = vshrl.u32 %v2420, 7
    %2423 = vset.pattern.permute.xlu0 %v2421
    %2424 = vperm.xlu0 %2423, %v2419
    %v2425 = vpop.permute.xlu0 %2424
    %v2426 = vlaneseq
    %v2427 = vshrl.u32 %v2426, 7
    %v2428 = vadd.s32 %v2427, 8
    %2429 = vset.pattern.permute.xlu0 %v2428
    %2430 = vperm.xlu0 %2429, %v2419
    %v2431 = vpop.permute.xlu0 %2430
    %v2432 = vlaneseq
    %v2433 = vshrl.u32 %v2432, 7
    %v2434 = vadd.s32 %v2433, 16
    %2435 = vset.pattern.permute.xlu0 %v2434
    %2436 = vperm.xlu0 %2435, %v2419
    %v2437 = vpop.permute.xlu0 %2436
    %v2438 = vlaneseq
    %v2439 = vshrl.u32 %v2438, 7
    %v2440 = vadd.s32 %v2439, 24
    %2441 = vset.pattern.permute.xlu0 %v2440
    %2442 = vperm.xlu0 %2441, %v2419
    %v2443 = vpop.permute.xlu0 %2442
    %v2444 = vlaneseq
    %v2445 = vshrl.u32 %v2444, 7
    %v2446 = vadd.s32 %v2445, 32
    %2447 = vset.pattern.permute.xlu0 %v2446
    %2448 = vperm.xlu0 %2447, %v2419
    %v2449 = vpop.permute.xlu0 %2448
    %v2450 = vlaneseq
    %v2451 = vshrl.u32 %v2450, 7
    %v2452 = vadd.s32 %v2451, 40
    %2453 = vset.pattern.permute.xlu0 %v2452
    %2454 = vperm.xlu0 %2453, %v2419
    %v2455 = vpop.permute.xlu0 %2454
    %v2456 = vlaneseq
    %v2457 = vshrl.u32 %v2456, 7
    %v2458 = vadd.s32 %v2457, 48
    %2459 = vset.pattern.permute.xlu0 %v2458
    %2460 = vperm.xlu0 %2459, %v2419
    %v2461 = vpop.permute.xlu0 %2460
    %v2462 = vlaneseq
    %v2463 = vshrl.u32 %v2462, 7
    %v2464 = vadd.s32 %v2463, 56
    %2465 = vset.pattern.permute.xlu0 %v2464
    %2466 = vperm.xlu0 %2465, %v2419
    %v2467 = vpop.permute.xlu0 %2466
    %v2468 = vperm.slane %v2415, 1
    %v2469 = vlaneseq
    %v2470 = vshrl.u32 %v2469, 7
    %2472 = vset.pattern.permute.xlu0 %v2470
    %2473 = vperm.xlu0 %2472, %v2468
    %v2474 = vpop.permute.xlu0 %2473
    %v2475 = vlaneseq
    %v2476 = vshrl.u32 %v2475, 7
    %v2477 = vadd.s32 %v2476, 8
    %2478 = vset.pattern.permute.xlu0 %v2477
    %2479 = vperm.xlu0 %2478, %v2468
    %v2480 = vpop.permute.xlu0 %2479
    %v2481 = vlaneseq
    %v2482 = vshrl.u32 %v2481, 7
    %v2483 = vadd.s32 %v2482, 16
    %2484 = vset.pattern.permute.xlu0 %v2483
    %2485 = vperm.xlu0 %2484, %v2468
    %v2486 = vpop.permute.xlu0 %2485
    %v2487 = vlaneseq
    %v2488 = vshrl.u32 %v2487, 7
    %v2489 = vadd.s32 %v2488, 24
    %2490 = vset.pattern.permute.xlu0 %v2489
    %2491 = vperm.xlu0 %2490, %v2468
    %v2492 = vpop.permute.xlu0 %2491
    %v2493 = vlaneseq
    %v2494 = vshrl.u32 %v2493, 7
    %v2495 = vadd.s32 %v2494, 32
    %2496 = vset.pattern.permute.xlu0 %v2495
    %2497 = vperm.xlu0 %2496, %v2468
    %v2498 = vpop.permute.xlu0 %2497
    %v2499 = vlaneseq
    %v2500 = vshrl.u32 %v2499, 7
    %v2501 = vadd.s32 %v2500, 40
    %2502 = vset.pattern.permute.xlu0 %v2501
    %2503 = vperm.xlu0 %2502, %v2468
    %v2504 = vpop.permute.xlu0 %2503
    %v2505 = vlaneseq
    %v2506 = vshrl.u32 %v2505, 7
    %v2507 = vadd.s32 %v2506, 48
    %2508 = vset.pattern.permute.xlu0 %v2507
    %2509 = vperm.xlu0 %2508, %v2468
    %v2510 = vpop.permute.xlu0 %2509
    %v2511 = vlaneseq
    %v2512 = vshrl.u32 %v2511, 7
    %v2513 = vadd.s32 %v2512, 56
    %2514 = vset.pattern.permute.xlu0 %v2513
    %2515 = vperm.xlu0 %2514, %v2468
    %v2516 = vpop.permute.xlu0 %2515
    %v2517 = vperm.slane %v2415, 2
    %v2518 = vlaneseq
    %v2519 = vshrl.u32 %v2518, 7
    %2521 = vset.pattern.permute.xlu0 %v2519
    %2522 = vperm.xlu0 %2521, %v2517
    %v2523 = vpop.permute.xlu0 %2522
    %v2524 = vlaneseq
    %v2525 = vshrl.u32 %v2524, 7
    %v2526 = vadd.s32 %v2525, 8
    %2527 = vset.pattern.permute.xlu0 %v2526
    %2528 = vperm.xlu0 %2527, %v2517
    %v2529 = vpop.permute.xlu0 %2528
    %v2530 = vlaneseq
    %v2531 = vshrl.u32 %v2530, 7
    %v2532 = vadd.s32 %v2531, 16
    %2533 = vset.pattern.permute.xlu0 %v2532
    %2534 = vperm.xlu0 %2533, %v2517
    %v2535 = vpop.permute.xlu0 %2534
    %v2536 = vlaneseq
    %v2537 = vshrl.u32 %v2536, 7
    %v2538 = vadd.s32 %v2537, 24
    %2539 = vset.pattern.permute.xlu0 %v2538
    %2540 = vperm.xlu0 %2539, %v2517
    %v2541 = vpop.permute.xlu0 %2540
    %v2542 = vlaneseq
    %v2543 = vshrl.u32 %v2542, 7
    %v2544 = vadd.s32 %v2543, 32
    %2545 = vset.pattern.permute.xlu0 %v2544
    %2546 = vperm.xlu0 %2545, %v2517
    %v2547 = vpop.permute.xlu0 %2546
    %v2548 = vlaneseq
    %v2549 = vshrl.u32 %v2548, 7
    %v2550 = vadd.s32 %v2549, 40
    %2551 = vset.pattern.permute.xlu0 %v2550
    %2552 = vperm.xlu0 %2551, %v2517
    %v2553 = vpop.permute.xlu0 %2552
    %v2554 = vlaneseq
    %v2555 = vshrl.u32 %v2554, 7
    %v2556 = vadd.s32 %v2555, 48
    %2557 = vset.pattern.permute.xlu0 %v2556
    %2558 = vperm.xlu0 %2557, %v2517
    %v2559 = vpop.permute.xlu0 %2558
    %v2560 = vlaneseq
    %v2561 = vshrl.u32 %v2560, 7
    %v2562 = vadd.s32 %v2561, 56
    %2563 = vset.pattern.permute.xlu0 %v2562
    %2564 = vperm.xlu0 %2563, %v2517
    %v2565 = vpop.permute.xlu0 %2564
    %v2566 = vperm.slane %v2415, 3
    %v2567 = vlaneseq
    %v2568 = vshrl.u32 %v2567, 7
    %2570 = vset.pattern.permute.xlu0 %v2568
    %2571 = vperm.xlu0 %2570, %v2566
    %v2572 = vpop.permute.xlu0 %2571
    %v2573 = vlaneseq
    %v2574 = vshrl.u32 %v2573, 7
    %v2575 = vadd.s32 %v2574, 8
    %2576 = vset.pattern.permute.xlu0 %v2575
    %2577 = vperm.xlu0 %2576, %v2566
    %v2578 = vpop.permute.xlu0 %2577
    %v2579 = vlaneseq
    %v2580 = vshrl.u32 %v2579, 7
    %v2581 = vadd.s32 %v2580, 16
    %2582 = vset.pattern.permute.xlu0 %v2581
    %2583 = vperm.xlu0 %2582, %v2566
    %v2584 = vpop.permute.xlu0 %2583
    %v2585 = vlaneseq
    %v2586 = vshrl.u32 %v2585, 7
    %v2587 = vadd.s32 %v2586, 24
    %2588 = vset.pattern.permute.xlu0 %v2587
    %2589 = vperm.xlu0 %2588, %v2566
    %v2590 = vpop.permute.xlu0 %2589
    %v2591 = vlaneseq
    %v2592 = vshrl.u32 %v2591, 7
    %v2593 = vadd.s32 %v2592, 32
    %2594 = vset.pattern.permute.xlu0 %v2593
    %2595 = vperm.xlu0 %2594, %v2566
    %v2596 = vpop.permute.xlu0 %2595
    %v2597 = vlaneseq
    %v2598 = vshrl.u32 %v2597, 7
    %v2599 = vadd.s32 %v2598, 40
    %2600 = vset.pattern.permute.xlu0 %v2599
    %2601 = vperm.xlu0 %2600, %v2566
    %v2602 = vpop.permute.xlu0 %2601
    %v2603 = vlaneseq
    %v2604 = vshrl.u32 %v2603, 7
    %v2605 = vadd.s32 %v2604, 48
    %2606 = vset.pattern.permute.xlu0 %v2605
    %2607 = vperm.xlu0 %2606, %v2566
    %v2608 = vpop.permute.xlu0 %2607
    %v2609 = vlaneseq
    %v2610 = vshrl.u32 %v2609, 7
    %v2611 = vadd.s32 %v2610, 56
    %2612 = vset.pattern.permute.xlu0 %v2611
    %2613 = vperm.xlu0 %2612, %v2566
    %v2614 = vpop.permute.xlu0 %2613
    %v2615 = vperm.slane %v2415, 4
    %v2616 = vlaneseq
    %v2617 = vshrl.u32 %v2616, 7
    %2619 = vset.pattern.permute.xlu0 %v2617
    %2620 = vperm.xlu0 %2619, %v2615
    %v2621 = vpop.permute.xlu0 %2620
    %v2622 = vlaneseq
    %v2623 = vshrl.u32 %v2622, 7
    %v2624 = vadd.s32 %v2623, 8
    %2625 = vset.pattern.permute.xlu0 %v2624
    %2626 = vperm.xlu0 %2625, %v2615
    %v2627 = vpop.permute.xlu0 %2626
    %v2628 = vlaneseq
    %v2629 = vshrl.u32 %v2628, 7
    %v2630 = vadd.s32 %v2629, 16
    %2631 = vset.pattern.permute.xlu0 %v2630
    %2632 = vperm.xlu0 %2631, %v2615
    %v2633 = vpop.permute.xlu0 %2632
    %v2634 = vlaneseq
    %v2635 = vshrl.u32 %v2634, 7
    %v2636 = vadd.s32 %v2635, 24
    %2637 = vset.pattern.permute.xlu0 %v2636
    %2638 = vperm.xlu0 %2637, %v2615
    %v2639 = vpop.permute.xlu0 %2638
    %v2640 = vlaneseq
    %v2641 = vshrl.u32 %v2640, 7
    %v2642 = vadd.s32 %v2641, 32
    %2643 = vset.pattern.permute.xlu0 %v2642
    %2644 = vperm.xlu0 %2643, %v2615
    %v2645 = vpop.permute.xlu0 %2644
    %v2646 = vlaneseq
    %v2647 = vshrl.u32 %v2646, 7
    %v2648 = vadd.s32 %v2647, 40
    %2649 = vset.pattern.permute.xlu0 %v2648
    %2650 = vperm.xlu0 %2649, %v2615
    %v2651 = vpop.permute.xlu0 %2650
    %v2652 = vlaneseq
    %v2653 = vshrl.u32 %v2652, 7
    %v2654 = vadd.s32 %v2653, 48
    %2655 = vset.pattern.permute.xlu0 %v2654
    %2656 = vperm.xlu0 %2655, %v2615
    %v2657 = vpop.permute.xlu0 %2656
    %v2658 = vlaneseq
    %v2659 = vshrl.u32 %v2658, 7
    %v2660 = vadd.s32 %v2659, 56
    %2661 = vset.pattern.permute.xlu0 %v2660
    %2662 = vperm.xlu0 %2661, %v2615
    %v2663 = vpop.permute.xlu0 %2662
    %v2664 = vperm.slane %v2415, 5
    %v2665 = vlaneseq
    %v2666 = vshrl.u32 %v2665, 7
    %2668 = vset.pattern.permute.xlu0 %v2666
    %2669 = vperm.xlu0 %2668, %v2664
    %v2670 = vpop.permute.xlu0 %2669
    %v2671 = vlaneseq
    %v2672 = vshrl.u32 %v2671, 7
    %v2673 = vadd.s32 %v2672, 8
    %2674 = vset.pattern.permute.xlu0 %v2673
    %2675 = vperm.xlu0 %2674, %v2664
    %v2676 = vpop.permute.xlu0 %2675
    %v2677 = vlaneseq
    %v2678 = vshrl.u32 %v2677, 7
    %v2679 = vadd.s32 %v2678, 16
    %2680 = vset.pattern.permute.xlu0 %v2679
    %2681 = vperm.xlu0 %2680, %v2664
    %v2682 = vpop.permute.xlu0 %2681
    %v2683 = vlaneseq
    %v2684 = vshrl.u32 %v2683, 7
    %v2685 = vadd.s32 %v2684, 24
    %2686 = vset.pattern.permute.xlu0 %v2685
    %2687 = vperm.xlu0 %2686, %v2664
    %v2688 = vpop.permute.xlu0 %2687
    %v2689 = vlaneseq
    %v2690 = vshrl.u32 %v2689, 7
    %v2691 = vadd.s32 %v2690, 32
    %2692 = vset.pattern.permute.xlu0 %v2691
    %2693 = vperm.xlu0 %2692, %v2664
    %v2694 = vpop.permute.xlu0 %2693
    %v2695 = vlaneseq
    %v2696 = vshrl.u32 %v2695, 7
    %v2697 = vadd.s32 %v2696, 40
    %2698 = vset.pattern.permute.xlu0 %v2697
    %2699 = vperm.xlu0 %2698, %v2664
    %v2700 = vpop.permute.xlu0 %2699
    %v2701 = vlaneseq
    %v2702 = vshrl.u32 %v2701, 7
    %v2703 = vadd.s32 %v2702, 48
    %2704 = vset.pattern.permute.xlu0 %v2703
    %2705 = vperm.xlu0 %2704, %v2664
    %v2706 = vpop.permute.xlu0 %2705
    %v2707 = vlaneseq
    %v2708 = vshrl.u32 %v2707, 7
    %v2709 = vadd.s32 %v2708, 56
    %2710 = vset.pattern.permute.xlu0 %v2709
    %2711 = vperm.xlu0 %2710, %v2664
    %v2712 = vpop.permute.xlu0 %2711
    %v2713 = vperm.slane %v2415, 6
    %v2714 = vlaneseq
    %v2715 = vshrl.u32 %v2714, 7
    %2717 = vset.pattern.permute.xlu0 %v2715
    %2718 = vperm.xlu0 %2717, %v2713
    %v2719 = vpop.permute.xlu0 %2718
    %v2720 = vlaneseq
    %v2721 = vshrl.u32 %v2720, 7
    %v2722 = vadd.s32 %v2721, 8
    %2723 = vset.pattern.permute.xlu0 %v2722
    %2724 = vperm.xlu0 %2723, %v2713
    %v2725 = vpop.permute.xlu0 %2724
    %v2726 = vlaneseq
    %v2727 = vshrl.u32 %v2726, 7
    %v2728 = vadd.s32 %v2727, 16
    %2729 = vset.pattern.permute.xlu0 %v2728
    %2730 = vperm.xlu0 %2729, %v2713
    %v2731 = vpop.permute.xlu0 %2730
    %v2732 = vlaneseq
    %v2733 = vshrl.u32 %v2732, 7
    %v2734 = vadd.s32 %v2733, 24
    %2735 = vset.pattern.permute.xlu0 %v2734
    %2736 = vperm.xlu0 %2735, %v2713
    %v2737 = vpop.permute.xlu0 %2736
    %v2738 = vlaneseq
    %v2739 = vshrl.u32 %v2738, 7
    %v2740 = vadd.s32 %v2739, 32
    %2741 = vset.pattern.permute.xlu0 %v2740
    %2742 = vperm.xlu0 %2741, %v2713
    %v2743 = vpop.permute.xlu0 %2742
    %v2744 = vlaneseq
    %v2745 = vshrl.u32 %v2744, 7
    %v2746 = vadd.s32 %v2745, 40
    %2747 = vset.pattern.permute.xlu0 %v2746
    %2748 = vperm.xlu0 %2747, %v2713
    %v2749 = vpop.permute.xlu0 %2748
    %v2750 = vlaneseq
    %v2751 = vshrl.u32 %v2750, 7
    %v2752 = vadd.s32 %v2751, 48
    %2753 = vset.pattern.permute.xlu0 %v2752
    %2754 = vperm.xlu0 %2753, %v2713
    %v2755 = vpop.permute.xlu0 %2754
    %v2756 = vlaneseq
    %v2757 = vshrl.u32 %v2756, 7
    %v2758 = vadd.s32 %v2757, 56
    %2759 = vset.pattern.permute.xlu0 %v2758
    %2760 = vperm.xlu0 %2759, %v2713
    %v2761 = vpop.permute.xlu0 %2760
    %v2762 = vperm.slane %v2415, 7
    %v2763 = vlaneseq
    %v2764 = vshrl.u32 %v2763, 7
    %2766 = vset.pattern.permute.xlu0 %v2764
    %2767 = vperm.xlu0 %2766, %v2762
    %v2768 = vpop.permute.xlu0 %2767
    %v2769 = vlaneseq
    %v2770 = vshrl.u32 %v2769, 7
    %v2771 = vadd.s32 %v2770, 8
    %2772 = vset.pattern.permute.xlu0 %v2771
    %2773 = vperm.xlu0 %2772, %v2762
    %v2774 = vpop.permute.xlu0 %2773
    %v2775 = vlaneseq
    %v2776 = vshrl.u32 %v2775, 7
    %v2777 = vadd.s32 %v2776, 16
    %2778 = vset.pattern.permute.xlu0 %v2777
    %2779 = vperm.xlu0 %2778, %v2762
    %v2780 = vpop.permute.xlu0 %2779
    %v2781 = vlaneseq
    %v2782 = vshrl.u32 %v2781, 7
    %v2783 = vadd.s32 %v2782, 24
    %2784 = vset.pattern.permute.xlu0 %v2783
    %2785 = vperm.xlu0 %2784, %v2762
    %v2786 = vpop.permute.xlu0 %2785
    %v2787 = vlaneseq
    %v2788 = vshrl.u32 %v2787, 7
    %v2789 = vadd.s32 %v2788, 32
    %2790 = vset.pattern.permute.xlu0 %v2789
    %2791 = vperm.xlu0 %2790, %v2762
    %v2792 = vpop.permute.xlu0 %2791
    %v2793 = vlaneseq
    %v2794 = vshrl.u32 %v2793, 7
    %v2795 = vadd.s32 %v2794, 40
    %2796 = vset.pattern.permute.xlu0 %v2795
    %2797 = vperm.xlu0 %2796, %v2762
    %v2798 = vpop.permute.xlu0 %2797
    %v2799 = vlaneseq
    %v2800 = vshrl.u32 %v2799, 7
    %v2801 = vadd.s32 %v2800, 48
    %2802 = vset.pattern.permute.xlu0 %v2801
    %2803 = vperm.xlu0 %2802, %v2762
    %v2804 = vpop.permute.xlu0 %2803
    %v2805 = vlaneseq
    %v2806 = vshrl.u32 %v2805, 7
    %v2807 = vadd.s32 %v2806, 56
    %2808 = vset.pattern.permute.xlu0 %v2807
    %2809 = vperm.xlu0 %2808, %v2762
    %v2810 = vpop.permute.xlu0 %2809
    %v2811 = vperm.slane %v2416, 0
    %v2812 = vlaneseq
    %v2813 = vshrl.u32 %v2812, 7
    %2815 = vset.pattern.permute.xlu0 %v2813
    %2816 = vperm.xlu0 %2815, %v2811
    %v2817 = vpop.permute.xlu0 %2816
    %v2818 = vlaneseq
    %v2819 = vshrl.u32 %v2818, 7
    %v2820 = vadd.s32 %v2819, 8
    %2821 = vset.pattern.permute.xlu0 %v2820
    %2822 = vperm.xlu0 %2821, %v2811
    %v2823 = vpop.permute.xlu0 %2822
    %v2824 = vlaneseq
    %v2825 = vshrl.u32 %v2824, 7
    %v2826 = vadd.s32 %v2825, 16
    %2827 = vset.pattern.permute.xlu0 %v2826
    %2828 = vperm.xlu0 %2827, %v2811
    %v2829 = vpop.permute.xlu0 %2828
    %v2830 = vlaneseq
    %v2831 = vshrl.u32 %v2830, 7
    %v2832 = vadd.s32 %v2831, 24
    %2833 = vset.pattern.permute.xlu0 %v2832
    %2834 = vperm.xlu0 %2833, %v2811
    %v2835 = vpop.permute.xlu0 %2834
    %v2836 = vlaneseq
    %v2837 = vshrl.u32 %v2836, 7
    %v2838 = vadd.s32 %v2837, 32
    %2839 = vset.pattern.permute.xlu0 %v2838
    %2840 = vperm.xlu0 %2839, %v2811
    %v2841 = vpop.permute.xlu0 %2840
    %v2842 = vlaneseq
    %v2843 = vshrl.u32 %v2842, 7
    %v2844 = vadd.s32 %v2843, 40
    %2845 = vset.pattern.permute.xlu0 %v2844
    %2846 = vperm.xlu0 %2845, %v2811
    %v2847 = vpop.permute.xlu0 %2846
    %v2848 = vlaneseq
    %v2849 = vshrl.u32 %v2848, 7
    %v2850 = vadd.s32 %v2849, 48
    %2851 = vset.pattern.permute.xlu0 %v2850
    %2852 = vperm.xlu0 %2851, %v2811
    %v2853 = vpop.permute.xlu0 %2852
    %v2854 = vlaneseq
    %v2855 = vshrl.u32 %v2854, 7
    %v2856 = vadd.s32 %v2855, 56
    %2857 = vset.pattern.permute.xlu0 %v2856
    %2858 = vperm.xlu0 %2857, %v2811
    %v2859 = vpop.permute.xlu0 %2858
    %v2860 = vperm.slane %v2416, 1
    %v2861 = vlaneseq
    %v2862 = vshrl.u32 %v2861, 7
    %2864 = vset.pattern.permute.xlu0 %v2862
    %2865 = vperm.xlu0 %2864, %v2860
    %v2866 = vpop.permute.xlu0 %2865
    %v2867 = vlaneseq
    %v2868 = vshrl.u32 %v2867, 7
    %v2869 = vadd.s32 %v2868, 8
    %2870 = vset.pattern.permute.xlu0 %v2869
    %2871 = vperm.xlu0 %2870, %v2860
    %v2872 = vpop.permute.xlu0 %2871
    %v2873 = vlaneseq
    %v2874 = vshrl.u32 %v2873, 7
    %v2875 = vadd.s32 %v2874, 16
    %2876 = vset.pattern.permute.xlu0 %v2875
    %2877 = vperm.xlu0 %2876, %v2860
    %v2878 = vpop.permute.xlu0 %2877
    %v2879 = vlaneseq
    %v2880 = vshrl.u32 %v2879, 7
    %v2881 = vadd.s32 %v2880, 24
    %2882 = vset.pattern.permute.xlu0 %v2881
    %2883 = vperm.xlu0 %2882, %v2860
    %v2884 = vpop.permute.xlu0 %2883
    %v2885 = vlaneseq
    %v2886 = vshrl.u32 %v2885, 7
    %v2887 = vadd.s32 %v2886, 32
    %2888 = vset.pattern.permute.xlu0 %v2887
    %2889 = vperm.xlu0 %2888, %v2860
    %v2890 = vpop.permute.xlu0 %2889
    %v2891 = vlaneseq
    %v2892 = vshrl.u32 %v2891, 7
    %v2893 = vadd.s32 %v2892, 40
    %2894 = vset.pattern.permute.xlu0 %v2893
    %2895 = vperm.xlu0 %2894, %v2860
    %v2896 = vpop.permute.xlu0 %2895
    %v2897 = vlaneseq
    %v2898 = vshrl.u32 %v2897, 7
    %v2899 = vadd.s32 %v2898, 48
    %2900 = vset.pattern.permute.xlu0 %v2899
    %2901 = vperm.xlu0 %2900, %v2860
    %v2902 = vpop.permute.xlu0 %2901
    %v2903 = vlaneseq
    %v2904 = vshrl.u32 %v2903, 7
    %v2905 = vadd.s32 %v2904, 56
    %2906 = vset.pattern.permute.xlu0 %v2905
    %2907 = vperm.xlu0 %2906, %v2860
    %v2908 = vpop.permute.xlu0 %2907
    %v2909 = vperm.slane %v2416, 2
    %v2910 = vlaneseq
    %v2911 = vshrl.u32 %v2910, 7
    %2913 = vset.pattern.permute.xlu0 %v2911
    %2914 = vperm.xlu0 %2913, %v2909
    %v2915 = vpop.permute.xlu0 %2914
    %v2916 = vlaneseq
    %v2917 = vshrl.u32 %v2916, 7
    %v2918 = vadd.s32 %v2917, 8
    %2919 = vset.pattern.permute.xlu0 %v2918
    %2920 = vperm.xlu0 %2919, %v2909
    %v2921 = vpop.permute.xlu0 %2920
    %v2922 = vlaneseq
    %v2923 = vshrl.u32 %v2922, 7
    %v2924 = vadd.s32 %v2923, 16
    %2925 = vset.pattern.permute.xlu0 %v2924
    %2926 = vperm.xlu0 %2925, %v2909
    %v2927 = vpop.permute.xlu0 %2926
    %v2928 = vlaneseq
    %v2929 = vshrl.u32 %v2928, 7
    %v2930 = vadd.s32 %v2929, 24
    %2931 = vset.pattern.permute.xlu0 %v2930
    %2932 = vperm.xlu0 %2931, %v2909
    %v2933 = vpop.permute.xlu0 %2932
    %v2934 = vlaneseq
    %v2935 = vshrl.u32 %v2934, 7
    %v2936 = vadd.s32 %v2935, 32
    %2937 = vset.pattern.permute.xlu0 %v2936
    %2938 = vperm.xlu0 %2937, %v2909
    %v2939 = vpop.permute.xlu0 %2938
    %v2940 = vlaneseq
    %v2941 = vshrl.u32 %v2940, 7
    %v2942 = vadd.s32 %v2941, 40
    %2943 = vset.pattern.permute.xlu0 %v2942
    %2944 = vperm.xlu0 %2943, %v2909
    %v2945 = vpop.permute.xlu0 %2944
    %v2946 = vlaneseq
    %v2947 = vshrl.u32 %v2946, 7
    %v2948 = vadd.s32 %v2947, 48
    %2949 = vset.pattern.permute.xlu0 %v2948
    %2950 = vperm.xlu0 %2949, %v2909
    %v2951 = vpop.permute.xlu0 %2950
    %v2952 = vlaneseq
    %v2953 = vshrl.u32 %v2952, 7
    %v2954 = vadd.s32 %v2953, 56
    %2955 = vset.pattern.permute.xlu0 %v2954
    %2956 = vperm.xlu0 %2955, %v2909
    %v2957 = vpop.permute.xlu0 %2956
    %v2958 = vperm.slane %v2416, 3
    %v2959 = vlaneseq
    %v2960 = vshrl.u32 %v2959, 7
    %2962 = vset.pattern.permute.xlu0 %v2960
    %2963 = vperm.xlu0 %2962, %v2958
    %v2964 = vpop.permute.xlu0 %2963
    %v2965 = vlaneseq
    %v2966 = vshrl.u32 %v2965, 7
    %v2967 = vadd.s32 %v2966, 8
    %2968 = vset.pattern.permute.xlu0 %v2967
    %2969 = vperm.xlu0 %2968, %v2958
    %v2970 = vpop.permute.xlu0 %2969
    %v2971 = vlaneseq
    %v2972 = vshrl.u32 %v2971, 7
    %v2973 = vadd.s32 %v2972, 16
    %2974 = vset.pattern.permute.xlu0 %v2973
    %2975 = vperm.xlu0 %2974, %v2958
    %v2976 = vpop.permute.xlu0 %2975
    %v2977 = vlaneseq
    %v2978 = vshrl.u32 %v2977, 7
    %v2979 = vadd.s32 %v2978, 24
    %2980 = vset.pattern.permute.xlu0 %v2979
    %2981 = vperm.xlu0 %2980, %v2958
    %v2982 = vpop.permute.xlu0 %2981
    %v2983 = vlaneseq
    %v2984 = vshrl.u32 %v2983, 7
    %v2985 = vadd.s32 %v2984, 32
    %2986 = vset.pattern.permute.xlu0 %v2985
    %2987 = vperm.xlu0 %2986, %v2958
    %v2988 = vpop.permute.xlu0 %2987
    %v2989 = vlaneseq
    %v2990 = vshrl.u32 %v2989, 7
    %v2991 = vadd.s32 %v2990, 40
    %2992 = vset.pattern.permute.xlu0 %v2991
    %2993 = vperm.xlu0 %2992, %v2958
    %v2994 = vpop.permute.xlu0 %2993
    %v2995 = vlaneseq
    %v2996 = vshrl.u32 %v2995, 7
    %v2997 = vadd.s32 %v2996, 48
    %2998 = vset.pattern.permute.xlu0 %v2997
    %2999 = vperm.xlu0 %2998, %v2958
    %v3000 = vpop.permute.xlu0 %2999
    %v3001 = vlaneseq
    %v3002 = vshrl.u32 %v3001, 7
    %v3003 = vadd.s32 %v3002, 56
    %3004 = vset.pattern.permute.xlu0 %v3003
    %3005 = vperm.xlu0 %3004, %v2958
    %v3006 = vpop.permute.xlu0 %3005
    %v3007 = vperm.slane %v2416, 4
    %v3008 = vlaneseq
    %v3009 = vshrl.u32 %v3008, 7
    %3011 = vset.pattern.permute.xlu0 %v3009
    %3012 = vperm.xlu0 %3011, %v3007
    %v3013 = vpop.permute.xlu0 %3012
    %v3014 = vlaneseq
    %v3015 = vshrl.u32 %v3014, 7
    %v3016 = vadd.s32 %v3015, 8
    %3017 = vset.pattern.permute.xlu0 %v3016
    %3018 = vperm.xlu0 %3017, %v3007
    %v3019 = vpop.permute.xlu0 %3018
    %v3020 = vlaneseq
    %v3021 = vshrl.u32 %v3020, 7
    %v3022 = vadd.s32 %v3021, 16
    %3023 = vset.pattern.permute.xlu0 %v3022
    %3024 = vperm.xlu0 %3023, %v3007
    %v3025 = vpop.permute.xlu0 %3024
    %v3026 = vlaneseq
    %v3027 = vshrl.u32 %v3026, 7
    %v3028 = vadd.s32 %v3027, 24
    %3029 = vset.pattern.permute.xlu0 %v3028
    %3030 = vperm.xlu0 %3029, %v3007
    %v3031 = vpop.permute.xlu0 %3030
    %v3032 = vlaneseq
    %v3033 = vshrl.u32 %v3032, 7
    %v3034 = vadd.s32 %v3033, 32
    %3035 = vset.pattern.permute.xlu0 %v3034
    %3036 = vperm.xlu0 %3035, %v3007
    %v3037 = vpop.permute.xlu0 %3036
    %v3038 = vlaneseq
    %v3039 = vshrl.u32 %v3038, 7
    %v3040 = vadd.s32 %v3039, 40
    %3041 = vset.pattern.permute.xlu0 %v3040
    %3042 = vperm.xlu0 %3041, %v3007
    %v3043 = vpop.permute.xlu0 %3042
    %v3044 = vlaneseq
    %v3045 = vshrl.u32 %v3044, 7
    %v3046 = vadd.s32 %v3045, 48
    %3047 = vset.pattern.permute.xlu0 %v3046
    %3048 = vperm.xlu0 %3047, %v3007
    %v3049 = vpop.permute.xlu0 %3048
    %v3050 = vlaneseq
    %v3051 = vshrl.u32 %v3050, 7
    %v3052 = vadd.s32 %v3051, 56
    %3053 = vset.pattern.permute.xlu0 %v3052
    %3054 = vperm.xlu0 %3053, %v3007
    %v3055 = vpop.permute.xlu0 %3054
    %v3056 = vperm.slane %v2416, 5
    %v3057 = vlaneseq
    %v3058 = vshrl.u32 %v3057, 7
    %3060 = vset.pattern.permute.xlu0 %v3058
    %3061 = vperm.xlu0 %3060, %v3056
    %v3062 = vpop.permute.xlu0 %3061
    %v3063 = vlaneseq
    %v3064 = vshrl.u32 %v3063, 7
    %v3065 = vadd.s32 %v3064, 8
    %3066 = vset.pattern.permute.xlu0 %v3065
    %3067 = vperm.xlu0 %3066, %v3056
    %v3068 = vpop.permute.xlu0 %3067
    %v3069 = vlaneseq
    %v3070 = vshrl.u32 %v3069, 7
    %v3071 = vadd.s32 %v3070, 16
    %3072 = vset.pattern.permute.xlu0 %v3071
    %3073 = vperm.xlu0 %3072, %v3056
    %v3074 = vpop.permute.xlu0 %3073
    %v3075 = vlaneseq
    %v3076 = vshrl.u32 %v3075, 7
    %v3077 = vadd.s32 %v3076, 24
    %3078 = vset.pattern.permute.xlu0 %v3077
    %3079 = vperm.xlu0 %3078, %v3056
    %v3080 = vpop.permute.xlu0 %3079
    %v3081 = vlaneseq
    %v3082 = vshrl.u32 %v3081, 7
    %v3083 = vadd.s32 %v3082, 32
    %3084 = vset.pattern.permute.xlu0 %v3083
    %3085 = vperm.xlu0 %3084, %v3056
    %v3086 = vpop.permute.xlu0 %3085
    %v3087 = vlaneseq
    %v3088 = vshrl.u32 %v3087, 7
    %v3089 = vadd.s32 %v3088, 40
    %3090 = vset.pattern.permute.xlu0 %v3089
    %3091 = vperm.xlu0 %3090, %v3056
    %v3092 = vpop.permute.xlu0 %3091
    %v3093 = vlaneseq
    %v3094 = vshrl.u32 %v3093, 7
    %v3095 = vadd.s32 %v3094, 48
    %3096 = vset.pattern.permute.xlu0 %v3095
    %3097 = vperm.xlu0 %3096, %v3056
    %v3098 = vpop.permute.xlu0 %3097
    %v3099 = vlaneseq
    %v3100 = vshrl.u32 %v3099, 7
    %v3101 = vadd.s32 %v3100, 56
    %3102 = vset.pattern.permute.xlu0 %v3101
    %3103 = vperm.xlu0 %3102, %v3056
    %v3104 = vpop.permute.xlu0 %3103
    %v3105 = vperm.slane %v2416, 6
    %v3106 = vlaneseq
    %v3107 = vshrl.u32 %v3106, 7
    %3109 = vset.pattern.permute.xlu0 %v3107
    %3110 = vperm.xlu0 %3109, %v3105
    %v3111 = vpop.permute.xlu0 %3110
    %v3112 = vlaneseq
    %v3113 = vshrl.u32 %v3112, 7
    %v3114 = vadd.s32 %v3113, 8
    %3115 = vset.pattern.permute.xlu0 %v3114
    %3116 = vperm.xlu0 %3115, %v3105
    %v3117 = vpop.permute.xlu0 %3116
    %v3118 = vlaneseq
    %v3119 = vshrl.u32 %v3118, 7
    %v3120 = vadd.s32 %v3119, 16
    %3121 = vset.pattern.permute.xlu0 %v3120
    %3122 = vperm.xlu0 %3121, %v3105
    %v3123 = vpop.permute.xlu0 %3122
    %v3124 = vlaneseq
    %v3125 = vshrl.u32 %v3124, 7
    %v3126 = vadd.s32 %v3125, 24
    %3127 = vset.pattern.permute.xlu0 %v3126
    %3128 = vperm.xlu0 %3127, %v3105
    %v3129 = vpop.permute.xlu0 %3128
    %v3130 = vlaneseq
    %v3131 = vshrl.u32 %v3130, 7
    %v3132 = vadd.s32 %v3131, 32
    %3133 = vset.pattern.permute.xlu0 %v3132
    %3134 = vperm.xlu0 %3133, %v3105
    %v3135 = vpop.permute.xlu0 %3134
    %v3136 = vlaneseq
    %v3137 = vshrl.u32 %v3136, 7
    %v3138 = vadd.s32 %v3137, 40
    %3139 = vset.pattern.permute.xlu0 %v3138
    %3140 = vperm.xlu0 %3139, %v3105
    %v3141 = vpop.permute.xlu0 %3140
    %v3142 = vlaneseq
    %v3143 = vshrl.u32 %v3142, 7
    %v3144 = vadd.s32 %v3143, 48
    %3145 = vset.pattern.permute.xlu0 %v3144
    %3146 = vperm.xlu0 %3145, %v3105
    %v3147 = vpop.permute.xlu0 %3146
    %v3148 = vlaneseq
    %v3149 = vshrl.u32 %v3148, 7
    %v3150 = vadd.s32 %v3149, 56
    %3151 = vset.pattern.permute.xlu0 %v3150
    %3152 = vperm.xlu0 %3151, %v3105
    %v3153 = vpop.permute.xlu0 %3152
    %v3154 = vperm.slane %v2416, 7
    %v3155 = vlaneseq
    %v3156 = vshrl.u32 %v3155, 7
    %3158 = vset.pattern.permute.xlu0 %v3156
    %3159 = vperm.xlu0 %3158, %v3154
    %v3160 = vpop.permute.xlu0 %3159
    %v3161 = vlaneseq
    %v3162 = vshrl.u32 %v3161, 7
    %v3163 = vadd.s32 %v3162, 8
    %3164 = vset.pattern.permute.xlu0 %v3163
    %3165 = vperm.xlu0 %3164, %v3154
    %v3166 = vpop.permute.xlu0 %3165
    %v3167 = vlaneseq
    %v3168 = vshrl.u32 %v3167, 7
    %v3169 = vadd.s32 %v3168, 16
    %3170 = vset.pattern.permute.xlu0 %v3169
    %3171 = vperm.xlu0 %3170, %v3154
    %v3172 = vpop.permute.xlu0 %3171
    %v3173 = vlaneseq
    %v3174 = vshrl.u32 %v3173, 7
    %v3175 = vadd.s32 %v3174, 24
    %3176 = vset.pattern.permute.xlu0 %v3175
    %3177 = vperm.xlu0 %3176, %v3154
    %v3178 = vpop.permute.xlu0 %3177
    %v3179 = vlaneseq
    %v3180 = vshrl.u32 %v3179, 7
    %v3181 = vadd.s32 %v3180, 32
    %3182 = vset.pattern.permute.xlu0 %v3181
    %3183 = vperm.xlu0 %3182, %v3154
    %v3184 = vpop.permute.xlu0 %3183
    %v3185 = vlaneseq
    %v3186 = vshrl.u32 %v3185, 7
    %v3187 = vadd.s32 %v3186, 40
    %3188 = vset.pattern.permute.xlu0 %v3187
    %3189 = vperm.xlu0 %3188, %v3154
    %v3190 = vpop.permute.xlu0 %3189
    %v3191 = vlaneseq
    %v3192 = vshrl.u32 %v3191, 7
    %v3193 = vadd.s32 %v3192, 48
    %3194 = vset.pattern.permute.xlu0 %v3193
    %3195 = vperm.xlu0 %3194, %v3154
    %v3196 = vpop.permute.xlu0 %3195
    %v3197 = vlaneseq
    %v3198 = vshrl.u32 %v3197, 7
    %v3199 = vadd.s32 %v3198, 56
    %3200 = vset.pattern.permute.xlu0 %v3199
    %3201 = vperm.xlu0 %3200, %v3154
    %v3202 = vpop.permute.xlu0 %3201
    %v3331 = vsub.f32 %v2377, %v2425
    %v3332 = vsub.f32 %v2379, %v2431
    %v3333 = vsub.f32 %v2381, %v2437
    %v3334 = vsub.f32 %v2383, %v2443
    %v3335 = vsub.f32 %v2385, %v2449
    %v3336 = vsub.f32 %v2387, %v2455
    %v3337 = vsub.f32 %v2389, %v2461
    %v3338 = vsub.f32 %v2391, %v2467
    %v3339 = vsub.f32 %v2377, %v2474
    %v3340 = vsub.f32 %v2379, %v2480
    %v3341 = vsub.f32 %v2381, %v2486
    %v3342 = vsub.f32 %v2383, %v2492
    %v3343 = vsub.f32 %v2385, %v2498
    %v3344 = vsub.f32 %v2387, %v2504
    %v3345 = vsub.f32 %v2389, %v2510
    %v3346 = vsub.f32 %v2391, %v2516
    %v3347 = vsub.f32 %v2377, %v2523
    %v3348 = vsub.f32 %v2379, %v2529
    %v3349 = vsub.f32 %v2381, %v2535
    %v3350 = vsub.f32 %v2383, %v2541
    %v3351 = vsub.f32 %v2385, %v2547
    %v3352 = vsub.f32 %v2387, %v2553
    %v3353 = vsub.f32 %v2389, %v2559
    %v3354 = vsub.f32 %v2391, %v2565
    %v3355 = vsub.f32 %v2377, %v2572
    %v3356 = vsub.f32 %v2379, %v2578
    %v3357 = vsub.f32 %v2381, %v2584
    %v3358 = vsub.f32 %v2383, %v2590
    %v3359 = vsub.f32 %v2385, %v2596
    %v3360 = vsub.f32 %v2387, %v2602
    %v3361 = vsub.f32 %v2389, %v2608
    %v3362 = vsub.f32 %v2391, %v2614
    %v3363 = vsub.f32 %v2377, %v2621
    %v3364 = vsub.f32 %v2379, %v2627
    %v3365 = vsub.f32 %v2381, %v2633
    %v3366 = vsub.f32 %v2383, %v2639
    %v3367 = vsub.f32 %v2385, %v2645
    %v3368 = vsub.f32 %v2387, %v2651
    %v3369 = vsub.f32 %v2389, %v2657
    %v3370 = vsub.f32 %v2391, %v2663
    %v3371 = vsub.f32 %v2377, %v2670
    %v3372 = vsub.f32 %v2379, %v2676
    %v3373 = vsub.f32 %v2381, %v2682
    %v3374 = vsub.f32 %v2383, %v2688
    %v3375 = vsub.f32 %v2385, %v2694
    %v3376 = vsub.f32 %v2387, %v2700
    %v3377 = vsub.f32 %v2389, %v2706
    %v3378 = vsub.f32 %v2391, %v2712
    %v3379 = vsub.f32 %v2377, %v2719
    %v3380 = vsub.f32 %v2379, %v2725
    %v3381 = vsub.f32 %v2381, %v2731
    %v3382 = vsub.f32 %v2383, %v2737
    %v3383 = vsub.f32 %v2385, %v2743
    %v3384 = vsub.f32 %v2387, %v2749
    %v3385 = vsub.f32 %v2389, %v2755
    %v3386 = vsub.f32 %v2391, %v2761
    %v3387 = vsub.f32 %v2377, %v2768
    %v3388 = vsub.f32 %v2379, %v2774
    %v3389 = vsub.f32 %v2381, %v2780
    %v3390 = vsub.f32 %v2383, %v2786
    %v3391 = vsub.f32 %v2385, %v2792
    %v3392 = vsub.f32 %v2387, %v2798
    %v3393 = vsub.f32 %v2389, %v2804
    %v3394 = vsub.f32 %v2391, %v2810
    %v3395 = vsub.f32 %v2377, %v2817
    %v3396 = vsub.f32 %v2379, %v2823
    %v3397 = vsub.f32 %v2381, %v2829
    %v3398 = vsub.f32 %v2383, %v2835
    %v3399 = vsub.f32 %v2385, %v2841
    %v3400 = vsub.f32 %v2387, %v2847
    %v3401 = vsub.f32 %v2389, %v2853
    %v3402 = vsub.f32 %v2391, %v2859
    %v3403 = vsub.f32 %v2377, %v2866
    %v3404 = vsub.f32 %v2379, %v2872
    %v3405 = vsub.f32 %v2381, %v2878
    %v3406 = vsub.f32 %v2383, %v2884
    %v3407 = vsub.f32 %v2385, %v2890
    %v3408 = vsub.f32 %v2387, %v2896
    %v3409 = vsub.f32 %v2389, %v2902
    %v3410 = vsub.f32 %v2391, %v2908
    %v3411 = vsub.f32 %v2377, %v2915
    %v3412 = vsub.f32 %v2379, %v2921
    %v3413 = vsub.f32 %v2381, %v2927
    %v3414 = vsub.f32 %v2383, %v2933
    %v3415 = vsub.f32 %v2385, %v2939
    %v3416 = vsub.f32 %v2387, %v2945
    %v3417 = vsub.f32 %v2389, %v2951
    %v3418 = vsub.f32 %v2391, %v2957
    %v3419 = vsub.f32 %v2377, %v2964
    %v3420 = vsub.f32 %v2379, %v2970
    %v3421 = vsub.f32 %v2381, %v2976
    %v3422 = vsub.f32 %v2383, %v2982
    %v3423 = vsub.f32 %v2385, %v2988
    %v3424 = vsub.f32 %v2387, %v2994
    %v3425 = vsub.f32 %v2389, %v3000
    %v3426 = vsub.f32 %v2391, %v3006
    %v3427 = vsub.f32 %v2377, %v3013
    %v3428 = vsub.f32 %v2379, %v3019
    %v3429 = vsub.f32 %v2381, %v3025
    %v3430 = vsub.f32 %v2383, %v3031
    %v3431 = vsub.f32 %v2385, %v3037
    %v3432 = vsub.f32 %v2387, %v3043
    %v3433 = vsub.f32 %v2389, %v3049
    %v3434 = vsub.f32 %v2391, %v3055
    %v3435 = vsub.f32 %v2377, %v3062
    %v3436 = vsub.f32 %v2379, %v3068
    %v3437 = vsub.f32 %v2381, %v3074
    %v3438 = vsub.f32 %v2383, %v3080
    %v3439 = vsub.f32 %v2385, %v3086
    %v3440 = vsub.f32 %v2387, %v3092
    %v3441 = vsub.f32 %v2389, %v3098
    %v3442 = vsub.f32 %v2391, %v3104
    %v3443 = vsub.f32 %v2377, %v3111
    %v3444 = vsub.f32 %v2379, %v3117
    %v3445 = vsub.f32 %v2381, %v3123
    %v3446 = vsub.f32 %v2383, %v3129
    %v3447 = vsub.f32 %v2385, %v3135
    %v3448 = vsub.f32 %v2387, %v3141
    %v3449 = vsub.f32 %v2389, %v3147
    %v3450 = vsub.f32 %v2391, %v3153
    %v3451 = vsub.f32 %v2377, %v3160
    %v3452 = vsub.f32 %v2379, %v3166
    %v3453 = vsub.f32 %v2381, %v3172
    %v3454 = vsub.f32 %v2383, %v3178
    %v3455 = vsub.f32 %v2385, %v3184
    %v3456 = vsub.f32 %v2387, %v3190
    %v3457 = vsub.f32 %v2389, %v3196
    %v3458 = vsub.f32 %v2391, %v3202
    %3587 = vset.pattern.permute.xlu0 0
    %3588 = vperm.xlu0 %3587, %v3331
    %v3589 = vpop.permute.xlu0 %3588
    %3590 = vset.pattern.permute.xlu0 0
    %3591 = vperm.xlu0 %3590, %v3332
    %v3592 = vpop.permute.xlu0 %3591
    %3593 = vset.pattern.permute.xlu0 0
    %3594 = vperm.xlu0 %3593, %v3333
    %v3595 = vpop.permute.xlu0 %3594
    %3596 = vset.pattern.permute.xlu0 0
    %3597 = vperm.xlu0 %3596, %v3334
    %v3598 = vpop.permute.xlu0 %3597
    %3599 = vset.pattern.permute.xlu0 0
    %3600 = vperm.xlu0 %3599, %v3335
    %v3601 = vpop.permute.xlu0 %3600
    %3602 = vset.pattern.permute.xlu0 0
    %3603 = vperm.xlu0 %3602, %v3336
    %v3604 = vpop.permute.xlu0 %3603
    %3605 = vset.pattern.permute.xlu0 0
    %3606 = vperm.xlu0 %3605, %v3337
    %v3607 = vpop.permute.xlu0 %3606
    %3608 = vset.pattern.permute.xlu0 0
    %3609 = vperm.xlu0 %3608, %v3338
    %v3610 = vpop.permute.xlu0 %3609
    %3611 = vset.pattern.permute.xlu0 0
    %3612 = vperm.xlu0 %3611, %v3339
    %v3613 = vpop.permute.xlu0 %3612
    %3614 = vset.pattern.permute.xlu0 0
    %3615 = vperm.xlu0 %3614, %v3340
    %v3616 = vpop.permute.xlu0 %3615
    %3617 = vset.pattern.permute.xlu0 0
    %3618 = vperm.xlu0 %3617, %v3341
    %v3619 = vpop.permute.xlu0 %3618
    %3620 = vset.pattern.permute.xlu0 0
    %3621 = vperm.xlu0 %3620, %v3342
    %v3622 = vpop.permute.xlu0 %3621
    %3623 = vset.pattern.permute.xlu0 0
    %3624 = vperm.xlu0 %3623, %v3343
    %v3625 = vpop.permute.xlu0 %3624
    %3626 = vset.pattern.permute.xlu0 0
    %3627 = vperm.xlu0 %3626, %v3344
    %v3628 = vpop.permute.xlu0 %3627
    %3629 = vset.pattern.permute.xlu0 0
    %3630 = vperm.xlu0 %3629, %v3345
    %v3631 = vpop.permute.xlu0 %3630
    %3632 = vset.pattern.permute.xlu0 0
    %3633 = vperm.xlu0 %3632, %v3346
    %v3634 = vpop.permute.xlu0 %3633
    %3635 = vset.pattern.permute.xlu0 0
    %3636 = vperm.xlu0 %3635, %v3347
    %v3637 = vpop.permute.xlu0 %3636
    %3638 = vset.pattern.permute.xlu0 0
    %3639 = vperm.xlu0 %3638, %v3348
    %v3640 = vpop.permute.xlu0 %3639
    %3641 = vset.pattern.permute.xlu0 0
    %3642 = vperm.xlu0 %3641, %v3349
    %v3643 = vpop.permute.xlu0 %3642
    %3644 = vset.pattern.permute.xlu0 0
    %3645 = vperm.xlu0 %3644, %v3350
    %v3646 = vpop.permute.xlu0 %3645
    %3647 = vset.pattern.permute.xlu0 0
    %3648 = vperm.xlu0 %3647, %v3351
    %v3649 = vpop.permute.xlu0 %3648
    %3650 = vset.pattern.permute.xlu0 0
    %3651 = vperm.xlu0 %3650, %v3352
    %v3652 = vpop.permute.xlu0 %3651
    %3653 = vset.pattern.permute.xlu0 0
    %3654 = vperm.xlu0 %3653, %v3353
    %v3655 = vpop.permute.xlu0 %3654
    %3656 = vset.pattern.permute.xlu0 0
    %3657 = vperm.xlu0 %3656, %v3354
    %v3658 = vpop.permute.xlu0 %3657
    %3659 = vset.pattern.permute.xlu0 0
    %3660 = vperm.xlu0 %3659, %v3355
    %v3661 = vpop.permute.xlu0 %3660
    %3662 = vset.pattern.permute.xlu0 0
    %3663 = vperm.xlu0 %3662, %v3356
    %v3664 = vpop.permute.xlu0 %3663
    %3665 = vset.pattern.permute.xlu0 0
    %3666 = vperm.xlu0 %3665, %v3357
    %v3667 = vpop.permute.xlu0 %3666
    %3668 = vset.pattern.permute.xlu0 0
    %3669 = vperm.xlu0 %3668, %v3358
    %v3670 = vpop.permute.xlu0 %3669
    %3671 = vset.pattern.permute.xlu0 0
    %3672 = vperm.xlu0 %3671, %v3359
    %v3673 = vpop.permute.xlu0 %3672
    %3674 = vset.pattern.permute.xlu0 0
    %3675 = vperm.xlu0 %3674, %v3360
    %v3676 = vpop.permute.xlu0 %3675
    %3677 = vset.pattern.permute.xlu0 0
    %3678 = vperm.xlu0 %3677, %v3361
    %v3679 = vpop.permute.xlu0 %3678
    %3680 = vset.pattern.permute.xlu0 0
    %3681 = vperm.xlu0 %3680, %v3362
    %v3682 = vpop.permute.xlu0 %3681
    %3683 = vset.pattern.permute.xlu0 0
    %3684 = vperm.xlu0 %3683, %v3363
    %v3685 = vpop.permute.xlu0 %3684
    %3686 = vset.pattern.permute.xlu0 0
    %3687 = vperm.xlu0 %3686, %v3364
    %v3688 = vpop.permute.xlu0 %3687
    %3689 = vset.pattern.permute.xlu0 0
    %3690 = vperm.xlu0 %3689, %v3365
    %v3691 = vpop.permute.xlu0 %3690
    %3692 = vset.pattern.permute.xlu0 0
    %3693 = vperm.xlu0 %3692, %v3366
    %v3694 = vpop.permute.xlu0 %3693
    %3695 = vset.pattern.permute.xlu0 0
    %3696 = vperm.xlu0 %3695, %v3367
    %v3697 = vpop.permute.xlu0 %3696
    %3698 = vset.pattern.permute.xlu0 0
    %3699 = vperm.xlu0 %3698, %v3368
    %v3700 = vpop.permute.xlu0 %3699
    %3701 = vset.pattern.permute.xlu0 0
    %3702 = vperm.xlu0 %3701, %v3369
    %v3703 = vpop.permute.xlu0 %3702
    %3704 = vset.pattern.permute.xlu0 0
    %3705 = vperm.xlu0 %3704, %v3370
    %v3706 = vpop.permute.xlu0 %3705
    %3707 = vset.pattern.permute.xlu0 0
    %3708 = vperm.xlu0 %3707, %v3371
    %v3709 = vpop.permute.xlu0 %3708
    %3710 = vset.pattern.permute.xlu0 0
    %3711 = vperm.xlu0 %3710, %v3372
    %v3712 = vpop.permute.xlu0 %3711
    %3713 = vset.pattern.permute.xlu0 0
    %3714 = vperm.xlu0 %3713, %v3373
    %v3715 = vpop.permute.xlu0 %3714
    %3716 = vset.pattern.permute.xlu0 0
    %3717 = vperm.xlu0 %3716, %v3374
    %v3718 = vpop.permute.xlu0 %3717
    %3719 = vset.pattern.permute.xlu0 0
    %3720 = vperm.xlu0 %3719, %v3375
    %v3721 = vpop.permute.xlu0 %3720
    %3722 = vset.pattern.permute.xlu0 0
    %3723 = vperm.xlu0 %3722, %v3376
    %v3724 = vpop.permute.xlu0 %3723
    %3725 = vset.pattern.permute.xlu0 0
    %3726 = vperm.xlu0 %3725, %v3377
    %v3727 = vpop.permute.xlu0 %3726
    %3728 = vset.pattern.permute.xlu0 0
    %3729 = vperm.xlu0 %3728, %v3378
    %v3730 = vpop.permute.xlu0 %3729
    %3731 = vset.pattern.permute.xlu0 0
    %3732 = vperm.xlu0 %3731, %v3379
    %v3733 = vpop.permute.xlu0 %3732
    %3734 = vset.pattern.permute.xlu0 0
    %3735 = vperm.xlu0 %3734, %v3380
    %v3736 = vpop.permute.xlu0 %3735
    %3737 = vset.pattern.permute.xlu0 0
    %3738 = vperm.xlu0 %3737, %v3381
    %v3739 = vpop.permute.xlu0 %3738
    %3740 = vset.pattern.permute.xlu0 0
    %3741 = vperm.xlu0 %3740, %v3382
    %v3742 = vpop.permute.xlu0 %3741
    %3743 = vset.pattern.permute.xlu0 0
    %3744 = vperm.xlu0 %3743, %v3383
    %v3745 = vpop.permute.xlu0 %3744
    %3746 = vset.pattern.permute.xlu0 0
    %3747 = vperm.xlu0 %3746, %v3384
    %v3748 = vpop.permute.xlu0 %3747
    %3749 = vset.pattern.permute.xlu0 0
    %3750 = vperm.xlu0 %3749, %v3385
    %v3751 = vpop.permute.xlu0 %3750
    %3752 = vset.pattern.permute.xlu0 0
    %3753 = vperm.xlu0 %3752, %v3386
    %v3754 = vpop.permute.xlu0 %3753
    %3755 = vset.pattern.permute.xlu0 0
    %3756 = vperm.xlu0 %3755, %v3387
    %v3757 = vpop.permute.xlu0 %3756
    %3758 = vset.pattern.permute.xlu0 0
    %3759 = vperm.xlu0 %3758, %v3388
    %v3760 = vpop.permute.xlu0 %3759
    %3761 = vset.pattern.permute.xlu0 0
    %3762 = vperm.xlu0 %3761, %v3389
    %v3763 = vpop.permute.xlu0 %3762
    %3764 = vset.pattern.permute.xlu0 0
    %3765 = vperm.xlu0 %3764, %v3390
    %v3766 = vpop.permute.xlu0 %3765
    %3767 = vset.pattern.permute.xlu0 0
    %3768 = vperm.xlu0 %3767, %v3391
    %v3769 = vpop.permute.xlu0 %3768
    %3770 = vset.pattern.permute.xlu0 0
    %3771 = vperm.xlu0 %3770, %v3392
    %v3772 = vpop.permute.xlu0 %3771
    %3773 = vset.pattern.permute.xlu0 0
    %3774 = vperm.xlu0 %3773, %v3393
    %v3775 = vpop.permute.xlu0 %3774
    %3776 = vset.pattern.permute.xlu0 0
    %3777 = vperm.xlu0 %3776, %v3394
    %v3778 = vpop.permute.xlu0 %3777
    %3779 = vset.pattern.permute.xlu0 0
    %3780 = vperm.xlu0 %3779, %v3395
    %v3781 = vpop.permute.xlu0 %3780
    %3782 = vset.pattern.permute.xlu0 0
    %3783 = vperm.xlu0 %3782, %v3396
    %v3784 = vpop.permute.xlu0 %3783
    %3785 = vset.pattern.permute.xlu0 0
    %3786 = vperm.xlu0 %3785, %v3397
    %v3787 = vpop.permute.xlu0 %3786
    %3788 = vset.pattern.permute.xlu0 0
    %3789 = vperm.xlu0 %3788, %v3398
    %v3790 = vpop.permute.xlu0 %3789
    %3791 = vset.pattern.permute.xlu0 0
    %3792 = vperm.xlu0 %3791, %v3399
    %v3793 = vpop.permute.xlu0 %3792
    %3794 = vset.pattern.permute.xlu0 0
    %3795 = vperm.xlu0 %3794, %v3400
    %v3796 = vpop.permute.xlu0 %3795
    %3797 = vset.pattern.permute.xlu0 0
    %3798 = vperm.xlu0 %3797, %v3401
    %v3799 = vpop.permute.xlu0 %3798
    %3800 = vset.pattern.permute.xlu0 0
    %3801 = vperm.xlu0 %3800, %v3402
    %v3802 = vpop.permute.xlu0 %3801
    %3803 = vset.pattern.permute.xlu0 0
    %3804 = vperm.xlu0 %3803, %v3403
    %v3805 = vpop.permute.xlu0 %3804
    %3806 = vset.pattern.permute.xlu0 0
    %3807 = vperm.xlu0 %3806, %v3404
    %v3808 = vpop.permute.xlu0 %3807
    %3809 = vset.pattern.permute.xlu0 0
    %3810 = vperm.xlu0 %3809, %v3405
    %v3811 = vpop.permute.xlu0 %3810
    %3812 = vset.pattern.permute.xlu0 0
    %3813 = vperm.xlu0 %3812, %v3406
    %v3814 = vpop.permute.xlu0 %3813
    %3815 = vset.pattern.permute.xlu0 0
    %3816 = vperm.xlu0 %3815, %v3407
    %v3817 = vpop.permute.xlu0 %3816
    %3818 = vset.pattern.permute.xlu0 0
    %3819 = vperm.xlu0 %3818, %v3408
    %v3820 = vpop.permute.xlu0 %3819
    %3821 = vset.pattern.permute.xlu0 0
    %3822 = vperm.xlu0 %3821, %v3409
    %v3823 = vpop.permute.xlu0 %3822
    %3824 = vset.pattern.permute.xlu0 0
    %3825 = vperm.xlu0 %3824, %v3410
    %v3826 = vpop.permute.xlu0 %3825
    %3827 = vset.pattern.permute.xlu0 0
    %3828 = vperm.xlu0 %3827, %v3411
    %v3829 = vpop.permute.xlu0 %3828
    %3830 = vset.pattern.permute.xlu0 0
    %3831 = vperm.xlu0 %3830, %v3412
    %v3832 = vpop.permute.xlu0 %3831
    %3833 = vset.pattern.permute.xlu0 0
    %3834 = vperm.xlu0 %3833, %v3413
    %v3835 = vpop.permute.xlu0 %3834
    %3836 = vset.pattern.permute.xlu0 0
    %3837 = vperm.xlu0 %3836, %v3414
    %v3838 = vpop.permute.xlu0 %3837
    %3839 = vset.pattern.permute.xlu0 0
    %3840 = vperm.xlu0 %3839, %v3415
    %v3841 = vpop.permute.xlu0 %3840
    %3842 = vset.pattern.permute.xlu0 0
    %3843 = vperm.xlu0 %3842, %v3416
    %v3844 = vpop.permute.xlu0 %3843
    %3845 = vset.pattern.permute.xlu0 0
    %3846 = vperm.xlu0 %3845, %v3417
    %v3847 = vpop.permute.xlu0 %3846
    %3848 = vset.pattern.permute.xlu0 0
    %3849 = vperm.xlu0 %3848, %v3418
    %v3850 = vpop.permute.xlu0 %3849
    %3851 = vset.pattern.permute.xlu0 0
    %3852 = vperm.xlu0 %3851, %v3419
    %v3853 = vpop.permute.xlu0 %3852
    %3854 = vset.pattern.permute.xlu0 0
    %3855 = vperm.xlu0 %3854, %v3420
    %v3856 = vpop.permute.xlu0 %3855
    %3857 = vset.pattern.permute.xlu0 0
    %3858 = vperm.xlu0 %3857, %v3421
    %v3859 = vpop.permute.xlu0 %3858
    %3860 = vset.pattern.permute.xlu0 0
    %3861 = vperm.xlu0 %3860, %v3422
    %v3862 = vpop.permute.xlu0 %3861
    %3863 = vset.pattern.permute.xlu0 0
    %3864 = vperm.xlu0 %3863, %v3423
    %v3865 = vpop.permute.xlu0 %3864
    %3866 = vset.pattern.permute.xlu0 0
    %3867 = vperm.xlu0 %3866, %v3424
    %v3868 = vpop.permute.xlu0 %3867
    %3869 = vset.pattern.permute.xlu0 0
    %3870 = vperm.xlu0 %3869, %v3425
    %v3871 = vpop.permute.xlu0 %3870
    %3872 = vset.pattern.permute.xlu0 0
    %3873 = vperm.xlu0 %3872, %v3426
    %v3874 = vpop.permute.xlu0 %3873
    %3875 = vset.pattern.permute.xlu0 0
    %3876 = vperm.xlu0 %3875, %v3427
    %v3877 = vpop.permute.xlu0 %3876
    %3878 = vset.pattern.permute.xlu0 0
    %3879 = vperm.xlu0 %3878, %v3428
    %v3880 = vpop.permute.xlu0 %3879
    %3881 = vset.pattern.permute.xlu0 0
    %3882 = vperm.xlu0 %3881, %v3429
    %v3883 = vpop.permute.xlu0 %3882
    %3884 = vset.pattern.permute.xlu0 0
    %3885 = vperm.xlu0 %3884, %v3430
    %v3886 = vpop.permute.xlu0 %3885
    %3887 = vset.pattern.permute.xlu0 0
    %3888 = vperm.xlu0 %3887, %v3431
    %v3889 = vpop.permute.xlu0 %3888
    %3890 = vset.pattern.permute.xlu0 0
    %3891 = vperm.xlu0 %3890, %v3432
    %v3892 = vpop.permute.xlu0 %3891
    %3893 = vset.pattern.permute.xlu0 0
    %3894 = vperm.xlu0 %3893, %v3433
    %v3895 = vpop.permute.xlu0 %3894
    %3896 = vset.pattern.permute.xlu0 0
    %3897 = vperm.xlu0 %3896, %v3434
    %v3898 = vpop.permute.xlu0 %3897
    %3899 = vset.pattern.permute.xlu0 0
    %3900 = vperm.xlu0 %3899, %v3435
    %v3901 = vpop.permute.xlu0 %3900
    %3902 = vset.pattern.permute.xlu0 0
    %3903 = vperm.xlu0 %3902, %v3436
    %v3904 = vpop.permute.xlu0 %3903
    %3905 = vset.pattern.permute.xlu0 0
    %3906 = vperm.xlu0 %3905, %v3437
    %v3907 = vpop.permute.xlu0 %3906
    %3908 = vset.pattern.permute.xlu0 0
    %3909 = vperm.xlu0 %3908, %v3438
    %v3910 = vpop.permute.xlu0 %3909
    %3911 = vset.pattern.permute.xlu0 0
    %3912 = vperm.xlu0 %3911, %v3439
    %v3913 = vpop.permute.xlu0 %3912
    %3914 = vset.pattern.permute.xlu0 0
    %3915 = vperm.xlu0 %3914, %v3440
    %v3916 = vpop.permute.xlu0 %3915
    %3917 = vset.pattern.permute.xlu0 0
    %3918 = vperm.xlu0 %3917, %v3441
    %v3919 = vpop.permute.xlu0 %3918
    %3920 = vset.pattern.permute.xlu0 0
    %3921 = vperm.xlu0 %3920, %v3442
    %v3922 = vpop.permute.xlu0 %3921
    %3923 = vset.pattern.permute.xlu0 0
    %3924 = vperm.xlu0 %3923, %v3443
    %v3925 = vpop.permute.xlu0 %3924
    %3926 = vset.pattern.permute.xlu0 0
    %3927 = vperm.xlu0 %3926, %v3444
    %v3928 = vpop.permute.xlu0 %3927
    %3929 = vset.pattern.permute.xlu0 0
    %3930 = vperm.xlu0 %3929, %v3445
    %v3931 = vpop.permute.xlu0 %3930
    %3932 = vset.pattern.permute.xlu0 0
    %3933 = vperm.xlu0 %3932, %v3446
    %v3934 = vpop.permute.xlu0 %3933
    %3935 = vset.pattern.permute.xlu0 0
    %3936 = vperm.xlu0 %3935, %v3447
    %v3937 = vpop.permute.xlu0 %3936
    %3938 = vset.pattern.permute.xlu0 0
    %3939 = vperm.xlu0 %3938, %v3448
    %v3940 = vpop.permute.xlu0 %3939
    %3941 = vset.pattern.permute.xlu0 0
    %3942 = vperm.xlu0 %3941, %v3449
    %v3943 = vpop.permute.xlu0 %3942
    %3944 = vset.pattern.permute.xlu0 0
    %3945 = vperm.xlu0 %3944, %v3450
    %v3946 = vpop.permute.xlu0 %3945
    %3947 = vset.pattern.permute.xlu0 0
    %3948 = vperm.xlu0 %3947, %v3451
    %v3949 = vpop.permute.xlu0 %3948
    %3950 = vset.pattern.permute.xlu0 0
    %3951 = vperm.xlu0 %3950, %v3452
    %v3952 = vpop.permute.xlu0 %3951
    %3953 = vset.pattern.permute.xlu0 0
    %3954 = vperm.xlu0 %3953, %v3453
    %v3955 = vpop.permute.xlu0 %3954
    %3956 = vset.pattern.permute.xlu0 0
    %3957 = vperm.xlu0 %3956, %v3454
    %v3958 = vpop.permute.xlu0 %3957
    %3959 = vset.pattern.permute.xlu0 0
    %3960 = vperm.xlu0 %3959, %v3455
    %v3961 = vpop.permute.xlu0 %3960
    %3962 = vset.pattern.permute.xlu0 0
    %3963 = vperm.xlu0 %3962, %v3456
    %v3964 = vpop.permute.xlu0 %3963
    %3965 = vset.pattern.permute.xlu0 0
    %3966 = vperm.xlu0 %3965, %v3457
    %v3967 = vpop.permute.xlu0 %3966
    %3968 = vset.pattern.permute.xlu0 0
    %3969 = vperm.xlu0 %3968, %v3458
    %v3970 = vpop.permute.xlu0 %3969
    %v3971 = vlaneseq
    %v3972 = vand.u32 %v3971, 127
    %v3973 = vperm.slane %v3589, %v3972
    %v3974 = vadd.s32 %v3972, 4294967288
    %v3975 = vperm.slane %v3592, %v3974
    %vm3976 = vcmask 130112
    %v3977 = vsel %vm3976, %v3975, %v3973
    %v3978 = vadd.s32 %v3972, 4294967280
    %v3979 = vperm.slane %v3595, %v3978
    %vm3980 = vcmask 195712
    %v3981 = vsel %vm3980, %v3979, %v3977
    %v3982 = vadd.s32 %v3972, 4294967272
    %v3983 = vperm.slane %v3598, %v3982
    %vm3984 = vcmask 261312
    %v3985 = vsel %vm3984, %v3983, %v3981
    %v3986 = vadd.s32 %v3972, 4294967264
    %v3987 = vperm.slane %v3601, %v3986
    %vm3988 = vcmask 326912
    %v3989 = vsel %vm3988, %v3987, %v3985
    %v3990 = vadd.s32 %v3972, 4294967256
    %v3991 = vperm.slane %v3604, %v3990
    %vm3992 = vcmask 392512
    %v3993 = vsel %vm3992, %v3991, %v3989
    %v3994 = vadd.s32 %v3972, 4294967248
    %v3995 = vperm.slane %v3607, %v3994
    %vm3996 = vcmask 458112
    %v3997 = vsel %vm3996, %v3995, %v3993
    %v3998 = vadd.s32 %v3972, 4294967240
    %v3999 = vperm.slane %v3610, %v3998
    %vm4000 = vcmask 523712
    %v4001 = vsel %vm4000, %v3999, %v3997
    %v4002 = vperm.slane %v3613, %v3972
    %v4003 = vperm.slane %v3616, %v3974
    %v4004 = vsel %vm3976, %v4003, %v4002
    %v4005 = vperm.slane %v3619, %v3978
    %v4006 = vsel %vm3980, %v4005, %v4004
    %v4007 = vperm.slane %v3622, %v3982
    %v4008 = vsel %vm3984, %v4007, %v4006
    %v4009 = vperm.slane %v3625, %v3986
    %v4010 = vsel %vm3988, %v4009, %v4008
    %v4011 = vperm.slane %v3628, %v3990
    %v4012 = vsel %vm3992, %v4011, %v4010
    %v4013 = vperm.slane %v3631, %v3994
    %v4014 = vsel %vm3996, %v4013, %v4012
    %v4015 = vperm.slane %v3634, %v3998
    %v4016 = vsel %vm4000, %v4015, %v4014
    %v4017 = vperm.slane %v3637, %v3972
    %v4018 = vperm.slane %v3640, %v3974
    %v4019 = vsel %vm3976, %v4018, %v4017
    %v4020 = vperm.slane %v3643, %v3978
    %v4021 = vsel %vm3980, %v4020, %v4019
    %v4022 = vperm.slane %v3646, %v3982
    %v4023 = vsel %vm3984, %v4022, %v4021
    %v4024 = vperm.slane %v3649, %v3986
    %v4025 = vsel %vm3988, %v4024, %v4023
    %v4026 = vperm.slane %v3652, %v3990
    %v4027 = vsel %vm3992, %v4026, %v4025
    %v4028 = vperm.slane %v3655, %v3994
    %v4029 = vsel %vm3996, %v4028, %v4027
    %v4030 = vperm.slane %v3658, %v3998
    %v4031 = vsel %vm4000, %v4030, %v4029
    %v4032 = vperm.slane %v3661, %v3972
    %v4033 = vperm.slane %v3664, %v3974
    %v4034 = vsel %vm3976, %v4033, %v4032
    %v4035 = vperm.slane %v3667, %v3978
    %v4036 = vsel %vm3980, %v4035, %v4034
    %v4037 = vperm.slane %v3670, %v3982
    %v4038 = vsel %vm3984, %v4037, %v4036
    %v4039 = vperm.slane %v3673, %v3986
    %v4040 = vsel %vm3988, %v4039, %v4038
    %v4041 = vperm.slane %v3676, %v3990
    %v4042 = vsel %vm3992, %v4041, %v4040
    %v4043 = vperm.slane %v3679, %v3994
    %v4044 = vsel %vm3996, %v4043, %v4042
    %v4045 = vperm.slane %v3682, %v3998
    %v4046 = vsel %vm4000, %v4045, %v4044
    %v4047 = vperm.slane %v3685, %v3972
    %v4048 = vperm.slane %v3688, %v3974
    %v4049 = vsel %vm3976, %v4048, %v4047
    %v4050 = vperm.slane %v3691, %v3978
    %v4051 = vsel %vm3980, %v4050, %v4049
    %v4052 = vperm.slane %v3694, %v3982
    %v4053 = vsel %vm3984, %v4052, %v4051
    %v4054 = vperm.slane %v3697, %v3986
    %v4055 = vsel %vm3988, %v4054, %v4053
    %v4056 = vperm.slane %v3700, %v3990
    %v4057 = vsel %vm3992, %v4056, %v4055
    %v4058 = vperm.slane %v3703, %v3994
    %v4059 = vsel %vm3996, %v4058, %v4057
    %v4060 = vperm.slane %v3706, %v3998
    %v4061 = vsel %vm4000, %v4060, %v4059
    %v4062 = vperm.slane %v3709, %v3972
    %v4063 = vperm.slane %v3712, %v3974
    %v4064 = vsel %vm3976, %v4063, %v4062
    %v4065 = vperm.slane %v3715, %v3978
    %v4066 = vsel %vm3980, %v4065, %v4064
    %v4067 = vperm.slane %v3718, %v3982
    %v4068 = vsel %vm3984, %v4067, %v4066
    %v4069 = vperm.slane %v3721, %v3986
    %v4070 = vsel %vm3988, %v4069, %v4068
    %v4071 = vperm.slane %v3724, %v3990
    %v4072 = vsel %vm3992, %v4071, %v4070
    %v4073 = vperm.slane %v3727, %v3994
    %v4074 = vsel %vm3996, %v4073, %v4072
    %v4075 = vperm.slane %v3730, %v3998
    %v4076 = vsel %vm4000, %v4075, %v4074
    %v4077 = vperm.slane %v3733, %v3972
    %v4078 = vperm.slane %v3736, %v3974
    %v4079 = vsel %vm3976, %v4078, %v4077
    %v4080 = vperm.slane %v3739, %v3978
    %v4081 = vsel %vm3980, %v4080, %v4079
    %v4082 = vperm.slane %v3742, %v3982
    %v4083 = vsel %vm3984, %v4082, %v4081
    %v4084 = vperm.slane %v3745, %v3986
    %v4085 = vsel %vm3988, %v4084, %v4083
    %v4086 = vperm.slane %v3748, %v3990
    %v4087 = vsel %vm3992, %v4086, %v4085
    %v4088 = vperm.slane %v3751, %v3994
    %v4089 = vsel %vm3996, %v4088, %v4087
    %v4090 = vperm.slane %v3754, %v3998
    %v4091 = vsel %vm4000, %v4090, %v4089
    %v4092 = vperm.slane %v3757, %v3972
    %v4093 = vperm.slane %v3760, %v3974
    %v4094 = vsel %vm3976, %v4093, %v4092
    %v4095 = vperm.slane %v3763, %v3978
    %v4096 = vsel %vm3980, %v4095, %v4094
    %v4097 = vperm.slane %v3766, %v3982
    %v4098 = vsel %vm3984, %v4097, %v4096
    %v4099 = vperm.slane %v3769, %v3986
    %v4100 = vsel %vm3988, %v4099, %v4098
    %v4101 = vperm.slane %v3772, %v3990
    %v4102 = vsel %vm3992, %v4101, %v4100
    %v4103 = vperm.slane %v3775, %v3994
    %v4104 = vsel %vm3996, %v4103, %v4102
    %v4105 = vperm.slane %v3778, %v3998
    %v4106 = vsel %vm4000, %v4105, %v4104
    %v4107 = vperm.slane %v3781, %v3972
    %v4108 = vperm.slane %v3784, %v3974
    %v4109 = vsel %vm3976, %v4108, %v4107
    %v4110 = vperm.slane %v3787, %v3978
    %v4111 = vsel %vm3980, %v4110, %v4109
    %v4112 = vperm.slane %v3790, %v3982
    %v4113 = vsel %vm3984, %v4112, %v4111
    %v4114 = vperm.slane %v3793, %v3986
    %v4115 = vsel %vm3988, %v4114, %v4113
    %v4116 = vperm.slane %v3796, %v3990
    %v4117 = vsel %vm3992, %v4116, %v4115
    %v4118 = vperm.slane %v3799, %v3994
    %v4119 = vsel %vm3996, %v4118, %v4117
    %v4120 = vperm.slane %v3802, %v3998
    %v4121 = vsel %vm4000, %v4120, %v4119
    %v4122 = vperm.slane %v3805, %v3972
    %v4123 = vperm.slane %v3808, %v3974
    %v4124 = vsel %vm3976, %v4123, %v4122
    %v4125 = vperm.slane %v3811, %v3978
    %v4126 = vsel %vm3980, %v4125, %v4124
    %v4127 = vperm.slane %v3814, %v3982
    %v4128 = vsel %vm3984, %v4127, %v4126
    %v4129 = vperm.slane %v3817, %v3986
    %v4130 = vsel %vm3988, %v4129, %v4128
    %v4131 = vperm.slane %v3820, %v3990
    %v4132 = vsel %vm3992, %v4131, %v4130
    %v4133 = vperm.slane %v3823, %v3994
    %v4134 = vsel %vm3996, %v4133, %v4132
    %v4135 = vperm.slane %v3826, %v3998
    %v4136 = vsel %vm4000, %v4135, %v4134
    %v4137 = vperm.slane %v3829, %v3972
    %v4138 = vperm.slane %v3832, %v3974
    %v4139 = vsel %vm3976, %v4138, %v4137
    %v4140 = vperm.slane %v3835, %v3978
    %v4141 = vsel %vm3980, %v4140, %v4139
    %v4142 = vperm.slane %v3838, %v3982
    %v4143 = vsel %vm3984, %v4142, %v4141
    %v4144 = vperm.slane %v3841, %v3986
    %v4145 = vsel %vm3988, %v4144, %v4143
    %v4146 = vperm.slane %v3844, %v3990
    %v4147 = vsel %vm3992, %v4146, %v4145
    %v4148 = vperm.slane %v3847, %v3994
    %v4149 = vsel %vm3996, %v4148, %v4147
    %v4150 = vperm.slane %v3850, %v3998
    %v4151 = vsel %vm4000, %v4150, %v4149
    %v4152 = vperm.slane %v3853, %v3972
    %v4153 = vperm.slane %v3856, %v3974
    %v4154 = vsel %vm3976, %v4153, %v4152
    %v4155 = vperm.slane %v3859, %v3978
    %v4156 = vsel %vm3980, %v4155, %v4154
    %v4157 = vperm.slane %v3862, %v3982
    %v4158 = vsel %vm3984, %v4157, %v4156
    %v4159 = vperm.slane %v3865, %v3986
    %v4160 = vsel %vm3988, %v4159, %v4158
    %v4161 = vperm.slane %v3868, %v3990
    %v4162 = vsel %vm3992, %v4161, %v4160
    %v4163 = vperm.slane %v3871, %v3994
    %v4164 = vsel %vm3996, %v4163, %v4162
    %v4165 = vperm.slane %v3874, %v3998
    %v4166 = vsel %vm4000, %v4165, %v4164
    %v4167 = vperm.slane %v3877, %v3972
    %v4168 = vperm.slane %v3880, %v3974
    %v4169 = vsel %vm3976, %v4168, %v4167
    %v4170 = vperm.slane %v3883, %v3978
    %v4171 = vsel %vm3980, %v4170, %v4169
    %v4172 = vperm.slane %v3886, %v3982
    %v4173 = vsel %vm3984, %v4172, %v4171
    %v4174 = vperm.slane %v3889, %v3986
    %v4175 = vsel %vm3988, %v4174, %v4173
    %v4176 = vperm.slane %v3892, %v3990
    %v4177 = vsel %vm3992, %v4176, %v4175
    %v4178 = vperm.slane %v3895, %v3994
    %v4179 = vsel %vm3996, %v4178, %v4177
    %v4180 = vperm.slane %v3898, %v3998
    %v4181 = vsel %vm4000, %v4180, %v4179
    %v4182 = vperm.slane %v3901, %v3972
    %v4183 = vperm.slane %v3904, %v3974
    %v4184 = vsel %vm3976, %v4183, %v4182
    %v4185 = vperm.slane %v3907, %v3978
    %v4186 = vsel %vm3980, %v4185, %v4184
    %v4187 = vperm.slane %v3910, %v3982
    %v4188 = vsel %vm3984, %v4187, %v4186
    %v4189 = vperm.slane %v3913, %v3986
    %v4190 = vsel %vm3988, %v4189, %v4188
    %v4191 = vperm.slane %v3916, %v3990
    %v4192 = vsel %vm3992, %v4191, %v4190
    %v4193 = vperm.slane %v3919, %v3994
    %v4194 = vsel %vm3996, %v4193, %v4192
    %v4195 = vperm.slane %v3922, %v3998
    %v4196 = vsel %vm4000, %v4195, %v4194
    %v4197 = vperm.slane %v3925, %v3972
    %v4198 = vperm.slane %v3928, %v3974
    %v4199 = vsel %vm3976, %v4198, %v4197
    %v4200 = vperm.slane %v3931, %v3978
    %v4201 = vsel %vm3980, %v4200, %v4199
    %v4202 = vperm.slane %v3934, %v3982
    %v4203 = vsel %vm3984, %v4202, %v4201
    %v4204 = vperm.slane %v3937, %v3986
    %v4205 = vsel %vm3988, %v4204, %v4203
    %v4206 = vperm.slane %v3940, %v3990
    %v4207 = vsel %vm3992, %v4206, %v4205
    %v4208 = vperm.slane %v3943, %v3994
    %v4209 = vsel %vm3996, %v4208, %v4207
    %v4210 = vperm.slane %v3946, %v3998
    %v4211 = vsel %vm4000, %v4210, %v4209
    %v4212 = vperm.slane %v3949, %v3972
    %v4213 = vperm.slane %v3952, %v3974
    %v4214 = vsel %vm3976, %v4213, %v4212
    %v4215 = vperm.slane %v3955, %v3978
    %v4216 = vsel %vm3980, %v4215, %v4214
    %v4217 = vperm.slane %v3958, %v3982
    %v4218 = vsel %vm3984, %v4217, %v4216
    %v4219 = vperm.slane %v3961, %v3986
    %v4220 = vsel %vm3988, %v4219, %v4218
    %v4221 = vperm.slane %v3964, %v3990
    %v4222 = vsel %vm3992, %v4221, %v4220
    %v4223 = vperm.slane %v3967, %v3994
    %v4224 = vsel %vm3996, %v4223, %v4222
    %v4225 = vperm.slane %v3970, %v3998
    %v4226 = vsel %vm4000, %v4225, %v4224
    %vm4227 = vcmask 1041409
    %v4228 = vsel %vm4227, %v4016, %v4001
    %vm4229 = vcmask 1042434
    %v4230 = vsel %vm4229, %v4031, %v4228
    %vm4231 = vcmask 1043459
    %v4232 = vsel %vm4231, %v4046, %v4230
    %vm4233 = vcmask 1044484
    %v4234 = vsel %vm4233, %v4061, %v4232
    %vm4235 = vcmask 1045509
    %v4236 = vsel %vm4235, %v4076, %v4234
    %vm4237 = vcmask 1046534
    %v4238 = vsel %vm4237, %v4091, %v4236
    %vm4239 = vcmask 1047559
    %v4240 = vsel %vm4239, %v4106, %v4238
    %v4241 = vsel %vm4227, %v4136, %v4121
    %v4242 = vsel %vm4229, %v4151, %v4241
    %v4243 = vsel %vm4231, %v4166, %v4242
    %v4244 = vsel %vm4233, %v4181, %v4243
    %v4245 = vsel %vm4235, %v4196, %v4244
    %v4246 = vsel %vm4237, %v4211, %v4245
    %v4247 = vsel %vm4239, %v4226, %v4246
    %vm4250 = vcmask 523264
    %v4251 = vsel %vm4250, %v4240, inf
    %4252 = vmin.xlane.f32.xlu0 %v4251
    %v4253 = vpop.xlane.xlu0 %4252
    %v4254 = vsel %vm4250, %v4247, inf
    %4255 = vmin.xlane.f32.xlu0 %v4254
    %v4256 = vpop.xlane.xlu0 %4255
    %v4259 = vperm.slane %v4253, 0
    %v4260 = vperm.slane %v4253, 1
    %v4261 = vperm.slane %v4253, 2
    %v4262 = vperm.slane %v4253, 3
    %v4263 = vperm.slane %v4253, 4
    %v4264 = vperm.slane %v4253, 5
    %v4265 = vperm.slane %v4253, 6
    %v4266 = vperm.slane %v4253, 7
    %v4267 = vperm.slane %v4256, 0
    %v4268 = vperm.slane %v4256, 1
    %v4269 = vperm.slane %v4256, 2
    %v4270 = vperm.slane %v4256, 3
    %v4271 = vperm.slane %v4256, 4
    %v4272 = vperm.slane %v4256, 5
    %v4273 = vperm.slane %v4256, 6
    %v4274 = vperm.slane %v4256, 7
    %vm4291 = vcmp.eq.f32.partialorder %v3331, %v4259
    %vm4292 = vcmp.eq.f32.partialorder %v3332, %v4259
    %vm4293 = vcmp.eq.f32.partialorder %v3333, %v4259
    %vm4294 = vcmp.eq.f32.partialorder %v3334, %v4259
    %vm4295 = vcmp.eq.f32.partialorder %v3335, %v4259
    %vm4296 = vcmp.eq.f32.partialorder %v3336, %v4259
    %vm4297 = vcmp.eq.f32.partialorder %v3337, %v4259
    %vm4298 = vcmp.eq.f32.partialorder %v3338, %v4259
    %vm4299 = vcmp.eq.f32.partialorder %v3339, %v4260
    %vm4300 = vcmp.eq.f32.partialorder %v3340, %v4260
    %vm4301 = vcmp.eq.f32.partialorder %v3341, %v4260
    %vm4302 = vcmp.eq.f32.partialorder %v3342, %v4260
    %vm4303 = vcmp.eq.f32.partialorder %v3343, %v4260
    %vm4304 = vcmp.eq.f32.partialorder %v3344, %v4260
    %vm4305 = vcmp.eq.f32.partialorder %v3345, %v4260
    %vm4306 = vcmp.eq.f32.partialorder %v3346, %v4260
    %vm4307 = vcmp.eq.f32.partialorder %v3347, %v4261
    %vm4308 = vcmp.eq.f32.partialorder %v3348, %v4261
    %vm4309 = vcmp.eq.f32.partialorder %v3349, %v4261
    %vm4310 = vcmp.eq.f32.partialorder %v3350, %v4261
    %vm4311 = vcmp.eq.f32.partialorder %v3351, %v4261
    %vm4312 = vcmp.eq.f32.partialorder %v3352, %v4261
    %vm4313 = vcmp.eq.f32.partialorder %v3353, %v4261
    %vm4314 = vcmp.eq.f32.partialorder %v3354, %v4261
    %vm4315 = vcmp.eq.f32.partialorder %v3355, %v4262
    %vm4316 = vcmp.eq.f32.partialorder %v3356, %v4262
    %vm4317 = vcmp.eq.f32.partialorder %v3357, %v4262
    %vm4318 = vcmp.eq.f32.partialorder %v3358, %v4262
    %vm4319 = vcmp.eq.f32.partialorder %v3359, %v4262
    %vm4320 = vcmp.eq.f32.partialorder %v3360, %v4262
    %vm4321 = vcmp.eq.f32.partialorder %v3361, %v4262
    %vm4322 = vcmp.eq.f32.partialorder %v3362, %v4262
    %vm4323 = vcmp.eq.f32.partialorder %v3363, %v4263
    %vm4324 = vcmp.eq.f32.partialorder %v3364, %v4263
    %vm4325 = vcmp.eq.f32.partialorder %v3365, %v4263
    %vm4326 = vcmp.eq.f32.partialorder %v3366, %v4263
    %vm4327 = vcmp.eq.f32.partialorder %v3367, %v4263
    %vm4328 = vcmp.eq.f32.partialorder %v3368, %v4263
    %vm4329 = vcmp.eq.f32.partialorder %v3369, %v4263
    %vm4330 = vcmp.eq.f32.partialorder %v3370, %v4263
    %vm4331 = vcmp.eq.f32.partialorder %v3371, %v4264
    %vm4332 = vcmp.eq.f32.partialorder %v3372, %v4264
    %vm4333 = vcmp.eq.f32.partialorder %v3373, %v4264
    %vm4334 = vcmp.eq.f32.partialorder %v3374, %v4264
    %vm4335 = vcmp.eq.f32.partialorder %v3375, %v4264
    %vm4336 = vcmp.eq.f32.partialorder %v3376, %v4264
    %vm4337 = vcmp.eq.f32.partialorder %v3377, %v4264
    %vm4338 = vcmp.eq.f32.partialorder %v3378, %v4264
    %vm4339 = vcmp.eq.f32.partialorder %v3379, %v4265
    %vm4340 = vcmp.eq.f32.partialorder %v3380, %v4265
    %vm4341 = vcmp.eq.f32.partialorder %v3381, %v4265
    %vm4342 = vcmp.eq.f32.partialorder %v3382, %v4265
    %vm4343 = vcmp.eq.f32.partialorder %v3383, %v4265
    %vm4344 = vcmp.eq.f32.partialorder %v3384, %v4265
    %vm4345 = vcmp.eq.f32.partialorder %v3385, %v4265
    %vm4346 = vcmp.eq.f32.partialorder %v3386, %v4265
    %vm4347 = vcmp.eq.f32.partialorder %v3387, %v4266
    %vm4348 = vcmp.eq.f32.partialorder %v3388, %v4266
    %vm4349 = vcmp.eq.f32.partialorder %v3389, %v4266
    %vm4350 = vcmp.eq.f32.partialorder %v3390, %v4266
    %vm4351 = vcmp.eq.f32.partialorder %v3391, %v4266
    %vm4352 = vcmp.eq.f32.partialorder %v3392, %v4266
    %vm4353 = vcmp.eq.f32.partialorder %v3393, %v4266
    %vm4354 = vcmp.eq.f32.partialorder %v3394, %v4266
    %vm4355 = vcmp.eq.f32.partialorder %v3395, %v4267
    %vm4356 = vcmp.eq.f32.partialorder %v3396, %v4267
    %vm4357 = vcmp.eq.f32.partialorder %v3397, %v4267
    %vm4358 = vcmp.eq.f32.partialorder %v3398, %v4267
    %vm4359 = vcmp.eq.f32.partialorder %v3399, %v4267
    %vm4360 = vcmp.eq.f32.partialorder %v3400, %v4267
    %vm4361 = vcmp.eq.f32.partialorder %v3401, %v4267
    %vm4362 = vcmp.eq.f32.partialorder %v3402, %v4267
    %vm4363 = vcmp.eq.f32.partialorder %v3403, %v4268
    %vm4364 = vcmp.eq.f32.partialorder %v3404, %v4268
    %vm4365 = vcmp.eq.f32.partialorder %v3405, %v4268
    %vm4366 = vcmp.eq.f32.partialorder %v3406, %v4268
    %vm4367 = vcmp.eq.f32.partialorder %v3407, %v4268
    %vm4368 = vcmp.eq.f32.partialorder %v3408, %v4268
    %vm4369 = vcmp.eq.f32.partialorder %v3409, %v4268
    %vm4370 = vcmp.eq.f32.partialorder %v3410, %v4268
    %vm4371 = vcmp.eq.f32.partialorder %v3411, %v4269
    %vm4372 = vcmp.eq.f32.partialorder %v3412, %v4269
    %vm4373 = vcmp.eq.f32.partialorder %v3413, %v4269
    %vm4374 = vcmp.eq.f32.partialorder %v3414, %v4269
    %vm4375 = vcmp.eq.f32.partialorder %v3415, %v4269
    %vm4376 = vcmp.eq.f32.partialorder %v3416, %v4269
    %vm4377 = vcmp.eq.f32.partialorder %v3417, %v4269
    %vm4378 = vcmp.eq.f32.partialorder %v3418, %v4269
    %vm4379 = vcmp.eq.f32.partialorder %v3419, %v4270
    %vm4380 = vcmp.eq.f32.partialorder %v3420, %v4270
    %vm4381 = vcmp.eq.f32.partialorder %v3421, %v4270
    %vm4382 = vcmp.eq.f32.partialorder %v3422, %v4270
    %vm4383 = vcmp.eq.f32.partialorder %v3423, %v4270
    %vm4384 = vcmp.eq.f32.partialorder %v3424, %v4270
    %vm4385 = vcmp.eq.f32.partialorder %v3425, %v4270
    %vm4386 = vcmp.eq.f32.partialorder %v3426, %v4270
    %vm4387 = vcmp.eq.f32.partialorder %v3427, %v4271
    %vm4388 = vcmp.eq.f32.partialorder %v3428, %v4271
    %vm4389 = vcmp.eq.f32.partialorder %v3429, %v4271
    %vm4390 = vcmp.eq.f32.partialorder %v3430, %v4271
    %vm4391 = vcmp.eq.f32.partialorder %v3431, %v4271
    %vm4392 = vcmp.eq.f32.partialorder %v3432, %v4271
    %vm4393 = vcmp.eq.f32.partialorder %v3433, %v4271
    %vm4394 = vcmp.eq.f32.partialorder %v3434, %v4271
    %vm4395 = vcmp.eq.f32.partialorder %v3435, %v4272
    %vm4396 = vcmp.eq.f32.partialorder %v3436, %v4272
    %vm4397 = vcmp.eq.f32.partialorder %v3437, %v4272
    %vm4398 = vcmp.eq.f32.partialorder %v3438, %v4272
    %vm4399 = vcmp.eq.f32.partialorder %v3439, %v4272
    %vm4400 = vcmp.eq.f32.partialorder %v3440, %v4272
    %vm4401 = vcmp.eq.f32.partialorder %v3441, %v4272
    %vm4402 = vcmp.eq.f32.partialorder %v3442, %v4272
    %vm4403 = vcmp.eq.f32.partialorder %v3443, %v4273
    %vm4404 = vcmp.eq.f32.partialorder %v3444, %v4273
    %vm4405 = vcmp.eq.f32.partialorder %v3445, %v4273
    %vm4406 = vcmp.eq.f32.partialorder %v3446, %v4273
    %vm4407 = vcmp.eq.f32.partialorder %v3447, %v4273
    %vm4408 = vcmp.eq.f32.partialorder %v3448, %v4273
    %vm4409 = vcmp.eq.f32.partialorder %v3449, %v4273
    %vm4410 = vcmp.eq.f32.partialorder %v3450, %v4273
    %vm4411 = vcmp.eq.f32.partialorder %v3451, %v4274
    %vm4412 = vcmp.eq.f32.partialorder %v3452, %v4274
    %vm4413 = vcmp.eq.f32.partialorder %v3453, %v4274
    %vm4414 = vcmp.eq.f32.partialorder %v3454, %v4274
    %vm4415 = vcmp.eq.f32.partialorder %v3455, %v4274
    %vm4416 = vcmp.eq.f32.partialorder %v3456, %v4274
    %vm4417 = vcmp.eq.f32.partialorder %v3457, %v4274
    %vm4418 = vcmp.eq.f32.partialorder %v3458, %v4274
    %v4419 = vlaneseq
    %v4420 = vshrl.u32 %v4419, 7
    %4422 = vset.pattern.permute.xlu0 %v4420
    %4423 = vperm.xlu0 %4422, %v3972
    %v4424 = vpop.permute.xlu0 %4423
    %v4425 = vlaneseq
    %v4426 = vshrl.u32 %v4425, 7
    %v4427 = vadd.s32 %v4426, 8
    %4428 = vset.pattern.permute.xlu0 %v4427
    %4429 = vperm.xlu0 %4428, %v3972
    %v4430 = vpop.permute.xlu0 %4429
    %v4431 = vlaneseq
    %v4432 = vshrl.u32 %v4431, 7
    %v4433 = vadd.s32 %v4432, 16
    %4434 = vset.pattern.permute.xlu0 %v4433
    %4435 = vperm.xlu0 %4434, %v3972
    %v4436 = vpop.permute.xlu0 %4435
    %v4437 = vlaneseq
    %v4438 = vshrl.u32 %v4437, 7
    %v4439 = vadd.s32 %v4438, 24
    %4440 = vset.pattern.permute.xlu0 %v4439
    %4441 = vperm.xlu0 %4440, %v3972
    %v4442 = vpop.permute.xlu0 %4441
    %v4443 = vlaneseq
    %v4444 = vshrl.u32 %v4443, 7
    %v4445 = vadd.s32 %v4444, 32
    %4446 = vset.pattern.permute.xlu0 %v4445
    %4447 = vperm.xlu0 %4446, %v3972
    %v4448 = vpop.permute.xlu0 %4447
    %v4449 = vlaneseq
    %v4450 = vshrl.u32 %v4449, 7
    %v4451 = vadd.s32 %v4450, 40
    %4452 = vset.pattern.permute.xlu0 %v4451
    %4453 = vperm.xlu0 %4452, %v3972
    %v4454 = vpop.permute.xlu0 %4453
    %v4455 = vlaneseq
    %v4456 = vshrl.u32 %v4455, 7
    %v4457 = vadd.s32 %v4456, 48
    %4458 = vset.pattern.permute.xlu0 %v4457
    %4459 = vperm.xlu0 %4458, %v3972
    %v4460 = vpop.permute.xlu0 %4459
    %v4461 = vlaneseq
    %v4462 = vshrl.u32 %v4461, 7
    %v4463 = vadd.s32 %v4462, 56
    %4464 = vset.pattern.permute.xlu0 %v4463
    %4465 = vperm.xlu0 %4464, %v3972
    %v4466 = vpop.permute.xlu0 %4465
    %v4467 = vsel %vm4291, %v4424, 64
    %v4468 = vsel %vm4292, %v4430, 64
    %v4469 = vsel %vm4293, %v4436, 64
    %v4470 = vsel %vm4294, %v4442, 64
    %v4471 = vsel %vm4295, %v4448, 64
    %v4472 = vsel %vm4296, %v4454, 64
    %v4473 = vsel %vm4297, %v4460, 64
    %v4474 = vsel %vm4298, %v4466, 64
    %v4475 = vsel %vm4299, %v4424, 64
    %v4476 = vsel %vm4300, %v4430, 64
    %v4477 = vsel %vm4301, %v4436, 64
    %v4478 = vsel %vm4302, %v4442, 64
    %v4479 = vsel %vm4303, %v4448, 64
    %v4480 = vsel %vm4304, %v4454, 64
    %v4481 = vsel %vm4305, %v4460, 64
    %v4482 = vsel %vm4306, %v4466, 64
    %v4483 = vsel %vm4307, %v4424, 64
    %v4484 = vsel %vm4308, %v4430, 64
    %v4485 = vsel %vm4309, %v4436, 64
    %v4486 = vsel %vm4310, %v4442, 64
    %v4487 = vsel %vm4311, %v4448, 64
    %v4488 = vsel %vm4312, %v4454, 64
    %v4489 = vsel %vm4313, %v4460, 64
    %v4490 = vsel %vm4314, %v4466, 64
    %v4491 = vsel %vm4315, %v4424, 64
    %v4492 = vsel %vm4316, %v4430, 64
    %v4493 = vsel %vm4317, %v4436, 64
    %v4494 = vsel %vm4318, %v4442, 64
    %v4495 = vsel %vm4319, %v4448, 64
    %v4496 = vsel %vm4320, %v4454, 64
    %v4497 = vsel %vm4321, %v4460, 64
    %v4498 = vsel %vm4322, %v4466, 64
    %v4499 = vsel %vm4323, %v4424, 64
    %v4500 = vsel %vm4324, %v4430, 64
    %v4501 = vsel %vm4325, %v4436, 64
    %v4502 = vsel %vm4326, %v4442, 64
    %v4503 = vsel %vm4327, %v4448, 64
    %v4504 = vsel %vm4328, %v4454, 64
    %v4505 = vsel %vm4329, %v4460, 64
    %v4506 = vsel %vm4330, %v4466, 64
    %v4507 = vsel %vm4331, %v4424, 64
    %v4508 = vsel %vm4332, %v4430, 64
    %v4509 = vsel %vm4333, %v4436, 64
    %v4510 = vsel %vm4334, %v4442, 64
    %v4511 = vsel %vm4335, %v4448, 64
    %v4512 = vsel %vm4336, %v4454, 64
    %v4513 = vsel %vm4337, %v4460, 64
    %v4514 = vsel %vm4338, %v4466, 64
    %v4515 = vsel %vm4339, %v4424, 64
    %v4516 = vsel %vm4340, %v4430, 64
    %v4517 = vsel %vm4341, %v4436, 64
    %v4518 = vsel %vm4342, %v4442, 64
    %v4519 = vsel %vm4343, %v4448, 64
    %v4520 = vsel %vm4344, %v4454, 64
    %v4521 = vsel %vm4345, %v4460, 64
    %v4522 = vsel %vm4346, %v4466, 64
    %v4523 = vsel %vm4347, %v4424, 64
    %v4524 = vsel %vm4348, %v4430, 64
    %v4525 = vsel %vm4349, %v4436, 64
    %v4526 = vsel %vm4350, %v4442, 64
    %v4527 = vsel %vm4351, %v4448, 64
    %v4528 = vsel %vm4352, %v4454, 64
    %v4529 = vsel %vm4353, %v4460, 64
    %v4530 = vsel %vm4354, %v4466, 64
    %v4531 = vsel %vm4355, %v4424, 64
    %v4532 = vsel %vm4356, %v4430, 64
    %v4533 = vsel %vm4357, %v4436, 64
    %v4534 = vsel %vm4358, %v4442, 64
    %v4535 = vsel %vm4359, %v4448, 64
    %v4536 = vsel %vm4360, %v4454, 64
    %v4537 = vsel %vm4361, %v4460, 64
    %v4538 = vsel %vm4362, %v4466, 64
    %v4539 = vsel %vm4363, %v4424, 64
    %v4540 = vsel %vm4364, %v4430, 64
    %v4541 = vsel %vm4365, %v4436, 64
    %v4542 = vsel %vm4366, %v4442, 64
    %v4543 = vsel %vm4367, %v4448, 64
    %v4544 = vsel %vm4368, %v4454, 64
    %v4545 = vsel %vm4369, %v4460, 64
    %v4546 = vsel %vm4370, %v4466, 64
    %v4547 = vsel %vm4371, %v4424, 64
    %v4548 = vsel %vm4372, %v4430, 64
    %v4549 = vsel %vm4373, %v4436, 64
    %v4550 = vsel %vm4374, %v4442, 64
    %v4551 = vsel %vm4375, %v4448, 64
    %v4552 = vsel %vm4376, %v4454, 64
    %v4553 = vsel %vm4377, %v4460, 64
    %v4554 = vsel %vm4378, %v4466, 64
    %v4555 = vsel %vm4379, %v4424, 64
    %v4556 = vsel %vm4380, %v4430, 64
    %v4557 = vsel %vm4381, %v4436, 64
    %v4558 = vsel %vm4382, %v4442, 64
    %v4559 = vsel %vm4383, %v4448, 64
    %v4560 = vsel %vm4384, %v4454, 64
    %v4561 = vsel %vm4385, %v4460, 64
    %v4562 = vsel %vm4386, %v4466, 64
    %v4563 = vsel %vm4387, %v4424, 64
    %v4564 = vsel %vm4388, %v4430, 64
    %v4565 = vsel %vm4389, %v4436, 64
    %v4566 = vsel %vm4390, %v4442, 64
    %v4567 = vsel %vm4391, %v4448, 64
    %v4568 = vsel %vm4392, %v4454, 64
    %v4569 = vsel %vm4393, %v4460, 64
    %v4570 = vsel %vm4394, %v4466, 64
    %v4571 = vsel %vm4395, %v4424, 64
    %v4572 = vsel %vm4396, %v4430, 64
    %v4573 = vsel %vm4397, %v4436, 64
    %v4574 = vsel %vm4398, %v4442, 64
    %v4575 = vsel %vm4399, %v4448, 64
    %v4576 = vsel %vm4400, %v4454, 64
    %v4577 = vsel %vm4401, %v4460, 64
    %v4578 = vsel %vm4402, %v4466, 64
    %v4579 = vsel %vm4403, %v4424, 64
    %v4580 = vsel %vm4404, %v4430, 64
    %v4581 = vsel %vm4405, %v4436, 64
    %v4582 = vsel %vm4406, %v4442, 64
    %v4583 = vsel %vm4407, %v4448, 64
    %v4584 = vsel %vm4408, %v4454, 64
    %v4585 = vsel %vm4409, %v4460, 64
    %v4586 = vsel %vm4410, %v4466, 64
    %v4587 = vsel %vm4411, %v4424, 64
    %v4588 = vsel %vm4412, %v4430, 64
    %v4589 = vsel %vm4413, %v4436, 64
    %v4590 = vsel %vm4414, %v4442, 64
    %v4591 = vsel %vm4415, %v4448, 64
    %v4592 = vsel %vm4416, %v4454, 64
    %v4593 = vsel %vm4417, %v4460, 64
    %v4594 = vsel %vm4418, %v4466, 64
    %4595 = vset.pattern.permute.xlu0 0
    %4596 = vperm.xlu0 %4595, %v4467
    %v4597 = vpop.permute.xlu0 %4596
    %4598 = vset.pattern.permute.xlu0 0
    %4599 = vperm.xlu0 %4598, %v4468
    %v4600 = vpop.permute.xlu0 %4599
    %4601 = vset.pattern.permute.xlu0 0
    %4602 = vperm.xlu0 %4601, %v4469
    %v4603 = vpop.permute.xlu0 %4602
    %4604 = vset.pattern.permute.xlu0 0
    %4605 = vperm.xlu0 %4604, %v4470
    %v4606 = vpop.permute.xlu0 %4605
    %4607 = vset.pattern.permute.xlu0 0
    %4608 = vperm.xlu0 %4607, %v4471
    %v4609 = vpop.permute.xlu0 %4608
    %4610 = vset.pattern.permute.xlu0 0
    %4611 = vperm.xlu0 %4610, %v4472
    %v4612 = vpop.permute.xlu0 %4611
    %4613 = vset.pattern.permute.xlu0 0
    %4614 = vperm.xlu0 %4613, %v4473
    %v4615 = vpop.permute.xlu0 %4614
    %4616 = vset.pattern.permute.xlu0 0
    %4617 = vperm.xlu0 %4616, %v4474
    %v4618 = vpop.permute.xlu0 %4617
    %4619 = vset.pattern.permute.xlu0 0
    %4620 = vperm.xlu0 %4619, %v4475
    %v4621 = vpop.permute.xlu0 %4620
    %4622 = vset.pattern.permute.xlu0 0
    %4623 = vperm.xlu0 %4622, %v4476
    %v4624 = vpop.permute.xlu0 %4623
    %4625 = vset.pattern.permute.xlu0 0
    %4626 = vperm.xlu0 %4625, %v4477
    %v4627 = vpop.permute.xlu0 %4626
    %4628 = vset.pattern.permute.xlu0 0
    %4629 = vperm.xlu0 %4628, %v4478
    %v4630 = vpop.permute.xlu0 %4629
    %4631 = vset.pattern.permute.xlu0 0
    %4632 = vperm.xlu0 %4631, %v4479
    %v4633 = vpop.permute.xlu0 %4632
    %4634 = vset.pattern.permute.xlu0 0
    %4635 = vperm.xlu0 %4634, %v4480
    %v4636 = vpop.permute.xlu0 %4635
    %4637 = vset.pattern.permute.xlu0 0
    %4638 = vperm.xlu0 %4637, %v4481
    %v4639 = vpop.permute.xlu0 %4638
    %4640 = vset.pattern.permute.xlu0 0
    %4641 = vperm.xlu0 %4640, %v4482
    %v4642 = vpop.permute.xlu0 %4641
    %4643 = vset.pattern.permute.xlu0 0
    %4644 = vperm.xlu0 %4643, %v4483
    %v4645 = vpop.permute.xlu0 %4644
    %4646 = vset.pattern.permute.xlu0 0
    %4647 = vperm.xlu0 %4646, %v4484
    %v4648 = vpop.permute.xlu0 %4647
    %4649 = vset.pattern.permute.xlu0 0
    %4650 = vperm.xlu0 %4649, %v4485
    %v4651 = vpop.permute.xlu0 %4650
    %4652 = vset.pattern.permute.xlu0 0
    %4653 = vperm.xlu0 %4652, %v4486
    %v4654 = vpop.permute.xlu0 %4653
    %4655 = vset.pattern.permute.xlu0 0
    %4656 = vperm.xlu0 %4655, %v4487
    %v4657 = vpop.permute.xlu0 %4656
    %4658 = vset.pattern.permute.xlu0 0
    %4659 = vperm.xlu0 %4658, %v4488
    %v4660 = vpop.permute.xlu0 %4659
    %4661 = vset.pattern.permute.xlu0 0
    %4662 = vperm.xlu0 %4661, %v4489
    %v4663 = vpop.permute.xlu0 %4662
    %4664 = vset.pattern.permute.xlu0 0
    %4665 = vperm.xlu0 %4664, %v4490
    %v4666 = vpop.permute.xlu0 %4665
    %4667 = vset.pattern.permute.xlu0 0
    %4668 = vperm.xlu0 %4667, %v4491
    %v4669 = vpop.permute.xlu0 %4668
    %4670 = vset.pattern.permute.xlu0 0
    %4671 = vperm.xlu0 %4670, %v4492
    %v4672 = vpop.permute.xlu0 %4671
    %4673 = vset.pattern.permute.xlu0 0
    %4674 = vperm.xlu0 %4673, %v4493
    %v4675 = vpop.permute.xlu0 %4674
    %4676 = vset.pattern.permute.xlu0 0
    %4677 = vperm.xlu0 %4676, %v4494
    %v4678 = vpop.permute.xlu0 %4677
    %4679 = vset.pattern.permute.xlu0 0
    %4680 = vperm.xlu0 %4679, %v4495
    %v4681 = vpop.permute.xlu0 %4680
    %4682 = vset.pattern.permute.xlu0 0
    %4683 = vperm.xlu0 %4682, %v4496
    %v4684 = vpop.permute.xlu0 %4683
    %4685 = vset.pattern.permute.xlu0 0
    %4686 = vperm.xlu0 %4685, %v4497
    %v4687 = vpop.permute.xlu0 %4686
    %4688 = vset.pattern.permute.xlu0 0
    %4689 = vperm.xlu0 %4688, %v4498
    %v4690 = vpop.permute.xlu0 %4689
    %4691 = vset.pattern.permute.xlu0 0
    %4692 = vperm.xlu0 %4691, %v4499
    %v4693 = vpop.permute.xlu0 %4692
    %4694 = vset.pattern.permute.xlu0 0
    %4695 = vperm.xlu0 %4694, %v4500
    %v4696 = vpop.permute.xlu0 %4695
    %4697 = vset.pattern.permute.xlu0 0
    %4698 = vperm.xlu0 %4697, %v4501
    %v4699 = vpop.permute.xlu0 %4698
    %4700 = vset.pattern.permute.xlu0 0
    %4701 = vperm.xlu0 %4700, %v4502
    %v4702 = vpop.permute.xlu0 %4701
    %4703 = vset.pattern.permute.xlu0 0
    %4704 = vperm.xlu0 %4703, %v4503
    %v4705 = vpop.permute.xlu0 %4704
    %4706 = vset.pattern.permute.xlu0 0
    %4707 = vperm.xlu0 %4706, %v4504
    %v4708 = vpop.permute.xlu0 %4707
    %4709 = vset.pattern.permute.xlu0 0
    %4710 = vperm.xlu0 %4709, %v4505
    %v4711 = vpop.permute.xlu0 %4710
    %4712 = vset.pattern.permute.xlu0 0
    %4713 = vperm.xlu0 %4712, %v4506
    %v4714 = vpop.permute.xlu0 %4713
    %4715 = vset.pattern.permute.xlu0 0
    %4716 = vperm.xlu0 %4715, %v4507
    %v4717 = vpop.permute.xlu0 %4716
    %4718 = vset.pattern.permute.xlu0 0
    %4719 = vperm.xlu0 %4718, %v4508
    %v4720 = vpop.permute.xlu0 %4719
    %4721 = vset.pattern.permute.xlu0 0
    %4722 = vperm.xlu0 %4721, %v4509
    %v4723 = vpop.permute.xlu0 %4722
    %4724 = vset.pattern.permute.xlu0 0
    %4725 = vperm.xlu0 %4724, %v4510
    %v4726 = vpop.permute.xlu0 %4725
    %4727 = vset.pattern.permute.xlu0 0
    %4728 = vperm.xlu0 %4727, %v4511
    %v4729 = vpop.permute.xlu0 %4728
    %4730 = vset.pattern.permute.xlu0 0
    %4731 = vperm.xlu0 %4730, %v4512
    %v4732 = vpop.permute.xlu0 %4731
    %4733 = vset.pattern.permute.xlu0 0
    %4734 = vperm.xlu0 %4733, %v4513
    %v4735 = vpop.permute.xlu0 %4734
    %4736 = vset.pattern.permute.xlu0 0
    %4737 = vperm.xlu0 %4736, %v4514
    %v4738 = vpop.permute.xlu0 %4737
    %4739 = vset.pattern.permute.xlu0 0
    %4740 = vperm.xlu0 %4739, %v4515
    %v4741 = vpop.permute.xlu0 %4740
    %4742 = vset.pattern.permute.xlu0 0
    %4743 = vperm.xlu0 %4742, %v4516
    %v4744 = vpop.permute.xlu0 %4743
    %4745 = vset.pattern.permute.xlu0 0
    %4746 = vperm.xlu0 %4745, %v4517
    %v4747 = vpop.permute.xlu0 %4746
    %4748 = vset.pattern.permute.xlu0 0
    %4749 = vperm.xlu0 %4748, %v4518
    %v4750 = vpop.permute.xlu0 %4749
    %4751 = vset.pattern.permute.xlu0 0
    %4752 = vperm.xlu0 %4751, %v4519
    %v4753 = vpop.permute.xlu0 %4752
    %4754 = vset.pattern.permute.xlu0 0
    %4755 = vperm.xlu0 %4754, %v4520
    %v4756 = vpop.permute.xlu0 %4755
    %4757 = vset.pattern.permute.xlu0 0
    %4758 = vperm.xlu0 %4757, %v4521
    %v4759 = vpop.permute.xlu0 %4758
    %4760 = vset.pattern.permute.xlu0 0
    %4761 = vperm.xlu0 %4760, %v4522
    %v4762 = vpop.permute.xlu0 %4761
    %4763 = vset.pattern.permute.xlu0 0
    %4764 = vperm.xlu0 %4763, %v4523
    %v4765 = vpop.permute.xlu0 %4764
    %4766 = vset.pattern.permute.xlu0 0
    %4767 = vperm.xlu0 %4766, %v4524
    %v4768 = vpop.permute.xlu0 %4767
    %4769 = vset.pattern.permute.xlu0 0
    %4770 = vperm.xlu0 %4769, %v4525
    %v4771 = vpop.permute.xlu0 %4770
    %4772 = vset.pattern.permute.xlu0 0
    %4773 = vperm.xlu0 %4772, %v4526
    %v4774 = vpop.permute.xlu0 %4773
    %4775 = vset.pattern.permute.xlu0 0
    %4776 = vperm.xlu0 %4775, %v4527
    %v4777 = vpop.permute.xlu0 %4776
    %4778 = vset.pattern.permute.xlu0 0
    %4779 = vperm.xlu0 %4778, %v4528
    %v4780 = vpop.permute.xlu0 %4779
    %4781 = vset.pattern.permute.xlu0 0
    %4782 = vperm.xlu0 %4781, %v4529
    %v4783 = vpop.permute.xlu0 %4782
    %4784 = vset.pattern.permute.xlu0 0
    %4785 = vperm.xlu0 %4784, %v4530
    %v4786 = vpop.permute.xlu0 %4785
    %4787 = vset.pattern.permute.xlu0 0
    %4788 = vperm.xlu0 %4787, %v4531
    %v4789 = vpop.permute.xlu0 %4788
    %4790 = vset.pattern.permute.xlu0 0
    %4791 = vperm.xlu0 %4790, %v4532
    %v4792 = vpop.permute.xlu0 %4791
    %4793 = vset.pattern.permute.xlu0 0
    %4794 = vperm.xlu0 %4793, %v4533
    %v4795 = vpop.permute.xlu0 %4794
    %4796 = vset.pattern.permute.xlu0 0
    %4797 = vperm.xlu0 %4796, %v4534
    %v4798 = vpop.permute.xlu0 %4797
    %4799 = vset.pattern.permute.xlu0 0
    %4800 = vperm.xlu0 %4799, %v4535
    %v4801 = vpop.permute.xlu0 %4800
    %4802 = vset.pattern.permute.xlu0 0
    %4803 = vperm.xlu0 %4802, %v4536
    %v4804 = vpop.permute.xlu0 %4803
    %4805 = vset.pattern.permute.xlu0 0
    %4806 = vperm.xlu0 %4805, %v4537
    %v4807 = vpop.permute.xlu0 %4806
    %4808 = vset.pattern.permute.xlu0 0
    %4809 = vperm.xlu0 %4808, %v4538
    %v4810 = vpop.permute.xlu0 %4809
    %4811 = vset.pattern.permute.xlu0 0
    %4812 = vperm.xlu0 %4811, %v4539
    %v4813 = vpop.permute.xlu0 %4812
    %4814 = vset.pattern.permute.xlu0 0
    %4815 = vperm.xlu0 %4814, %v4540
    %v4816 = vpop.permute.xlu0 %4815
    %4817 = vset.pattern.permute.xlu0 0
    %4818 = vperm.xlu0 %4817, %v4541
    %v4819 = vpop.permute.xlu0 %4818
    %4820 = vset.pattern.permute.xlu0 0
    %4821 = vperm.xlu0 %4820, %v4542
    %v4822 = vpop.permute.xlu0 %4821
    %4823 = vset.pattern.permute.xlu0 0
    %4824 = vperm.xlu0 %4823, %v4543
    %v4825 = vpop.permute.xlu0 %4824
    %4826 = vset.pattern.permute.xlu0 0
    %4827 = vperm.xlu0 %4826, %v4544
    %v4828 = vpop.permute.xlu0 %4827
    %4829 = vset.pattern.permute.xlu0 0
    %4830 = vperm.xlu0 %4829, %v4545
    %v4831 = vpop.permute.xlu0 %4830
    %4832 = vset.pattern.permute.xlu0 0
    %4833 = vperm.xlu0 %4832, %v4546
    %v4834 = vpop.permute.xlu0 %4833
    %4835 = vset.pattern.permute.xlu0 0
    %4836 = vperm.xlu0 %4835, %v4547
    %v4837 = vpop.permute.xlu0 %4836
    %4838 = vset.pattern.permute.xlu0 0
    %4839 = vperm.xlu0 %4838, %v4548
    %v4840 = vpop.permute.xlu0 %4839
    %4841 = vset.pattern.permute.xlu0 0
    %4842 = vperm.xlu0 %4841, %v4549
    %v4843 = vpop.permute.xlu0 %4842
    %4844 = vset.pattern.permute.xlu0 0
    %4845 = vperm.xlu0 %4844, %v4550
    %v4846 = vpop.permute.xlu0 %4845
    %4847 = vset.pattern.permute.xlu0 0
    %4848 = vperm.xlu0 %4847, %v4551
    %v4849 = vpop.permute.xlu0 %4848
    %4850 = vset.pattern.permute.xlu0 0
    %4851 = vperm.xlu0 %4850, %v4552
    %v4852 = vpop.permute.xlu0 %4851
    %4853 = vset.pattern.permute.xlu0 0
    %4854 = vperm.xlu0 %4853, %v4553
    %v4855 = vpop.permute.xlu0 %4854
    %4856 = vset.pattern.permute.xlu0 0
    %4857 = vperm.xlu0 %4856, %v4554
    %v4858 = vpop.permute.xlu0 %4857
    %4859 = vset.pattern.permute.xlu0 0
    %4860 = vperm.xlu0 %4859, %v4555
    %v4861 = vpop.permute.xlu0 %4860
    %4862 = vset.pattern.permute.xlu0 0
    %4863 = vperm.xlu0 %4862, %v4556
    %v4864 = vpop.permute.xlu0 %4863
    %4865 = vset.pattern.permute.xlu0 0
    %4866 = vperm.xlu0 %4865, %v4557
    %v4867 = vpop.permute.xlu0 %4866
    %4868 = vset.pattern.permute.xlu0 0
    %4869 = vperm.xlu0 %4868, %v4558
    %v4870 = vpop.permute.xlu0 %4869
    %4871 = vset.pattern.permute.xlu0 0
    %4872 = vperm.xlu0 %4871, %v4559
    %v4873 = vpop.permute.xlu0 %4872
    %4874 = vset.pattern.permute.xlu0 0
    %4875 = vperm.xlu0 %4874, %v4560
    %v4876 = vpop.permute.xlu0 %4875
    %4877 = vset.pattern.permute.xlu0 0
    %4878 = vperm.xlu0 %4877, %v4561
    %v4879 = vpop.permute.xlu0 %4878
    %4880 = vset.pattern.permute.xlu0 0
    %4881 = vperm.xlu0 %4880, %v4562
    %v4882 = vpop.permute.xlu0 %4881
    %4883 = vset.pattern.permute.xlu0 0
    %4884 = vperm.xlu0 %4883, %v4563
    %v4885 = vpop.permute.xlu0 %4884
    %4886 = vset.pattern.permute.xlu0 0
    %4887 = vperm.xlu0 %4886, %v4564
    %v4888 = vpop.permute.xlu0 %4887
    %4889 = vset.pattern.permute.xlu0 0
    %4890 = vperm.xlu0 %4889, %v4565
    %v4891 = vpop.permute.xlu0 %4890
    %4892 = vset.pattern.permute.xlu0 0
    %4893 = vperm.xlu0 %4892, %v4566
    %v4894 = vpop.permute.xlu0 %4893
    %4895 = vset.pattern.permute.xlu0 0
    %4896 = vperm.xlu0 %4895, %v4567
    %v4897 = vpop.permute.xlu0 %4896
    %4898 = vset.pattern.permute.xlu0 0
    %4899 = vperm.xlu0 %4898, %v4568
    %v4900 = vpop.permute.xlu0 %4899
    %4901 = vset.pattern.permute.xlu0 0
    %4902 = vperm.xlu0 %4901, %v4569
    %v4903 = vpop.permute.xlu0 %4902
    %4904 = vset.pattern.permute.xlu0 0
    %4905 = vperm.xlu0 %4904, %v4570
    %v4906 = vpop.permute.xlu0 %4905
    %4907 = vset.pattern.permute.xlu0 0
    %4908 = vperm.xlu0 %4907, %v4571
    %v4909 = vpop.permute.xlu0 %4908
    %4910 = vset.pattern.permute.xlu0 0
    %4911 = vperm.xlu0 %4910, %v4572
    %v4912 = vpop.permute.xlu0 %4911
    %4913 = vset.pattern.permute.xlu0 0
    %4914 = vperm.xlu0 %4913, %v4573
    %v4915 = vpop.permute.xlu0 %4914
    %4916 = vset.pattern.permute.xlu0 0
    %4917 = vperm.xlu0 %4916, %v4574
    %v4918 = vpop.permute.xlu0 %4917
    %4919 = vset.pattern.permute.xlu0 0
    %4920 = vperm.xlu0 %4919, %v4575
    %v4921 = vpop.permute.xlu0 %4920
    %4922 = vset.pattern.permute.xlu0 0
    %4923 = vperm.xlu0 %4922, %v4576
    %v4924 = vpop.permute.xlu0 %4923
    %4925 = vset.pattern.permute.xlu0 0
    %4926 = vperm.xlu0 %4925, %v4577
    %v4927 = vpop.permute.xlu0 %4926
    %4928 = vset.pattern.permute.xlu0 0
    %4929 = vperm.xlu0 %4928, %v4578
    %v4930 = vpop.permute.xlu0 %4929
    %4931 = vset.pattern.permute.xlu0 0
    %4932 = vperm.xlu0 %4931, %v4579
    %v4933 = vpop.permute.xlu0 %4932
    %4934 = vset.pattern.permute.xlu0 0
    %4935 = vperm.xlu0 %4934, %v4580
    %v4936 = vpop.permute.xlu0 %4935
    %4937 = vset.pattern.permute.xlu0 0
    %4938 = vperm.xlu0 %4937, %v4581
    %v4939 = vpop.permute.xlu0 %4938
    %4940 = vset.pattern.permute.xlu0 0
    %4941 = vperm.xlu0 %4940, %v4582
    %v4942 = vpop.permute.xlu0 %4941
    %4943 = vset.pattern.permute.xlu0 0
    %4944 = vperm.xlu0 %4943, %v4583
    %v4945 = vpop.permute.xlu0 %4944
    %4946 = vset.pattern.permute.xlu0 0
    %4947 = vperm.xlu0 %4946, %v4584
    %v4948 = vpop.permute.xlu0 %4947
    %4949 = vset.pattern.permute.xlu0 0
    %4950 = vperm.xlu0 %4949, %v4585
    %v4951 = vpop.permute.xlu0 %4950
    %4952 = vset.pattern.permute.xlu0 0
    %4953 = vperm.xlu0 %4952, %v4586
    %v4954 = vpop.permute.xlu0 %4953
    %4955 = vset.pattern.permute.xlu0 0
    %4956 = vperm.xlu0 %4955, %v4587
    %v4957 = vpop.permute.xlu0 %4956
    %4958 = vset.pattern.permute.xlu0 0
    %4959 = vperm.xlu0 %4958, %v4588
    %v4960 = vpop.permute.xlu0 %4959
    %4961 = vset.pattern.permute.xlu0 0
    %4962 = vperm.xlu0 %4961, %v4589
    %v4963 = vpop.permute.xlu0 %4962
    %4964 = vset.pattern.permute.xlu0 0
    %4965 = vperm.xlu0 %4964, %v4590
    %v4966 = vpop.permute.xlu0 %4965
    %4967 = vset.pattern.permute.xlu0 0
    %4968 = vperm.xlu0 %4967, %v4591
    %v4969 = vpop.permute.xlu0 %4968
    %4970 = vset.pattern.permute.xlu0 0
    %4971 = vperm.xlu0 %4970, %v4592
    %v4972 = vpop.permute.xlu0 %4971
    %4973 = vset.pattern.permute.xlu0 0
    %4974 = vperm.xlu0 %4973, %v4593
    %v4975 = vpop.permute.xlu0 %4974
    %4976 = vset.pattern.permute.xlu0 0
    %4977 = vperm.xlu0 %4976, %v4594
    %v4978 = vpop.permute.xlu0 %4977
    %v4979 = vperm.slane %v4597, %v3972
    %v4980 = vperm.slane %v4600, %v3974
    %v4981 = vsel %vm3976, %v4980, %v4979
    %v4982 = vperm.slane %v4603, %v3978
    %v4983 = vsel %vm3980, %v4982, %v4981
    %v4984 = vperm.slane %v4606, %v3982
    %v4985 = vsel %vm3984, %v4984, %v4983
    %v4986 = vperm.slane %v4609, %v3986
    %v4987 = vsel %vm3988, %v4986, %v4985
    %v4988 = vperm.slane %v4612, %v3990
    %v4989 = vsel %vm3992, %v4988, %v4987
    %v4990 = vperm.slane %v4615, %v3994
    %v4991 = vsel %vm3996, %v4990, %v4989
    %v4992 = vperm.slane %v4618, %v3998
    %v4993 = vsel %vm4000, %v4992, %v4991
    %v4994 = vperm.slane %v4621, %v3972
    %v4995 = vperm.slane %v4624, %v3974
    %v4996 = vsel %vm3976, %v4995, %v4994
    %v4997 = vperm.slane %v4627, %v3978
    %v4998 = vsel %vm3980, %v4997, %v4996
    %v4999 = vperm.slane %v4630, %v3982
    %v5000 = vsel %vm3984, %v4999, %v4998
    %v5001 = vperm.slane %v4633, %v3986
    %v5002 = vsel %vm3988, %v5001, %v5000
    %v5003 = vperm.slane %v4636, %v3990
    %v5004 = vsel %vm3992, %v5003, %v5002
    %v5005 = vperm.slane %v4639, %v3994
    %v5006 = vsel %vm3996, %v5005, %v5004
    %v5007 = vperm.slane %v4642, %v3998
    %v5008 = vsel %vm4000, %v5007, %v5006
    %v5009 = vperm.slane %v4645, %v3972
    %v5010 = vperm.slane %v4648, %v3974
    %v5011 = vsel %vm3976, %v5010, %v5009
    %v5012 = vperm.slane %v4651, %v3978
    %v5013 = vsel %vm3980, %v5012, %v5011
    %v5014 = vperm.slane %v4654, %v3982
    %v5015 = vsel %vm3984, %v5014, %v5013
    %v5016 = vperm.slane %v4657, %v3986
    %v5017 = vsel %vm3988, %v5016, %v5015
    %v5018 = vperm.slane %v4660, %v3990
    %v5019 = vsel %vm3992, %v5018, %v5017
    %v5020 = vperm.slane %v4663, %v3994
    %v5021 = vsel %vm3996, %v5020, %v5019
    %v5022 = vperm.slane %v4666, %v3998
    %v5023 = vsel %vm4000, %v5022, %v5021
    %v5024 = vperm.slane %v4669, %v3972
    %v5025 = vperm.slane %v4672, %v3974
    %v5026 = vsel %vm3976, %v5025, %v5024
    %v5027 = vperm.slane %v4675, %v3978
    %v5028 = vsel %vm3980, %v5027, %v5026
    %v5029 = vperm.slane %v4678, %v3982
    %v5030 = vsel %vm3984, %v5029, %v5028
    %v5031 = vperm.slane %v4681, %v3986
    %v5032 = vsel %vm3988, %v5031, %v5030
    %v5033 = vperm.slane %v4684, %v3990
    %v5034 = vsel %vm3992, %v5033, %v5032
    %v5035 = vperm.slane %v4687, %v3994
    %v5036 = vsel %vm3996, %v5035, %v5034
    %v5037 = vperm.slane %v4690, %v3998
    %v5038 = vsel %vm4000, %v5037, %v5036
    %v5039 = vperm.slane %v4693, %v3972
    %v5040 = vperm.slane %v4696, %v3974
    %v5041 = vsel %vm3976, %v5040, %v5039
    %v5042 = vperm.slane %v4699, %v3978
    %v5043 = vsel %vm3980, %v5042, %v5041
    %v5044 = vperm.slane %v4702, %v3982
    %v5045 = vsel %vm3984, %v5044, %v5043
    %v5046 = vperm.slane %v4705, %v3986
    %v5047 = vsel %vm3988, %v5046, %v5045
    %v5048 = vperm.slane %v4708, %v3990
    %v5049 = vsel %vm3992, %v5048, %v5047
    %v5050 = vperm.slane %v4711, %v3994
    %v5051 = vsel %vm3996, %v5050, %v5049
    %v5052 = vperm.slane %v4714, %v3998
    %v5053 = vsel %vm4000, %v5052, %v5051
    %v5054 = vperm.slane %v4717, %v3972
    %v5055 = vperm.slane %v4720, %v3974
    %v5056 = vsel %vm3976, %v5055, %v5054
    %v5057 = vperm.slane %v4723, %v3978
    %v5058 = vsel %vm3980, %v5057, %v5056
    %v5059 = vperm.slane %v4726, %v3982
    %v5060 = vsel %vm3984, %v5059, %v5058
    %v5061 = vperm.slane %v4729, %v3986
    %v5062 = vsel %vm3988, %v5061, %v5060
    %v5063 = vperm.slane %v4732, %v3990
    %v5064 = vsel %vm3992, %v5063, %v5062
    %v5065 = vperm.slane %v4735, %v3994
    %v5066 = vsel %vm3996, %v5065, %v5064
    %v5067 = vperm.slane %v4738, %v3998
    %v5068 = vsel %vm4000, %v5067, %v5066
    %v5069 = vperm.slane %v4741, %v3972
    %v5070 = vperm.slane %v4744, %v3974
    %v5071 = vsel %vm3976, %v5070, %v5069
    %v5072 = vperm.slane %v4747, %v3978
    %v5073 = vsel %vm3980, %v5072, %v5071
    %v5074 = vperm.slane %v4750, %v3982
    %v5075 = vsel %vm3984, %v5074, %v5073
    %v5076 = vperm.slane %v4753, %v3986
    %v5077 = vsel %vm3988, %v5076, %v5075
    %v5078 = vperm.slane %v4756, %v3990
    %v5079 = vsel %vm3992, %v5078, %v5077
    %v5080 = vperm.slane %v4759, %v3994
    %v5081 = vsel %vm3996, %v5080, %v5079
    %v5082 = vperm.slane %v4762, %v3998
    %v5083 = vsel %vm4000, %v5082, %v5081
    %v5084 = vperm.slane %v4765, %v3972
    %v5085 = vperm.slane %v4768, %v3974
    %v5086 = vsel %vm3976, %v5085, %v5084
    %v5087 = vperm.slane %v4771, %v3978
    %v5088 = vsel %vm3980, %v5087, %v5086
    %v5089 = vperm.slane %v4774, %v3982
    %v5090 = vsel %vm3984, %v5089, %v5088
    %v5091 = vperm.slane %v4777, %v3986
    %v5092 = vsel %vm3988, %v5091, %v5090
    %v5093 = vperm.slane %v4780, %v3990
    %v5094 = vsel %vm3992, %v5093, %v5092
    %v5095 = vperm.slane %v4783, %v3994
    %v5096 = vsel %vm3996, %v5095, %v5094
    %v5097 = vperm.slane %v4786, %v3998
    %v5098 = vsel %vm4000, %v5097, %v5096
    %v5099 = vperm.slane %v4789, %v3972
    %v5100 = vperm.slane %v4792, %v3974
    %v5101 = vsel %vm3976, %v5100, %v5099
    %v5102 = vperm.slane %v4795, %v3978
    %v5103 = vsel %vm3980, %v5102, %v5101
    %v5104 = vperm.slane %v4798, %v3982
    %v5105 = vsel %vm3984, %v5104, %v5103
    %v5106 = vperm.slane %v4801, %v3986
    %v5107 = vsel %vm3988, %v5106, %v5105
    %v5108 = vperm.slane %v4804, %v3990
    %v5109 = vsel %vm3992, %v5108, %v5107
    %v5110 = vperm.slane %v4807, %v3994
    %v5111 = vsel %vm3996, %v5110, %v5109
    %v5112 = vperm.slane %v4810, %v3998
    %v5113 = vsel %vm4000, %v5112, %v5111
    %v5114 = vperm.slane %v4813, %v3972
    %v5115 = vperm.slane %v4816, %v3974
    %v5116 = vsel %vm3976, %v5115, %v5114
    %v5117 = vperm.slane %v4819, %v3978
    %v5118 = vsel %vm3980, %v5117, %v5116
    %v5119 = vperm.slane %v4822, %v3982
    %v5120 = vsel %vm3984, %v5119, %v5118
    %v5121 = vperm.slane %v4825, %v3986
    %v5122 = vsel %vm3988, %v5121, %v5120
    %v5123 = vperm.slane %v4828, %v3990
    %v5124 = vsel %vm3992, %v5123, %v5122
    %v5125 = vperm.slane %v4831, %v3994
    %v5126 = vsel %vm3996, %v5125, %v5124
    %v5127 = vperm.slane %v4834, %v3998
    %v5128 = vsel %vm4000, %v5127, %v5126
    %v5129 = vperm.slane %v4837, %v3972
    %v5130 = vperm.slane %v4840, %v3974
    %v5131 = vsel %vm3976, %v5130, %v5129
    %v5132 = vperm.slane %v4843, %v3978
    %v5133 = vsel %vm3980, %v5132, %v5131
    %v5134 = vperm.slane %v4846, %v3982
    %v5135 = vsel %vm3984, %v5134, %v5133
    %v5136 = vperm.slane %v4849, %v3986
    %v5137 = vsel %vm3988, %v5136, %v5135
    %v5138 = vperm.slane %v4852, %v3990
    %v5139 = vsel %vm3992, %v5138, %v5137
    %v5140 = vperm.slane %v4855, %v3994
    %v5141 = vsel %vm3996, %v5140, %v5139
    %v5142 = vperm.slane %v4858, %v3998
    %v5143 = vsel %vm4000, %v5142, %v5141
    %v5144 = vperm.slane %v4861, %v3972
    %v5145 = vperm.slane %v4864, %v3974
    %v5146 = vsel %vm3976, %v5145, %v5144
    %v5147 = vperm.slane %v4867, %v3978
    %v5148 = vsel %vm3980, %v5147, %v5146
    %v5149 = vperm.slane %v4870, %v3982
    %v5150 = vsel %vm3984, %v5149, %v5148
    %v5151 = vperm.slane %v4873, %v3986
    %v5152 = vsel %vm3988, %v5151, %v5150
    %v5153 = vperm.slane %v4876, %v3990
    %v5154 = vsel %vm3992, %v5153, %v5152
    %v5155 = vperm.slane %v4879, %v3994
    %v5156 = vsel %vm3996, %v5155, %v5154
    %v5157 = vperm.slane %v4882, %v3998
    %v5158 = vsel %vm4000, %v5157, %v5156
    %v5159 = vperm.slane %v4885, %v3972
    %v5160 = vperm.slane %v4888, %v3974
    %v5161 = vsel %vm3976, %v5160, %v5159
    %v5162 = vperm.slane %v4891, %v3978
    %v5163 = vsel %vm3980, %v5162, %v5161
    %v5164 = vperm.slane %v4894, %v3982
    %v5165 = vsel %vm3984, %v5164, %v5163
    %v5166 = vperm.slane %v4897, %v3986
    %v5167 = vsel %vm3988, %v5166, %v5165
    %v5168 = vperm.slane %v4900, %v3990
    %v5169 = vsel %vm3992, %v5168, %v5167
    %v5170 = vperm.slane %v4903, %v3994
    %v5171 = vsel %vm3996, %v5170, %v5169
    %v5172 = vperm.slane %v4906, %v3998
    %v5173 = vsel %vm4000, %v5172, %v5171
    %v5174 = vperm.slane %v4909, %v3972
    %v5175 = vperm.slane %v4912, %v3974
    %v5176 = vsel %vm3976, %v5175, %v5174
    %v5177 = vperm.slane %v4915, %v3978
    %v5178 = vsel %vm3980, %v5177, %v5176
    %v5179 = vperm.slane %v4918, %v3982
    %v5180 = vsel %vm3984, %v5179, %v5178
    %v5181 = vperm.slane %v4921, %v3986
    %v5182 = vsel %vm3988, %v5181, %v5180
    %v5183 = vperm.slane %v4924, %v3990
    %v5184 = vsel %vm3992, %v5183, %v5182
    %v5185 = vperm.slane %v4927, %v3994
    %v5186 = vsel %vm3996, %v5185, %v5184
    %v5187 = vperm.slane %v4930, %v3998
    %v5188 = vsel %vm4000, %v5187, %v5186
    %v5189 = vperm.slane %v4933, %v3972
    %v5190 = vperm.slane %v4936, %v3974
    %v5191 = vsel %vm3976, %v5190, %v5189
    %v5192 = vperm.slane %v4939, %v3978
    %v5193 = vsel %vm3980, %v5192, %v5191
    %v5194 = vperm.slane %v4942, %v3982
    %v5195 = vsel %vm3984, %v5194, %v5193
    %v5196 = vperm.slane %v4945, %v3986
    %v5197 = vsel %vm3988, %v5196, %v5195
    %v5198 = vperm.slane %v4948, %v3990
    %v5199 = vsel %vm3992, %v5198, %v5197
    %v5200 = vperm.slane %v4951, %v3994
    %v5201 = vsel %vm3996, %v5200, %v5199
    %v5202 = vperm.slane %v4954, %v3998
    %v5203 = vsel %vm4000, %v5202, %v5201
    %v5204 = vperm.slane %v4957, %v3972
    %v5205 = vperm.slane %v4960, %v3974
    %v5206 = vsel %vm3976, %v5205, %v5204
    %v5207 = vperm.slane %v4963, %v3978
    %v5208 = vsel %vm3980, %v5207, %v5206
    %v5209 = vperm.slane %v4966, %v3982
    %v5210 = vsel %vm3984, %v5209, %v5208
    %v5211 = vperm.slane %v4969, %v3986
    %v5212 = vsel %vm3988, %v5211, %v5210
    %v5213 = vperm.slane %v4972, %v3990
    %v5214 = vsel %vm3992, %v5213, %v5212
    %v5215 = vperm.slane %v4975, %v3994
    %v5216 = vsel %vm3996, %v5215, %v5214
    %v5217 = vperm.slane %v4978, %v3998
    %v5218 = vsel %vm4000, %v5217, %v5216
    %v5219 = vsel %vm4227, %v5008, %v4993
    %v5220 = vsel %vm4229, %v5023, %v5219
    %v5221 = vsel %vm4231, %v5038, %v5220
    %v5222 = vsel %vm4233, %v5053, %v5221
    %v5223 = vsel %vm4235, %v5068, %v5222
    %v5224 = vsel %vm4237, %v5083, %v5223
    %v5225 = vsel %vm4239, %v5098, %v5224
    %v5226 = vsel %vm4227, %v5128, %v5113
    %v5227 = vsel %vm4229, %v5143, %v5226
    %v5228 = vsel %vm4231, %v5158, %v5227
    %v5229 = vsel %vm4233, %v5173, %v5228
    %v5230 = vsel %vm4235, %v5188, %v5229
    %v5231 = vsel %vm4237, %v5203, %v5230
    %v5232 = vsel %vm4239, %v5218, %v5231
    %v5233 = vsel %vm4250, %v5225, 2147483647
    %v5234 = vand.u32 %v5233, 65535
    %v5235 = vshra.s32 %v5233, 16
    %v5236 = vcvt.s32.f32 %v5234
    %v5237 = vcvt.s32.f32 %v5235
    %5238 = vmin.xlane.f32.xlu0 %v5237
    %v5239 = vpop.xlane.xlu0 %5238
    %vm5240 = vcmp.eq.f32.partialorder %v5237, %v5239
    %v5241 = vsel %vm5240, %v5236, inf
    %5242 = vmin.xlane.f32.xlu0 %v5241
    %v5243 = vpop.xlane.xlu0 %5242
    %v5244 = vcvt.f32.s32 %v5243
    %v5245 = vcvt.f32.s32 %v5239
    %v5246 = vshll.u32 %v5245, 16
    %v5247 = vadd.s32 %v5246, %v5244
    %v5248 = vsel %vm4250, %v5232, 2147483647
    %v5249 = vand.u32 %v5248, 65535
    %v5250 = vshra.s32 %v5248, 16
    %v5251 = vcvt.s32.f32 %v5249
    %v5252 = vcvt.s32.f32 %v5250
    %5253 = vmin.xlane.f32.xlu0 %v5252
    %v5254 = vpop.xlane.xlu0 %5253
    %vm5255 = vcmp.eq.f32.partialorder %v5252, %v5254
    %v5256 = vsel %vm5255, %v5251, inf
    %5257 = vmin.xlane.f32.xlu0 %v5256
    %v5258 = vpop.xlane.xlu0 %5257
    %v5259 = vcvt.f32.s32 %v5258
    %v5260 = vcvt.f32.s32 %v5254
    %v5261 = vshll.u32 %v5260, 16
    %v5262 = vadd.s32 %v5261, %v5259
    %vm5263 = vcmp.eq.s32.totalorder %v3972, %v5247
    %vm5264 = vcmp.eq.s32.totalorder %v3972, %v5262
    %v5265 = vsel %vm5263, 1, 0
    %v5266 = vsel %vm5264, 1, 0
    %v5267 = vcvt.s32.f32 %v5265
    %v5268 = vcvt.s32.f32 %v5266
    %v5270 = vsel %vm4250, %v5267, 0
    %v5273 = vsel %vm4250, %v5268, 0
    %5275 = vmatpush.msra.mxu0 0.0
    %5276 = vmatpush.msra.mxu0 0.0
    %5277 = vmatpush.msra.mxu0 0.0
    %5278 = vmatpush.msra.mxu0 0.0
    %5279 = vmatpush.msra.mxu0 0.0
    %5280 = vmatpush.msra.mxu0 0.0
    %5281 = vmatpush.msra.mxu0 0.0
    %5282 = vmatpush.msra.mxu0 0.0
    %5283 = vmatpush.msra.mxu0 %v2367
    %5284 = vmatpush.msra.mxu0 %v2366
    %5285 = vmatpush.msra.mxu0 %v2365
    %5286 = vmatpush.msra.mxu0 %v2364
    %5287 = vmatpush.msra.mxu0 %v2363
    %5288 = vmatpush.msra.mxu0 %v2362
    %5289 = vmatpush.msra.mxu0 %v2361
    %5290 = vmatpush.msra.mxu0 %v2360
    %5291 = vmatmul.f32.gmra.mxu0 %v5270
    %v5292 = vpop.f32.mrf.mxu0
    %v5293 = vadd.f32 0.0, %v5292
    %5294 = vmatmul.f32.gmra.mxu0 %v5273
    %v5295 = vpop.f32.mrf.mxu0
    %v5296 = vadd.f32 0.0, %v5295
    %5297 = vdwg.mxu0
    %5298 = vst [vmem:[#allocation5] sm:$0xff] %v5293
    %5299 = vst [vmem:[#allocation5 + $0x8] sm:$0xff] %v5296
    %v5300 = vpack.c.bf16 %v5296, %v5293
    %v5301 = vld [vmem:[%s8] sm:$0xff]
    %v5302 = vld [vmem:[%s8 + $0x8] sm:$0xff]
    %v5303 = vld [vmem:[%s8 + $0x10] sm:$0xff]
    %v5304 = vld [vmem:[%s8 + $0x18] sm:$0xff]
    %v5305 = vld [vmem:[%s8 + $0x20] sm:$0xff]
    %v5306 = vld [vmem:[%s8 + $0x28] sm:$0xff]
    %v5307 = vld [vmem:[%s8 + $0x30] sm:$0xff]
    %v5308 = vld [vmem:[%s8 + $0x38] sm:$0xff]
    %v5309 = vld [vmem:[%s8 + $0x40] sm:$0xff]
    %v5310 = vld [vmem:[%s8 + $0x48] sm:$0xff]
    %v5311 = vld [vmem:[%s8 + $0x50] sm:$0xff]
    %v5312 = vld [vmem:[%s8 + $0x58] sm:$0xff]
    %v5313 = vld [vmem:[%s8 + $0x60] sm:$0xff]
    %v5314 = vld [vmem:[%s8 + $0x68] sm:$0xff]
    %v5315 = vld [vmem:[%s8 + $0x70] sm:$0xff]
    %v5316 = vld [vmem:[%s8 + $0x78] sm:$0xff]
    %v5317 = vld [vmem:[%s9] sm:$0x3]
    %v5319 = vperm.slane %v5317, 0
    %v5320 = vperm.slane %v5317, 1
    %v5339 = vunpack.c.l.b16 %v5301
    %v5340 = vunpack.c.h.b16 %v5301
    %v5341 = vunpack.c.l.b16 %v5302
    %v5342 = vunpack.c.h.b16 %v5302
    %v5343 = vunpack.c.l.b16 %v5303
    %v5344 = vunpack.c.h.b16 %v5303
    %v5345 = vunpack.c.l.b16 %v5304
    %v5346 = vunpack.c.h.b16 %v5304
    %v5347 = vunpack.c.l.b16 %v5305
    %v5348 = vunpack.c.h.b16 %v5305
    %v5349 = vunpack.c.l.b16 %v5306
    %v5350 = vunpack.c.h.b16 %v5306
    %v5351 = vunpack.c.l.b16 %v5307
    %v5352 = vunpack.c.h.b16 %v5307
    %v5353 = vunpack.c.l.b16 %v5308
    %v5354 = vunpack.c.h.b16 %v5308
    %v5355 = vunpack.c.l.b16 %v5309
    %v5356 = vunpack.c.h.b16 %v5309
    %v5357 = vunpack.c.l.b16 %v5310
    %v5358 = vunpack.c.h.b16 %v5310
    %v5359 = vunpack.c.l.b16 %v5311
    %v5360 = vunpack.c.h.b16 %v5311
    %v5361 = vunpack.c.l.b16 %v5312
    %v5362 = vunpack.c.h.b16 %v5312
    %v5363 = vunpack.c.l.b16 %v5313
    %v5364 = vunpack.c.h.b16 %v5313
    %v5365 = vunpack.c.l.b16 %v5314
    %v5366 = vunpack.c.h.b16 %v5314
    %v5367 = vunpack.c.l.b16 %v5315
    %v5368 = vunpack.c.h.b16 %v5315
    %v5369 = vunpack.c.l.b16 %v5316
    %v5370 = vunpack.c.h.b16 %v5316
    %v5371 = vpack.c.b16 %v5341, %v5339
    %v5372 = vpack.c.b16 %v5342, %v5340
    %v5373 = vpack.c.b16 %v5345, %v5343
    %v5374 = vpack.c.b16 %v5346, %v5344
    %v5375 = vpack.c.b16 %v5349, %v5347
    %v5376 = vpack.c.b16 %v5350, %v5348
    %v5377 = vpack.c.b16 %v5353, %v5351
    %v5378 = vpack.c.b16 %v5354, %v5352
    %v5379 = vpack.c.b16 %v5357, %v5355
    %v5380 = vpack.c.b16 %v5358, %v5356
    %v5381 = vpack.c.b16 %v5361, %v5359
    %v5382 = vpack.c.b16 %v5362, %v5360
    %v5383 = vpack.c.b16 %v5365, %v5363
    %v5384 = vpack.c.b16 %v5366, %v5364
    %v5385 = vpack.c.b16 %v5369, %v5367
    %v5386 = vpack.c.b16 %v5370, %v5368
    %5403 = vmatpush.bf16.msra.mxu0 %v5385
    %5404 = vmatpush.bf16.msra.mxu0 %v5383
    %5405 = vmatpush.bf16.msra.mxu0 %v5381
    %5406 = vmatpush.bf16.msra.mxu0 %v5379
    %5407 = vmatpush.bf16.msra.mxu0 %v5377
    %5408 = vmatpush.bf16.msra.mxu0 %v5375
    %5409 = vmatpush.bf16.msra.mxu0 %v5373
    %5410 = vmatpush.bf16.msra.mxu0 %v5371
    %5411 = vmatmul.bf16.gmra.mxu0 %v5300
    %v5412 = vpop.f32.mrf.mxu0
    %v5413 = vadd.f32 %v5319, %v5412
    %v5414 = vpop.f32.mrf.mxu0
    %v5415 = vadd.f32 %v5319, %v5414
    %5416 = vdwg.mxu0
    %5417 = vmatpush.bf16.msra.mxu0 %v5386
    %5418 = vmatpush.bf16.msra.mxu0 %v5384
    %5419 = vmatpush.bf16.msra.mxu0 %v5382
    %5420 = vmatpush.bf16.msra.mxu0 %v5380
    %5421 = vmatpush.bf16.msra.mxu0 %v5378
    %5422 = vmatpush.bf16.msra.mxu0 %v5376
    %5423 = vmatpush.bf16.msra.mxu0 %v5374
    %5424 = vmatpush.bf16.msra.mxu0 %v5372
    %5425 = vmatmul.bf16.gmra.mxu0 %v5300
    %v5426 = vpop.f32.mrf.mxu0
    %v5427 = vadd.f32 %v5320, %v5426
    %v5428 = vpop.f32.mrf.mxu0
    %v5429 = vadd.f32 %v5320, %v5428
    %5430 = vdwg.mxu0
    %v5431 = vmax.f32 %v5413, 0.0
    %v5432 = vmax.f32 %v5427, 0.0
    %v5433 = vmax.f32 %v5415, 0.0
    %v5434 = vmax.f32 %v5429, 0.0
    %v5435 = vpack.c.bf16 %v5433, %v5431
    %v5436 = vpack.c.bf16 %v5434, %v5432
    %v5437 = vld [vmem:[%s10] sm:$0xff]
    %v5438 = vld [vmem:[%s10 + $0x8] sm:$0xff]
    %v5439 = vld [vmem:[%s10 + $0x10] sm:$0xff]
    %v5440 = vld [vmem:[%s10 + $0x18] sm:$0xff]
    %v5441 = vld [vmem:[%s10 + $0x20] sm:$0xff]
    %v5442 = vld [vmem:[%s10 + $0x28] sm:$0xff]
    %v5443 = vld [vmem:[%s10 + $0x30] sm:$0xff]
    %v5444 = vld [vmem:[%s10 + $0x38] sm:$0xff]
    %v5445 = vld [vmem:[%s10 + $0x40] sm:$0xff]
    %v5446 = vld [vmem:[%s10 + $0x48] sm:$0xff]
    %v5447 = vld [vmem:[%s10 + $0x50] sm:$0xff]
    %v5448 = vld [vmem:[%s10 + $0x58] sm:$0xff]
    %v5449 = vld [vmem:[%s10 + $0x60] sm:$0xff]
    %v5450 = vld [vmem:[%s10 + $0x68] sm:$0xff]
    %v5451 = vld [vmem:[%s10 + $0x70] sm:$0xff]
    %v5452 = vld [vmem:[%s10 + $0x78] sm:$0xff]
    %v5453 = vld [vmem:[%s10 + $0x80] sm:$0xff]
    %v5454 = vld [vmem:[%s10 + $0x88] sm:$0xff]
    %v5455 = vld [vmem:[%s10 + $0x90] sm:$0xff]
    %v5456 = vld [vmem:[%s10 + $0x98] sm:$0xff]
    %v5457 = vld [vmem:[%s10 + $0xa0] sm:$0xff]
    %v5458 = vld [vmem:[%s10 + $0xa8] sm:$0xff]
    %v5459 = vld [vmem:[%s10 + $0xb0] sm:$0xff]
    %v5460 = vld [vmem:[%s10 + $0xb8] sm:$0xff]
    %v5461 = vld [vmem:[%s10 + $0xc0] sm:$0xff]
    %v5462 = vld [vmem:[%s10 + $0xc8] sm:$0xff]
    %v5463 = vld [vmem:[%s10 + $0xd0] sm:$0xff]
    %v5464 = vld [vmem:[%s10 + $0xd8] sm:$0xff]
    %v5465 = vld [vmem:[%s10 + $0xe0] sm:$0xff]
    %v5466 = vld [vmem:[%s10 + $0xe8] sm:$0xff]
    %v5467 = vld [vmem:[%s10 + $0xf0] sm:$0xff]
    %v5468 = vld [vmem:[%s10 + $0xf8] sm:$0xff]
    %v5469 = vld [vmem:[%s10 + $0x100] sm:$0xff]
    %v5470 = vld [vmem:[%s10 + $0x108] sm:$0xff]
    %v5471 = vld [vmem:[%s10 + $0x110] sm:$0xff]
    %v5472 = vld [vmem:[%s10 + $0x118] sm:$0xff]
    %v5473 = vld [vmem:[%s10 + $0x120] sm:$0xff]
    %v5474 = vld [vmem:[%s10 + $0x128] sm:$0xff]
    %v5475 = vld [vmem:[%s10 + $0x130] sm:$0xff]
    %v5476 = vld [vmem:[%s10 + $0x138] sm:$0xff]
    %v5477 = vld [vmem:[%s10 + $0x140] sm:$0xff]
    %v5478 = vld [vmem:[%s10 + $0x148] sm:$0xff]
    %v5479 = vld [vmem:[%s10 + $0x150] sm:$0xff]
    %v5480 = vld [vmem:[%s10 + $0x158] sm:$0xff]
    %v5481 = vld [vmem:[%s10 + $0x160] sm:$0xff]
    %v5482 = vld [vmem:[%s10 + $0x168] sm:$0xff]
    %v5483 = vld [vmem:[%s10 + $0x170] sm:$0xff]
    %v5484 = vld [vmem:[%s10 + $0x178] sm:$0xff]
    %v5485 = vld [vmem:[%s10 + $0x180] sm:$0xff]
    %v5486 = vld [vmem:[%s10 + $0x188] sm:$0xff]
    %v5487 = vld [vmem:[%s10 + $0x190] sm:$0xff]
    %v5488 = vld [vmem:[%s10 + $0x198] sm:$0xff]
    %v5489 = vld [vmem:[%s10 + $0x1a0] sm:$0xff]
    %v5490 = vld [vmem:[%s10 + $0x1a8] sm:$0xff]
    %v5491 = vld [vmem:[%s10 + $0x1b0] sm:$0xff]
    %v5492 = vld [vmem:[%s10 + $0x1b8] sm:$0xff]
    %v5493 = vld [vmem:[%s10 + $0x1c0] sm:$0xff]
    %v5494 = vld [vmem:[%s10 + $0x1c8] sm:$0xff]
    %v5495 = vld [vmem:[%s10 + $0x1d0] sm:$0xff]
    %v5496 = vld [vmem:[%s10 + $0x1d8] sm:$0xff]
    %v5497 = vld [vmem:[%s10 + $0x1e0] sm:$0xff]
    %v5498 = vld [vmem:[%s10 + $0x1e8] sm:$0xff]
    %v5499 = vld [vmem:[%s10 + $0x1f0] sm:$0xff]
    %v5500 = vld [vmem:[%s10 + $0x1f8] sm:$0xff]
    %v5501 = vld [vmem:[%s11] sm:$0xf]
    %v5503 = vperm.slane %v5501, 0
    %v5504 = vperm.slane %v5501, 1
    %v5505 = vperm.slane %v5501, 2
    %v5506 = vperm.slane %v5501, 3
    %v5575 = vunpack.c.l.b16 %v5437
    %v5576 = vunpack.c.h.b16 %v5437
    %v5577 = vunpack.c.l.b16 %v5438
    %v5578 = vunpack.c.h.b16 %v5438
    %v5579 = vunpack.c.l.b16 %v5439
    %v5580 = vunpack.c.h.b16 %v5439
    %v5581 = vunpack.c.l.b16 %v5440
    %v5582 = vunpack.c.h.b16 %v5440
    %v5583 = vunpack.c.l.b16 %v5441
    %v5584 = vunpack.c.h.b16 %v5441
    %v5585 = vunpack.c.l.b16 %v5442
    %v5586 = vunpack.c.h.b16 %v5442
    %v5587 = vunpack.c.l.b16 %v5443
    %v5588 = vunpack.c.h.b16 %v5443
    %v5589 = vunpack.c.l.b16 %v5444
    %v5590 = vunpack.c.h.b16 %v5444
    %v5591 = vunpack.c.l.b16 %v5445
    %v5592 = vunpack.c.h.b16 %v5445
    %v5593 = vunpack.c.l.b16 %v5446
    %v5594 = vunpack.c.h.b16 %v5446
    %v5595 = vunpack.c.l.b16 %v5447
    %v5596 = vunpack.c.h.b16 %v5447
    %v5597 = vunpack.c.l.b16 %v5448
    %v5598 = vunpack.c.h.b16 %v5448
    %v5599 = vunpack.c.l.b16 %v5449
    %v5600 = vunpack.c.h.b16 %v5449
    %v5601 = vunpack.c.l.b16 %v5450
    %v5602 = vunpack.c.h.b16 %v5450
    %v5603 = vunpack.c.l.b16 %v5451
    %v5604 = vunpack.c.h.b16 %v5451
    %v5605 = vunpack.c.l.b16 %v5452
    %v5606 = vunpack.c.h.b16 %v5452
    %v5607 = vunpack.c.l.b16 %v5453
    %v5608 = vunpack.c.h.b16 %v5453
    %v5609 = vunpack.c.l.b16 %v5454
    %v5610 = vunpack.c.h.b16 %v5454
    %v5611 = vunpack.c.l.b16 %v5455
    %v5612 = vunpack.c.h.b16 %v5455
    %v5613 = vunpack.c.l.b16 %v5456
    %v5614 = vunpack.c.h.b16 %v5456
    %v5615 = vunpack.c.l.b16 %v5457
    %v5616 = vunpack.c.h.b16 %v5457
    %v5617 = vunpack.c.l.b16 %v5458
    %v5618 = vunpack.c.h.b16 %v5458
    %v5619 = vunpack.c.l.b16 %v5459
    %v5620 = vunpack.c.h.b16 %v5459
    %v5621 = vunpack.c.l.b16 %v5460
    %v5622 = vunpack.c.h.b16 %v5460
    %v5623 = vunpack.c.l.b16 %v5461
    %v5624 = vunpack.c.h.b16 %v5461
    %v5625 = vunpack.c.l.b16 %v5462
    %v5626 = vunpack.c.h.b16 %v5462
    %v5627 = vunpack.c.l.b16 %v5463
    %v5628 = vunpack.c.h.b16 %v5463
    %v5629 = vunpack.c.l.b16 %v5464
    %v5630 = vunpack.c.h.b16 %v5464
    %v5631 = vunpack.c.l.b16 %v5465
    %v5632 = vunpack.c.h.b16 %v5465
    %v5633 = vunpack.c.l.b16 %v5466
    %v5634 = vunpack.c.h.b16 %v5466
    %v5635 = vunpack.c.l.b16 %v5467
    %v5636 = vunpack.c.h.b16 %v5467
    %v5637 = vunpack.c.l.b16 %v5468
    %v5638 = vunpack.c.h.b16 %v5468
    %v5639 = vunpack.c.l.b16 %v5469
    %v5640 = vunpack.c.h.b16 %v5469
    %v5641 = vunpack.c.l.b16 %v5470
    %v5642 = vunpack.c.h.b16 %v5470
    %v5643 = vunpack.c.l.b16 %v5471
    %v5644 = vunpack.c.h.b16 %v5471
    %v5645 = vunpack.c.l.b16 %v5472
    %v5646 = vunpack.c.h.b16 %v5472
    %v5647 = vunpack.c.l.b16 %v5473
    %v5648 = vunpack.c.h.b16 %v5473
    %v5649 = vunpack.c.l.b16 %v5474
    %v5650 = vunpack.c.h.b16 %v5474
    %v5651 = vunpack.c.l.b16 %v5475
    %v5652 = vunpack.c.h.b16 %v5475
    %v5653 = vunpack.c.l.b16 %v5476
    %v5654 = vunpack.c.h.b16 %v5476
    %v5655 = vunpack.c.l.b16 %v5477
    %v5656 = vunpack.c.h.b16 %v5477
    %v5657 = vunpack.c.l.b16 %v5478
    %v5658 = vunpack.c.h.b16 %v5478
    %v5659 = vunpack.c.l.b16 %v5479
    %v5660 = vunpack.c.h.b16 %v5479
    %v5661 = vunpack.c.l.b16 %v5480
    %v5662 = vunpack.c.h.b16 %v5480
    %v5663 = vunpack.c.l.b16 %v5481
    %v5664 = vunpack.c.h.b16 %v5481
    %v5665 = vunpack.c.l.b16 %v5482
    %v5666 = vunpack.c.h.b16 %v5482
    %v5667 = vunpack.c.l.b16 %v5483
    %v5668 = vunpack.c.h.b16 %v5483
    %v5669 = vunpack.c.l.b16 %v5484
    %v5670 = vunpack.c.h.b16 %v5484
    %v5671 = vunpack.c.l.b16 %v5485
    %v5672 = vunpack.c.h.b16 %v5485
    %v5673 = vunpack.c.l.b16 %v5486
    %v5674 = vunpack.c.h.b16 %v5486
    %v5675 = vunpack.c.l.b16 %v5487
    %v5676 = vunpack.c.h.b16 %v5487
    %v5677 = vunpack.c.l.b16 %v5488
    %v5678 = vunpack.c.h.b16 %v5488
    %v5679 = vunpack.c.l.b16 %v5489
    %v5680 = vunpack.c.h.b16 %v5489
    %v5681 = vunpack.c.l.b16 %v5490
    %v5682 = vunpack.c.h.b16 %v5490
    %v5683 = vunpack.c.l.b16 %v5491
    %v5684 = vunpack.c.h.b16 %v5491
    %v5685 = vunpack.c.l.b16 %v5492
    %v5686 = vunpack.c.h.b16 %v5492
    %v5687 = vunpack.c.l.b16 %v5493
    %v5688 = vunpack.c.h.b16 %v5493
    %v5689 = vunpack.c.l.b16 %v5494
    %v5690 = vunpack.c.h.b16 %v5494
    %v5691 = vunpack.c.l.b16 %v5495
    %v5692 = vunpack.c.h.b16 %v5495
    %v5693 = vunpack.c.l.b16 %v5496
    %v5694 = vunpack.c.h.b16 %v5496
    %v5695 = vunpack.c.l.b16 %v5497
    %v5696 = vunpack.c.h.b16 %v5497
    %v5697 = vunpack.c.l.b16 %v5498
    %v5698 = vunpack.c.h.b16 %v5498
    %v5699 = vunpack.c.l.b16 %v5499
    %v5700 = vunpack.c.h.b16 %v5499
    %v5701 = vunpack.c.l.b16 %v5500
    %v5702 = vunpack.c.h.b16 %v5500
    %v5703 = vpack.c.b16 %v5579, %v5575
    %v5704 = vpack.c.b16 %v5580, %v5576
    %v5705 = vpack.c.b16 %v5581, %v5577
    %v5706 = vpack.c.b16 %v5582, %v5578
    %v5707 = vpack.c.b16 %v5587, %v5583
    %v5708 = vpack.c.b16 %v5588, %v5584
    %v5709 = vpack.c.b16 %v5589, %v5585
    %v5710 = vpack.c.b16 %v5590, %v5586
    %v5711 = vpack.c.b16 %v5595, %v5591
    %v5712 = vpack.c.b16 %v5596, %v5592
    %v5713 = vpack.c.b16 %v5597, %v5593
    %v5714 = vpack.c.b16 %v5598, %v5594
    %v5715 = vpack.c.b16 %v5603, %v5599
    %v5716 = vpack.c.b16 %v5604, %v5600
    %v5717 = vpack.c.b16 %v5605, %v5601
    %v5718 = vpack.c.b16 %v5606, %v5602
    %v5719 = vpack.c.b16 %v5611, %v5607
    %v5720 = vpack.c.b16 %v5612, %v5608
    %v5721 = vpack.c.b16 %v5613, %v5609
    %v5722 = vpack.c.b16 %v5614, %v5610
    %v5723 = vpack.c.b16 %v5619, %v5615
    %v5724 = vpack.c.b16 %v5620, %v5616
    %v5725 = vpack.c.b16 %v5621, %v5617
    %v5726 = vpack.c.b16 %v5622, %v5618
    %v5727 = vpack.c.b16 %v5627, %v5623
    %v5728 = vpack.c.b16 %v5628, %v5624
    %v5729 = vpack.c.b16 %v5629, %v5625
    %v5730 = vpack.c.b16 %v5630, %v5626
    %v5731 = vpack.c.b16 %v5635, %v5631
    %v5732 = vpack.c.b16 %v5636, %v5632
    %v5733 = vpack.c.b16 %v5637, %v5633
    %v5734 = vpack.c.b16 %v5638, %v5634
    %v5735 = vpack.c.b16 %v5643, %v5639
    %v5736 = vpack.c.b16 %v5644, %v5640
    %v5737 = vpack.c.b16 %v5645, %v5641
    %v5738 = vpack.c.b16 %v5646, %v5642
    %v5739 = vpack.c.b16 %v5651, %v5647
    %v5740 = vpack.c.b16 %v5652, %v5648
    %v5741 = vpack.c.b16 %v5653, %v5649
    %v5742 = vpack.c.b16 %v5654, %v5650
    %v5743 = vpack.c.b16 %v5659, %v5655
    %v5744 = vpack.c.b16 %v5660, %v5656
    %v5745 = vpack.c.b16 %v5661, %v5657
    %v5746 = vpack.c.b16 %v5662, %v5658
    %v5747 = vpack.c.b16 %v5667, %v5663
    %v5748 = vpack.c.b16 %v5668, %v5664
    %v5749 = vpack.c.b16 %v5669, %v5665
    %v5750 = vpack.c.b16 %v5670, %v5666
    %v5751 = vpack.c.b16 %v5675, %v5671
    %v5752 = vpack.c.b16 %v5676, %v5672
    %v5753 = vpack.c.b16 %v5677, %v5673
    %v5754 = vpack.c.b16 %v5678, %v5674
    %v5755 = vpack.c.b16 %v5683, %v5679
    %v5756 = vpack.c.b16 %v5684, %v5680
    %v5757 = vpack.c.b16 %v5685, %v5681
    %v5758 = vpack.c.b16 %v5686, %v5682
    %v5759 = vpack.c.b16 %v5691, %v5687
    %v5760 = vpack.c.b16 %v5692, %v5688
    %v5761 = vpack.c.b16 %v5693, %v5689
    %v5762 = vpack.c.b16 %v5694, %v5690
    %v5763 = vpack.c.b16 %v5699, %v5695
    %v5764 = vpack.c.b16 %v5700, %v5696
    %v5765 = vpack.c.b16 %v5701, %v5697
    %v5766 = vpack.c.b16 %v5702, %v5698
    %5831 = vmatpush.bf16.msra.mxu0 %v5731
    %5832 = vmatpush.bf16.msra.mxu0 %v5727
    %5833 = vmatpush.bf16.msra.mxu0 %v5723
    %5834 = vmatpush.bf16.msra.mxu0 %v5719
    %5835 = vmatpush.bf16.msra.mxu0 %v5715
    %5836 = vmatpush.bf16.msra.mxu0 %v5711
    %5837 = vmatpush.bf16.msra.mxu0 %v5707
    %5838 = vmatpush.bf16.msra.mxu0 %v5703
    %5839 = vmatmul.bf16.gmra.mxu0 %v5435
    %v5840 = vpop.f32.mrf.mxu0
    %v5841 = vadd.f32 %v5503, %v5840
    %v5842 = vpop.f32.mrf.mxu0
    %v5843 = vadd.f32 %v5503, %v5842
    %5844 = vdwg.mxu0
    %5845 = vmatpush.bf16.msra.mxu0 %v5763
    %5846 = vmatpush.bf16.msra.mxu0 %v5759
    %5847 = vmatpush.bf16.msra.mxu0 %v5755
    %5848 = vmatpush.bf16.msra.mxu0 %v5751
    %5849 = vmatpush.bf16.msra.mxu0 %v5747
    %5850 = vmatpush.bf16.msra.mxu0 %v5743
    %5851 = vmatpush.bf16.msra.mxu0 %v5739
    %5852 = vmatpush.bf16.msra.mxu0 %v5735
    %5853 = vmatmul.bf16.gmra.mxu0 %v5436
    %v5854 = vpop.f32.mrf.mxu0
    %v5855 = vadd.f32 %v5841, %v5854
    %v5856 = vpop.f32.mrf.mxu0
    %v5857 = vadd.f32 %v5843, %v5856
    %5858 = vdwg.mxu0
    %5859 = vmatpush.bf16.msra.mxu0 %v5732
    %5860 = vmatpush.bf16.msra.mxu0 %v5728
    %5861 = vmatpush.bf16.msra.mxu0 %v5724
    %5862 = vmatpush.bf16.msra.mxu0 %v5720
    %5863 = vmatpush.bf16.msra.mxu0 %v5716
    %5864 = vmatpush.bf16.msra.mxu0 %v5712
    %5865 = vmatpush.bf16.msra.mxu0 %v5708
    %5866 = vmatpush.bf16.msra.mxu0 %v5704
    %5867 = vmatmul.bf16.gmra.mxu0 %v5435
    %v5868 = vpop.f32.mrf.mxu0
    %v5869 = vadd.f32 %v5504, %v5868
    %v5870 = vpop.f32.mrf.mxu0
    %v5871 = vadd.f32 %v5504, %v5870
    %5872 = vdwg.mxu0
    %5873 = vmatpush.bf16.msra.mxu0 %v5764
    %5874 = vmatpush.bf16.msra.mxu0 %v5760
    %5875 = vmatpush.bf16.msra.mxu0 %v5756
    %5876 = vmatpush.bf16.msra.mxu0 %v5752
    %5877 = vmatpush.bf16.msra.mxu0 %v5748
    %5878 = vmatpush.bf16.msra.mxu0 %v5744
    %5879 = vmatpush.bf16.msra.mxu0 %v5740
    %5880 = vmatpush.bf16.msra.mxu0 %v5736
    %5881 = vmatmul.bf16.gmra.mxu0 %v5436
    %v5882 = vpop.f32.mrf.mxu0
    %v5883 = vadd.f32 %v5869, %v5882
    %v5884 = vpop.f32.mrf.mxu0
    %v5885 = vadd.f32 %v5871, %v5884
    %5886 = vdwg.mxu0
    %5887 = vmatpush.bf16.msra.mxu0 %v5733
    %5888 = vmatpush.bf16.msra.mxu0 %v5729
    %5889 = vmatpush.bf16.msra.mxu0 %v5725
    %5890 = vmatpush.bf16.msra.mxu0 %v5721
    %5891 = vmatpush.bf16.msra.mxu0 %v5717
    %5892 = vmatpush.bf16.msra.mxu0 %v5713
    %5893 = vmatpush.bf16.msra.mxu0 %v5709
    %5894 = vmatpush.bf16.msra.mxu0 %v5705
    %5895 = vmatmul.bf16.gmra.mxu0 %v5435
    %v5896 = vpop.f32.mrf.mxu0
    %v5897 = vadd.f32 %v5505, %v5896
    %v5898 = vpop.f32.mrf.mxu0
    %v5899 = vadd.f32 %v5505, %v5898
    %5900 = vdwg.mxu0
    %5901 = vmatpush.bf16.msra.mxu0 %v5765
    %5902 = vmatpush.bf16.msra.mxu0 %v5761
    %5903 = vmatpush.bf16.msra.mxu0 %v5757
    %5904 = vmatpush.bf16.msra.mxu0 %v5753
    %5905 = vmatpush.bf16.msra.mxu0 %v5749
    %5906 = vmatpush.bf16.msra.mxu0 %v5745
    %5907 = vmatpush.bf16.msra.mxu0 %v5741
    %5908 = vmatpush.bf16.msra.mxu0 %v5737
    %5909 = vmatmul.bf16.gmra.mxu0 %v5436
    %v5910 = vpop.f32.mrf.mxu0
    %v5911 = vadd.f32 %v5897, %v5910
    %v5912 = vpop.f32.mrf.mxu0
    %v5913 = vadd.f32 %v5899, %v5912
    %5914 = vdwg.mxu0
    %5915 = vmatpush.bf16.msra.mxu0 %v5734
    %5916 = vmatpush.bf16.msra.mxu0 %v5730
    %5917 = vmatpush.bf16.msra.mxu0 %v5726
    %5918 = vmatpush.bf16.msra.mxu0 %v5722
    %5919 = vmatpush.bf16.msra.mxu0 %v5718
    %5920 = vmatpush.bf16.msra.mxu0 %v5714
    %5921 = vmatpush.bf16.msra.mxu0 %v5710
    %5922 = vmatpush.bf16.msra.mxu0 %v5706
    %5923 = vmatmul.bf16.gmra.mxu0 %v5435
    %v5924 = vpop.f32.mrf.mxu0
    %v5925 = vadd.f32 %v5506, %v5924
    %v5926 = vpop.f32.mrf.mxu0
    %v5927 = vadd.f32 %v5506, %v5926
    %5928 = vdwg.mxu0
    %5929 = vmatpush.bf16.msra.mxu0 %v5766
    %5930 = vmatpush.bf16.msra.mxu0 %v5762
    %5931 = vmatpush.bf16.msra.mxu0 %v5758
    %5932 = vmatpush.bf16.msra.mxu0 %v5754
    %5933 = vmatpush.bf16.msra.mxu0 %v5750
    %5934 = vmatpush.bf16.msra.mxu0 %v5746
    %5935 = vmatpush.bf16.msra.mxu0 %v5742
    %5936 = vmatpush.bf16.msra.mxu0 %v5738
    %5937 = vmatmul.bf16.gmra.mxu0 %v5436
    %v5938 = vpop.f32.mrf.mxu0
    %v5939 = vadd.f32 %v5925, %v5938
    %v5940 = vpop.f32.mrf.mxu0
    %v5941 = vadd.f32 %v5927, %v5940
    %5942 = vdwg.mxu0
    %v5943 = vmax.f32 %v5855, 0.0
    %v5944 = vmax.f32 %v5883, 0.0
    %v5945 = vmax.f32 %v5911, 0.0
    %v5946 = vmax.f32 %v5939, 0.0
    %v5947 = vmax.f32 %v5857, 0.0
    %v5948 = vmax.f32 %v5885, 0.0
    %v5949 = vmax.f32 %v5913, 0.0
    %v5950 = vmax.f32 %v5941, 0.0
    %v5951 = vpack.c.bf16 %v5947, %v5943
    %v5952 = vpack.c.bf16 %v5948, %v5944
    %v5953 = vpack.c.bf16 %v5949, %v5945
    %v5954 = vpack.c.bf16 %v5950, %v5946
    %v5955 = vld [vmem:[%s12] sm:$0xff]
    %v5956 = vld [vmem:[%s12 + $0x8] sm:$0xff]
    %v5957 = vld [vmem:[%s12 + $0x10] sm:$0xff]
    %v5958 = vld [vmem:[%s12 + $0x18] sm:$0xf]
    %v5959 = vld [vmem:[%s12 + $0x1c] sm:$0xff]
    %v5960 = vld [vmem:[%s12 + $0x24] sm:$0xff]
    %v5961 = vld [vmem:[%s12 + $0x2c] sm:$0xff]
    %v5962 = vld [vmem:[%s12 + $0x34] sm:$0xf]
    %v5963 = vld [vmem:[%s12 + $0x38] sm:$0xff]
    %v5964 = vld [vmem:[%s12 + $0x40] sm:$0xff]
    %v5965 = vld [vmem:[%s12 + $0x48] sm:$0xff]
    %v5966 = vld [vmem:[%s12 + $0x50] sm:$0xf]
    %v5967 = vld [vmem:[%s12 + $0x54] sm:$0xff]
    %v5968 = vld [vmem:[%s12 + $0x5c] sm:$0xff]
    %v5969 = vld [vmem:[%s12 + $0x64] sm:$0xff]
    %v5970 = vld [vmem:[%s12 + $0x6c] sm:$0xf]
    %v5971 = vld [vmem:[%s12 + $0x70] sm:$0xff]
    %v5972 = vld [vmem:[%s12 + $0x78] sm:$0xff]
    %v5973 = vld [vmem:[%s12 + $0x80] sm:$0xff]
    %v5974 = vld [vmem:[%s12 + $0x88] sm:$0xf]
    %v5975 = vld [vmem:[%s12 + $0x8c] sm:$0xff]
    %v5976 = vld [vmem:[%s12 + $0x94] sm:$0xff]
    %v5977 = vld [vmem:[%s12 + $0x9c] sm:$0xff]
    %v5978 = vld [vmem:[%s12 + $0xa4] sm:$0xf]
    %v5979 = vld [vmem:[%s12 + $0xa8] sm:$0xff]
    %v5980 = vld [vmem:[%s12 + $0xb0] sm:$0xff]
    %v5981 = vld [vmem:[%s12 + $0xb8] sm:$0xff]
    %v5982 = vld [vmem:[%s12 + $0xc0] sm:$0xf]
    %v5983 = vld [vmem:[%s12 + $0xc4] sm:$0xff]
    %v5984 = vld [vmem:[%s12 + $0xcc] sm:$0xff]
    %v5985 = vld [vmem:[%s12 + $0xd4] sm:$0xff]
    %v5986 = vld [vmem:[%s12 + $0xdc] sm:$0xf]
    %v5987 = vld [vmem:[%s12 + $0xe0] sm:$0xff]
    %v5988 = vld [vmem:[%s12 + $0xe8] sm:$0xff]
    %v5989 = vld [vmem:[%s12 + $0xf0] sm:$0xff]
    %v5990 = vld [vmem:[%s12 + $0xf8] sm:$0xf]
    %v5991 = vld [vmem:[%s12 + $0xfc] sm:$0xff]
    %v5992 = vld [vmem:[%s12 + $0x104] sm:$0xff]
    %v5993 = vld [vmem:[%s12 + $0x10c] sm:$0xff]
    %v5994 = vld [vmem:[%s12 + $0x114] sm:$0xf]
    %v5995 = vld [vmem:[%s12 + $0x118] sm:$0xff]
    %v5996 = vld [vmem:[%s12 + $0x120] sm:$0xff]
    %v5997 = vld [vmem:[%s12 + $0x128] sm:$0xff]
    %v5998 = vld [vmem:[%s12 + $0x130] sm:$0xf]
    %v5999 = vld [vmem:[%s12 + $0x134] sm:$0xff]
    %v6000 = vld [vmem:[%s12 + $0x13c] sm:$0xff]
    %v6001 = vld [vmem:[%s12 + $0x144] sm:$0xff]
    %v6002 = vld [vmem:[%s12 + $0x14c] sm:$0xf]
    %v6003 = vld [vmem:[%s12 + $0x150] sm:$0xff]
    %v6004 = vld [vmem:[%s12 + $0x158] sm:$0xff]
    %v6005 = vld [vmem:[%s12 + $0x160] sm:$0xff]
    %v6006 = vld [vmem:[%s12 + $0x168] sm:$0xf]
    %v6007 = vld [vmem:[%s12 + $0x16c] sm:$0xff]
    %v6008 = vld [vmem:[%s12 + $0x174] sm:$0xff]
    %v6009 = vld [vmem:[%s12 + $0x17c] sm:$0xff]
    %v6010 = vld [vmem:[%s12 + $0x184] sm:$0xf]
    %v6011 = vld [vmem:[%s12 + $0x188] sm:$0xff]
    %v6012 = vld [vmem:[%s12 + $0x190] sm:$0xff]
    %v6013 = vld [vmem:[%s12 + $0x198] sm:$0xff]
    %v6014 = vld [vmem:[%s12 + $0x1a0] sm:$0xf]
    %v6015 = vld [vmem:[%s12 + $0x1a4] sm:$0xff]
    %v6016 = vld [vmem:[%s12 + $0x1ac] sm:$0xff]
    %v6017 = vld [vmem:[%s12 + $0x1b4] sm:$0xff]
    %v6018 = vld [vmem:[%s12 + $0x1bc] sm:$0xf]
    %v6019 = vld [vmem:[%s12 + $0x1c0] sm:$0xff]
    %v6020 = vld [vmem:[%s12 + $0x1c8] sm:$0xff]
    %v6021 = vld [vmem:[%s12 + $0x1d0] sm:$0xff]
    %v6022 = vld [vmem:[%s12 + $0x1d8] sm:$0xf]
    %v6023 = vld [vmem:[%s12 + $0x1dc] sm:$0xff]
    %v6024 = vld [vmem:[%s12 + $0x1e4] sm:$0xff]
    %v6025 = vld [vmem:[%s12 + $0x1ec] sm:$0xff]
    %v6026 = vld [vmem:[%s12 + $0x1f4] sm:$0xf]
    %v6027 = vld [vmem:[%s12 + $0x1f8] sm:$0xff]
    %v6028 = vld [vmem:[%s12 + $0x200] sm:$0xff]
    %v6029 = vld [vmem:[%s12 + $0x208] sm:$0xff]
    %v6030 = vld [vmem:[%s12 + $0x210] sm:$0xf]
    %v6031 = vld [vmem:[%s12 + $0x214] sm:$0xff]
    %v6032 = vld [vmem:[%s12 + $0x21c] sm:$0xff]
    %v6033 = vld [vmem:[%s12 + $0x224] sm:$0xff]
    %v6034 = vld [vmem:[%s12 + $0x22c] sm:$0xf]
    %v6035 = vld [vmem:[%s12 + $0x230] sm:$0xff]
    %v6036 = vld [vmem:[%s12 + $0x238] sm:$0xff]
    %v6037 = vld [vmem:[%s12 + $0x240] sm:$0xff]
    %v6038 = vld [vmem:[%s12 + $0x248] sm:$0xf]
    %v6039 = vld [vmem:[%s12 + $0x24c] sm:$0xff]
    %v6040 = vld [vmem:[%s12 + $0x254] sm:$0xff]
    %v6041 = vld [vmem:[%s12 + $0x25c] sm:$0xff]
    %v6042 = vld [vmem:[%s12 + $0x264] sm:$0xf]
    %v6043 = vld [vmem:[%s12 + $0x268] sm:$0xff]
    %v6044 = vld [vmem:[%s12 + $0x270] sm:$0xff]
    %v6045 = vld [vmem:[%s12 + $0x278] sm:$0xff]
    %v6046 = vld [vmem:[%s12 + $0x280] sm:$0xf]
    %v6047 = vld [vmem:[%s12 + $0x284] sm:$0xff]
    %v6048 = vld [vmem:[%s12 + $0x28c] sm:$0xff]
    %v6049 = vld [vmem:[%s12 + $0x294] sm:$0xff]
    %v6050 = vld [vmem:[%s12 + $0x29c] sm:$0xf]
    %v6051 = vld [vmem:[%s12 + $0x2a0] sm:$0xff]
    %v6052 = vld [vmem:[%s12 + $0x2a8] sm:$0xff]
    %v6053 = vld [vmem:[%s12 + $0x2b0] sm:$0xff]
    %v6054 = vld [vmem:[%s12 + $0x2b8] sm:$0xf]
    %v6055 = vld [vmem:[%s12 + $0x2bc] sm:$0xff]
    %v6056 = vld [vmem:[%s12 + $0x2c4] sm:$0xff]
    %v6057 = vld [vmem:[%s12 + $0x2cc] sm:$0xff]
    %v6058 = vld [vmem:[%s12 + $0x2d4] sm:$0xf]
    %v6059 = vld [vmem:[%s12 + $0x2d8] sm:$0xff]
    %v6060 = vld [vmem:[%s12 + $0x2e0] sm:$0xff]
    %v6061 = vld [vmem:[%s12 + $0x2e8] sm:$0xff]
    %v6062 = vld [vmem:[%s12 + $0x2f0] sm:$0xf]
    %v6063 = vld [vmem:[%s12 + $0x2f4] sm:$0xff]
    %v6064 = vld [vmem:[%s12 + $0x2fc] sm:$0xff]
    %v6065 = vld [vmem:[%s12 + $0x304] sm:$0xff]
    %v6066 = vld [vmem:[%s12 + $0x30c] sm:$0xf]
    %v6067 = vld [vmem:[%s12 + $0x310] sm:$0xff]
    %v6068 = vld [vmem:[%s12 + $0x318] sm:$0xff]
    %v6069 = vld [vmem:[%s12 + $0x320] sm:$0xff]
    %v6070 = vld [vmem:[%s12 + $0x328] sm:$0xf]
    %v6071 = vld [vmem:[%s12 + $0x32c] sm:$0xff]
    %v6072 = vld [vmem:[%s12 + $0x334] sm:$0xff]
    %v6073 = vld [vmem:[%s12 + $0x33c] sm:$0xff]
    %v6074 = vld [vmem:[%s12 + $0x344] sm:$0xf]
    %v6075 = vld [vmem:[%s12 + $0x348] sm:$0xff]
    %v6076 = vld [vmem:[%s12 + $0x350] sm:$0xff]
    %v6077 = vld [vmem:[%s12 + $0x358] sm:$0xff]
    %v6078 = vld [vmem:[%s12 + $0x360] sm:$0xf]
    %v6079 = vld [vmem:[%s12 + $0x364] sm:$0xff]
    %v6080 = vld [vmem:[%s12 + $0x36c] sm:$0xff]
    %v6081 = vld [vmem:[%s12 + $0x374] sm:$0xff]
    %v6082 = vld [vmem:[%s12 + $0x37c] sm:$0xf]
    %v6083 = vld [vmem:[%s12 + $0x380] sm:$0xff]
    %v6084 = vld [vmem:[%s12 + $0x388] sm:$0xff]
    %v6085 = vld [vmem:[%s12 + $0x390] sm:$0xff]
    %v6086 = vld [vmem:[%s12 + $0x398] sm:$0xf]
    %v6087 = vld [vmem:[%s12 + $0x39c] sm:$0xff]
    %v6088 = vld [vmem:[%s12 + $0x3a4] sm:$0xff]
    %v6089 = vld [vmem:[%s12 + $0x3ac] sm:$0xff]
    %v6090 = vld [vmem:[%s12 + $0x3b4] sm:$0xf]
    %v6091 = vld [vmem:[%s12 + $0x3b8] sm:$0xff]
    %v6092 = vld [vmem:[%s12 + $0x3c0] sm:$0xff]
    %v6093 = vld [vmem:[%s12 + $0x3c8] sm:$0xff]
    %v6094 = vld [vmem:[%s12 + $0x3d0] sm:$0xf]
    %v6095 = vld [vmem:[%s12 + $0x3d4] sm:$0xff]
    %v6096 = vld [vmem:[%s12 + $0x3dc] sm:$0xff]
    %v6097 = vld [vmem:[%s12 + $0x3e4] sm:$0xff]
    %v6098 = vld [vmem:[%s12 + $0x3ec] sm:$0xf]
    %v6099 = vld [vmem:[%s12 + $0x3f0] sm:$0xff]
    %v6100 = vld [vmem:[%s12 + $0x3f8] sm:$0xff]
    %v6101 = vld [vmem:[%s12 + $0x400] sm:$0xff]
    %v6102 = vld [vmem:[%s12 + $0x408] sm:$0xf]
    %v6103 = vld [vmem:[%s12 + $0x40c] sm:$0xff]
    %v6104 = vld [vmem:[%s12 + $0x414] sm:$0xff]
    %v6105 = vld [vmem:[%s12 + $0x41c] sm:$0xff]
    %v6106 = vld [vmem:[%s12 + $0x424] sm:$0xf]
    %v6107 = vld [vmem:[%s12 + $0x428] sm:$0xff]
    %v6108 = vld [vmem:[%s12 + $0x430] sm:$0xff]
    %v6109 = vld [vmem:[%s12 + $0x438] sm:$0xff]
    %v6110 = vld [vmem:[%s12 + $0x440] sm:$0xf]
    %v6111 = vld [vmem:[%s12 + $0x444] sm:$0xff]
    %v6112 = vld [vmem:[%s12 + $0x44c] sm:$0xff]
    %v6113 = vld [vmem:[%s12 + $0x454] sm:$0xff]
    %v6114 = vld [vmem:[%s12 + $0x45c] sm:$0xf]
    %v6115 = vld [vmem:[%s12 + $0x460] sm:$0xff]
    %v6116 = vld [vmem:[%s12 + $0x468] sm:$0xff]
    %v6117 = vld [vmem:[%s12 + $0x470] sm:$0xff]
    %v6118 = vld [vmem:[%s12 + $0x478] sm:$0xf]
    %v6119 = vld [vmem:[%s12 + $0x47c] sm:$0xff]
    %v6120 = vld [vmem:[%s12 + $0x484] sm:$0xff]
    %v6121 = vld [vmem:[%s12 + $0x48c] sm:$0xff]
    %v6122 = vld [vmem:[%s12 + $0x494] sm:$0xf]
    %v6123 = vld [vmem:[%s12 + $0x498] sm:$0xff]
    %v6124 = vld [vmem:[%s12 + $0x4a0] sm:$0xff]
    %v6125 = vld [vmem:[%s12 + $0x4a8] sm:$0xff]
    %v6126 = vld [vmem:[%s12 + $0x4b0] sm:$0xf]
    %v6127 = vld [vmem:[%s12 + $0x4b4] sm:$0xff]
    %v6128 = vld [vmem:[%s12 + $0x4bc] sm:$0xff]
    %v6129 = vld [vmem:[%s12 + $0x4c4] sm:$0xff]
    %v6130 = vld [vmem:[%s12 + $0x4cc] sm:$0xf]
    %v6131 = vld [vmem:[%s12 + $0x4d0] sm:$0xff]
    %v6132 = vld [vmem:[%s12 + $0x4d8] sm:$0xff]
    %v6133 = vld [vmem:[%s12 + $0x4e0] sm:$0xff]
    %v6134 = vld [vmem:[%s12 + $0x4e8] sm:$0xf]
    %v6135 = vld [vmem:[%s12 + $0x4ec] sm:$0xff]
    %v6136 = vld [vmem:[%s12 + $0x4f4] sm:$0xff]
    %v6137 = vld [vmem:[%s12 + $0x4fc] sm:$0xff]
    %v6138 = vld [vmem:[%s12 + $0x504] sm:$0xf]
    %v6139 = vld [vmem:[%s12 + $0x508] sm:$0xff]
    %v6140 = vld [vmem:[%s12 + $0x510] sm:$0xff]
    %v6141 = vld [vmem:[%s12 + $0x518] sm:$0xff]
    %v6142 = vld [vmem:[%s12 + $0x520] sm:$0xf]
    %v6143 = vld [vmem:[%s12 + $0x524] sm:$0xff]
    %v6144 = vld [vmem:[%s12 + $0x52c] sm:$0xff]
    %v6145 = vld [vmem:[%s12 + $0x534] sm:$0xff]
    %v6146 = vld [vmem:[%s12 + $0x53c] sm:$0xf]
    %v6147 = vld [vmem:[%s12 + $0x540] sm:$0xff]
    %v6148 = vld [vmem:[%s12 + $0x548] sm:$0xff]
    %v6149 = vld [vmem:[%s12 + $0x550] sm:$0xff]
    %v6150 = vld [vmem:[%s12 + $0x558] sm:$0xf]
    %v6151 = vld [vmem:[%s12 + $0x55c] sm:$0xff]
    %v6152 = vld [vmem:[%s12 + $0x564] sm:$0xff]
    %v6153 = vld [vmem:[%s12 + $0x56c] sm:$0xff]
    %v6154 = vld [vmem:[%s12 + $0x574] sm:$0xf]
    %v6155 = vld [vmem:[%s12 + $0x578] sm:$0xff]
    %v6156 = vld [vmem:[%s12 + $0x580] sm:$0xff]
    %v6157 = vld [vmem:[%s12 + $0x588] sm:$0xff]
    %v6158 = vld [vmem:[%s12 + $0x590] sm:$0xf]
    %v6159 = vld [vmem:[%s12 + $0x594] sm:$0xff]
    %v6160 = vld [vmem:[%s12 + $0x59c] sm:$0xff]
    %v6161 = vld [vmem:[%s12 + $0x5a4] sm:$0xff]
    %v6162 = vld [vmem:[%s12 + $0x5ac] sm:$0xf]
    %v6163 = vld [vmem:[%s12 + $0x5b0] sm:$0xff]
    %v6164 = vld [vmem:[%s12 + $0x5b8] sm:$0xff]
    %v6165 = vld [vmem:[%s12 + $0x5c0] sm:$0xff]
    %v6166 = vld [vmem:[%s12 + $0x5c8] sm:$0xf]
    %v6167 = vld [vmem:[%s12 + $0x5cc] sm:$0xff]
    %v6168 = vld [vmem:[%s12 + $0x5d4] sm:$0xff]
    %v6169 = vld [vmem:[%s12 + $0x5dc] sm:$0xff]
    %v6170 = vld [vmem:[%s12 + $0x5e4] sm:$0xf]
    %v6171 = vld [vmem:[%s12 + $0x5e8] sm:$0xff]
    %v6172 = vld [vmem:[%s12 + $0x5f0] sm:$0xff]
    %v6173 = vld [vmem:[%s12 + $0x5f8] sm:$0xff]
    %v6174 = vld [vmem:[%s12 + $0x600] sm:$0xf]
    %v6175 = vld [vmem:[%s12 + $0x604] sm:$0xff]
    %v6176 = vld [vmem:[%s12 + $0x60c] sm:$0xff]
    %v6177 = vld [vmem:[%s12 + $0x614] sm:$0xff]
    %v6178 = vld [vmem:[%s12 + $0x61c] sm:$0xf]
    %v6179 = vld [vmem:[%s12 + $0x620] sm:$0xff]
    %v6180 = vld [vmem:[%s12 + $0x628] sm:$0xff]
    %v6181 = vld [vmem:[%s12 + $0x630] sm:$0xff]
    %v6182 = vld [vmem:[%s12 + $0x638] sm:$0xf]
    %v6183 = vld [vmem:[%s12 + $0x63c] sm:$0xff]
    %v6184 = vld [vmem:[%s12 + $0x644] sm:$0xff]
    %v6185 = vld [vmem:[%s12 + $0x64c] sm:$0xff]
    %v6186 = vld [vmem:[%s12 + $0x654] sm:$0xf]
    %v6187 = vld [vmem:[%s12 + $0x658] sm:$0xff]
    %v6188 = vld [vmem:[%s12 + $0x660] sm:$0xff]
    %v6189 = vld [vmem:[%s12 + $0x668] sm:$0xff]
    %v6190 = vld [vmem:[%s12 + $0x670] sm:$0xf]
    %v6191 = vld [vmem:[%s12 + $0x674] sm:$0xff]
    %v6192 = vld [vmem:[%s12 + $0x67c] sm:$0xff]
    %v6193 = vld [vmem:[%s12 + $0x684] sm:$0xff]
    %v6194 = vld [vmem:[%s12 + $0x68c] sm:$0xf]
    %v6195 = vld [vmem:[%s12 + $0x690] sm:$0xff]
    %v6196 = vld [vmem:[%s12 + $0x698] sm:$0xff]
    %v6197 = vld [vmem:[%s12 + $0x6a0] sm:$0xff]
    %v6198 = vld [vmem:[%s12 + $0x6a8] sm:$0xf]
    %v6199 = vld [vmem:[%s12 + $0x6ac] sm:$0xff]
    %v6200 = vld [vmem:[%s12 + $0x6b4] sm:$0xff]
    %v6201 = vld [vmem:[%s12 + $0x6bc] sm:$0xff]
    %v6202 = vld [vmem:[%s12 + $0x6c4] sm:$0xf]
    %v6203 = vld [vmem:[%s12 + $0x6c8] sm:$0xff]
    %v6204 = vld [vmem:[%s12 + $0x6d0] sm:$0xff]
    %v6205 = vld [vmem:[%s12 + $0x6d8] sm:$0xff]
    %v6206 = vld [vmem:[%s12 + $0x6e0] sm:$0xf]
    %v6207 = vld [vmem:[%s12 + $0x6e4] sm:$0xff]
    %v6208 = vld [vmem:[%s12 + $0x6ec] sm:$0xff]
    %v6209 = vld [vmem:[%s12 + $0x6f4] sm:$0xff]
    %v6210 = vld [vmem:[%s12 + $0x6fc] sm:$0xf]
    %v6211 = vld [vmem:[%s13] sm:$0x7f]
    %v6213 = vperm.slane %v6211, 0
    %v6214 = vperm.slane %v6211, 1
    %v6215 = vperm.slane %v6211, 2
    %v6216 = vperm.slane %v6211, 3
    %v6217 = vperm.slane %v6211, 4
    %v6218 = vperm.slane %v6211, 5
    %v6219 = vperm.slane %v6211, 6
    %v6483 = vunpack.c.l.b16 %v5955
    %v6484 = vunpack.c.h.b16 %v5955
    %v6485 = vunpack.c.l.b16 %v5956
    %v6486 = vunpack.c.h.b16 %v5956
    %v6487 = vunpack.c.l.b16 %v5957
    %v6488 = vunpack.c.h.b16 %v5957
    %v6489 = vunpack.c.l.b16 %v5958
    %v6490 = vunpack.c.l.b16 %v5959
    %v6491 = vunpack.c.h.b16 %v5959
    %v6492 = vunpack.c.l.b16 %v5960
    %v6493 = vunpack.c.h.b16 %v5960
    %v6494 = vunpack.c.l.b16 %v5961
    %v6495 = vunpack.c.h.b16 %v5961
    %v6496 = vunpack.c.l.b16 %v5962
    %v6497 = vunpack.c.l.b16 %v5963
    %v6498 = vunpack.c.h.b16 %v5963
    %v6499 = vunpack.c.l.b16 %v5964
    %v6500 = vunpack.c.h.b16 %v5964
    %v6501 = vunpack.c.l.b16 %v5965
    %v6502 = vunpack.c.h.b16 %v5965
    %v6503 = vunpack.c.l.b16 %v5966
    %v6504 = vunpack.c.l.b16 %v5967
    %v6505 = vunpack.c.h.b16 %v5967
    %v6506 = vunpack.c.l.b16 %v5968
    %v6507 = vunpack.c.h.b16 %v5968
    %v6508 = vunpack.c.l.b16 %v5969
    %v6509 = vunpack.c.h.b16 %v5969
    %v6510 = vunpack.c.l.b16 %v5970
    %v6511 = vunpack.c.l.b16 %v5971
    %v6512 = vunpack.c.h.b16 %v5971
    %v6513 = vunpack.c.l.b16 %v5972
    %v6514 = vunpack.c.h.b16 %v5972
    %v6515 = vunpack.c.l.b16 %v5973
    %v6516 = vunpack.c.h.b16 %v5973
    %v6517 = vunpack.c.l.b16 %v5974
    %v6518 = vunpack.c.l.b16 %v5975
    %v6519 = vunpack.c.h.b16 %v5975
    %v6520 = vunpack.c.l.b16 %v5976
    %v6521 = vunpack.c.h.b16 %v5976
    %v6522 = vunpack.c.l.b16 %v5977
    %v6523 = vunpack.c.h.b16 %v5977
    %v6524 = vunpack.c.l.b16 %v5978
    %v6525 = vunpack.c.l.b16 %v5979
    %v6526 = vunpack.c.h.b16 %v5979
    %v6527 = vunpack.c.l.b16 %v5980
    %v6528 = vunpack.c.h.b16 %v5980
    %v6529 = vunpack.c.l.b16 %v5981
    %v6530 = vunpack.c.h.b16 %v5981
    %v6531 = vunpack.c.l.b16 %v5982
    %v6532 = vunpack.c.l.b16 %v5983
    %v6533 = vunpack.c.h.b16 %v5983
    %v6534 = vunpack.c.l.b16 %v5984
    %v6535 = vunpack.c.h.b16 %v5984
    %v6536 = vunpack.c.l.b16 %v5985
    %v6537 = vunpack.c.h.b16 %v5985
    %v6538 = vunpack.c.l.b16 %v5986
    %v6539 = vunpack.c.l.b16 %v5987
    %v6540 = vunpack.c.h.b16 %v5987
    %v6541 = vunpack.c.l.b16 %v5988
    %v6542 = vunpack.c.h.b16 %v5988
    %v6543 = vunpack.c.l.b16 %v5989
    %v6544 = vunpack.c.h.b16 %v5989
    %v6545 = vunpack.c.l.b16 %v5990
    %v6546 = vunpack.c.l.b16 %v5991
    %v6547 = vunpack.c.h.b16 %v5991
    %v6548 = vunpack.c.l.b16 %v5992
    %v6549 = vunpack.c.h.b16 %v5992
    %v6550 = vunpack.c.l.b16 %v5993
    %v6551 = vunpack.c.h.b16 %v5993
    %v6552 = vunpack.c.l.b16 %v5994
    %v6553 = vunpack.c.l.b16 %v5995
    %v6554 = vunpack.c.h.b16 %v5995
    %v6555 = vunpack.c.l.b16 %v5996
    %v6556 = vunpack.c.h.b16 %v5996
    %v6557 = vunpack.c.l.b16 %v5997
    %v6558 = vunpack.c.h.b16 %v5997
    %v6559 = vunpack.c.l.b16 %v5998
    %v6560 = vunpack.c.l.b16 %v5999
    %v6561 = vunpack.c.h.b16 %v5999
    %v6562 = vunpack.c.l.b16 %v6000
    %v6563 = vunpack.c.h.b16 %v6000
    %v6564 = vunpack.c.l.b16 %v6001
    %v6565 = vunpack.c.h.b16 %v6001
    %v6566 = vunpack.c.l.b16 %v6002
    %v6567 = vunpack.c.l.b16 %v6003
    %v6568 = vunpack.c.h.b16 %v6003
    %v6569 = vunpack.c.l.b16 %v6004
    %v6570 = vunpack.c.h.b16 %v6004
    %v6571 = vunpack.c.l.b16 %v6005
    %v6572 = vunpack.c.h.b16 %v6005
    %v6573 = vunpack.c.l.b16 %v6006
    %v6574 = vunpack.c.l.b16 %v6007
    %v6575 = vunpack.c.h.b16 %v6007
    %v6576 = vunpack.c.l.b16 %v6008
    %v6577 = vunpack.c.h.b16 %v6008
    %v6578 = vunpack.c.l.b16 %v6009
    %v6579 = vunpack.c.h.b16 %v6009
    %v6580 = vunpack.c.l.b16 %v6010
    %v6581 = vunpack.c.l.b16 %v6011
    %v6582 = vunpack.c.h.b16 %v6011
    %v6583 = vunpack.c.l.b16 %v6012
    %v6584 = vunpack.c.h.b16 %v6012
    %v6585 = vunpack.c.l.b16 %v6013
    %v6586 = vunpack.c.h.b16 %v6013
    %v6587 = vunpack.c.l.b16 %v6014
    %v6588 = vunpack.c.l.b16 %v6015
    %v6589 = vunpack.c.h.b16 %v6015
    %v6590 = vunpack.c.l.b16 %v6016
    %v6591 = vunpack.c.h.b16 %v6016
    %v6592 = vunpack.c.l.b16 %v6017
    %v6593 = vunpack.c.h.b16 %v6017
    %v6594 = vunpack.c.l.b16 %v6018
    %v6595 = vunpack.c.l.b16 %v6019
    %v6596 = vunpack.c.h.b16 %v6019
    %v6597 = vunpack.c.l.b16 %v6020
    %v6598 = vunpack.c.h.b16 %v6020
    %v6599 = vunpack.c.l.b16 %v6021
    %v6600 = vunpack.c.h.b16 %v6021
    %v6601 = vunpack.c.l.b16 %v6022
    %v6602 = vunpack.c.l.b16 %v6023
    %v6603 = vunpack.c.h.b16 %v6023
    %v6604 = vunpack.c.l.b16 %v6024
    %v6605 = vunpack.c.h.b16 %v6024
    %v6606 = vunpack.c.l.b16 %v6025
    %v6607 = vunpack.c.h.b16 %v6025
    %v6608 = vunpack.c.l.b16 %v6026
    %v6609 = vunpack.c.l.b16 %v6027
    %v6610 = vunpack.c.h.b16 %v6027
    %v6611 = vunpack.c.l.b16 %v6028
    %v6612 = vunpack.c.h.b16 %v6028
    %v6613 = vunpack.c.l.b16 %v6029
    %v6614 = vunpack.c.h.b16 %v6029
    %v6615 = vunpack.c.l.b16 %v6030
    %v6616 = vunpack.c.l.b16 %v6031
    %v6617 = vunpack.c.h.b16 %v6031
    %v6618 = vunpack.c.l.b16 %v6032
    %v6619 = vunpack.c.h.b16 %v6032
    %v6620 = vunpack.c.l.b16 %v6033
    %v6621 = vunpack.c.h.b16 %v6033
    %v6622 = vunpack.c.l.b16 %v6034
    %v6623 = vunpack.c.l.b16 %v6035
    %v6624 = vunpack.c.h.b16 %v6035
    %v6625 = vunpack.c.l.b16 %v6036
    %v6626 = vunpack.c.h.b16 %v6036
    %v6627 = vunpack.c.l.b16 %v6037
    %v6628 = vunpack.c.h.b16 %v6037
    %v6629 = vunpack.c.l.b16 %v6038
    %v6630 = vunpack.c.l.b16 %v6039
    %v6631 = vunpack.c.h.b16 %v6039
    %v6632 = vunpack.c.l.b16 %v6040
    %v6633 = vunpack.c.h.b16 %v6040
    %v6634 = vunpack.c.l.b16 %v6041
    %v6635 = vunpack.c.h.b16 %v6041
    %v6636 = vunpack.c.l.b16 %v6042
    %v6637 = vunpack.c.l.b16 %v6043
    %v6638 = vunpack.c.h.b16 %v6043
    %v6639 = vunpack.c.l.b16 %v6044
    %v6640 = vunpack.c.h.b16 %v6044
    %v6641 = vunpack.c.l.b16 %v6045
    %v6642 = vunpack.c.h.b16 %v6045
    %v6643 = vunpack.c.l.b16 %v6046
    %v6644 = vunpack.c.l.b16 %v6047
    %v6645 = vunpack.c.h.b16 %v6047
    %v6646 = vunpack.c.l.b16 %v6048
    %v6647 = vunpack.c.h.b16 %v6048
    %v6648 = vunpack.c.l.b16 %v6049
    %v6649 = vunpack.c.h.b16 %v6049
    %v6650 = vunpack.c.l.b16 %v6050
    %v6651 = vunpack.c.l.b16 %v6051
    %v6652 = vunpack.c.h.b16 %v6051
    %v6653 = vunpack.c.l.b16 %v6052
    %v6654 = vunpack.c.h.b16 %v6052
    %v6655 = vunpack.c.l.b16 %v6053
    %v6656 = vunpack.c.h.b16 %v6053
    %v6657 = vunpack.c.l.b16 %v6054
    %v6658 = vunpack.c.l.b16 %v6055
    %v6659 = vunpack.c.h.b16 %v6055
    %v6660 = vunpack.c.l.b16 %v6056
    %v6661 = vunpack.c.h.b16 %v6056
    %v6662 = vunpack.c.l.b16 %v6057
    %v6663 = vunpack.c.h.b16 %v6057
    %v6664 = vunpack.c.l.b16 %v6058
    %v6665 = vunpack.c.l.b16 %v6059
    %v6666 = vunpack.c.h.b16 %v6059
    %v6667 = vunpack.c.l.b16 %v6060
    %v6668 = vunpack.c.h.b16 %v6060
    %v6669 = vunpack.c.l.b16 %v6061
    %v6670 = vunpack.c.h.b16 %v6061
    %v6671 = vunpack.c.l.b16 %v6062
    %v6672 = vunpack.c.l.b16 %v6063
    %v6673 = vunpack.c.h.b16 %v6063
    %v6674 = vunpack.c.l.b16 %v6064
    %v6675 = vunpack.c.h.b16 %v6064
    %v6676 = vunpack.c.l.b16 %v6065
    %v6677 = vunpack.c.h.b16 %v6065
    %v6678 = vunpack.c.l.b16 %v6066
    %v6679 = vunpack.c.l.b16 %v6067
    %v6680 = vunpack.c.h.b16 %v6067
    %v6681 = vunpack.c.l.b16 %v6068
    %v6682 = vunpack.c.h.b16 %v6068
    %v6683 = vunpack.c.l.b16 %v6069
    %v6684 = vunpack.c.h.b16 %v6069
    %v6685 = vunpack.c.l.b16 %v6070
    %v6686 = vunpack.c.l.b16 %v6071
    %v6687 = vunpack.c.h.b16 %v6071
    %v6688 = vunpack.c.l.b16 %v6072
    %v6689 = vunpack.c.h.b16 %v6072
    %v6690 = vunpack.c.l.b16 %v6073
    %v6691 = vunpack.c.h.b16 %v6073
    %v6692 = vunpack.c.l.b16 %v6074
    %v6693 = vunpack.c.l.b16 %v6075
    %v6694 = vunpack.c.h.b16 %v6075
    %v6695 = vunpack.c.l.b16 %v6076
    %v6696 = vunpack.c.h.b16 %v6076
    %v6697 = vunpack.c.l.b16 %v6077
    %v6698 = vunpack.c.h.b16 %v6077
    %v6699 = vunpack.c.l.b16 %v6078
    %v6700 = vunpack.c.l.b16 %v6079
    %v6701 = vunpack.c.h.b16 %v6079
    %v6702 = vunpack.c.l.b16 %v6080
    %v6703 = vunpack.c.h.b16 %v6080
    %v6704 = vunpack.c.l.b16 %v6081
    %v6705 = vunpack.c.h.b16 %v6081
    %v6706 = vunpack.c.l.b16 %v6082
    %v6707 = vunpack.c.l.b16 %v6083
    %v6708 = vunpack.c.h.b16 %v6083
    %v6709 = vunpack.c.l.b16 %v6084
    %v6710 = vunpack.c.h.b16 %v6084
    %v6711 = vunpack.c.l.b16 %v6085
    %v6712 = vunpack.c.h.b16 %v6085
    %v6713 = vunpack.c.l.b16 %v6086
    %v6714 = vunpack.c.l.b16 %v6087
    %v6715 = vunpack.c.h.b16 %v6087
    %v6716 = vunpack.c.l.b16 %v6088
    %v6717 = vunpack.c.h.b16 %v6088
    %v6718 = vunpack.c.l.b16 %v6089
    %v6719 = vunpack.c.h.b16 %v6089
    %v6720 = vunpack.c.l.b16 %v6090
    %v6721 = vunpack.c.l.b16 %v6091
    %v6722 = vunpack.c.h.b16 %v6091
    %v6723 = vunpack.c.l.b16 %v6092
    %v6724 = vunpack.c.h.b16 %v6092
    %v6725 = vunpack.c.l.b16 %v6093
    %v6726 = vunpack.c.h.b16 %v6093
    %v6727 = vunpack.c.l.b16 %v6094
    %v6728 = vunpack.c.l.b16 %v6095
    %v6729 = vunpack.c.h.b16 %v6095
    %v6730 = vunpack.c.l.b16 %v6096
    %v6731 = vunpack.c.h.b16 %v6096
    %v6732 = vunpack.c.l.b16 %v6097
    %v6733 = vunpack.c.h.b16 %v6097
    %v6734 = vunpack.c.l.b16 %v6098
    %v6735 = vunpack.c.l.b16 %v6099
    %v6736 = vunpack.c.h.b16 %v6099
    %v6737 = vunpack.c.l.b16 %v6100
    %v6738 = vunpack.c.h.b16 %v6100
    %v6739 = vunpack.c.l.b16 %v6101
    %v6740 = vunpack.c.h.b16 %v6101
    %v6741 = vunpack.c.l.b16 %v6102
    %v6742 = vunpack.c.l.b16 %v6103
    %v6743 = vunpack.c.h.b16 %v6103
    %v6744 = vunpack.c.l.b16 %v6104
    %v6745 = vunpack.c.h.b16 %v6104
    %v6746 = vunpack.c.l.b16 %v6105
    %v6747 = vunpack.c.h.b16 %v6105
    %v6748 = vunpack.c.l.b16 %v6106
    %v6749 = vunpack.c.l.b16 %v6107
    %v6750 = vunpack.c.h.b16 %v6107
    %v6751 = vunpack.c.l.b16 %v6108
    %v6752 = vunpack.c.h.b16 %v6108
    %v6753 = vunpack.c.l.b16 %v6109
    %v6754 = vunpack.c.h.b16 %v6109
    %v6755 = vunpack.c.l.b16 %v6110
    %v6756 = vunpack.c.l.b16 %v6111
    %v6757 = vunpack.c.h.b16 %v6111
    %v6758 = vunpack.c.l.b16 %v6112
    %v6759 = vunpack.c.h.b16 %v6112
    %v6760 = vunpack.c.l.b16 %v6113
    %v6761 = vunpack.c.h.b16 %v6113
    %v6762 = vunpack.c.l.b16 %v6114
    %v6763 = vunpack.c.l.b16 %v6115
    %v6764 = vunpack.c.h.b16 %v6115
    %v6765 = vunpack.c.l.b16 %v6116
    %v6766 = vunpack.c.h.b16 %v6116
    %v6767 = vunpack.c.l.b16 %v6117
    %v6768 = vunpack.c.h.b16 %v6117
    %v6769 = vunpack.c.l.b16 %v6118
    %v6770 = vunpack.c.l.b16 %v6119
    %v6771 = vunpack.c.h.b16 %v6119
    %v6772 = vunpack.c.l.b16 %v6120
    %v6773 = vunpack.c.h.b16 %v6120
    %v6774 = vunpack.c.l.b16 %v6121
    %v6775 = vunpack.c.h.b16 %v6121
    %v6776 = vunpack.c.l.b16 %v6122
    %v6777 = vunpack.c.l.b16 %v6123
    %v6778 = vunpack.c.h.b16 %v6123
    %v6779 = vunpack.c.l.b16 %v6124
    %v6780 = vunpack.c.h.b16 %v6124
    %v6781 = vunpack.c.l.b16 %v6125
    %v6782 = vunpack.c.h.b16 %v6125
    %v6783 = vunpack.c.l.b16 %v6126
    %v6784 = vunpack.c.l.b16 %v6127
    %v6785 = vunpack.c.h.b16 %v6127
    %v6786 = vunpack.c.l.b16 %v6128
    %v6787 = vunpack.c.h.b16 %v6128
    %v6788 = vunpack.c.l.b16 %v6129
    %v6789 = vunpack.c.h.b16 %v6129
    %v6790 = vunpack.c.l.b16 %v6130
    %v6791 = vunpack.c.l.b16 %v6131
    %v6792 = vunpack.c.h.b16 %v6131
    %v6793 = vunpack.c.l.b16 %v6132
    %v6794 = vunpack.c.h.b16 %v6132
    %v6795 = vunpack.c.l.b16 %v6133
    %v6796 = vunpack.c.h.b16 %v6133
    %v6797 = vunpack.c.l.b16 %v6134
    %v6798 = vunpack.c.l.b16 %v6135
    %v6799 = vunpack.c.h.b16 %v6135
    %v6800 = vunpack.c.l.b16 %v6136
    %v6801 = vunpack.c.h.b16 %v6136
    %v6802 = vunpack.c.l.b16 %v6137
    %v6803 = vunpack.c.h.b16 %v6137
    %v6804 = vunpack.c.l.b16 %v6138
    %v6805 = vunpack.c.l.b16 %v6139
    %v6806 = vunpack.c.h.b16 %v6139
    %v6807 = vunpack.c.l.b16 %v6140
    %v6808 = vunpack.c.h.b16 %v6140
    %v6809 = vunpack.c.l.b16 %v6141
    %v6810 = vunpack.c.h.b16 %v6141
    %v6811 = vunpack.c.l.b16 %v6142
    %v6812 = vunpack.c.l.b16 %v6143
    %v6813 = vunpack.c.h.b16 %v6143
    %v6814 = vunpack.c.l.b16 %v6144
    %v6815 = vunpack.c.h.b16 %v6144
    %v6816 = vunpack.c.l.b16 %v6145
    %v6817 = vunpack.c.h.b16 %v6145
    %v6818 = vunpack.c.l.b16 %v6146
    %v6819 = vunpack.c.l.b16 %v6147
    %v6820 = vunpack.c.h.b16 %v6147
    %v6821 = vunpack.c.l.b16 %v6148
    %v6822 = vunpack.c.h.b16 %v6148
    %v6823 = vunpack.c.l.b16 %v6149
    %v6824 = vunpack.c.h.b16 %v6149
    %v6825 = vunpack.c.l.b16 %v6150
    %v6826 = vunpack.c.l.b16 %v6151
    %v6827 = vunpack.c.h.b16 %v6151
    %v6828 = vunpack.c.l.b16 %v6152
    %v6829 = vunpack.c.h.b16 %v6152
    %v6830 = vunpack.c.l.b16 %v6153
    %v6831 = vunpack.c.h.b16 %v6153
    %v6832 = vunpack.c.l.b16 %v6154
    %v6833 = vunpack.c.l.b16 %v6155
    %v6834 = vunpack.c.h.b16 %v6155
    %v6835 = vunpack.c.l.b16 %v6156
    %v6836 = vunpack.c.h.b16 %v6156
    %v6837 = vunpack.c.l.b16 %v6157
    %v6838 = vunpack.c.h.b16 %v6157
    %v6839 = vunpack.c.l.b16 %v6158
    %v6840 = vunpack.c.l.b16 %v6159
    %v6841 = vunpack.c.h.b16 %v6159
    %v6842 = vunpack.c.l.b16 %v6160
    %v6843 = vunpack.c.h.b16 %v6160
    %v6844 = vunpack.c.l.b16 %v6161
    %v6845 = vunpack.c.h.b16 %v6161
    %v6846 = vunpack.c.l.b16 %v6162
    %v6847 = vunpack.c.l.b16 %v6163
    %v6848 = vunpack.c.h.b16 %v6163
    %v6849 = vunpack.c.l.b16 %v6164
    %v6850 = vunpack.c.h.b16 %v6164
    %v6851 = vunpack.c.l.b16 %v6165
    %v6852 = vunpack.c.h.b16 %v6165
    %v6853 = vunpack.c.l.b16 %v6166
    %v6854 = vunpack.c.l.b16 %v6167
    %v6855 = vunpack.c.h.b16 %v6167
    %v6856 = vunpack.c.l.b16 %v6168
    %v6857 = vunpack.c.h.b16 %v6168
    %v6858 = vunpack.c.l.b16 %v6169
    %v6859 = vunpack.c.h.b16 %v6169
    %v6860 = vunpack.c.l.b16 %v6170
    %v6861 = vunpack.c.l.b16 %v6171
    %v6862 = vunpack.c.h.b16 %v6171
    %v6863 = vunpack.c.l.b16 %v6172
    %v6864 = vunpack.c.h.b16 %v6172
    %v6865 = vunpack.c.l.b16 %v6173
    %v6866 = vunpack.c.h.b16 %v6173
    %v6867 = vunpack.c.l.b16 %v6174
    %v6868 = vunpack.c.l.b16 %v6175
    %v6869 = vunpack.c.h.b16 %v6175
    %v6870 = vunpack.c.l.b16 %v6176
    %v6871 = vunpack.c.h.b16 %v6176
    %v6872 = vunpack.c.l.b16 %v6177
    %v6873 = vunpack.c.h.b16 %v6177
    %v6874 = vunpack.c.l.b16 %v6178
    %v6875 = vunpack.c.l.b16 %v6179
    %v6876 = vunpack.c.h.b16 %v6179
    %v6877 = vunpack.c.l.b16 %v6180
    %v6878 = vunpack.c.h.b16 %v6180
    %v6879 = vunpack.c.l.b16 %v6181
    %v6880 = vunpack.c.h.b16 %v6181
    %v6881 = vunpack.c.l.b16 %v6182
    %v6882 = vunpack.c.l.b16 %v6183
    %v6883 = vunpack.c.h.b16 %v6183
    %v6884 = vunpack.c.l.b16 %v6184
    %v6885 = vunpack.c.h.b16 %v6184
    %v6886 = vunpack.c.l.b16 %v6185
    %v6887 = vunpack.c.h.b16 %v6185
    %v6888 = vunpack.c.l.b16 %v6186
    %v6889 = vunpack.c.l.b16 %v6187
    %v6890 = vunpack.c.h.b16 %v6187
    %v6891 = vunpack.c.l.b16 %v6188
    %v6892 = vunpack.c.h.b16 %v6188
    %v6893 = vunpack.c.l.b16 %v6189
    %v6894 = vunpack.c.h.b16 %v6189
    %v6895 = vunpack.c.l.b16 %v6190
    %v6896 = vunpack.c.l.b16 %v6191
    %v6897 = vunpack.c.h.b16 %v6191
    %v6898 = vunpack.c.l.b16 %v6192
    %v6899 = vunpack.c.h.b16 %v6192
    %v6900 = vunpack.c.l.b16 %v6193
    %v6901 = vunpack.c.h.b16 %v6193
    %v6902 = vunpack.c.l.b16 %v6194
    %v6903 = vunpack.c.l.b16 %v6195
    %v6904 = vunpack.c.h.b16 %v6195
    %v6905 = vunpack.c.l.b16 %v6196
    %v6906 = vunpack.c.h.b16 %v6196
    %v6907 = vunpack.c.l.b16 %v6197
    %v6908 = vunpack.c.h.b16 %v6197
    %v6909 = vunpack.c.l.b16 %v6198
    %v6910 = vunpack.c.l.b16 %v6199
    %v6911 = vunpack.c.h.b16 %v6199
    %v6912 = vunpack.c.l.b16 %v6200
    %v6913 = vunpack.c.h.b16 %v6200
    %v6914 = vunpack.c.l.b16 %v6201
    %v6915 = vunpack.c.h.b16 %v6201
    %v6916 = vunpack.c.l.b16 %v6202
    %v6917 = vunpack.c.l.b16 %v6203
    %v6918 = vunpack.c.h.b16 %v6203
    %v6919 = vunpack.c.l.b16 %v6204
    %v6920 = vunpack.c.h.b16 %v6204
    %v6921 = vunpack.c.l.b16 %v6205
    %v6922 = vunpack.c.h.b16 %v6205
    %v6923 = vunpack.c.l.b16 %v6206
    %v6924 = vunpack.c.l.b16 %v6207
    %v6925 = vunpack.c.h.b16 %v6207
    %v6926 = vunpack.c.l.b16 %v6208
    %v6927 = vunpack.c.h.b16 %v6208
    %v6928 = vunpack.c.l.b16 %v6209
    %v6929 = vunpack.c.h.b16 %v6209
    %v6930 = vunpack.c.l.b16 %v6210
    %v6931 = vpack.c.b16 %v6490, %v6483
    %v6932 = vpack.c.b16 %v6491, %v6484
    %v6933 = vpack.c.b16 %v6492, %v6485
    %v6934 = vpack.c.b16 %v6493, %v6486
    %v6935 = vpack.c.b16 %v6494, %v6487
    %v6936 = vpack.c.b16 %v6495, %v6488
    %v6937 = vpack.c.b16 %v6496, %v6489
    %v6938 = vpack.c.b16 %v6504, %v6497
    %v6939 = vpack.c.b16 %v6505, %v6498
    %v6940 = vpack.c.b16 %v6506, %v6499
    %v6941 = vpack.c.b16 %v6507, %v6500
    %v6942 = vpack.c.b16 %v6508, %v6501
    %v6943 = vpack.c.b16 %v6509, %v6502
    %v6944 = vpack.c.b16 %v6510, %v6503
    %v6945 = vpack.c.b16 %v6518, %v6511
    %v6946 = vpack.c.b16 %v6519, %v6512
    %v6947 = vpack.c.b16 %v6520, %v6513
    %v6948 = vpack.c.b16 %v6521, %v6514
    %v6949 = vpack.c.b16 %v6522, %v6515
    %v6950 = vpack.c.b16 %v6523, %v6516
    %v6951 = vpack.c.b16 %v6524, %v6517
    %v6952 = vpack.c.b16 %v6532, %v6525
    %v6953 = vpack.c.b16 %v6533, %v6526
    %v6954 = vpack.c.b16 %v6534, %v6527
    %v6955 = vpack.c.b16 %v6535, %v6528
    %v6956 = vpack.c.b16 %v6536, %v6529
    %v6957 = vpack.c.b16 %v6537, %v6530
    %v6958 = vpack.c.b16 %v6538, %v6531
    %v6959 = vpack.c.b16 %v6546, %v6539
    %v6960 = vpack.c.b16 %v6547, %v6540
    %v6961 = vpack.c.b16 %v6548, %v6541
    %v6962 = vpack.c.b16 %v6549, %v6542
    %v6963 = vpack.c.b16 %v6550, %v6543
    %v6964 = vpack.c.b16 %v6551, %v6544
    %v6965 = vpack.c.b16 %v6552, %v6545
    %v6966 = vpack.c.b16 %v6560, %v6553
    %v6967 = vpack.c.b16 %v6561, %v6554
    %v6968 = vpack.c.b16 %v6562, %v6555
    %v6969 = vpack.c.b16 %v6563, %v6556
    %v6970 = vpack.c.b16 %v6564, %v6557
    %v6971 = vpack.c.b16 %v6565, %v6558
    %v6972 = vpack.c.b16 %v6566, %v6559
    %v6973 = vpack.c.b16 %v6574, %v6567
    %v6974 = vpack.c.b16 %v6575, %v6568
    %v6975 = vpack.c.b16 %v6576, %v6569
    %v6976 = vpack.c.b16 %v6577, %v6570
    %v6977 = vpack.c.b16 %v6578, %v6571
    %v6978 = vpack.c.b16 %v6579, %v6572
    %v6979 = vpack.c.b16 %v6580, %v6573
    %v6980 = vpack.c.b16 %v6588, %v6581
    %v6981 = vpack.c.b16 %v6589, %v6582
    %v6982 = vpack.c.b16 %v6590, %v6583
    %v6983 = vpack.c.b16 %v6591, %v6584
    %v6984 = vpack.c.b16 %v6592, %v6585
    %v6985 = vpack.c.b16 %v6593, %v6586
    %v6986 = vpack.c.b16 %v6594, %v6587
    %v6987 = vpack.c.b16 %v6602, %v6595
    %v6988 = vpack.c.b16 %v6603, %v6596
    %v6989 = vpack.c.b16 %v6604, %v6597
    %v6990 = vpack.c.b16 %v6605, %v6598
    %v6991 = vpack.c.b16 %v6606, %v6599
    %v6992 = vpack.c.b16 %v6607, %v6600
    %v6993 = vpack.c.b16 %v6608, %v6601
    %v6994 = vpack.c.b16 %v6616, %v6609
    %v6995 = vpack.c.b16 %v6617, %v6610
    %v6996 = vpack.c.b16 %v6618, %v6611
    %v6997 = vpack.c.b16 %v6619, %v6612
    %v6998 = vpack.c.b16 %v6620, %v6613
    %v6999 = vpack.c.b16 %v6621, %v6614
    %v7000 = vpack.c.b16 %v6622, %v6615
    %v7001 = vpack.c.b16 %v6630, %v6623
    %v7002 = vpack.c.b16 %v6631, %v6624
    %v7003 = vpack.c.b16 %v6632, %v6625
    %v7004 = vpack.c.b16 %v6633, %v6626
    %v7005 = vpack.c.b16 %v6634, %v6627
    %v7006 = vpack.c.b16 %v6635, %v6628
    %v7007 = vpack.c.b16 %v6636, %v6629
    %v7008 = vpack.c.b16 %v6644, %v6637
    %v7009 = vpack.c.b16 %v6645, %v6638
    %v7010 = vpack.c.b16 %v6646, %v6639
    %v7011 = vpack.c.b16 %v6647, %v6640
    %v7012 = vpack.c.b16 %v6648, %v6641
    %v7013 = vpack.c.b16 %v6649, %v6642
    %v7014 = vpack.c.b16 %v6650, %v6643
    %v7015 = vpack.c.b16 %v6658, %v6651
    %v7016 = vpack.c.b16 %v6659, %v6652
    %v7017 = vpack.c.b16 %v6660, %v6653
    %v7018 = vpack.c.b16 %v6661, %v6654
    %v7019 = vpack.c.b16 %v6662, %v6655
    %v7020 = vpack.c.b16 %v6663, %v6656
    %v7021 = vpack.c.b16 %v6664, %v6657
    %v7022 = vpack.c.b16 %v6672, %v6665
    %v7023 = vpack.c.b16 %v6673, %v6666
    %v7024 = vpack.c.b16 %v6674, %v6667
    %v7025 = vpack.c.b16 %v6675, %v6668
    %v7026 = vpack.c.b16 %v6676, %v6669
    %v7027 = vpack.c.b16 %v6677, %v6670
    %v7028 = vpack.c.b16 %v6678, %v6671
    %v7029 = vpack.c.b16 %v6686, %v6679
    %v7030 = vpack.c.b16 %v6687, %v6680
    %v7031 = vpack.c.b16 %v6688, %v6681
    %v7032 = vpack.c.b16 %v6689, %v6682
    %v7033 = vpack.c.b16 %v6690, %v6683
    %v7034 = vpack.c.b16 %v6691, %v6684
    %v7035 = vpack.c.b16 %v6692, %v6685
    %v7036 = vpack.c.b16 %v6700, %v6693
    %v7037 = vpack.c.b16 %v6701, %v6694
    %v7038 = vpack.c.b16 %v6702, %v6695
    %v7039 = vpack.c.b16 %v6703, %v6696
    %v7040 = vpack.c.b16 %v6704, %v6697
    %v7041 = vpack.c.b16 %v6705, %v6698
    %v7042 = vpack.c.b16 %v6706, %v6699
    %v7043 = vpack.c.b16 %v6714, %v6707
    %v7044 = vpack.c.b16 %v6715, %v6708
    %v7045 = vpack.c.b16 %v6716, %v6709
    %v7046 = vpack.c.b16 %v6717, %v6710
    %v7047 = vpack.c.b16 %v6718, %v6711
    %v7048 = vpack.c.b16 %v6719, %v6712
    %v7049 = vpack.c.b16 %v6720, %v6713
    %v7050 = vpack.c.b16 %v6728, %v6721
    %v7051 = vpack.c.b16 %v6729, %v6722
    %v7052 = vpack.c.b16 %v6730, %v6723
    %v7053 = vpack.c.b16 %v6731, %v6724
    %v7054 = vpack.c.b16 %v6732, %v6725
    %v7055 = vpack.c.b16 %v6733, %v6726
    %v7056 = vpack.c.b16 %v6734, %v6727
    %v7057 = vpack.c.b16 %v6742, %v6735
    %v7058 = vpack.c.b16 %v6743, %v6736
    %v7059 = vpack.c.b16 %v6744, %v6737
    %v7060 = vpack.c.b16 %v6745, %v6738
    %v7061 = vpack.c.b16 %v6746, %v6739
    %v7062 = vpack.c.b16 %v6747, %v6740
    %v7063 = vpack.c.b16 %v6748, %v6741
    %v7064 = vpack.c.b16 %v6756, %v6749
    %v7065 = vpack.c.b16 %v6757, %v6750
    %v7066 = vpack.c.b16 %v6758, %v6751
    %v7067 = vpack.c.b16 %v6759, %v6752
    %v7068 = vpack.c.b16 %v6760, %v6753
    %v7069 = vpack.c.b16 %v6761, %v6754
    %v7070 = vpack.c.b16 %v6762, %v6755
    %v7071 = vpack.c.b16 %v6770, %v6763
    %v7072 = vpack.c.b16 %v6771, %v6764
    %v7073 = vpack.c.b16 %v6772, %v6765
    %v7074 = vpack.c.b16 %v6773, %v6766
    %v7075 = vpack.c.b16 %v6774, %v6767
    %v7076 = vpack.c.b16 %v6775, %v6768
    %v7077 = vpack.c.b16 %v6776, %v6769
    %v7078 = vpack.c.b16 %v6784, %v6777
    %v7079 = vpack.c.b16 %v6785, %v6778
    %v7080 = vpack.c.b16 %v6786, %v6779
    %v7081 = vpack.c.b16 %v6787, %v6780
    %v7082 = vpack.c.b16 %v6788, %v6781
    %v7083 = vpack.c.b16 %v6789, %v6782
    %v7084 = vpack.c.b16 %v6790, %v6783
    %v7085 = vpack.c.b16 %v6798, %v6791
    %v7086 = vpack.c.b16 %v6799, %v6792
    %v7087 = vpack.c.b16 %v6800, %v6793
    %v7088 = vpack.c.b16 %v6801, %v6794
    %v7089 = vpack.c.b16 %v6802, %v6795
    %v7090 = vpack.c.b16 %v6803, %v6796
    %v7091 = vpack.c.b16 %v6804, %v6797
    %v7092 = vpack.c.b16 %v6812, %v6805
    %v7093 = vpack.c.b16 %v6813, %v6806
    %v7094 = vpack.c.b16 %v6814, %v6807
    %v7095 = vpack.c.b16 %v6815, %v6808
    %v7096 = vpack.c.b16 %v6816, %v6809
    %v7097 = vpack.c.b16 %v6817, %v6810
    %v7098 = vpack.c.b16 %v6818, %v6811
    %v7099 = vpack.c.b16 %v6826, %v6819
    %v7100 = vpack.c.b16 %v6827, %v6820
    %v7101 = vpack.c.b16 %v6828, %v6821
    %v7102 = vpack.c.b16 %v6829, %v6822
    %v7103 = vpack.c.b16 %v6830, %v6823
    %v7104 = vpack.c.b16 %v6831, %v6824
    %v7105 = vpack.c.b16 %v6832, %v6825
    %v7106 = vpack.c.b16 %v6840, %v6833
    %v7107 = vpack.c.b16 %v6841, %v6834
    %v7108 = vpack.c.b16 %v6842, %v6835
    %v7109 = vpack.c.b16 %v6843, %v6836
    %v7110 = vpack.c.b16 %v6844, %v6837
    %v7111 = vpack.c.b16 %v6845, %v6838
    %v7112 = vpack.c.b16 %v6846, %v6839
    %v7113 = vpack.c.b16 %v6854, %v6847
    %v7114 = vpack.c.b16 %v6855, %v6848
    %v7115 = vpack.c.b16 %v6856, %v6849
    %v7116 = vpack.c.b16 %v6857, %v6850
    %v7117 = vpack.c.b16 %v6858, %v6851
    %v7118 = vpack.c.b16 %v6859, %v6852
    %v7119 = vpack.c.b16 %v6860, %v6853
    %v7120 = vpack.c.b16 %v6868, %v6861
    %v7121 = vpack.c.b16 %v6869, %v6862
    %v7122 = vpack.c.b16 %v6870, %v6863
    %v7123 = vpack.c.b16 %v6871, %v6864
    %v7124 = vpack.c.b16 %v6872, %v6865
    %v7125 = vpack.c.b16 %v6873, %v6866
    %v7126 = vpack.c.b16 %v6874, %v6867
    %v7127 = vpack.c.b16 %v6882, %v6875
    %v7128 = vpack.c.b16 %v6883, %v6876
    %v7129 = vpack.c.b16 %v6884, %v6877
    %v7130 = vpack.c.b16 %v6885, %v6878
    %v7131 = vpack.c.b16 %v6886, %v6879
    %v7132 = vpack.c.b16 %v6887, %v6880
    %v7133 = vpack.c.b16 %v6888, %v6881
    %v7134 = vpack.c.b16 %v6896, %v6889
    %v7135 = vpack.c.b16 %v6897, %v6890
    %v7136 = vpack.c.b16 %v6898, %v6891
    %v7137 = vpack.c.b16 %v6899, %v6892
    %v7138 = vpack.c.b16 %v6900, %v6893
    %v7139 = vpack.c.b16 %v6901, %v6894
    %v7140 = vpack.c.b16 %v6902, %v6895
    %v7141 = vpack.c.b16 %v6910, %v6903
    %v7142 = vpack.c.b16 %v6911, %v6904
    %v7143 = vpack.c.b16 %v6912, %v6905
    %v7144 = vpack.c.b16 %v6913, %v6906
    %v7145 = vpack.c.b16 %v6914, %v6907
    %v7146 = vpack.c.b16 %v6915, %v6908
    %v7147 = vpack.c.b16 %v6916, %v6909
    %v7148 = vpack.c.b16 %v6924, %v6917
    %v7149 = vpack.c.b16 %v6925, %v6918
    %v7150 = vpack.c.b16 %v6926, %v6919
    %v7151 = vpack.c.b16 %v6927, %v6920
    %v7152 = vpack.c.b16 %v6928, %v6921
    %v7153 = vpack.c.b16 %v6929, %v6922
    %v7154 = vpack.c.b16 %v6930, %v6923
    %7379 = vmatpush.bf16.msra.mxu0 %v6980
    %7380 = vmatpush.bf16.msra.mxu0 %v6973
    %7381 = vmatpush.bf16.msra.mxu0 %v6966
    %7382 = vmatpush.bf16.msra.mxu0 %v6959
    %7383 = vmatpush.bf16.msra.mxu0 %v6952
    %7384 = vmatpush.bf16.msra.mxu0 %v6945
    %7385 = vmatpush.bf16.msra.mxu0 %v6938
    %7386 = vmatpush.bf16.msra.mxu0 %v6931
    %7387 = vmatmul.bf16.gmra.mxu0 %v5951
    %v7388 = vpop.f32.mrf.mxu0
    %v7389 = vadd.f32 %v6213, %v7388
    %v7390 = vpop.f32.mrf.mxu0
    %v7391 = vadd.f32 %v6213, %v7390
    %7392 = vdwg.mxu0
    %7393 = vmatpush.bf16.msra.mxu0 %v7036
    %7394 = vmatpush.bf16.msra.mxu0 %v7029
    %7395 = vmatpush.bf16.msra.mxu0 %v7022
    %7396 = vmatpush.bf16.msra.mxu0 %v7015
    %7397 = vmatpush.bf16.msra.mxu0 %v7008
    %7398 = vmatpush.bf16.msra.mxu0 %v7001
    %7399 = vmatpush.bf16.msra.mxu0 %v6994
    %7400 = vmatpush.bf16.msra.mxu0 %v6987
    %7401 = vmatmul.bf16.gmra.mxu0 %v5952
    %v7402 = vpop.f32.mrf.mxu0
    %v7403 = vadd.f32 %v7389, %v7402
    %v7404 = vpop.f32.mrf.mxu0
    %v7405 = vadd.f32 %v7391, %v7404
    %7406 = vdwg.mxu0
    %7407 = vmatpush.bf16.msra.mxu0 %v7092
    %7408 = vmatpush.bf16.msra.mxu0 %v7085
    %7409 = vmatpush.bf16.msra.mxu0 %v7078
    %7410 = vmatpush.bf16.msra.mxu0 %v7071
    %7411 = vmatpush.bf16.msra.mxu0 %v7064
    %7412 = vmatpush.bf16.msra.mxu0 %v7057
    %7413 = vmatpush.bf16.msra.mxu0 %v7050
    %7414 = vmatpush.bf16.msra.mxu0 %v7043
    %7415 = vmatmul.bf16.gmra.mxu0 %v5953
    %v7416 = vpop.f32.mrf.mxu0
    %v7417 = vadd.f32 %v7403, %v7416
    %v7418 = vpop.f32.mrf.mxu0
    %v7419 = vadd.f32 %v7405, %v7418
    %7420 = vdwg.mxu0
    %7421 = vmatpush.bf16.msra.mxu0 %v7148
    %7422 = vmatpush.bf16.msra.mxu0 %v7141
    %7423 = vmatpush.bf16.msra.mxu0 %v7134
    %7424 = vmatpush.bf16.msra.mxu0 %v7127
    %7425 = vmatpush.bf16.msra.mxu0 %v7120
    %7426 = vmatpush.bf16.msra.mxu0 %v7113
    %7427 = vmatpush.bf16.msra.mxu0 %v7106
    %7428 = vmatpush.bf16.msra.mxu0 %v7099
    %7429 = vmatmul.bf16.gmra.mxu0 %v5954
    %v7430 = vpop.f32.mrf.mxu0
    %v7431 = vadd.f32 %v7417, %v7430
    %v7432 = vpop.f32.mrf.mxu0
    %v7433 = vadd.f32 %v7419, %v7432
    %7434 = vdwg.mxu0
    %7435 = vmatpush.bf16.msra.mxu0 %v6981
    %7436 = vmatpush.bf16.msra.mxu0 %v6974
    %7437 = vmatpush.bf16.msra.mxu0 %v6967
    %7438 = vmatpush.bf16.msra.mxu0 %v6960
    %7439 = vmatpush.bf16.msra.mxu0 %v6953
    %7440 = vmatpush.bf16.msra.mxu0 %v6946
    %7441 = vmatpush.bf16.msra.mxu0 %v6939
    %7442 = vmatpush.bf16.msra.mxu0 %v6932
    %7443 = vmatmul.bf16.gmra.mxu0 %v5951
    %v7444 = vpop.f32.mrf.mxu0
    %v7445 = vadd.f32 %v6214, %v7444
    %v7446 = vpop.f32.mrf.mxu0
    %v7447 = vadd.f32 %v6214, %v7446
    %7448 = vdwg.mxu0
    %7449 = vmatpush.bf16.msra.mxu0 %v7037
    %7450 = vmatpush.bf16.msra.mxu0 %v7030
    %7451 = vmatpush.bf16.msra.mxu0 %v7023
    %7452 = vmatpush.bf16.msra.mxu0 %v7016
    %7453 = vmatpush.bf16.msra.mxu0 %v7009
    %7454 = vmatpush.bf16.msra.mxu0 %v7002
    %7455 = vmatpush.bf16.msra.mxu0 %v6995
    %7456 = vmatpush.bf16.msra.mxu0 %v6988
    %7457 = vmatmul.bf16.gmra.mxu0 %v5952
    %v7458 = vpop.f32.mrf.mxu0
    %v7459 = vadd.f32 %v7445, %v7458
    %v7460 = vpop.f32.mrf.mxu0
    %v7461 = vadd.f32 %v7447, %v7460
    %7462 = vdwg.mxu0
    %7463 = vmatpush.bf16.msra.mxu0 %v7093
    %7464 = vmatpush.bf16.msra.mxu0 %v7086
    %7465 = vmatpush.bf16.msra.mxu0 %v7079
    %7466 = vmatpush.bf16.msra.mxu0 %v7072
    %7467 = vmatpush.bf16.msra.mxu0 %v7065
    %7468 = vmatpush.bf16.msra.mxu0 %v7058
    %7469 = vmatpush.bf16.msra.mxu0 %v7051
    %7470 = vmatpush.bf16.msra.mxu0 %v7044
    %7471 = vmatmul.bf16.gmra.mxu0 %v5953
    %v7472 = vpop.f32.mrf.mxu0
    %v7473 = vadd.f32 %v7459, %v7472
    %v7474 = vpop.f32.mrf.mxu0
    %v7475 = vadd.f32 %v7461, %v7474
    %7476 = vdwg.mxu0
    %7477 = vmatpush.bf16.msra.mxu0 %v7149
    %7478 = vmatpush.bf16.msra.mxu0 %v7142
    %7479 = vmatpush.bf16.msra.mxu0 %v7135
    %7480 = vmatpush.bf16.msra.mxu0 %v7128
    %7481 = vmatpush.bf16.msra.mxu0 %v7121
    %7482 = vmatpush.bf16.msra.mxu0 %v7114
    %7483 = vmatpush.bf16.msra.mxu0 %v7107
    %7484 = vmatpush.bf16.msra.mxu0 %v7100
    %7485 = vmatmul.bf16.gmra.mxu0 %v5954
    %v7486 = vpop.f32.mrf.mxu0
    %v7487 = vadd.f32 %v7473, %v7486
    %v7488 = vpop.f32.mrf.mxu0
    %v7489 = vadd.f32 %v7475, %v7488
    %7490 = vdwg.mxu0
    %7491 = vmatpush.bf16.msra.mxu0 %v6982
    %7492 = vmatpush.bf16.msra.mxu0 %v6975
    %7493 = vmatpush.bf16.msra.mxu0 %v6968
    %7494 = vmatpush.bf16.msra.mxu0 %v6961
    %7495 = vmatpush.bf16.msra.mxu0 %v6954
    %7496 = vmatpush.bf16.msra.mxu0 %v6947
    %7497 = vmatpush.bf16.msra.mxu0 %v6940
    %7498 = vmatpush.bf16.msra.mxu0 %v6933
    %7499 = vmatmul.bf16.gmra.mxu0 %v5951
    %v7500 = vpop.f32.mrf.mxu0
    %v7501 = vadd.f32 %v6215, %v7500
    %v7502 = vpop.f32.mrf.mxu0
    %v7503 = vadd.f32 %v6215, %v7502
    %7504 = vdwg.mxu0
    %7505 = vmatpush.bf16.msra.mxu0 %v7038
    %7506 = vmatpush.bf16.msra.mxu0 %v7031
    %7507 = vmatpush.bf16.msra.mxu0 %v7024
    %7508 = vmatpush.bf16.msra.mxu0 %v7017
    %7509 = vmatpush.bf16.msra.mxu0 %v7010
    %7510 = vmatpush.bf16.msra.mxu0 %v7003
    %7511 = vmatpush.bf16.msra.mxu0 %v6996
    %7512 = vmatpush.bf16.msra.mxu0 %v6989
    %7513 = vmatmul.bf16.gmra.mxu0 %v5952
    %v7514 = vpop.f32.mrf.mxu0
    %v7515 = vadd.f32 %v7501, %v7514
    %v7516 = vpop.f32.mrf.mxu0
    %v7517 = vadd.f32 %v7503, %v7516
    %7518 = vdwg.mxu0
    %7519 = vmatpush.bf16.msra.mxu0 %v7094
    %7520 = vmatpush.bf16.msra.mxu0 %v7087
    %7521 = vmatpush.bf16.msra.mxu0 %v7080
    %7522 = vmatpush.bf16.msra.mxu0 %v7073
    %7523 = vmatpush.bf16.msra.mxu0 %v7066
    %7524 = vmatpush.bf16.msra.mxu0 %v7059
    %7525 = vmatpush.bf16.msra.mxu0 %v7052
    %7526 = vmatpush.bf16.msra.mxu0 %v7045
    %7527 = vmatmul.bf16.gmra.mxu0 %v5953
    %v7528 = vpop.f32.mrf.mxu0
    %v7529 = vadd.f32 %v7515, %v7528
    %v7530 = vpop.f32.mrf.mxu0
    %v7531 = vadd.f32 %v7517, %v7530
    %7532 = vdwg.mxu0
    %7533 = vmatpush.bf16.msra.mxu0 %v7150
    %7534 = vmatpush.bf16.msra.mxu0 %v7143
    %7535 = vmatpush.bf16.msra.mxu0 %v7136
    %7536 = vmatpush.bf16.msra.mxu0 %v7129
    %7537 = vmatpush.bf16.msra.mxu0 %v7122
    %7538 = vmatpush.bf16.msra.mxu0 %v7115
    %7539 = vmatpush.bf16.msra.mxu0 %v7108
    %7540 = vmatpush.bf16.msra.mxu0 %v7101
    %7541 = vmatmul.bf16.gmra.mxu0 %v5954
    %v7542 = vpop.f32.mrf.mxu0
    %v7543 = vadd.f32 %v7529, %v7542
    %v7544 = vpop.f32.mrf.mxu0
    %v7545 = vadd.f32 %v7531, %v7544
    %7546 = vdwg.mxu0
    %7547 = vmatpush.bf16.msra.mxu0 %v6983
    %7548 = vmatpush.bf16.msra.mxu0 %v6976
    %7549 = vmatpush.bf16.msra.mxu0 %v6969
    %7550 = vmatpush.bf16.msra.mxu0 %v6962
    %7551 = vmatpush.bf16.msra.mxu0 %v6955
    %7552 = vmatpush.bf16.msra.mxu0 %v6948
    %7553 = vmatpush.bf16.msra.mxu0 %v6941
    %7554 = vmatpush.bf16.msra.mxu0 %v6934
    %7555 = vmatmul.bf16.gmra.mxu0 %v5951
    %v7556 = vpop.f32.mrf.mxu0
    %v7557 = vadd.f32 %v6216, %v7556
    %v7558 = vpop.f32.mrf.mxu0
    %v7559 = vadd.f32 %v6216, %v7558
    %7560 = vdwg.mxu0
    %7561 = vmatpush.bf16.msra.mxu0 %v7039
    %7562 = vmatpush.bf16.msra.mxu0 %v7032
    %7563 = vmatpush.bf16.msra.mxu0 %v7025
    %7564 = vmatpush.bf16.msra.mxu0 %v7018
    %7565 = vmatpush.bf16.msra.mxu0 %v7011
    %7566 = vmatpush.bf16.msra.mxu0 %v7004
    %7567 = vmatpush.bf16.msra.mxu0 %v6997
    %7568 = vmatpush.bf16.msra.mxu0 %v6990
    %7569 = vmatmul.bf16.gmra.mxu0 %v5952
    %v7570 = vpop.f32.mrf.mxu0
    %v7571 = vadd.f32 %v7557, %v7570
    %v7572 = vpop.f32.mrf.mxu0
    %v7573 = vadd.f32 %v7559, %v7572
    %7574 = vdwg.mxu0
    %7575 = vmatpush.bf16.msra.mxu0 %v7095
    %7576 = vmatpush.bf16.msra.mxu0 %v7088
    %7577 = vmatpush.bf16.msra.mxu0 %v7081
    %7578 = vmatpush.bf16.msra.mxu0 %v7074
    %7579 = vmatpush.bf16.msra.mxu0 %v7067
    %7580 = vmatpush.bf16.msra.mxu0 %v7060
    %7581 = vmatpush.bf16.msra.mxu0 %v7053
    %7582 = vmatpush.bf16.msra.mxu0 %v7046
    %7583 = vmatmul.bf16.gmra.mxu0 %v5953
    %v7584 = vpop.f32.mrf.mxu0
    %v7585 = vadd.f32 %v7571, %v7584
    %v7586 = vpop.f32.mrf.mxu0
    %v7587 = vadd.f32 %v7573, %v7586
    %7588 = vdwg.mxu0
    %7589 = vmatpush.bf16.msra.mxu0 %v7151
    %7590 = vmatpush.bf16.msra.mxu0 %v7144
    %7591 = vmatpush.bf16.msra.mxu0 %v7137
    %7592 = vmatpush.bf16.msra.mxu0 %v7130
    %7593 = vmatpush.bf16.msra.mxu0 %v7123
    %7594 = vmatpush.bf16.msra.mxu0 %v7116
    %7595 = vmatpush.bf16.msra.mxu0 %v7109
    %7596 = vmatpush.bf16.msra.mxu0 %v7102
    %7597 = vmatmul.bf16.gmra.mxu0 %v5954
    %v7598 = vpop.f32.mrf.mxu0
    %v7599 = vadd.f32 %v7585, %v7598
    %v7600 = vpop.f32.mrf.mxu0
    %v7601 = vadd.f32 %v7587, %v7600
    %7602 = vdwg.mxu0
    %7603 = vmatpush.bf16.msra.mxu0 %v6984
    %7604 = vmatpush.bf16.msra.mxu0 %v6977
    %7605 = vmatpush.bf16.msra.mxu0 %v6970
    %7606 = vmatpush.bf16.msra.mxu0 %v6963
    %7607 = vmatpush.bf16.msra.mxu0 %v6956
    %7608 = vmatpush.bf16.msra.mxu0 %v6949
    %7609 = vmatpush.bf16.msra.mxu0 %v6942
    %7610 = vmatpush.bf16.msra.mxu0 %v6935
    %7611 = vmatmul.bf16.gmra.mxu0 %v5951
    %v7612 = vpop.f32.mrf.mxu0
    %v7613 = vadd.f32 %v6217, %v7612
    %v7614 = vpop.f32.mrf.mxu0
    %v7615 = vadd.f32 %v6217, %v7614
    %7616 = vdwg.mxu0
    %7617 = vmatpush.bf16.msra.mxu0 %v7040
    %7618 = vmatpush.bf16.msra.mxu0 %v7033
    %7619 = vmatpush.bf16.msra.mxu0 %v7026
    %7620 = vmatpush.bf16.msra.mxu0 %v7019
    %7621 = vmatpush.bf16.msra.mxu0 %v7012
    %7622 = vmatpush.bf16.msra.mxu0 %v7005
    %7623 = vmatpush.bf16.msra.mxu0 %v6998
    %7624 = vmatpush.bf16.msra.mxu0 %v6991
    %7625 = vmatmul.bf16.gmra.mxu0 %v5952
    %v7626 = vpop.f32.mrf.mxu0
    %v7627 = vadd.f32 %v7613, %v7626
    %v7628 = vpop.f32.mrf.mxu0
    %v7629 = vadd.f32 %v7615, %v7628
    %7630 = vdwg.mxu0
    %7631 = vmatpush.bf16.msra.mxu0 %v7096
    %7632 = vmatpush.bf16.msra.mxu0 %v7089
    %7633 = vmatpush.bf16.msra.mxu0 %v7082
    %7634 = vmatpush.bf16.msra.mxu0 %v7075
    %7635 = vmatpush.bf16.msra.mxu0 %v7068
    %7636 = vmatpush.bf16.msra.mxu0 %v7061
    %7637 = vmatpush.bf16.msra.mxu0 %v7054
    %7638 = vmatpush.bf16.msra.mxu0 %v7047
    %7639 = vmatmul.bf16.gmra.mxu0 %v5953
    %v7640 = vpop.f32.mrf.mxu0
    %v7641 = vadd.f32 %v7627, %v7640
    %v7642 = vpop.f32.mrf.mxu0
    %v7643 = vadd.f32 %v7629, %v7642
    %7644 = vdwg.mxu0
    %7645 = vmatpush.bf16.msra.mxu0 %v7152
    %7646 = vmatpush.bf16.msra.mxu0 %v7145
    %7647 = vmatpush.bf16.msra.mxu0 %v7138
    %7648 = vmatpush.bf16.msra.mxu0 %v7131
    %7649 = vmatpush.bf16.msra.mxu0 %v7124
    %7650 = vmatpush.bf16.msra.mxu0 %v7117
    %7651 = vmatpush.bf16.msra.mxu0 %v7110
    %7652 = vmatpush.bf16.msra.mxu0 %v7103
    %7653 = vmatmul.bf16.gmra.mxu0 %v5954
    %v7654 = vpop.f32.mrf.mxu0
    %v7655 = vadd.f32 %v7641, %v7654
    %v7656 = vpop.f32.mrf.mxu0
    %v7657 = vadd.f32 %v7643, %v7656
    %7658 = vdwg.mxu0
    %7659 = vmatpush.bf16.msra.mxu0 %v6985
    %7660 = vmatpush.bf16.msra.mxu0 %v6978
    %7661 = vmatpush.bf16.msra.mxu0 %v6971
    %7662 = vmatpush.bf16.msra.mxu0 %v6964
    %7663 = vmatpush.bf16.msra.mxu0 %v6957
    %7664 = vmatpush.bf16.msra.mxu0 %v6950
    %7665 = vmatpush.bf16.msra.mxu0 %v6943
    %7666 = vmatpush.bf16.msra.mxu0 %v6936
    %7667 = vmatmul.bf16.gmra.mxu0 %v5951
    %v7668 = vpop.f32.mrf.mxu0
    %v7669 = vadd.f32 %v6218, %v7668
    %v7670 = vpop.f32.mrf.mxu0
    %v7671 = vadd.f32 %v6218, %v7670
    %7672 = vdwg.mxu0
    %7673 = vmatpush.bf16.msra.mxu0 %v7041
    %7674 = vmatpush.bf16.msra.mxu0 %v7034
    %7675 = vmatpush.bf16.msra.mxu0 %v7027
    %7676 = vmatpush.bf16.msra.mxu0 %v7020
    %7677 = vmatpush.bf16.msra.mxu0 %v7013
    %7678 = vmatpush.bf16.msra.mxu0 %v7006
    %7679 = vmatpush.bf16.msra.mxu0 %v6999
    %7680 = vmatpush.bf16.msra.mxu0 %v6992
    %7681 = vmatmul.bf16.gmra.mxu0 %v5952
    %v7682 = vpop.f32.mrf.mxu0
    %v7683 = vadd.f32 %v7669, %v7682
    %v7684 = vpop.f32.mrf.mxu0
    %v7685 = vadd.f32 %v7671, %v7684
    %7686 = vdwg.mxu0
    %7687 = vmatpush.bf16.msra.mxu0 %v7097
    %7688 = vmatpush.bf16.msra.mxu0 %v7090
    %7689 = vmatpush.bf16.msra.mxu0 %v7083
    %7690 = vmatpush.bf16.msra.mxu0 %v7076
    %7691 = vmatpush.bf16.msra.mxu0 %v7069
    %7692 = vmatpush.bf16.msra.mxu0 %v7062
    %7693 = vmatpush.bf16.msra.mxu0 %v7055
    %7694 = vmatpush.bf16.msra.mxu0 %v7048
    %7695 = vmatmul.bf16.gmra.mxu0 %v5953
    %v7696 = vpop.f32.mrf.mxu0
    %v7697 = vadd.f32 %v7683, %v7696
    %v7698 = vpop.f32.mrf.mxu0
    %v7699 = vadd.f32 %v7685, %v7698
    %7700 = vdwg.mxu0
    %7701 = vmatpush.bf16.msra.mxu0 %v7153
    %7702 = vmatpush.bf16.msra.mxu0 %v7146
    %7703 = vmatpush.bf16.msra.mxu0 %v7139
    %7704 = vmatpush.bf16.msra.mxu0 %v7132
    %7705 = vmatpush.bf16.msra.mxu0 %v7125
    %7706 = vmatpush.bf16.msra.mxu0 %v7118
    %7707 = vmatpush.bf16.msra.mxu0 %v7111
    %7708 = vmatpush.bf16.msra.mxu0 %v7104
    %7709 = vmatmul.bf16.gmra.mxu0 %v5954
    %v7710 = vpop.f32.mrf.mxu0
    %v7711 = vadd.f32 %v7697, %v7710
    %v7712 = vpop.f32.mrf.mxu0
    %v7713 = vadd.f32 %v7699, %v7712
    %7714 = vdwg.mxu0
    %7715 = vmatpush.bf16.msra.mxu0 %v6986
    %7716 = vmatpush.bf16.msra.mxu0 %v6979
    %7717 = vmatpush.bf16.msra.mxu0 %v6972
    %7718 = vmatpush.bf16.msra.mxu0 %v6965
    %7719 = vmatpush.bf16.msra.mxu0 %v6958
    %7720 = vmatpush.bf16.msra.mxu0 %v6951
    %7721 = vmatpush.bf16.msra.mxu0 %v6944
    %7722 = vmatpush.bf16.msra.mxu0 %v6937
    %7723 = vmatmul.bf16.gmra.mxu0 %v5951
    %v7724 = vpop.f32.mrf.mxu0
    %v7725 = vadd.f32 %v6219, %v7724
    %v7726 = vpop.f32.mrf.mxu0
    %v7727 = vadd.f32 %v6219, %v7726
    %7728 = vdwg.mxu0
    %7729 = vmatpush.bf16.msra.mxu0 %v7042
    %7730 = vmatpush.bf16.msra.mxu0 %v7035
    %7731 = vmatpush.bf16.msra.mxu0 %v7028
    %7732 = vmatpush.bf16.msra.mxu0 %v7021
    %7733 = vmatpush.bf16.msra.mxu0 %v7014
    %7734 = vmatpush.bf16.msra.mxu0 %v7007
    %7735 = vmatpush.bf16.msra.mxu0 %v7000
    %7736 = vmatpush.bf16.msra.mxu0 %v6993
    %7737 = vmatmul.bf16.gmra.mxu0 %v5952
    %v7738 = vpop.f32.mrf.mxu0
    %v7739 = vadd.f32 %v7725, %v7738
    %v7740 = vpop.f32.mrf.mxu0
    %v7741 = vadd.f32 %v7727, %v7740
    %7742 = vdwg.mxu0
    %7743 = vmatpush.bf16.msra.mxu0 %v7098
    %7744 = vmatpush.bf16.msra.mxu0 %v7091
    %7745 = vmatpush.bf16.msra.mxu0 %v7084
    %7746 = vmatpush.bf16.msra.mxu0 %v7077
    %7747 = vmatpush.bf16.msra.mxu0 %v7070
    %7748 = vmatpush.bf16.msra.mxu0 %v7063
    %7749 = vmatpush.bf16.msra.mxu0 %v7056
    %7750 = vmatpush.bf16.msra.mxu0 %v7049
    %7751 = vmatmul.bf16.gmra.mxu0 %v5953
    %v7752 = vpop.f32.mrf.mxu0
    %v7753 = vadd.f32 %v7739, %v7752
    %v7754 = vpop.f32.mrf.mxu0
    %v7755 = vadd.f32 %v7741, %v7754
    %7756 = vdwg.mxu0
    %7757 = vmatpush.bf16.msra.mxu0 %v7154
    %7758 = vmatpush.bf16.msra.mxu0 %v7147
    %7759 = vmatpush.bf16.msra.mxu0 %v7140
    %7760 = vmatpush.bf16.msra.mxu0 %v7133
    %7761 = vmatpush.bf16.msra.mxu0 %v7126
    %7762 = vmatpush.bf16.msra.mxu0 %v7119
    %7763 = vmatpush.bf16.msra.mxu0 %v7112
    %7764 = vmatpush.bf16.msra.mxu0 %v7105
    %7765 = vmatmul.bf16.gmra.mxu0 %v5954
    %v7766 = vpop.f32.mrf.mxu0
    %v7767 = vadd.f32 %v7753, %v7766
    %v7768 = vpop.f32.mrf.mxu0
    %v7769 = vadd.f32 %v7755, %v7768
    %7770 = vdwg.mxu0
    %v7771 = vmax.f32 %v7431, 0.0
    %v7772 = vmax.f32 %v7487, 0.0
    %v7773 = vmax.f32 %v7543, 0.0
    %v7774 = vmax.f32 %v7599, 0.0
    %v7775 = vmax.f32 %v7655, 0.0
    %v7776 = vmax.f32 %v7711, 0.0
    %v7777 = vmax.f32 %v7767, 0.0
    %v7778 = vmax.f32 %v7433, 0.0
    %v7779 = vmax.f32 %v7489, 0.0
    %v7780 = vmax.f32 %v7545, 0.0
    %v7781 = vmax.f32 %v7601, 0.0
    %v7782 = vmax.f32 %v7657, 0.0
    %v7783 = vmax.f32 %v7713, 0.0
    %v7784 = vmax.f32 %v7769, 0.0
    %v7785 = vsub.f32 0.0, %v7771
    %v7786 = vsub.f32 0.0, %v7772
    %v7787 = vsub.f32 0.0, %v7773
    %v7788 = vsub.f32 0.0, %v7774
    %v7789 = vsub.f32 0.0, %v7775
    %v7790 = vsub.f32 0.0, %v7776
    %v7791 = vsub.f32 0.0, %v7777
    %v7792 = vsub.f32 0.0, %v7778
    %v7793 = vsub.f32 0.0, %v7779
    %v7794 = vsub.f32 0.0, %v7780
    %v7795 = vsub.f32 0.0, %v7781
    %v7796 = vsub.f32 0.0, %v7782
    %v7797 = vsub.f32 0.0, %v7783
    %v7798 = vsub.f32 0.0, %v7784
    %v7799 = vmul.f32 %v7785, 1.442695
    %v7800 = vpow.pop %v7799
    %v7801 = vmul.f32 %v7786, 1.442695
    %v7802 = vpow.pop %v7801
    %v7803 = vmul.f32 %v7787, 1.442695
    %v7804 = vpow.pop %v7803
    %v7805 = vmul.f32 %v7788, 1.442695
    %v7806 = vpow.pop %v7805
    %v7807 = vmul.f32 %v7789, 1.442695
    %v7808 = vpow.pop %v7807
    %v7809 = vmul.f32 %v7790, 1.442695
    %v7810 = vpow.pop %v7809
    %v7811 = vmul.f32 %v7791, 1.442695
    %v7812 = vpow.pop %v7811
    %v7813 = vmul.f32 %v7792, 1.442695
    %v7814 = vpow.pop %v7813
    %v7815 = vmul.f32 %v7793, 1.442695
    %v7816 = vpow.pop %v7815
    %v7817 = vmul.f32 %v7794, 1.442695
    %v7818 = vpow.pop %v7817
    %v7819 = vmul.f32 %v7795, 1.442695
    %v7820 = vpow.pop %v7819
    %v7821 = vmul.f32 %v7796, 1.442695
    %v7822 = vpow.pop %v7821
    %v7823 = vmul.f32 %v7797, 1.442695
    %v7824 = vpow.pop %v7823
    %v7825 = vmul.f32 %v7798, 1.442695
    %v7826 = vpow.pop %v7825
    %v7827 = vadd.f32 %v7800, 1.0
    %v7828 = vadd.f32 %v7802, 1.0
    %v7829 = vadd.f32 %v7804, 1.0
    %v7830 = vadd.f32 %v7806, 1.0
    %v7831 = vadd.f32 %v7808, 1.0
    %v7832 = vadd.f32 %v7810, 1.0
    %v7833 = vadd.f32 %v7812, 1.0
    %v7834 = vadd.f32 %v7814, 1.0
    %v7835 = vadd.f32 %v7816, 1.0
    %v7836 = vadd.f32 %v7818, 1.0
    %v7837 = vadd.f32 %v7820, 1.0
    %v7838 = vadd.f32 %v7822, 1.0
    %v7839 = vadd.f32 %v7824, 1.0
    %v7840 = vadd.f32 %v7826, 1.0
    %v7841 = vrcp.pop %v7827
    %v7842 = vrcp.pop %v7828
    %v7843 = vrcp.pop %v7829
    %v7844 = vrcp.pop %v7830
    %v7845 = vrcp.pop %v7831
    %v7846 = vrcp.pop %v7832
    %v7847 = vrcp.pop %v7833
    %v7848 = vrcp.pop %v7834
    %v7849 = vrcp.pop %v7835
    %v7850 = vrcp.pop %v7836
    %v7851 = vrcp.pop %v7837
    %v7852 = vrcp.pop %v7838
    %v7853 = vrcp.pop %v7839
    %v7854 = vrcp.pop %v7840
    %v7855 = vmin.f32 %v7841, 1.0
    %v7856 = vmin.f32 %v7842, 1.0
    %v7857 = vmin.f32 %v7843, 1.0
    %v7858 = vmin.f32 %v7844, 1.0
    %v7859 = vmin.f32 %v7845, 1.0
    %v7860 = vmin.f32 %v7846, 1.0
    %v7861 = vmin.f32 %v7847, 1.0
    %v7862 = vmin.f32 %v7848, 1.0
    %v7863 = vmin.f32 %v7849, 1.0
    %v7864 = vmin.f32 %v7850, 1.0
    %v7865 = vmin.f32 %v7851, 1.0
    %v7866 = vmin.f32 %v7852, 1.0
    %v7867 = vmin.f32 %v7853, 1.0
    %v7868 = vmin.f32 %v7854, 1.0
    %7869 = vst [vmem:[%s14] sm:$0xff] %v7855
    %7870 = vst [vmem:[%s14 + $0x8] sm:$0xff] %v7856
    %7871 = vst [vmem:[%s14 + $0x10] sm:$0xff] %v7857
    %7872 = vst [vmem:[%s14 + $0x18] sm:$0xff] %v7858
    %7873 = vst [vmem:[%s14 + $0x20] sm:$0xff] %v7859
    %7874 = vst [vmem:[%s14 + $0x28] sm:$0xff] %v7860
    %7875 = vst.msk [vmem:[%s14 + $0x30] sm:$0xff] %vm1282, %v7861
    %7876 = vst [vmem:[%s14 + $0x38] sm:$0xff] %v7862
    %7877 = vst [vmem:[%s14 + $0x40] sm:$0xff] %v7863
    %7878 = vst [vmem:[%s14 + $0x48] sm:$0xff] %v7864
    %7879 = vst [vmem:[%s14 + $0x50] sm:$0xff] %v7865
    %7880 = vst [vmem:[%s14 + $0x58] sm:$0xff] %v7866
    %7881 = vst [vmem:[%s14 + $0x60] sm:$0xff] %v7867
    %7882 = vst.msk [vmem:[%s14 + $0x68] sm:$0xff] %vm1282, %v7868
    %v7883 = vmul.f32 %v2354, %v2354
    %v7884 = vmul.f32 %v2356, %v2356
    %7885 = vadd.xlane.f32.xlu0 %v7883
    %v7886 = vpop.xlane.xlu0 %7885
    %7887 = vadd.xlane.f32.xlu0 %v7884
    %v7888 = vpop.xlane.xlu0 %7887
    %7889 = vmatpush.xpose.msra.mxu0 0.0
    %7890 = vmatpush.xpose.msra.mxu0 0.0
    %7891 = vmatpush.xpose.msra.mxu0 0.0
    %7892 = vmatpush.xpose.msra.mxu0 0.0
    %7893 = vmatpush.xpose.msra.mxu0 0.0
    %7894 = vmatpush.xpose.msra.mxu0 0.0
    %7895 = vmatpush.xpose.msra.mxu0 0.0
    %7896 = vmatpush.xpose.msra.mxu0 0.0
    %7897 = vmatpush.xpose.msra.mxu0 0.0
    %7898 = vmatpush.xpose.msra.mxu0 0.0
    %7899 = vmatpush.xpose.msra.mxu0 0.0
    %7900 = vmatpush.xpose.msra.mxu0 0.0
    %7901 = vmatpush.xpose.msra.mxu0 0.0
    %7902 = vmatpush.xpose.msra.mxu0 0.0
    %7903 = vmatpush.xpose.msra.mxu0 %v2356
    %7904 = vmatpush.xpose.msra.mxu0 %v2354
    %7905 = vmatmul.f32.gmra.mxu0 %v2360
    %v7906 = vpop.f32.mrf.mxu0
    %v7907 = vadd.f32 0.0, %v7906
    %7908 = vmatmul.f32.gmra.mxu0 %v2361
    %v7909 = vpop.f32.mrf.mxu0
    %v7910 = vadd.f32 0.0, %v7909
    %7911 = vmatmul.f32.gmra.mxu0 %v2362
    %v7912 = vpop.f32.mrf.mxu0
    %v7913 = vadd.f32 0.0, %v7912
    %7914 = vmatmul.f32.gmra.mxu0 %v2363
    %v7915 = vpop.f32.mrf.mxu0
    %v7916 = vadd.f32 0.0, %v7915
    %7917 = vmatmul.f32.gmra.mxu0 %v2364
    %v7918 = vpop.f32.mrf.mxu0
    %v7919 = vadd.f32 0.0, %v7918
    %7920 = vmatmul.f32.gmra.mxu0 %v2365
    %v7921 = vpop.f32.mrf.mxu0
    %v7922 = vadd.f32 0.0, %v7921
    %7923 = vmatmul.f32.gmra.mxu0 %v2366
    %v7924 = vpop.f32.mrf.mxu0
    %v7925 = vadd.f32 0.0, %v7924
    %7926 = vmatmul.f32.gmra.mxu0 %v2367
    %v7927 = vpop.f32.mrf.mxu0
    %v7928 = vadd.f32 0.0, %v7927
    %7929 = vdwg.mxu0
    %v7930 = vmul.f32 %v7907, 2.0
    %v7931 = vmul.f32 %v7910, 2.0
    %v7932 = vmul.f32 %v7913, 2.0
    %v7933 = vmul.f32 %v7916, 2.0
    %v7934 = vmul.f32 %v7919, 2.0
    %v7935 = vmul.f32 %v7922, 2.0
    %v7936 = vmul.f32 %v7925, 2.0
    %v7937 = vmul.f32 %v7928, 2.0
    %v7946 = vperm.slane %v7930, 0
    %v7947 = vlaneseq
    %v7948 = vshrl.u32 %v7947, 7
    %7950 = vset.pattern.permute.xlu0 %v7948
    %7951 = vperm.xlu0 %7950, %v7946
    %v7952 = vpop.permute.xlu0 %7951
    %v7953 = vlaneseq
    %v7954 = vshrl.u32 %v7953, 7
    %v7955 = vadd.s32 %v7954, 8
    %7956 = vset.pattern.permute.xlu0 %v7955
    %7957 = vperm.xlu0 %7956, %v7946
    %v7958 = vpop.permute.xlu0 %7957
    %v7959 = vperm.slane %v7930, 1
    %v7960 = vlaneseq
    %v7961 = vshrl.u32 %v7960, 7
    %7963 = vset.pattern.permute.xlu0 %v7961
    %7964 = vperm.xlu0 %7963, %v7959
    %v7965 = vpop.permute.xlu0 %7964
    %v7966 = vlaneseq
    %v7967 = vshrl.u32 %v7966, 7
    %v7968 = vadd.s32 %v7967, 8
    %7969 = vset.pattern.permute.xlu0 %v7968
    %7970 = vperm.xlu0 %7969, %v7959
    %v7971 = vpop.permute.xlu0 %7970
    %v7972 = vperm.slane %v7930, 2
    %v7973 = vlaneseq
    %v7974 = vshrl.u32 %v7973, 7
    %7976 = vset.pattern.permute.xlu0 %v7974
    %7977 = vperm.xlu0 %7976, %v7972
    %v7978 = vpop.permute.xlu0 %7977
    %v7979 = vlaneseq
    %v7980 = vshrl.u32 %v7979, 7
    %v7981 = vadd.s32 %v7980, 8
    %7982 = vset.pattern.permute.xlu0 %v7981
    %7983 = vperm.xlu0 %7982, %v7972
    %v7984 = vpop.permute.xlu0 %7983
    %v7985 = vperm.slane %v7930, 3
    %v7986 = vlaneseq
    %v7987 = vshrl.u32 %v7986, 7
    %7989 = vset.pattern.permute.xlu0 %v7987
    %7990 = vperm.xlu0 %7989, %v7985
    %v7991 = vpop.permute.xlu0 %7990
    %v7992 = vlaneseq
    %v7993 = vshrl.u32 %v7992, 7
    %v7994 = vadd.s32 %v7993, 8
    %7995 = vset.pattern.permute.xlu0 %v7994
    %7996 = vperm.xlu0 %7995, %v7985
    %v7997 = vpop.permute.xlu0 %7996
    %v7998 = vperm.slane %v7930, 4
    %v7999 = vlaneseq
    %v8000 = vshrl.u32 %v7999, 7
    %8002 = vset.pattern.permute.xlu0 %v8000
    %8003 = vperm.xlu0 %8002, %v7998
    %v8004 = vpop.permute.xlu0 %8003
    %v8005 = vlaneseq
    %v8006 = vshrl.u32 %v8005, 7
    %v8007 = vadd.s32 %v8006, 8
    %8008 = vset.pattern.permute.xlu0 %v8007
    %8009 = vperm.xlu0 %8008, %v7998
    %v8010 = vpop.permute.xlu0 %8009
    %v8011 = vperm.slane %v7930, 5
    %v8012 = vlaneseq
    %v8013 = vshrl.u32 %v8012, 7
    %8015 = vset.pattern.permute.xlu0 %v8013
    %8016 = vperm.xlu0 %8015, %v8011
    %v8017 = vpop.permute.xlu0 %8016
    %v8018 = vlaneseq
    %v8019 = vshrl.u32 %v8018, 7
    %v8020 = vadd.s32 %v8019, 8
    %8021 = vset.pattern.permute.xlu0 %v8020
    %8022 = vperm.xlu0 %8021, %v8011
    %v8023 = vpop.permute.xlu0 %8022
    %v8024 = vperm.slane %v7930, 6
    %v8025 = vlaneseq
    %v8026 = vshrl.u32 %v8025, 7
    %8028 = vset.pattern.permute.xlu0 %v8026
    %8029 = vperm.xlu0 %8028, %v8024
    %v8030 = vpop.permute.xlu0 %8029
    %v8031 = vlaneseq
    %v8032 = vshrl.u32 %v8031, 7
    %v8033 = vadd.s32 %v8032, 8
    %8034 = vset.pattern.permute.xlu0 %v8033
    %8035 = vperm.xlu0 %8034, %v8024
    %v8036 = vpop.permute.xlu0 %8035
    %v8037 = vperm.slane %v7930, 7
    %v8038 = vlaneseq
    %v8039 = vshrl.u32 %v8038, 7
    %8041 = vset.pattern.permute.xlu0 %v8039
    %8042 = vperm.xlu0 %8041, %v8037
    %v8043 = vpop.permute.xlu0 %8042
    %v8044 = vlaneseq
    %v8045 = vshrl.u32 %v8044, 7
    %v8046 = vadd.s32 %v8045, 8
    %8047 = vset.pattern.permute.xlu0 %v8046
    %8048 = vperm.xlu0 %8047, %v8037
    %v8049 = vpop.permute.xlu0 %8048
    %v8050 = vperm.slane %v7931, 0
    %v8051 = vlaneseq
    %v8052 = vshrl.u32 %v8051, 7
    %8054 = vset.pattern.permute.xlu0 %v8052
    %8055 = vperm.xlu0 %8054, %v8050
    %v8056 = vpop.permute.xlu0 %8055
    %v8057 = vlaneseq
    %v8058 = vshrl.u32 %v8057, 7
    %v8059 = vadd.s32 %v8058, 8
    %8060 = vset.pattern.permute.xlu0 %v8059
    %8061 = vperm.xlu0 %8060, %v8050
    %v8062 = vpop.permute.xlu0 %8061
    %v8063 = vperm.slane %v7931, 1
    %v8064 = vlaneseq
    %v8065 = vshrl.u32 %v8064, 7
    %8067 = vset.pattern.permute.xlu0 %v8065
    %8068 = vperm.xlu0 %8067, %v8063
    %v8069 = vpop.permute.xlu0 %8068
    %v8070 = vlaneseq
    %v8071 = vshrl.u32 %v8070, 7
    %v8072 = vadd.s32 %v8071, 8
    %8073 = vset.pattern.permute.xlu0 %v8072
    %8074 = vperm.xlu0 %8073, %v8063
    %v8075 = vpop.permute.xlu0 %8074
    %v8076 = vperm.slane %v7931, 2
    %v8077 = vlaneseq
    %v8078 = vshrl.u32 %v8077, 7
    %8080 = vset.pattern.permute.xlu0 %v8078
    %8081 = vperm.xlu0 %8080, %v8076
    %v8082 = vpop.permute.xlu0 %8081
    %v8083 = vlaneseq
    %v8084 = vshrl.u32 %v8083, 7
    %v8085 = vadd.s32 %v8084, 8
    %8086 = vset.pattern.permute.xlu0 %v8085
    %8087 = vperm.xlu0 %8086, %v8076
    %v8088 = vpop.permute.xlu0 %8087
    %v8089 = vperm.slane %v7931, 3
    %v8090 = vlaneseq
    %v8091 = vshrl.u32 %v8090, 7
    %8093 = vset.pattern.permute.xlu0 %v8091
    %8094 = vperm.xlu0 %8093, %v8089
    %v8095 = vpop.permute.xlu0 %8094
    %v8096 = vlaneseq
    %v8097 = vshrl.u32 %v8096, 7
    %v8098 = vadd.s32 %v8097, 8
    %8099 = vset.pattern.permute.xlu0 %v8098
    %8100 = vperm.xlu0 %8099, %v8089
    %v8101 = vpop.permute.xlu0 %8100
    %v8102 = vperm.slane %v7931, 4
    %v8103 = vlaneseq
    %v8104 = vshrl.u32 %v8103, 7
    %8106 = vset.pattern.permute.xlu0 %v8104
    %8107 = vperm.xlu0 %8106, %v8102
    %v8108 = vpop.permute.xlu0 %8107
    %v8109 = vlaneseq
    %v8110 = vshrl.u32 %v8109, 7
    %v8111 = vadd.s32 %v8110, 8
    %8112 = vset.pattern.permute.xlu0 %v8111
    %8113 = vperm.xlu0 %8112, %v8102
    %v8114 = vpop.permute.xlu0 %8113
    %v8115 = vperm.slane %v7931, 5
    %v8116 = vlaneseq
    %v8117 = vshrl.u32 %v8116, 7
    %8119 = vset.pattern.permute.xlu0 %v8117
    %8120 = vperm.xlu0 %8119, %v8115
    %v8121 = vpop.permute.xlu0 %8120
    %v8122 = vlaneseq
    %v8123 = vshrl.u32 %v8122, 7
    %v8124 = vadd.s32 %v8123, 8
    %8125 = vset.pattern.permute.xlu0 %v8124
    %8126 = vperm.xlu0 %8125, %v8115
    %v8127 = vpop.permute.xlu0 %8126
    %v8128 = vperm.slane %v7931, 6
    %v8129 = vlaneseq
    %v8130 = vshrl.u32 %v8129, 7
    %8132 = vset.pattern.permute.xlu0 %v8130
    %8133 = vperm.xlu0 %8132, %v8128
    %v8134 = vpop.permute.xlu0 %8133
    %v8135 = vlaneseq
    %v8136 = vshrl.u32 %v8135, 7
    %v8137 = vadd.s32 %v8136, 8
    %8138 = vset.pattern.permute.xlu0 %v8137
    %8139 = vperm.xlu0 %8138, %v8128
    %v8140 = vpop.permute.xlu0 %8139
    %v8141 = vperm.slane %v7931, 7
    %v8142 = vlaneseq
    %v8143 = vshrl.u32 %v8142, 7
    %8145 = vset.pattern.permute.xlu0 %v8143
    %8146 = vperm.xlu0 %8145, %v8141
    %v8147 = vpop.permute.xlu0 %8146
    %v8148 = vlaneseq
    %v8149 = vshrl.u32 %v8148, 7
    %v8150 = vadd.s32 %v8149, 8
    %8151 = vset.pattern.permute.xlu0 %v8150
    %8152 = vperm.xlu0 %8151, %v8141
    %v8153 = vpop.permute.xlu0 %8152
    %v8154 = vperm.slane %v7932, 0
    %v8155 = vlaneseq
    %v8156 = vshrl.u32 %v8155, 7
    %8158 = vset.pattern.permute.xlu0 %v8156
    %8159 = vperm.xlu0 %8158, %v8154
    %v8160 = vpop.permute.xlu0 %8159
    %v8161 = vlaneseq
    %v8162 = vshrl.u32 %v8161, 7
    %v8163 = vadd.s32 %v8162, 8
    %8164 = vset.pattern.permute.xlu0 %v8163
    %8165 = vperm.xlu0 %8164, %v8154
    %v8166 = vpop.permute.xlu0 %8165
    %v8167 = vperm.slane %v7932, 1
    %v8168 = vlaneseq
    %v8169 = vshrl.u32 %v8168, 7
    %8171 = vset.pattern.permute.xlu0 %v8169
    %8172 = vperm.xlu0 %8171, %v8167
    %v8173 = vpop.permute.xlu0 %8172
    %v8174 = vlaneseq
    %v8175 = vshrl.u32 %v8174, 7
    %v8176 = vadd.s32 %v8175, 8
    %8177 = vset.pattern.permute.xlu0 %v8176
    %8178 = vperm.xlu0 %8177, %v8167
    %v8179 = vpop.permute.xlu0 %8178
    %v8180 = vperm.slane %v7932, 2
    %v8181 = vlaneseq
    %v8182 = vshrl.u32 %v8181, 7
    %8184 = vset.pattern.permute.xlu0 %v8182
    %8185 = vperm.xlu0 %8184, %v8180
    %v8186 = vpop.permute.xlu0 %8185
    %v8187 = vlaneseq
    %v8188 = vshrl.u32 %v8187, 7
    %v8189 = vadd.s32 %v8188, 8
    %8190 = vset.pattern.permute.xlu0 %v8189
    %8191 = vperm.xlu0 %8190, %v8180
    %v8192 = vpop.permute.xlu0 %8191
    %v8193 = vperm.slane %v7932, 3
    %v8194 = vlaneseq
    %v8195 = vshrl.u32 %v8194, 7
    %8197 = vset.pattern.permute.xlu0 %v8195
    %8198 = vperm.xlu0 %8197, %v8193
    %v8199 = vpop.permute.xlu0 %8198
    %v8200 = vlaneseq
    %v8201 = vshrl.u32 %v8200, 7
    %v8202 = vadd.s32 %v8201, 8
    %8203 = vset.pattern.permute.xlu0 %v8202
    %8204 = vperm.xlu0 %8203, %v8193
    %v8205 = vpop.permute.xlu0 %8204
    %v8206 = vperm.slane %v7932, 4
    %v8207 = vlaneseq
    %v8208 = vshrl.u32 %v8207, 7
    %8210 = vset.pattern.permute.xlu0 %v8208
    %8211 = vperm.xlu0 %8210, %v8206
    %v8212 = vpop.permute.xlu0 %8211
    %v8213 = vlaneseq
    %v8214 = vshrl.u32 %v8213, 7
    %v8215 = vadd.s32 %v8214, 8
    %8216 = vset.pattern.permute.xlu0 %v8215
    %8217 = vperm.xlu0 %8216, %v8206
    %v8218 = vpop.permute.xlu0 %8217
    %v8219 = vperm.slane %v7932, 5
    %v8220 = vlaneseq
    %v8221 = vshrl.u32 %v8220, 7
    %8223 = vset.pattern.permute.xlu0 %v8221
    %8224 = vperm.xlu0 %8223, %v8219
    %v8225 = vpop.permute.xlu0 %8224
    %v8226 = vlaneseq
    %v8227 = vshrl.u32 %v8226, 7
    %v8228 = vadd.s32 %v8227, 8
    %8229 = vset.pattern.permute.xlu0 %v8228
    %8230 = vperm.xlu0 %8229, %v8219
    %v8231 = vpop.permute.xlu0 %8230
    %v8232 = vperm.slane %v7932, 6
    %v8233 = vlaneseq
    %v8234 = vshrl.u32 %v8233, 7
    %8236 = vset.pattern.permute.xlu0 %v8234
    %8237 = vperm.xlu0 %8236, %v8232
    %v8238 = vpop.permute.xlu0 %8237
    %v8239 = vlaneseq
    %v8240 = vshrl.u32 %v8239, 7
    %v8241 = vadd.s32 %v8240, 8
    %8242 = vset.pattern.permute.xlu0 %v8241
    %8243 = vperm.xlu0 %8242, %v8232
    %v8244 = vpop.permute.xlu0 %8243
    %v8245 = vperm.slane %v7932, 7
    %v8246 = vlaneseq
    %v8247 = vshrl.u32 %v8246, 7
    %8249 = vset.pattern.permute.xlu0 %v8247
    %8250 = vperm.xlu0 %8249, %v8245
    %v8251 = vpop.permute.xlu0 %8250
    %v8252 = vlaneseq
    %v8253 = vshrl.u32 %v8252, 7
    %v8254 = vadd.s32 %v8253, 8
    %8255 = vset.pattern.permute.xlu0 %v8254
    %8256 = vperm.xlu0 %8255, %v8245
    %v8257 = vpop.permute.xlu0 %8256
    %v8258 = vperm.slane %v7933, 0
    %v8259 = vlaneseq
    %v8260 = vshrl.u32 %v8259, 7
    %8262 = vset.pattern.permute.xlu0 %v8260
    %8263 = vperm.xlu0 %8262, %v8258
    %v8264 = vpop.permute.xlu0 %8263
    %v8265 = vlaneseq
    %v8266 = vshrl.u32 %v8265, 7
    %v8267 = vadd.s32 %v8266, 8
    %8268 = vset.pattern.permute.xlu0 %v8267
    %8269 = vperm.xlu0 %8268, %v8258
    %v8270 = vpop.permute.xlu0 %8269
    %v8271 = vperm.slane %v7933, 1
    %v8272 = vlaneseq
    %v8273 = vshrl.u32 %v8272, 7
    %8275 = vset.pattern.permute.xlu0 %v8273
    %8276 = vperm.xlu0 %8275, %v8271
    %v8277 = vpop.permute.xlu0 %8276
    %v8278 = vlaneseq
    %v8279 = vshrl.u32 %v8278, 7
    %v8280 = vadd.s32 %v8279, 8
    %8281 = vset.pattern.permute.xlu0 %v8280
    %8282 = vperm.xlu0 %8281, %v8271
    %v8283 = vpop.permute.xlu0 %8282
    %v8284 = vperm.slane %v7933, 2
    %v8285 = vlaneseq
    %v8286 = vshrl.u32 %v8285, 7
    %8288 = vset.pattern.permute.xlu0 %v8286
    %8289 = vperm.xlu0 %8288, %v8284
    %v8290 = vpop.permute.xlu0 %8289
    %v8291 = vlaneseq
    %v8292 = vshrl.u32 %v8291, 7
    %v8293 = vadd.s32 %v8292, 8
    %8294 = vset.pattern.permute.xlu0 %v8293
    %8295 = vperm.xlu0 %8294, %v8284
    %v8296 = vpop.permute.xlu0 %8295
    %v8297 = vperm.slane %v7933, 3
    %v8298 = vlaneseq
    %v8299 = vshrl.u32 %v8298, 7
    %8301 = vset.pattern.permute.xlu0 %v8299
    %8302 = vperm.xlu0 %8301, %v8297
    %v8303 = vpop.permute.xlu0 %8302
    %v8304 = vlaneseq
    %v8305 = vshrl.u32 %v8304, 7
    %v8306 = vadd.s32 %v8305, 8
    %8307 = vset.pattern.permute.xlu0 %v8306
    %8308 = vperm.xlu0 %8307, %v8297
    %v8309 = vpop.permute.xlu0 %8308
    %v8310 = vperm.slane %v7933, 4
    %v8311 = vlaneseq
    %v8312 = vshrl.u32 %v8311, 7
    %8314 = vset.pattern.permute.xlu0 %v8312
    %8315 = vperm.xlu0 %8314, %v8310
    %v8316 = vpop.permute.xlu0 %8315
    %v8317 = vlaneseq
    %v8318 = vshrl.u32 %v8317, 7
    %v8319 = vadd.s32 %v8318, 8
    %8320 = vset.pattern.permute.xlu0 %v8319
    %8321 = vperm.xlu0 %8320, %v8310
    %v8322 = vpop.permute.xlu0 %8321
    %v8323 = vperm.slane %v7933, 5
    %v8324 = vlaneseq
    %v8325 = vshrl.u32 %v8324, 7
    %8327 = vset.pattern.permute.xlu0 %v8325
    %8328 = vperm.xlu0 %8327, %v8323
    %v8329 = vpop.permute.xlu0 %8328
    %v8330 = vlaneseq
    %v8331 = vshrl.u32 %v8330, 7
    %v8332 = vadd.s32 %v8331, 8
    %8333 = vset.pattern.permute.xlu0 %v8332
    %8334 = vperm.xlu0 %8333, %v8323
    %v8335 = vpop.permute.xlu0 %8334
    %v8336 = vperm.slane %v7933, 6
    %v8337 = vlaneseq
    %v8338 = vshrl.u32 %v8337, 7
    %8340 = vset.pattern.permute.xlu0 %v8338
    %8341 = vperm.xlu0 %8340, %v8336
    %v8342 = vpop.permute.xlu0 %8341
    %v8343 = vlaneseq
    %v8344 = vshrl.u32 %v8343, 7
    %v8345 = vadd.s32 %v8344, 8
    %8346 = vset.pattern.permute.xlu0 %v8345
    %8347 = vperm.xlu0 %8346, %v8336
    %v8348 = vpop.permute.xlu0 %8347
    %v8349 = vperm.slane %v7933, 7
    %v8350 = vlaneseq
    %v8351 = vshrl.u32 %v8350, 7
    %8353 = vset.pattern.permute.xlu0 %v8351
    %8354 = vperm.xlu0 %8353, %v8349
    %v8355 = vpop.permute.xlu0 %8354
    %v8356 = vlaneseq
    %v8357 = vshrl.u32 %v8356, 7
    %v8358 = vadd.s32 %v8357, 8
    %8359 = vset.pattern.permute.xlu0 %v8358
    %8360 = vperm.xlu0 %8359, %v8349
    %v8361 = vpop.permute.xlu0 %8360
    %v8362 = vperm.slane %v7934, 0
    %v8363 = vlaneseq
    %v8364 = vshrl.u32 %v8363, 7
    %8366 = vset.pattern.permute.xlu0 %v8364
    %8367 = vperm.xlu0 %8366, %v8362
    %v8368 = vpop.permute.xlu0 %8367
    %v8369 = vlaneseq
    %v8370 = vshrl.u32 %v8369, 7
    %v8371 = vadd.s32 %v8370, 8
    %8372 = vset.pattern.permute.xlu0 %v8371
    %8373 = vperm.xlu0 %8372, %v8362
    %v8374 = vpop.permute.xlu0 %8373
    %v8375 = vperm.slane %v7934, 1
    %v8376 = vlaneseq
    %v8377 = vshrl.u32 %v8376, 7
    %8379 = vset.pattern.permute.xlu0 %v8377
    %8380 = vperm.xlu0 %8379, %v8375
    %v8381 = vpop.permute.xlu0 %8380
    %v8382 = vlaneseq
    %v8383 = vshrl.u32 %v8382, 7
    %v8384 = vadd.s32 %v8383, 8
    %8385 = vset.pattern.permute.xlu0 %v8384
    %8386 = vperm.xlu0 %8385, %v8375
    %v8387 = vpop.permute.xlu0 %8386
    %v8388 = vperm.slane %v7934, 2
    %v8389 = vlaneseq
    %v8390 = vshrl.u32 %v8389, 7
    %8392 = vset.pattern.permute.xlu0 %v8390
    %8393 = vperm.xlu0 %8392, %v8388
    %v8394 = vpop.permute.xlu0 %8393
    %v8395 = vlaneseq
    %v8396 = vshrl.u32 %v8395, 7
    %v8397 = vadd.s32 %v8396, 8
    %8398 = vset.pattern.permute.xlu0 %v8397
    %8399 = vperm.xlu0 %8398, %v8388
    %v8400 = vpop.permute.xlu0 %8399
    %v8401 = vperm.slane %v7934, 3
    %v8402 = vlaneseq
    %v8403 = vshrl.u32 %v8402, 7
    %8405 = vset.pattern.permute.xlu0 %v8403
    %8406 = vperm.xlu0 %8405, %v8401
    %v8407 = vpop.permute.xlu0 %8406
    %v8408 = vlaneseq
    %v8409 = vshrl.u32 %v8408, 7
    %v8410 = vadd.s32 %v8409, 8
    %8411 = vset.pattern.permute.xlu0 %v8410
    %8412 = vperm.xlu0 %8411, %v8401
    %v8413 = vpop.permute.xlu0 %8412
    %v8414 = vperm.slane %v7934, 4
    %v8415 = vlaneseq
    %v8416 = vshrl.u32 %v8415, 7
    %8418 = vset.pattern.permute.xlu0 %v8416
    %8419 = vperm.xlu0 %8418, %v8414
    %v8420 = vpop.permute.xlu0 %8419
    %v8421 = vlaneseq
    %v8422 = vshrl.u32 %v8421, 7
    %v8423 = vadd.s32 %v8422, 8
    %8424 = vset.pattern.permute.xlu0 %v8423
    %8425 = vperm.xlu0 %8424, %v8414
    %v8426 = vpop.permute.xlu0 %8425
    %v8427 = vperm.slane %v7934, 5
    %v8428 = vlaneseq
    %v8429 = vshrl.u32 %v8428, 7
    %8431 = vset.pattern.permute.xlu0 %v8429
    %8432 = vperm.xlu0 %8431, %v8427
    %v8433 = vpop.permute.xlu0 %8432
    %v8434 = vlaneseq
    %v8435 = vshrl.u32 %v8434, 7
    %v8436 = vadd.s32 %v8435, 8
    %8437 = vset.pattern.permute.xlu0 %v8436
    %8438 = vperm.xlu0 %8437, %v8427
    %v8439 = vpop.permute.xlu0 %8438
    %v8440 = vperm.slane %v7934, 6
    %v8441 = vlaneseq
    %v8442 = vshrl.u32 %v8441, 7
    %8444 = vset.pattern.permute.xlu0 %v8442
    %8445 = vperm.xlu0 %8444, %v8440
    %v8446 = vpop.permute.xlu0 %8445
    %v8447 = vlaneseq
    %v8448 = vshrl.u32 %v8447, 7
    %v8449 = vadd.s32 %v8448, 8
    %8450 = vset.pattern.permute.xlu0 %v8449
    %8451 = vperm.xlu0 %8450, %v8440
    %v8452 = vpop.permute.xlu0 %8451
    %v8453 = vperm.slane %v7934, 7
    %v8454 = vlaneseq
    %v8455 = vshrl.u32 %v8454, 7
    %8457 = vset.pattern.permute.xlu0 %v8455
    %8458 = vperm.xlu0 %8457, %v8453
    %v8459 = vpop.permute.xlu0 %8458
    %v8460 = vlaneseq
    %v8461 = vshrl.u32 %v8460, 7
    %v8462 = vadd.s32 %v8461, 8
    %8463 = vset.pattern.permute.xlu0 %v8462
    %8464 = vperm.xlu0 %8463, %v8453
    %v8465 = vpop.permute.xlu0 %8464
    %v8466 = vperm.slane %v7935, 0
    %v8467 = vlaneseq
    %v8468 = vshrl.u32 %v8467, 7
    %8470 = vset.pattern.permute.xlu0 %v8468
    %8471 = vperm.xlu0 %8470, %v8466
    %v8472 = vpop.permute.xlu0 %8471
    %v8473 = vlaneseq
    %v8474 = vshrl.u32 %v8473, 7
    %v8475 = vadd.s32 %v8474, 8
    %8476 = vset.pattern.permute.xlu0 %v8475
    %8477 = vperm.xlu0 %8476, %v8466
    %v8478 = vpop.permute.xlu0 %8477
    %v8479 = vperm.slane %v7935, 1
    %v8480 = vlaneseq
    %v8481 = vshrl.u32 %v8480, 7
    %8483 = vset.pattern.permute.xlu0 %v8481
    %8484 = vperm.xlu0 %8483, %v8479
    %v8485 = vpop.permute.xlu0 %8484
    %v8486 = vlaneseq
    %v8487 = vshrl.u32 %v8486, 7
    %v8488 = vadd.s32 %v8487, 8
    %8489 = vset.pattern.permute.xlu0 %v8488
    %8490 = vperm.xlu0 %8489, %v8479
    %v8491 = vpop.permute.xlu0 %8490
    %v8492 = vperm.slane %v7935, 2
    %v8493 = vlaneseq
    %v8494 = vshrl.u32 %v8493, 7
    %8496 = vset.pattern.permute.xlu0 %v8494
    %8497 = vperm.xlu0 %8496, %v8492
    %v8498 = vpop.permute.xlu0 %8497
    %v8499 = vlaneseq
    %v8500 = vshrl.u32 %v8499, 7
    %v8501 = vadd.s32 %v8500, 8
    %8502 = vset.pattern.permute.xlu0 %v8501
    %8503 = vperm.xlu0 %8502, %v8492
    %v8504 = vpop.permute.xlu0 %8503
    %v8505 = vperm.slane %v7935, 3
    %v8506 = vlaneseq
    %v8507 = vshrl.u32 %v8506, 7
    %8509 = vset.pattern.permute.xlu0 %v8507
    %8510 = vperm.xlu0 %8509, %v8505
    %v8511 = vpop.permute.xlu0 %8510
    %v8512 = vlaneseq
    %v8513 = vshrl.u32 %v8512, 7
    %v8514 = vadd.s32 %v8513, 8
    %8515 = vset.pattern.permute.xlu0 %v8514
    %8516 = vperm.xlu0 %8515, %v8505
    %v8517 = vpop.permute.xlu0 %8516
    %v8518 = vperm.slane %v7935, 4
    %v8519 = vlaneseq
    %v8520 = vshrl.u32 %v8519, 7
    %8522 = vset.pattern.permute.xlu0 %v8520
    %8523 = vperm.xlu0 %8522, %v8518
    %v8524 = vpop.permute.xlu0 %8523
    %v8525 = vlaneseq
    %v8526 = vshrl.u32 %v8525, 7
    %v8527 = vadd.s32 %v8526, 8
    %8528 = vset.pattern.permute.xlu0 %v8527
    %8529 = vperm.xlu0 %8528, %v8518
    %v8530 = vpop.permute.xlu0 %8529
    %v8531 = vperm.slane %v7935, 5
    %v8532 = vlaneseq
    %v8533 = vshrl.u32 %v8532, 7
    %8535 = vset.pattern.permute.xlu0 %v8533
    %8536 = vperm.xlu0 %8535, %v8531
    %v8537 = vpop.permute.xlu0 %8536
    %v8538 = vlaneseq
    %v8539 = vshrl.u32 %v8538, 7
    %v8540 = vadd.s32 %v8539, 8
    %8541 = vset.pattern.permute.xlu0 %v8540
    %8542 = vperm.xlu0 %8541, %v8531
    %v8543 = vpop.permute.xlu0 %8542
    %v8544 = vperm.slane %v7935, 6
    %v8545 = vlaneseq
    %v8546 = vshrl.u32 %v8545, 7
    %8548 = vset.pattern.permute.xlu0 %v8546
    %8549 = vperm.xlu0 %8548, %v8544
    %v8550 = vpop.permute.xlu0 %8549
    %v8551 = vlaneseq
    %v8552 = vshrl.u32 %v8551, 7
    %v8553 = vadd.s32 %v8552, 8
    %8554 = vset.pattern.permute.xlu0 %v8553
    %8555 = vperm.xlu0 %8554, %v8544
    %v8556 = vpop.permute.xlu0 %8555
    %v8557 = vperm.slane %v7935, 7
    %v8558 = vlaneseq
    %v8559 = vshrl.u32 %v8558, 7
    %8561 = vset.pattern.permute.xlu0 %v8559
    %8562 = vperm.xlu0 %8561, %v8557
    %v8563 = vpop.permute.xlu0 %8562
    %v8564 = vlaneseq
    %v8565 = vshrl.u32 %v8564, 7
    %v8566 = vadd.s32 %v8565, 8
    %8567 = vset.pattern.permute.xlu0 %v8566
    %8568 = vperm.xlu0 %8567, %v8557
    %v8569 = vpop.permute.xlu0 %8568
    %v8570 = vperm.slane %v7936, 0
    %v8571 = vlaneseq
    %v8572 = vshrl.u32 %v8571, 7
    %8574 = vset.pattern.permute.xlu0 %v8572
    %8575 = vperm.xlu0 %8574, %v8570
    %v8576 = vpop.permute.xlu0 %8575
    %v8577 = vlaneseq
    %v8578 = vshrl.u32 %v8577, 7
    %v8579 = vadd.s32 %v8578, 8
    %8580 = vset.pattern.permute.xlu0 %v8579
    %8581 = vperm.xlu0 %8580, %v8570
    %v8582 = vpop.permute.xlu0 %8581
    %v8583 = vperm.slane %v7936, 1
    %v8584 = vlaneseq
    %v8585 = vshrl.u32 %v8584, 7
    %8587 = vset.pattern.permute.xlu0 %v8585
    %8588 = vperm.xlu0 %8587, %v8583
    %v8589 = vpop.permute.xlu0 %8588
    %v8590 = vlaneseq
    %v8591 = vshrl.u32 %v8590, 7
    %v8592 = vadd.s32 %v8591, 8
    %8593 = vset.pattern.permute.xlu0 %v8592
    %8594 = vperm.xlu0 %8593, %v8583
    %v8595 = vpop.permute.xlu0 %8594
    %v8596 = vperm.slane %v7936, 2
    %v8597 = vlaneseq
    %v8598 = vshrl.u32 %v8597, 7
    %8600 = vset.pattern.permute.xlu0 %v8598
    %8601 = vperm.xlu0 %8600, %v8596
    %v8602 = vpop.permute.xlu0 %8601
    %v8603 = vlaneseq
    %v8604 = vshrl.u32 %v8603, 7
    %v8605 = vadd.s32 %v8604, 8
    %8606 = vset.pattern.permute.xlu0 %v8605
    %8607 = vperm.xlu0 %8606, %v8596
    %v8608 = vpop.permute.xlu0 %8607
    %v8609 = vperm.slane %v7936, 3
    %v8610 = vlaneseq
    %v8611 = vshrl.u32 %v8610, 7
    %8613 = vset.pattern.permute.xlu0 %v8611
    %8614 = vperm.xlu0 %8613, %v8609
    %v8615 = vpop.permute.xlu0 %8614
    %v8616 = vlaneseq
    %v8617 = vshrl.u32 %v8616, 7
    %v8618 = vadd.s32 %v8617, 8
    %8619 = vset.pattern.permute.xlu0 %v8618
    %8620 = vperm.xlu0 %8619, %v8609
    %v8621 = vpop.permute.xlu0 %8620
    %v8622 = vperm.slane %v7936, 4
    %v8623 = vlaneseq
    %v8624 = vshrl.u32 %v8623, 7
    %8626 = vset.pattern.permute.xlu0 %v8624
    %8627 = vperm.xlu0 %8626, %v8622
    %v8628 = vpop.permute.xlu0 %8627
    %v8629 = vlaneseq
    %v8630 = vshrl.u32 %v8629, 7
    %v8631 = vadd.s32 %v8630, 8
    %8632 = vset.pattern.permute.xlu0 %v8631
    %8633 = vperm.xlu0 %8632, %v8622
    %v8634 = vpop.permute.xlu0 %8633
    %v8635 = vperm.slane %v7936, 5
    %v8636 = vlaneseq
    %v8637 = vshrl.u32 %v8636, 7
    %8639 = vset.pattern.permute.xlu0 %v8637
    %8640 = vperm.xlu0 %8639, %v8635
    %v8641 = vpop.permute.xlu0 %8640
    %v8642 = vlaneseq
    %v8643 = vshrl.u32 %v8642, 7
    %v8644 = vadd.s32 %v8643, 8
    %8645 = vset.pattern.permute.xlu0 %v8644
    %8646 = vperm.xlu0 %8645, %v8635
    %v8647 = vpop.permute.xlu0 %8646
    %v8648 = vperm.slane %v7936, 6
    %v8649 = vlaneseq
    %v8650 = vshrl.u32 %v8649, 7
    %8652 = vset.pattern.permute.xlu0 %v8650
    %8653 = vperm.xlu0 %8652, %v8648
    %v8654 = vpop.permute.xlu0 %8653
    %v8655 = vlaneseq
    %v8656 = vshrl.u32 %v8655, 7
    %v8657 = vadd.s32 %v8656, 8
    %8658 = vset.pattern.permute.xlu0 %v8657
    %8659 = vperm.xlu0 %8658, %v8648
    %v8660 = vpop.permute.xlu0 %8659
    %v8661 = vperm.slane %v7936, 7
    %v8662 = vlaneseq
    %v8663 = vshrl.u32 %v8662, 7
    %8665 = vset.pattern.permute.xlu0 %v8663
    %8666 = vperm.xlu0 %8665, %v8661
    %v8667 = vpop.permute.xlu0 %8666
    %v8668 = vlaneseq
    %v8669 = vshrl.u32 %v8668, 7
    %v8670 = vadd.s32 %v8669, 8
    %8671 = vset.pattern.permute.xlu0 %v8670
    %8672 = vperm.xlu0 %8671, %v8661
    %v8673 = vpop.permute.xlu0 %8672
    %v8674 = vperm.slane %v7937, 0
    %v8675 = vlaneseq
    %v8676 = vshrl.u32 %v8675, 7
    %8678 = vset.pattern.permute.xlu0 %v8676
    %8679 = vperm.xlu0 %8678, %v8674
    %v8680 = vpop.permute.xlu0 %8679
    %v8681 = vlaneseq
    %v8682 = vshrl.u32 %v8681, 7
    %v8683 = vadd.s32 %v8682, 8
    %8684 = vset.pattern.permute.xlu0 %v8683
    %8685 = vperm.xlu0 %8684, %v8674
    %v8686 = vpop.permute.xlu0 %8685
    %v8687 = vperm.slane %v7937, 1
    %v8688 = vlaneseq
    %v8689 = vshrl.u32 %v8688, 7
    %8691 = vset.pattern.permute.xlu0 %v8689
    %8692 = vperm.xlu0 %8691, %v8687
    %v8693 = vpop.permute.xlu0 %8692
    %v8694 = vlaneseq
    %v8695 = vshrl.u32 %v8694, 7
    %v8696 = vadd.s32 %v8695, 8
    %8697 = vset.pattern.permute.xlu0 %v8696
    %8698 = vperm.xlu0 %8697, %v8687
    %v8699 = vpop.permute.xlu0 %8698
    %v8700 = vperm.slane %v7937, 2
    %v8701 = vlaneseq
    %v8702 = vshrl.u32 %v8701, 7
    %8704 = vset.pattern.permute.xlu0 %v8702
    %8705 = vperm.xlu0 %8704, %v8700
    %v8706 = vpop.permute.xlu0 %8705
    %v8707 = vlaneseq
    %v8708 = vshrl.u32 %v8707, 7
    %v8709 = vadd.s32 %v8708, 8
    %8710 = vset.pattern.permute.xlu0 %v8709
    %8711 = vperm.xlu0 %8710, %v8700
    %v8712 = vpop.permute.xlu0 %8711
    %v8713 = vperm.slane %v7937, 3
    %v8714 = vlaneseq
    %v8715 = vshrl.u32 %v8714, 7
    %8717 = vset.pattern.permute.xlu0 %v8715
    %8718 = vperm.xlu0 %8717, %v8713
    %v8719 = vpop.permute.xlu0 %8718
    %v8720 = vlaneseq
    %v8721 = vshrl.u32 %v8720, 7
    %v8722 = vadd.s32 %v8721, 8
    %8723 = vset.pattern.permute.xlu0 %v8722
    %8724 = vperm.xlu0 %8723, %v8713
    %v8725 = vpop.permute.xlu0 %8724
    %v8726 = vperm.slane %v7937, 4
    %v8727 = vlaneseq
    %v8728 = vshrl.u32 %v8727, 7
    %8730 = vset.pattern.permute.xlu0 %v8728
    %8731 = vperm.xlu0 %8730, %v8726
    %v8732 = vpop.permute.xlu0 %8731
    %v8733 = vlaneseq
    %v8734 = vshrl.u32 %v8733, 7
    %v8735 = vadd.s32 %v8734, 8
    %8736 = vset.pattern.permute.xlu0 %v8735
    %8737 = vperm.xlu0 %8736, %v8726
    %v8738 = vpop.permute.xlu0 %8737
    %v8739 = vperm.slane %v7937, 5
    %v8740 = vlaneseq
    %v8741 = vshrl.u32 %v8740, 7
    %8743 = vset.pattern.permute.xlu0 %v8741
    %8744 = vperm.xlu0 %8743, %v8739
    %v8745 = vpop.permute.xlu0 %8744
    %v8746 = vlaneseq
    %v8747 = vshrl.u32 %v8746, 7
    %v8748 = vadd.s32 %v8747, 8
    %8749 = vset.pattern.permute.xlu0 %v8748
    %8750 = vperm.xlu0 %8749, %v8739
    %v8751 = vpop.permute.xlu0 %8750
    %v8752 = vperm.slane %v7937, 6
    %v8753 = vlaneseq
    %v8754 = vshrl.u32 %v8753, 7
    %8756 = vset.pattern.permute.xlu0 %v8754
    %8757 = vperm.xlu0 %8756, %v8752
    %v8758 = vpop.permute.xlu0 %8757
    %v8759 = vlaneseq
    %v8760 = vshrl.u32 %v8759, 7
    %v8761 = vadd.s32 %v8760, 8
    %8762 = vset.pattern.permute.xlu0 %v8761
    %8763 = vperm.xlu0 %8762, %v8752
    %v8764 = vpop.permute.xlu0 %8763
    %v8765 = vperm.slane %v7937, 7
    %v8766 = vlaneseq
    %v8767 = vshrl.u32 %v8766, 7
    %8769 = vset.pattern.permute.xlu0 %v8767
    %8770 = vperm.xlu0 %8769, %v8765
    %v8771 = vpop.permute.xlu0 %8770
    %v8772 = vlaneseq
    %v8773 = vshrl.u32 %v8772, 7
    %v8774 = vadd.s32 %v8773, 8
    %8775 = vset.pattern.permute.xlu0 %v8774
    %8776 = vperm.xlu0 %8775, %v8765
    %v8777 = vpop.permute.xlu0 %8776
    %v8906 = vsub.f32 %v7886, %v7952
    %v8907 = vsub.f32 %v7888, %v7958
    %v8908 = vsub.f32 %v7886, %v7965
    %v8909 = vsub.f32 %v7888, %v7971
    %v8910 = vsub.f32 %v7886, %v7978
    %v8911 = vsub.f32 %v7888, %v7984
    %v8912 = vsub.f32 %v7886, %v7991
    %v8913 = vsub.f32 %v7888, %v7997
    %v8914 = vsub.f32 %v7886, %v8004
    %v8915 = vsub.f32 %v7888, %v8010
    %v8916 = vsub.f32 %v7886, %v8017
    %v8917 = vsub.f32 %v7888, %v8023
    %v8918 = vsub.f32 %v7886, %v8030
    %v8919 = vsub.f32 %v7888, %v8036
    %v8920 = vsub.f32 %v7886, %v8043
    %v8921 = vsub.f32 %v7888, %v8049
    %v8922 = vsub.f32 %v7886, %v8056
    %v8923 = vsub.f32 %v7888, %v8062
    %v8924 = vsub.f32 %v7886, %v8069
    %v8925 = vsub.f32 %v7888, %v8075
    %v8926 = vsub.f32 %v7886, %v8082
    %v8927 = vsub.f32 %v7888, %v8088
    %v8928 = vsub.f32 %v7886, %v8095
    %v8929 = vsub.f32 %v7888, %v8101
    %v8930 = vsub.f32 %v7886, %v8108
    %v8931 = vsub.f32 %v7888, %v8114
    %v8932 = vsub.f32 %v7886, %v8121
    %v8933 = vsub.f32 %v7888, %v8127
    %v8934 = vsub.f32 %v7886, %v8134
    %v8935 = vsub.f32 %v7888, %v8140
    %v8936 = vsub.f32 %v7886, %v8147
    %v8937 = vsub.f32 %v7888, %v8153
    %v8938 = vsub.f32 %v7886, %v8160
    %v8939 = vsub.f32 %v7888, %v8166
    %v8940 = vsub.f32 %v7886, %v8173
    %v8941 = vsub.f32 %v7888, %v8179
    %v8942 = vsub.f32 %v7886, %v8186
    %v8943 = vsub.f32 %v7888, %v8192
    %v8944 = vsub.f32 %v7886, %v8199
    %v8945 = vsub.f32 %v7888, %v8205
    %v8946 = vsub.f32 %v7886, %v8212
    %v8947 = vsub.f32 %v7888, %v8218
    %v8948 = vsub.f32 %v7886, %v8225
    %v8949 = vsub.f32 %v7888, %v8231
    %v8950 = vsub.f32 %v7886, %v8238
    %v8951 = vsub.f32 %v7888, %v8244
    %v8952 = vsub.f32 %v7886, %v8251
    %v8953 = vsub.f32 %v7888, %v8257
    %v8954 = vsub.f32 %v7886, %v8264
    %v8955 = vsub.f32 %v7888, %v8270
    %v8956 = vsub.f32 %v7886, %v8277
    %v8957 = vsub.f32 %v7888, %v8283
    %v8958 = vsub.f32 %v7886, %v8290
    %v8959 = vsub.f32 %v7888, %v8296
    %v8960 = vsub.f32 %v7886, %v8303
    %v8961 = vsub.f32 %v7888, %v8309
    %v8962 = vsub.f32 %v7886, %v8316
    %v8963 = vsub.f32 %v7888, %v8322
    %v8964 = vsub.f32 %v7886, %v8329
    %v8965 = vsub.f32 %v7888, %v8335
    %v8966 = vsub.f32 %v7886, %v8342
    %v8967 = vsub.f32 %v7888, %v8348
    %v8968 = vsub.f32 %v7886, %v8355
    %v8969 = vsub.f32 %v7888, %v8361
    %v8970 = vsub.f32 %v7886, %v8368
    %v8971 = vsub.f32 %v7888, %v8374
    %v8972 = vsub.f32 %v7886, %v8381
    %v8973 = vsub.f32 %v7888, %v8387
    %v8974 = vsub.f32 %v7886, %v8394
    %v8975 = vsub.f32 %v7888, %v8400
    %v8976 = vsub.f32 %v7886, %v8407
    %v8977 = vsub.f32 %v7888, %v8413
    %v8978 = vsub.f32 %v7886, %v8420
    %v8979 = vsub.f32 %v7888, %v8426
    %v8980 = vsub.f32 %v7886, %v8433
    %v8981 = vsub.f32 %v7888, %v8439
    %v8982 = vsub.f32 %v7886, %v8446
    %v8983 = vsub.f32 %v7888, %v8452
    %v8984 = vsub.f32 %v7886, %v8459
    %v8985 = vsub.f32 %v7888, %v8465
    %v8986 = vsub.f32 %v7886, %v8472
    %v8987 = vsub.f32 %v7888, %v8478
    %v8988 = vsub.f32 %v7886, %v8485
    %v8989 = vsub.f32 %v7888, %v8491
    %v8990 = vsub.f32 %v7886, %v8498
    %v8991 = vsub.f32 %v7888, %v8504
    %v8992 = vsub.f32 %v7886, %v8511
    %v8993 = vsub.f32 %v7888, %v8517
    %v8994 = vsub.f32 %v7886, %v8524
    %v8995 = vsub.f32 %v7888, %v8530
    %v8996 = vsub.f32 %v7886, %v8537
    %v8997 = vsub.f32 %v7888, %v8543
    %v8998 = vsub.f32 %v7886, %v8550
    %v8999 = vsub.f32 %v7888, %v8556
    %v9000 = vsub.f32 %v7886, %v8563
    %v9001 = vsub.f32 %v7888, %v8569
    %v9002 = vsub.f32 %v7886, %v8576
    %v9003 = vsub.f32 %v7888, %v8582
    %v9004 = vsub.f32 %v7886, %v8589
    %v9005 = vsub.f32 %v7888, %v8595
    %v9006 = vsub.f32 %v7886, %v8602
    %v9007 = vsub.f32 %v7888, %v8608
    %v9008 = vsub.f32 %v7886, %v8615
    %v9009 = vsub.f32 %v7888, %v8621
    %v9010 = vsub.f32 %v7886, %v8628
    %v9011 = vsub.f32 %v7888, %v8634
    %v9012 = vsub.f32 %v7886, %v8641
    %v9013 = vsub.f32 %v7888, %v8647
    %v9014 = vsub.f32 %v7886, %v8654
    %v9015 = vsub.f32 %v7888, %v8660
    %v9016 = vsub.f32 %v7886, %v8667
    %v9017 = vsub.f32 %v7888, %v8673
    %v9018 = vsub.f32 %v7886, %v8680
    %v9019 = vsub.f32 %v7888, %v8686
    %v9020 = vsub.f32 %v7886, %v8693
    %v9021 = vsub.f32 %v7888, %v8699
    %v9022 = vsub.f32 %v7886, %v8706
    %v9023 = vsub.f32 %v7888, %v8712
    %v9024 = vsub.f32 %v7886, %v8719
    %v9025 = vsub.f32 %v7888, %v8725
    %v9026 = vsub.f32 %v7886, %v8732
    %v9027 = vsub.f32 %v7888, %v8738
    %v9028 = vsub.f32 %v7886, %v8745
    %v9029 = vsub.f32 %v7888, %v8751
    %v9030 = vsub.f32 %v7886, %v8758
    %v9031 = vsub.f32 %v7888, %v8764
    %v9032 = vsub.f32 %v7886, %v8771
    %v9033 = vsub.f32 %v7888, %v8777
    %s9034 = smul.u32 0, 16
    %v9035 = vstv %s9034
    %v9036 = vadd.s32 %v3972, %v9035
    %vm9037 = vcmp.lt.s32.totalorder %v9036, 16
    %9166 = vset.pattern.permute.xlu0 0
    %9167 = vperm.xlu0 %9166, %v8906
    %v9168 = vpop.permute.xlu0 %9167
    %9169 = vset.pattern.permute.xlu0 0
    %9170 = vperm.xlu0 %9169, %v8907
    %v9171 = vpop.permute.xlu0 %9170
    %9172 = vset.pattern.permute.xlu0 0
    %9173 = vperm.xlu0 %9172, %v8908
    %v9174 = vpop.permute.xlu0 %9173
    %9175 = vset.pattern.permute.xlu0 0
    %9176 = vperm.xlu0 %9175, %v8909
    %v9177 = vpop.permute.xlu0 %9176
    %9178 = vset.pattern.permute.xlu0 0
    %9179 = vperm.xlu0 %9178, %v8910
    %v9180 = vpop.permute.xlu0 %9179
    %9181 = vset.pattern.permute.xlu0 0
    %9182 = vperm.xlu0 %9181, %v8911
    %v9183 = vpop.permute.xlu0 %9182
    %9184 = vset.pattern.permute.xlu0 0
    %9185 = vperm.xlu0 %9184, %v8912
    %v9186 = vpop.permute.xlu0 %9185
    %9187 = vset.pattern.permute.xlu0 0
    %9188 = vperm.xlu0 %9187, %v8913
    %v9189 = vpop.permute.xlu0 %9188
    %9190 = vset.pattern.permute.xlu0 0
    %9191 = vperm.xlu0 %9190, %v8914
    %v9192 = vpop.permute.xlu0 %9191
    %9193 = vset.pattern.permute.xlu0 0
    %9194 = vperm.xlu0 %9193, %v8915
    %v9195 = vpop.permute.xlu0 %9194
    %9196 = vset.pattern.permute.xlu0 0
    %9197 = vperm.xlu0 %9196, %v8916
    %v9198 = vpop.permute.xlu0 %9197
    %9199 = vset.pattern.permute.xlu0 0
    %9200 = vperm.xlu0 %9199, %v8917
    %v9201 = vpop.permute.xlu0 %9200
    %9202 = vset.pattern.permute.xlu0 0
    %9203 = vperm.xlu0 %9202, %v8918
    %v9204 = vpop.permute.xlu0 %9203
    %9205 = vset.pattern.permute.xlu0 0
    %9206 = vperm.xlu0 %9205, %v8919
    %v9207 = vpop.permute.xlu0 %9206
    %9208 = vset.pattern.permute.xlu0 0
    %9209 = vperm.xlu0 %9208, %v8920
    %v9210 = vpop.permute.xlu0 %9209
    %9211 = vset.pattern.permute.xlu0 0
    %9212 = vperm.xlu0 %9211, %v8921
    %v9213 = vpop.permute.xlu0 %9212
    %9214 = vset.pattern.permute.xlu0 0
    %9215 = vperm.xlu0 %9214, %v8922
    %v9216 = vpop.permute.xlu0 %9215
    %9217 = vset.pattern.permute.xlu0 0
    %9218 = vperm.xlu0 %9217, %v8923
    %v9219 = vpop.permute.xlu0 %9218
    %9220 = vset.pattern.permute.xlu0 0
    %9221 = vperm.xlu0 %9220, %v8924
    %v9222 = vpop.permute.xlu0 %9221
    %9223 = vset.pattern.permute.xlu0 0
    %9224 = vperm.xlu0 %9223, %v8925
    %v9225 = vpop.permute.xlu0 %9224
    %9226 = vset.pattern.permute.xlu0 0
    %9227 = vperm.xlu0 %9226, %v8926
    %v9228 = vpop.permute.xlu0 %9227
    %9229 = vset.pattern.permute.xlu0 0
    %9230 = vperm.xlu0 %9229, %v8927
    %v9231 = vpop.permute.xlu0 %9230
    %9232 = vset.pattern.permute.xlu0 0
    %9233 = vperm.xlu0 %9232, %v8928
    %v9234 = vpop.permute.xlu0 %9233
    %9235 = vset.pattern.permute.xlu0 0
    %9236 = vperm.xlu0 %9235, %v8929
    %v9237 = vpop.permute.xlu0 %9236
    %9238 = vset.pattern.permute.xlu0 0
    %9239 = vperm.xlu0 %9238, %v8930
    %v9240 = vpop.permute.xlu0 %9239
    %9241 = vset.pattern.permute.xlu0 0
    %9242 = vperm.xlu0 %9241, %v8931
    %v9243 = vpop.permute.xlu0 %9242
    %9244 = vset.pattern.permute.xlu0 0
    %9245 = vperm.xlu0 %9244, %v8932
    %v9246 = vpop.permute.xlu0 %9245
    %9247 = vset.pattern.permute.xlu0 0
    %9248 = vperm.xlu0 %9247, %v8933
    %v9249 = vpop.permute.xlu0 %9248
    %9250 = vset.pattern.permute.xlu0 0
    %9251 = vperm.xlu0 %9250, %v8934
    %v9252 = vpop.permute.xlu0 %9251
    %9253 = vset.pattern.permute.xlu0 0
    %9254 = vperm.xlu0 %9253, %v8935
    %v9255 = vpop.permute.xlu0 %9254
    %9256 = vset.pattern.permute.xlu0 0
    %9257 = vperm.xlu0 %9256, %v8936
    %v9258 = vpop.permute.xlu0 %9257
    %9259 = vset.pattern.permute.xlu0 0
    %9260 = vperm.xlu0 %9259, %v8937
    %v9261 = vpop.permute.xlu0 %9260
    %9262 = vset.pattern.permute.xlu0 0
    %9263 = vperm.xlu0 %9262, %v8938
    %v9264 = vpop.permute.xlu0 %9263
    %9265 = vset.pattern.permute.xlu0 0
    %9266 = vperm.xlu0 %9265, %v8939
    %v9267 = vpop.permute.xlu0 %9266
    %9268 = vset.pattern.permute.xlu0 0
    %9269 = vperm.xlu0 %9268, %v8940
    %v9270 = vpop.permute.xlu0 %9269
    %9271 = vset.pattern.permute.xlu0 0
    %9272 = vperm.xlu0 %9271, %v8941
    %v9273 = vpop.permute.xlu0 %9272
    %9274 = vset.pattern.permute.xlu0 0
    %9275 = vperm.xlu0 %9274, %v8942
    %v9276 = vpop.permute.xlu0 %9275
    %9277 = vset.pattern.permute.xlu0 0
    %9278 = vperm.xlu0 %9277, %v8943
    %v9279 = vpop.permute.xlu0 %9278
    %9280 = vset.pattern.permute.xlu0 0
    %9281 = vperm.xlu0 %9280, %v8944
    %v9282 = vpop.permute.xlu0 %9281
    %9283 = vset.pattern.permute.xlu0 0
    %9284 = vperm.xlu0 %9283, %v8945
    %v9285 = vpop.permute.xlu0 %9284
    %9286 = vset.pattern.permute.xlu0 0
    %9287 = vperm.xlu0 %9286, %v8946
    %v9288 = vpop.permute.xlu0 %9287
    %9289 = vset.pattern.permute.xlu0 0
    %9290 = vperm.xlu0 %9289, %v8947
    %v9291 = vpop.permute.xlu0 %9290
    %9292 = vset.pattern.permute.xlu0 0
    %9293 = vperm.xlu0 %9292, %v8948
    %v9294 = vpop.permute.xlu0 %9293
    %9295 = vset.pattern.permute.xlu0 0
    %9296 = vperm.xlu0 %9295, %v8949
    %v9297 = vpop.permute.xlu0 %9296
    %9298 = vset.pattern.permute.xlu0 0
    %9299 = vperm.xlu0 %9298, %v8950
    %v9300 = vpop.permute.xlu0 %9299
    %9301 = vset.pattern.permute.xlu0 0
    %9302 = vperm.xlu0 %9301, %v8951
    %v9303 = vpop.permute.xlu0 %9302
    %9304 = vset.pattern.permute.xlu0 0
    %9305 = vperm.xlu0 %9304, %v8952
    %v9306 = vpop.permute.xlu0 %9305
    %9307 = vset.pattern.permute.xlu0 0
    %9308 = vperm.xlu0 %9307, %v8953
    %v9309 = vpop.permute.xlu0 %9308
    %9310 = vset.pattern.permute.xlu0 0
    %9311 = vperm.xlu0 %9310, %v8954
    %v9312 = vpop.permute.xlu0 %9311
    %9313 = vset.pattern.permute.xlu0 0
    %9314 = vperm.xlu0 %9313, %v8955
    %v9315 = vpop.permute.xlu0 %9314
    %9316 = vset.pattern.permute.xlu0 0
    %9317 = vperm.xlu0 %9316, %v8956
    %v9318 = vpop.permute.xlu0 %9317
    %9319 = vset.pattern.permute.xlu0 0
    %9320 = vperm.xlu0 %9319, %v8957
    %v9321 = vpop.permute.xlu0 %9320
    %9322 = vset.pattern.permute.xlu0 0
    %9323 = vperm.xlu0 %9322, %v8958
    %v9324 = vpop.permute.xlu0 %9323
    %9325 = vset.pattern.permute.xlu0 0
    %9326 = vperm.xlu0 %9325, %v8959
    %v9327 = vpop.permute.xlu0 %9326
    %9328 = vset.pattern.permute.xlu0 0
    %9329 = vperm.xlu0 %9328, %v8960
    %v9330 = vpop.permute.xlu0 %9329
    %9331 = vset.pattern.permute.xlu0 0
    %9332 = vperm.xlu0 %9331, %v8961
    %v9333 = vpop.permute.xlu0 %9332
    %9334 = vset.pattern.permute.xlu0 0
    %9335 = vperm.xlu0 %9334, %v8962
    %v9336 = vpop.permute.xlu0 %9335
    %9337 = vset.pattern.permute.xlu0 0
    %9338 = vperm.xlu0 %9337, %v8963
    %v9339 = vpop.permute.xlu0 %9338
    %9340 = vset.pattern.permute.xlu0 0
    %9341 = vperm.xlu0 %9340, %v8964
    %v9342 = vpop.permute.xlu0 %9341
    %9343 = vset.pattern.permute.xlu0 0
    %9344 = vperm.xlu0 %9343, %v8965
    %v9345 = vpop.permute.xlu0 %9344
    %9346 = vset.pattern.permute.xlu0 0
    %9347 = vperm.xlu0 %9346, %v8966
    %v9348 = vpop.permute.xlu0 %9347
    %9349 = vset.pattern.permute.xlu0 0
    %9350 = vperm.xlu0 %9349, %v8967
    %v9351 = vpop.permute.xlu0 %9350
    %9352 = vset.pattern.permute.xlu0 0
    %9353 = vperm.xlu0 %9352, %v8968
    %v9354 = vpop.permute.xlu0 %9353
    %9355 = vset.pattern.permute.xlu0 0
    %9356 = vperm.xlu0 %9355, %v8969
    %v9357 = vpop.permute.xlu0 %9356
    %9358 = vset.pattern.permute.xlu0 0
    %9359 = vperm.xlu0 %9358, %v8970
    %v9360 = vpop.permute.xlu0 %9359
    %9361 = vset.pattern.permute.xlu0 0
    %9362 = vperm.xlu0 %9361, %v8971
    %v9363 = vpop.permute.xlu0 %9362
    %9364 = vset.pattern.permute.xlu0 0
    %9365 = vperm.xlu0 %9364, %v8972
    %v9366 = vpop.permute.xlu0 %9365
    %9367 = vset.pattern.permute.xlu0 0
    %9368 = vperm.xlu0 %9367, %v8973
    %v9369 = vpop.permute.xlu0 %9368
    %9370 = vset.pattern.permute.xlu0 0
    %9371 = vperm.xlu0 %9370, %v8974
    %v9372 = vpop.permute.xlu0 %9371
    %9373 = vset.pattern.permute.xlu0 0
    %9374 = vperm.xlu0 %9373, %v8975
    %v9375 = vpop.permute.xlu0 %9374
    %9376 = vset.pattern.permute.xlu0 0
    %9377 = vperm.xlu0 %9376, %v8976
    %v9378 = vpop.permute.xlu0 %9377
    %9379 = vset.pattern.permute.xlu0 0
    %9380 = vperm.xlu0 %9379, %v8977
    %v9381 = vpop.permute.xlu0 %9380
    %9382 = vset.pattern.permute.xlu0 0
    %9383 = vperm.xlu0 %9382, %v8978
    %v9384 = vpop.permute.xlu0 %9383
    %9385 = vset.pattern.permute.xlu0 0
    %9386 = vperm.xlu0 %9385, %v8979
    %v9387 = vpop.permute.xlu0 %9386
    %9388 = vset.pattern.permute.xlu0 0
    %9389 = vperm.xlu0 %9388, %v8980
    %v9390 = vpop.permute.xlu0 %9389
    %9391 = vset.pattern.permute.xlu0 0
    %9392 = vperm.xlu0 %9391, %v8981
    %v9393 = vpop.permute.xlu0 %9392
    %9394 = vset.pattern.permute.xlu0 0
    %9395 = vperm.xlu0 %9394, %v8982
    %v9396 = vpop.permute.xlu0 %9395
    %9397 = vset.pattern.permute.xlu0 0
    %9398 = vperm.xlu0 %9397, %v8983
    %v9399 = vpop.permute.xlu0 %9398
    %9400 = vset.pattern.permute.xlu0 0
    %9401 = vperm.xlu0 %9400, %v8984
    %v9402 = vpop.permute.xlu0 %9401
    %9403 = vset.pattern.permute.xlu0 0
    %9404 = vperm.xlu0 %9403, %v8985
    %v9405 = vpop.permute.xlu0 %9404
    %9406 = vset.pattern.permute.xlu0 0
    %9407 = vperm.xlu0 %9406, %v8986
    %v9408 = vpop.permute.xlu0 %9407
    %9409 = vset.pattern.permute.xlu0 0
    %9410 = vperm.xlu0 %9409, %v8987
    %v9411 = vpop.permute.xlu0 %9410
    %9412 = vset.pattern.permute.xlu0 0
    %9413 = vperm.xlu0 %9412, %v8988
    %v9414 = vpop.permute.xlu0 %9413
    %9415 = vset.pattern.permute.xlu0 0
    %9416 = vperm.xlu0 %9415, %v8989
    %v9417 = vpop.permute.xlu0 %9416
    %9418 = vset.pattern.permute.xlu0 0
    %9419 = vperm.xlu0 %9418, %v8990
    %v9420 = vpop.permute.xlu0 %9419
    %9421 = vset.pattern.permute.xlu0 0
    %9422 = vperm.xlu0 %9421, %v8991
    %v9423 = vpop.permute.xlu0 %9422
    %9424 = vset.pattern.permute.xlu0 0
    %9425 = vperm.xlu0 %9424, %v8992
    %v9426 = vpop.permute.xlu0 %9425
    %9427 = vset.pattern.permute.xlu0 0
    %9428 = vperm.xlu0 %9427, %v8993
    %v9429 = vpop.permute.xlu0 %9428
    %9430 = vset.pattern.permute.xlu0 0
    %9431 = vperm.xlu0 %9430, %v8994
    %v9432 = vpop.permute.xlu0 %9431
    %9433 = vset.pattern.permute.xlu0 0
    %9434 = vperm.xlu0 %9433, %v8995
    %v9435 = vpop.permute.xlu0 %9434
    %9436 = vset.pattern.permute.xlu0 0
    %9437 = vperm.xlu0 %9436, %v8996
    %v9438 = vpop.permute.xlu0 %9437
    %9439 = vset.pattern.permute.xlu0 0
    %9440 = vperm.xlu0 %9439, %v8997
    %v9441 = vpop.permute.xlu0 %9440
    %9442 = vset.pattern.permute.xlu0 0
    %9443 = vperm.xlu0 %9442, %v8998
    %v9444 = vpop.permute.xlu0 %9443
    %9445 = vset.pattern.permute.xlu0 0
    %9446 = vperm.xlu0 %9445, %v8999
    %v9447 = vpop.permute.xlu0 %9446
    %9448 = vset.pattern.permute.xlu0 0
    %9449 = vperm.xlu0 %9448, %v9000
    %v9450 = vpop.permute.xlu0 %9449
    %9451 = vset.pattern.permute.xlu0 0
    %9452 = vperm.xlu0 %9451, %v9001
    %v9453 = vpop.permute.xlu0 %9452
    %9454 = vset.pattern.permute.xlu0 0
    %9455 = vperm.xlu0 %9454, %v9002
    %v9456 = vpop.permute.xlu0 %9455
    %9457 = vset.pattern.permute.xlu0 0
    %9458 = vperm.xlu0 %9457, %v9003
    %v9459 = vpop.permute.xlu0 %9458
    %9460 = vset.pattern.permute.xlu0 0
    %9461 = vperm.xlu0 %9460, %v9004
    %v9462 = vpop.permute.xlu0 %9461
    %9463 = vset.pattern.permute.xlu0 0
    %9464 = vperm.xlu0 %9463, %v9005
    %v9465 = vpop.permute.xlu0 %9464
    %9466 = vset.pattern.permute.xlu0 0
    %9467 = vperm.xlu0 %9466, %v9006
    %v9468 = vpop.permute.xlu0 %9467
    %9469 = vset.pattern.permute.xlu0 0
    %9470 = vperm.xlu0 %9469, %v9007
    %v9471 = vpop.permute.xlu0 %9470
    %9472 = vset.pattern.permute.xlu0 0
    %9473 = vperm.xlu0 %9472, %v9008
    %v9474 = vpop.permute.xlu0 %9473
    %9475 = vset.pattern.permute.xlu0 0
    %9476 = vperm.xlu0 %9475, %v9009
    %v9477 = vpop.permute.xlu0 %9476
    %9478 = vset.pattern.permute.xlu0 0
    %9479 = vperm.xlu0 %9478, %v9010
    %v9480 = vpop.permute.xlu0 %9479
    %9481 = vset.pattern.permute.xlu0 0
    %9482 = vperm.xlu0 %9481, %v9011
    %v9483 = vpop.permute.xlu0 %9482
    %9484 = vset.pattern.permute.xlu0 0
    %9485 = vperm.xlu0 %9484, %v9012
    %v9486 = vpop.permute.xlu0 %9485
    %9487 = vset.pattern.permute.xlu0 0
    %9488 = vperm.xlu0 %9487, %v9013
    %v9489 = vpop.permute.xlu0 %9488
    %9490 = vset.pattern.permute.xlu0 0
    %9491 = vperm.xlu0 %9490, %v9014
    %v9492 = vpop.permute.xlu0 %9491
    %9493 = vset.pattern.permute.xlu0 0
    %9494 = vperm.xlu0 %9493, %v9015
    %v9495 = vpop.permute.xlu0 %9494
    %9496 = vset.pattern.permute.xlu0 0
    %9497 = vperm.xlu0 %9496, %v9016
    %v9498 = vpop.permute.xlu0 %9497
    %9499 = vset.pattern.permute.xlu0 0
    %9500 = vperm.xlu0 %9499, %v9017
    %v9501 = vpop.permute.xlu0 %9500
    %9502 = vset.pattern.permute.xlu0 0
    %9503 = vperm.xlu0 %9502, %v9018
    %v9504 = vpop.permute.xlu0 %9503
    %9505 = vset.pattern.permute.xlu0 0
    %9506 = vperm.xlu0 %9505, %v9019
    %v9507 = vpop.permute.xlu0 %9506
    %9508 = vset.pattern.permute.xlu0 0
    %9509 = vperm.xlu0 %9508, %v9020
    %v9510 = vpop.permute.xlu0 %9509
    %9511 = vset.pattern.permute.xlu0 0
    %9512 = vperm.xlu0 %9511, %v9021
    %v9513 = vpop.permute.xlu0 %9512
    %9514 = vset.pattern.permute.xlu0 0
    %9515 = vperm.xlu0 %9514, %v9022
    %v9516 = vpop.permute.xlu0 %9515
    %9517 = vset.pattern.permute.xlu0 0
    %9518 = vperm.xlu0 %9517, %v9023
    %v9519 = vpop.permute.xlu0 %9518
    %9520 = vset.pattern.permute.xlu0 0
    %9521 = vperm.xlu0 %9520, %v9024
    %v9522 = vpop.permute.xlu0 %9521
    %9523 = vset.pattern.permute.xlu0 0
    %9524 = vperm.xlu0 %9523, %v9025
    %v9525 = vpop.permute.xlu0 %9524
    %9526 = vset.pattern.permute.xlu0 0
    %9527 = vperm.xlu0 %9526, %v9026
    %v9528 = vpop.permute.xlu0 %9527
    %9529 = vset.pattern.permute.xlu0 0
    %9530 = vperm.xlu0 %9529, %v9027
    %v9531 = vpop.permute.xlu0 %9530
    %9532 = vset.pattern.permute.xlu0 0
    %9533 = vperm.xlu0 %9532, %v9028
    %v9534 = vpop.permute.xlu0 %9533
    %9535 = vset.pattern.permute.xlu0 0
    %9536 = vperm.xlu0 %9535, %v9029
    %v9537 = vpop.permute.xlu0 %9536
    %9538 = vset.pattern.permute.xlu0 0
    %9539 = vperm.xlu0 %9538, %v9030
    %v9540 = vpop.permute.xlu0 %9539
    %9541 = vset.pattern.permute.xlu0 0
    %9542 = vperm.xlu0 %9541, %v9031
    %v9543 = vpop.permute.xlu0 %9542
    %9544 = vset.pattern.permute.xlu0 0
    %9545 = vperm.xlu0 %9544, %v9032
    %v9546 = vpop.permute.xlu0 %9545
    %9547 = vset.pattern.permute.xlu0 0
    %9548 = vperm.xlu0 %9547, %v9033
    %v9549 = vpop.permute.xlu0 %9548
    %v9550 = vperm.slane %v9168, %v3972
    %v9551 = vperm.slane %v9171, %v3974
    %v9552 = vsel %vm3976, %v9551, %v9550
    %v9553 = vperm.slane %v9174, %v3972
    %v9554 = vperm.slane %v9177, %v3974
    %v9555 = vsel %vm3976, %v9554, %v9553
    %v9556 = vperm.slane %v9180, %v3972
    %v9557 = vperm.slane %v9183, %v3974
    %v9558 = vsel %vm3976, %v9557, %v9556
    %v9559 = vperm.slane %v9186, %v3972
    %v9560 = vperm.slane %v9189, %v3974
    %v9561 = vsel %vm3976, %v9560, %v9559
    %v9562 = vperm.slane %v9192, %v3972
    %v9563 = vperm.slane %v9195, %v3974
    %v9564 = vsel %vm3976, %v9563, %v9562
    %v9565 = vperm.slane %v9198, %v3972
    %v9566 = vperm.slane %v9201, %v3974
    %v9567 = vsel %vm3976, %v9566, %v9565
    %v9568 = vperm.slane %v9204, %v3972
    %v9569 = vperm.slane %v9207, %v3974
    %v9570 = vsel %vm3976, %v9569, %v9568
    %v9571 = vperm.slane %v9210, %v3972
    %v9572 = vperm.slane %v9213, %v3974
    %v9573 = vsel %vm3976, %v9572, %v9571
    %v9574 = vperm.slane %v9216, %v3972
    %v9575 = vperm.slane %v9219, %v3974
    %v9576 = vsel %vm3976, %v9575, %v9574
    %v9577 = vperm.slane %v9222, %v3972
    %v9578 = vperm.slane %v9225, %v3974
    %v9579 = vsel %vm3976, %v9578, %v9577
    %v9580 = vperm.slane %v9228, %v3972
    %v9581 = vperm.slane %v9231, %v3974
    %v9582 = vsel %vm3976, %v9581, %v9580
    %v9583 = vperm.slane %v9234, %v3972
    %v9584 = vperm.slane %v9237, %v3974
    %v9585 = vsel %vm3976, %v9584, %v9583
    %v9586 = vperm.slane %v9240, %v3972
    %v9587 = vperm.slane %v9243, %v3974
    %v9588 = vsel %vm3976, %v9587, %v9586
    %v9589 = vperm.slane %v9246, %v3972
    %v9590 = vperm.slane %v9249, %v3974
    %v9591 = vsel %vm3976, %v9590, %v9589
    %v9592 = vperm.slane %v9252, %v3972
    %v9593 = vperm.slane %v9255, %v3974
    %v9594 = vsel %vm3976, %v9593, %v9592
    %v9595 = vperm.slane %v9258, %v3972
    %v9596 = vperm.slane %v9261, %v3974
    %v9597 = vsel %vm3976, %v9596, %v9595
    %v9598 = vperm.slane %v9264, %v3972
    %v9599 = vperm.slane %v9267, %v3974
    %v9600 = vsel %vm3976, %v9599, %v9598
    %v9601 = vperm.slane %v9270, %v3972
    %v9602 = vperm.slane %v9273, %v3974
    %v9603 = vsel %vm3976, %v9602, %v9601
    %v9604 = vperm.slane %v9276, %v3972
    %v9605 = vperm.slane %v9279, %v3974
    %v9606 = vsel %vm3976, %v9605, %v9604
    %v9607 = vperm.slane %v9282, %v3972
    %v9608 = vperm.slane %v9285, %v3974
    %v9609 = vsel %vm3976, %v9608, %v9607
    %v9610 = vperm.slane %v9288, %v3972
    %v9611 = vperm.slane %v9291, %v3974
    %v9612 = vsel %vm3976, %v9611, %v9610
    %v9613 = vperm.slane %v9294, %v3972
    %v9614 = vperm.slane %v9297, %v3974
    %v9615 = vsel %vm3976, %v9614, %v9613
    %v9616 = vperm.slane %v9300, %v3972
    %v9617 = vperm.slane %v9303, %v3974
    %v9618 = vsel %vm3976, %v9617, %v9616
    %v9619 = vperm.slane %v9306, %v3972
    %v9620 = vperm.slane %v9309, %v3974
    %v9621 = vsel %vm3976, %v9620, %v9619
    %v9622 = vperm.slane %v9312, %v3972
    %v9623 = vperm.slane %v9315, %v3974
    %v9624 = vsel %vm3976, %v9623, %v9622
    %v9625 = vperm.slane %v9318, %v3972
    %v9626 = vperm.slane %v9321, %v3974
    %v9627 = vsel %vm3976, %v9626, %v9625
    %v9628 = vperm.slane %v9324, %v3972
    %v9629 = vperm.slane %v9327, %v3974
    %v9630 = vsel %vm3976, %v9629, %v9628
    %v9631 = vperm.slane %v9330, %v3972
    %v9632 = vperm.slane %v9333, %v3974
    %v9633 = vsel %vm3976, %v9632, %v9631
    %v9634 = vperm.slane %v9336, %v3972
    %v9635 = vperm.slane %v9339, %v3974
    %v9636 = vsel %vm3976, %v9635, %v9634
    %v9637 = vperm.slane %v9342, %v3972
    %v9638 = vperm.slane %v9345, %v3974
    %v9639 = vsel %vm3976, %v9638, %v9637
    %v9640 = vperm.slane %v9348, %v3972
    %v9641 = vperm.slane %v9351, %v3974
    %v9642 = vsel %vm3976, %v9641, %v9640
    %v9643 = vperm.slane %v9354, %v3972
    %v9644 = vperm.slane %v9357, %v3974
    %v9645 = vsel %vm3976, %v9644, %v9643
    %v9646 = vperm.slane %v9360, %v3972
    %v9647 = vperm.slane %v9363, %v3974
    %v9648 = vsel %vm3976, %v9647, %v9646
    %v9649 = vperm.slane %v9366, %v3972
    %v9650 = vperm.slane %v9369, %v3974
    %v9651 = vsel %vm3976, %v9650, %v9649
    %v9652 = vperm.slane %v9372, %v3972
    %v9653 = vperm.slane %v9375, %v3974
    %v9654 = vsel %vm3976, %v9653, %v9652
    %v9655 = vperm.slane %v9378, %v3972
    %v9656 = vperm.slane %v9381, %v3974
    %v9657 = vsel %vm3976, %v9656, %v9655
    %v9658 = vperm.slane %v9384, %v3972
    %v9659 = vperm.slane %v9387, %v3974
    %v9660 = vsel %vm3976, %v9659, %v9658
    %v9661 = vperm.slane %v9390, %v3972
    %v9662 = vperm.slane %v9393, %v3974
    %v9663 = vsel %vm3976, %v9662, %v9661
    %v9664 = vperm.slane %v9396, %v3972
    %v9665 = vperm.slane %v9399, %v3974
    %v9666 = vsel %vm3976, %v9665, %v9664
    %v9667 = vperm.slane %v9402, %v3972
    %v9668 = vperm.slane %v9405, %v3974
    %v9669 = vsel %vm3976, %v9668, %v9667
    %v9670 = vperm.slane %v9408, %v3972
    %v9671 = vperm.slane %v9411, %v3974
    %v9672 = vsel %vm3976, %v9671, %v9670
    %v9673 = vperm.slane %v9414, %v3972
    %v9674 = vperm.slane %v9417, %v3974
    %v9675 = vsel %vm3976, %v9674, %v9673
    %v9676 = vperm.slane %v9420, %v3972
    %v9677 = vperm.slane %v9423, %v3974
    %v9678 = vsel %vm3976, %v9677, %v9676
    %v9679 = vperm.slane %v9426, %v3972
    %v9680 = vperm.slane %v9429, %v3974
    %v9681 = vsel %vm3976, %v9680, %v9679
    %v9682 = vperm.slane %v9432, %v3972
    %v9683 = vperm.slane %v9435, %v3974
    %v9684 = vsel %vm3976, %v9683, %v9682
    %v9685 = vperm.slane %v9438, %v3972
    %v9686 = vperm.slane %v9441, %v3974
    %v9687 = vsel %vm3976, %v9686, %v9685
    %v9688 = vperm.slane %v9444, %v3972
    %v9689 = vperm.slane %v9447, %v3974
    %v9690 = vsel %vm3976, %v9689, %v9688
    %v9691 = vperm.slane %v9450, %v3972
    %v9692 = vperm.slane %v9453, %v3974
    %v9693 = vsel %vm3976, %v9692, %v9691
    %v9694 = vperm.slane %v9456, %v3972
    %v9695 = vperm.slane %v9459, %v3974
    %v9696 = vsel %vm3976, %v9695, %v9694
    %v9697 = vperm.slane %v9462, %v3972
    %v9698 = vperm.slane %v9465, %v3974
    %v9699 = vsel %vm3976, %v9698, %v9697
    %v9700 = vperm.slane %v9468, %v3972
    %v9701 = vperm.slane %v9471, %v3974
    %v9702 = vsel %vm3976, %v9701, %v9700
    %v9703 = vperm.slane %v9474, %v3972
    %v9704 = vperm.slane %v9477, %v3974
    %v9705 = vsel %vm3976, %v9704, %v9703
    %v9706 = vperm.slane %v9480, %v3972
    %v9707 = vperm.slane %v9483, %v3974
    %v9708 = vsel %vm3976, %v9707, %v9706
    %v9709 = vperm.slane %v9486, %v3972
    %v9710 = vperm.slane %v9489, %v3974
    %v9711 = vsel %vm3976, %v9710, %v9709
    %v9712 = vperm.slane %v9492, %v3972
    %v9713 = vperm.slane %v9495, %v3974
    %v9714 = vsel %vm3976, %v9713, %v9712
    %v9715 = vperm.slane %v9498, %v3972
    %v9716 = vperm.slane %v9501, %v3974
    %v9717 = vsel %vm3976, %v9716, %v9715
    %v9718 = vperm.slane %v9504, %v3972
    %v9719 = vperm.slane %v9507, %v3974
    %v9720 = vsel %vm3976, %v9719, %v9718
    %v9721 = vperm.slane %v9510, %v3972
    %v9722 = vperm.slane %v9513, %v3974
    %v9723 = vsel %vm3976, %v9722, %v9721
    %v9724 = vperm.slane %v9516, %v3972
    %v9725 = vperm.slane %v9519, %v3974
    %v9726 = vsel %vm3976, %v9725, %v9724
    %v9727 = vperm.slane %v9522, %v3972
    %v9728 = vperm.slane %v9525, %v3974
    %v9729 = vsel %vm3976, %v9728, %v9727
    %v9730 = vperm.slane %v9528, %v3972
    %v9731 = vperm.slane %v9531, %v3974
    %v9732 = vsel %vm3976, %v9731, %v9730
    %v9733 = vperm.slane %v9534, %v3972
    %v9734 = vperm.slane %v9537, %v3974
    %v9735 = vsel %vm3976, %v9734, %v9733
    %v9736 = vperm.slane %v9540, %v3972
    %v9737 = vperm.slane %v9543, %v3974
    %v9738 = vsel %vm3976, %v9737, %v9736
    %v9739 = vperm.slane %v9546, %v3972
    %v9740 = vperm.slane %v9549, %v3974
    %v9741 = vsel %vm3976, %v9740, %v9739
    %v9742 = vsel %vm4227, %v9555, %v9552
    %v9743 = vsel %vm4229, %v9558, %v9742
    %v9744 = vsel %vm4231, %v9561, %v9743
    %v9745 = vsel %vm4233, %v9564, %v9744
    %v9746 = vsel %vm4235, %v9567, %v9745
    %v9747 = vsel %vm4237, %v9570, %v9746
    %v9748 = vsel %vm4239, %v9573, %v9747
    %v9749 = vsel %vm4227, %v9579, %v9576
    %v9750 = vsel %vm4229, %v9582, %v9749
    %v9751 = vsel %vm4231, %v9585, %v9750
    %v9752 = vsel %vm4233, %v9588, %v9751
    %v9753 = vsel %vm4235, %v9591, %v9752
    %v9754 = vsel %vm4237, %v9594, %v9753
    %v9755 = vsel %vm4239, %v9597, %v9754
    %v9756 = vsel %vm4227, %v9603, %v9600
    %v9757 = vsel %vm4229, %v9606, %v9756
    %v9758 = vsel %vm4231, %v9609, %v9757
    %v9759 = vsel %vm4233, %v9612, %v9758
    %v9760 = vsel %vm4235, %v9615, %v9759
    %v9761 = vsel %vm4237, %v9618, %v9760
    %v9762 = vsel %vm4239, %v9621, %v9761
    %v9763 = vsel %vm4227, %v9627, %v9624
    %v9764 = vsel %vm4229, %v9630, %v9763
    %v9765 = vsel %vm4231, %v9633, %v9764
    %v9766 = vsel %vm4233, %v9636, %v9765
    %v9767 = vsel %vm4235, %v9639, %v9766
    %v9768 = vsel %vm4237, %v9642, %v9767
    %v9769 = vsel %vm4239, %v9645, %v9768
    %v9770 = vsel %vm4227, %v9651, %v9648
    %v9771 = vsel %vm4229, %v9654, %v9770
    %v9772 = vsel %vm4231, %v9657, %v9771
    %v9773 = vsel %vm4233, %v9660, %v9772
    %v9774 = vsel %vm4235, %v9663, %v9773
    %v9775 = vsel %vm4237, %v9666, %v9774
    %v9776 = vsel %vm4239, %v9669, %v9775
    %v9777 = vsel %vm4227, %v9675, %v9672
    %v9778 = vsel %vm4229, %v9678, %v9777
    %v9779 = vsel %vm4231, %v9681, %v9778
    %v9780 = vsel %vm4233, %v9684, %v9779
    %v9781 = vsel %vm4235, %v9687, %v9780
    %v9782 = vsel %vm4237, %v9690, %v9781
    %v9783 = vsel %vm4239, %v9693, %v9782
    %v9784 = vsel %vm4227, %v9699, %v9696
    %v9785 = vsel %vm4229, %v9702, %v9784
    %v9786 = vsel %vm4231, %v9705, %v9785
    %v9787 = vsel %vm4233, %v9708, %v9786
    %v9788 = vsel %vm4235, %v9711, %v9787
    %v9789 = vsel %vm4237, %v9714, %v9788
    %v9790 = vsel %vm4239, %v9717, %v9789
    %v9791 = vsel %vm4227, %v9723, %v9720
    %v9792 = vsel %vm4229, %v9726, %v9791
    %v9793 = vsel %vm4231, %v9729, %v9792
    %v9794 = vsel %vm4233, %v9732, %v9793
    %v9795 = vsel %vm4235, %v9735, %v9794
    %v9796 = vsel %vm4237, %v9738, %v9795
    %v9797 = vsel %vm4239, %v9741, %v9796
    %v9806 = vsel %vm9037, %v9748, inf
    %v9807 = vsel %vm9037, %v9755, inf
    %v9808 = vsel %vm9037, %v9762, inf
    %v9809 = vsel %vm9037, %v9769, inf
    %v9810 = vsel %vm9037, %v9776, inf
    %v9811 = vsel %vm9037, %v9783, inf
    %v9812 = vsel %vm9037, %v9790, inf
    %v9813 = vsel %vm9037, %v9797, inf
    %v9814 = vsel %vm1282, %v9806, inf
    %9815 = vmin.xlane.f32.xlu0 %v9814
    %v9816 = vpop.xlane.xlu0 %9815
    %v9817 = vsel %vm1282, %v9807, inf
    %9818 = vmin.xlane.f32.xlu0 %v9817
    %v9819 = vpop.xlane.xlu0 %9818
    %v9820 = vsel %vm1282, %v9808, inf
    %9821 = vmin.xlane.f32.xlu0 %v9820
    %v9822 = vpop.xlane.xlu0 %9821
    %v9823 = vsel %vm1282, %v9809, inf
    %9824 = vmin.xlane.f32.xlu0 %v9823
    %v9825 = vpop.xlane.xlu0 %9824
    %v9826 = vsel %vm1282, %v9810, inf
    %9827 = vmin.xlane.f32.xlu0 %v9826
    %v9828 = vpop.xlane.xlu0 %9827
    %v9829 = vsel %vm1282, %v9811, inf
    %9830 = vmin.xlane.f32.xlu0 %v9829
    %v9831 = vpop.xlane.xlu0 %9830
    %v9832 = vsel %vm1282, %v9812, inf
    %9833 = vmin.xlane.f32.xlu0 %v9832
    %v9834 = vpop.xlane.xlu0 %9833
    %v9835 = vsel %vm1282, %v9813, inf
    %9836 = vmin.xlane.f32.xlu0 %v9835
    %v9837 = vpop.xlane.xlu0 %9836
    %vm9838 = vcmp.eq.f32.partialorder %v9806, %v9816
    %vm9839 = vcmp.eq.f32.partialorder %v9807, %v9819
    %vm9840 = vcmp.eq.f32.partialorder %v9808, %v9822
    %vm9841 = vcmp.eq.f32.partialorder %v9809, %v9825
    %vm9842 = vcmp.eq.f32.partialorder %v9810, %v9828
    %vm9843 = vcmp.eq.f32.partialorder %v9811, %v9831
    %vm9844 = vcmp.eq.f32.partialorder %v9812, %v9834
    %vm9845 = vcmp.eq.f32.partialorder %v9813, %v9837
    %v9846 = vsel %vm9838, %v3972, 16
    %v9847 = vsel %vm9839, %v3972, 16
    %v9848 = vsel %vm9840, %v3972, 16
    %v9849 = vsel %vm9841, %v3972, 16
    %v9850 = vsel %vm9842, %v3972, 16
    %v9851 = vsel %vm9843, %v3972, 16
    %v9852 = vsel %vm9844, %v3972, 16
    %v9853 = vsel %vm9845, %v3972, 16
    %v9854 = vsel %vm1282, %v9846, 2147483647
    %v9855 = vand.u32 %v9854, 65535
    %v9856 = vshra.s32 %v9854, 16
    %v9857 = vcvt.s32.f32 %v9855
    %v9858 = vcvt.s32.f32 %v9856
    %9859 = vmin.xlane.f32.xlu0 %v9858
    %v9860 = vpop.xlane.xlu0 %9859
    %vm9861 = vcmp.eq.f32.partialorder %v9858, %v9860
    %v9862 = vsel %vm9861, %v9857, inf
    %9863 = vmin.xlane.f32.xlu0 %v9862
    %v9864 = vpop.xlane.xlu0 %9863
    %v9865 = vcvt.f32.s32 %v9864
    %v9866 = vcvt.f32.s32 %v9860
    %v9867 = vshll.u32 %v9866, 16
    %v9868 = vadd.s32 %v9867, %v9865
    %v9869 = vsel %vm1282, %v9847, 2147483647
    %v9870 = vand.u32 %v9869, 65535
    %v9871 = vshra.s32 %v9869, 16
    %v9872 = vcvt.s32.f32 %v9870
    %v9873 = vcvt.s32.f32 %v9871
    %9874 = vmin.xlane.f32.xlu0 %v9873
    %v9875 = vpop.xlane.xlu0 %9874
    %vm9876 = vcmp.eq.f32.partialorder %v9873, %v9875
    %v9877 = vsel %vm9876, %v9872, inf
    %9878 = vmin.xlane.f32.xlu0 %v9877
    %v9879 = vpop.xlane.xlu0 %9878
    %v9880 = vcvt.f32.s32 %v9879
    %v9881 = vcvt.f32.s32 %v9875
    %v9882 = vshll.u32 %v9881, 16
    %v9883 = vadd.s32 %v9882, %v9880
    %v9884 = vsel %vm1282, %v9848, 2147483647
    %v9885 = vand.u32 %v9884, 65535
    %v9886 = vshra.s32 %v9884, 16
    %v9887 = vcvt.s32.f32 %v9885
    %v9888 = vcvt.s32.f32 %v9886
    %9889 = vmin.xlane.f32.xlu0 %v9888
    %v9890 = vpop.xlane.xlu0 %9889
    %vm9891 = vcmp.eq.f32.partialorder %v9888, %v9890
    %v9892 = vsel %vm9891, %v9887, inf
    %9893 = vmin.xlane.f32.xlu0 %v9892
    %v9894 = vpop.xlane.xlu0 %9893
    %v9895 = vcvt.f32.s32 %v9894
    %v9896 = vcvt.f32.s32 %v9890
    %v9897 = vshll.u32 %v9896, 16
    %v9898 = vadd.s32 %v9897, %v9895
    %v9899 = vsel %vm1282, %v9849, 2147483647
    %v9900 = vand.u32 %v9899, 65535
    %v9901 = vshra.s32 %v9899, 16
    %v9902 = vcvt.s32.f32 %v9900
    %v9903 = vcvt.s32.f32 %v9901
    %9904 = vmin.xlane.f32.xlu0 %v9903
    %v9905 = vpop.xlane.xlu0 %9904
    %vm9906 = vcmp.eq.f32.partialorder %v9903, %v9905
    %v9907 = vsel %vm9906, %v9902, inf
    %9908 = vmin.xlane.f32.xlu0 %v9907
    %v9909 = vpop.xlane.xlu0 %9908
    %v9910 = vcvt.f32.s32 %v9909
    %v9911 = vcvt.f32.s32 %v9905
    %v9912 = vshll.u32 %v9911, 16
    %v9913 = vadd.s32 %v9912, %v9910
    %v9914 = vsel %vm1282, %v9850, 2147483647
    %v9915 = vand.u32 %v9914, 65535
    %v9916 = vshra.s32 %v9914, 16
    %v9917 = vcvt.s32.f32 %v9915
    %v9918 = vcvt.s32.f32 %v9916
    %9919 = vmin.xlane.f32.xlu0 %v9918
    %v9920 = vpop.xlane.xlu0 %9919
    %vm9921 = vcmp.eq.f32.partialorder %v9918, %v9920
    %v9922 = vsel %vm9921, %v9917, inf
    %9923 = vmin.xlane.f32.xlu0 %v9922
    %v9924 = vpop.xlane.xlu0 %9923
    %v9925 = vcvt.f32.s32 %v9924
    %v9926 = vcvt.f32.s32 %v9920
    %v9927 = vshll.u32 %v9926, 16
    %v9928 = vadd.s32 %v9927, %v9925
    %v9929 = vsel %vm1282, %v9851, 2147483647
    %v9930 = vand.u32 %v9929, 65535
    %v9931 = vshra.s32 %v9929, 16
    %v9932 = vcvt.s32.f32 %v9930
    %v9933 = vcvt.s32.f32 %v9931
    %9934 = vmin.xlane.f32.xlu0 %v9933
    %v9935 = vpop.xlane.xlu0 %9934
    %vm9936 = vcmp.eq.f32.partialorder %v9933, %v9935
    %v9937 = vsel %vm9936, %v9932, inf
    %9938 = vmin.xlane.f32.xlu0 %v9937
    %v9939 = vpop.xlane.xlu0 %9938
    %v9940 = vcvt.f32.s32 %v9939
    %v9941 = vcvt.f32.s32 %v9935
    %v9942 = vshll.u32 %v9941, 16
    %v9943 = vadd.s32 %v9942, %v9940
    %v9944 = vsel %vm1282, %v9852, 2147483647
    %v9945 = vand.u32 %v9944, 65535
    %v9946 = vshra.s32 %v9944, 16
    %v9947 = vcvt.s32.f32 %v9945
    %v9948 = vcvt.s32.f32 %v9946
    %9949 = vmin.xlane.f32.xlu0 %v9948
    %v9950 = vpop.xlane.xlu0 %9949
    %vm9951 = vcmp.eq.f32.partialorder %v9948, %v9950
    %v9952 = vsel %vm9951, %v9947, inf
    %9953 = vmin.xlane.f32.xlu0 %v9952
    %v9954 = vpop.xlane.xlu0 %9953
    %v9955 = vcvt.f32.s32 %v9954
    %v9956 = vcvt.f32.s32 %v9950
    %v9957 = vshll.u32 %v9956, 16
    %v9958 = vadd.s32 %v9957, %v9955
    %v9959 = vsel %vm1282, %v9853, 2147483647
    %v9960 = vand.u32 %v9959, 65535
    %v9961 = vshra.s32 %v9959, 16
    %v9962 = vcvt.s32.f32 %v9960
    %v9963 = vcvt.s32.f32 %v9961
    %9964 = vmin.xlane.f32.xlu0 %v9963
    %v9965 = vpop.xlane.xlu0 %9964
    %vm9966 = vcmp.eq.f32.partialorder %v9963, %v9965
    %v9967 = vsel %vm9966, %v9962, inf
    %9968 = vmin.xlane.f32.xlu0 %v9967
    %v9969 = vpop.xlane.xlu0 %9968
    %v9970 = vcvt.f32.s32 %v9969
    %v9971 = vcvt.f32.s32 %v9965
    %v9972 = vshll.u32 %v9971, 16
    %v9973 = vadd.s32 %v9972, %v9970
    %vm9974 = vcmp.eq.s32.totalorder %v3972, %v9868
    %vm9975 = vcmp.eq.s32.totalorder %v3972, %v9883
    %vm9976 = vcmp.eq.s32.totalorder %v3972, %v9898
    %vm9977 = vcmp.eq.s32.totalorder %v3972, %v9913
    %vm9978 = vcmp.eq.s32.totalorder %v3972, %v9928
    %vm9979 = vcmp.eq.s32.totalorder %v3972, %v9943
    %vm9980 = vcmp.eq.s32.totalorder %v3972, %v9958
    %vm9981 = vcmp.eq.s32.totalorder %v3972, %v9973
    %v9982 = vsel %vm9974, 1, 0
    %v9983 = vsel %vm9975, 1, 0
    %v9984 = vsel %vm9976, 1, 0
    %v9985 = vsel %vm9977, 1, 0
    %v9986 = vsel %vm9978, 1, 0
    %v9987 = vsel %vm9979, 1, 0
    %v9988 = vsel %vm9980, 1, 0
    %v9989 = vsel %vm9981, 1, 0
    %v9990 = vcvt.s32.f32 %v9982
    %v9991 = vcvt.s32.f32 %v9983
    %v9992 = vcvt.s32.f32 %v9984
    %v9993 = vcvt.s32.f32 %v9985
    %v9994 = vcvt.s32.f32 %v9986
    %v9995 = vcvt.s32.f32 %v9987
    %v9996 = vcvt.s32.f32 %v9988
    %v9997 = vcvt.s32.f32 %v9989
    %v9999 = vsel %vm1282, %v9990, 0
    %v10002 = vsel %vm1282, %v9991, 0
    %v10005 = vsel %vm1282, %v9992, 0
    %v10008 = vsel %vm1282, %v9993, 0
    %v10011 = vsel %vm1282, %v9994, 0
    %v10014 = vsel %vm1282, %v9995, 0
    %v10017 = vsel %vm1282, %v9996, 0
    %v10020 = vsel %vm1282, %v9997, 0
    %10022 = vmatpush.msra.mxu0 0.0
    %10023 = vmatpush.msra.mxu0 0.0
    %10024 = vmatpush.msra.mxu0 0.0
    %10025 = vmatpush.msra.mxu0 0.0
    %10026 = vmatpush.msra.mxu0 0.0
    %10027 = vmatpush.msra.mxu0 0.0
    %10028 = vmatpush.msra.mxu0 0.0
    %10029 = vmatpush.msra.mxu0 0.0
    %10030 = vmatpush.msra.mxu0 0.0
    %10031 = vmatpush.msra.mxu0 0.0
    %10032 = vmatpush.msra.mxu0 0.0
    %10033 = vmatpush.msra.mxu0 0.0
    %10034 = vmatpush.msra.mxu0 0.0
    %10035 = vmatpush.msra.mxu0 0.0
    %10036 = vmatpush.msra.mxu0 %v2356
    %10037 = vmatpush.msra.mxu0 %v2354
    %10038 = vmatmul.f32.gmra.mxu0 %v9999
    %v10039 = vpop.f32.mrf.mxu0
    %v10040 = vadd.f32 0.0, %v10039
    %10041 = vmatmul.f32.gmra.mxu0 %v10002
    %v10042 = vpop.f32.mrf.mxu0
    %v10043 = vadd.f32 0.0, %v10042
    %10044 = vmatmul.f32.gmra.mxu0 %v10005
    %v10045 = vpop.f32.mrf.mxu0
    %v10046 = vadd.f32 0.0, %v10045
    %10047 = vmatmul.f32.gmra.mxu0 %v10008
    %v10048 = vpop.f32.mrf.mxu0
    %v10049 = vadd.f32 0.0, %v10048
    %10050 = vmatmul.f32.gmra.mxu0 %v10011
    %v10051 = vpop.f32.mrf.mxu0
    %v10052 = vadd.f32 0.0, %v10051
    %10053 = vmatmul.f32.gmra.mxu0 %v10014
    %v10054 = vpop.f32.mrf.mxu0
    %v10055 = vadd.f32 0.0, %v10054
    %10056 = vmatmul.f32.gmra.mxu0 %v10017
    %v10057 = vpop.f32.mrf.mxu0
    %v10058 = vadd.f32 0.0, %v10057
    %10059 = vmatmul.f32.gmra.mxu0 %v10020
    %v10060 = vpop.f32.mrf.mxu0
    %v10061 = vadd.f32 0.0, %v10060
    %10062 = vdwg.mxu0
    %v10063 = vld [vmem:[#allocation2] sm:$0xff]
    %v10064 = vld [vmem:[#allocation2 + $0x8] sm:$0xff]
    %v10065 = vld [vmem:[#allocation2 + $0x10] sm:$0xff]
    %v10066 = vld [vmem:[#allocation2 + $0x18] sm:$0xff]
    %v10067 = vld [vmem:[#allocation2 + $0x20] sm:$0xff]
    %v10068 = vld [vmem:[#allocation2 + $0x28] sm:$0xff]
    %v10069 = vld [vmem:[#allocation2 + $0x30] sm:$0xff]
    %v10070 = vld [vmem:[#allocation2 + $0x38] sm:$0xff]
    %vm10071 = vcmp.lt.f32.partialorder %v9816, %v10063
    %vm10072 = vcmp.lt.f32.partialorder %v9819, %v10064
    %vm10073 = vcmp.lt.f32.partialorder %v9822, %v10065
    %vm10074 = vcmp.lt.f32.partialorder %v9825, %v10066
    %vm10075 = vcmp.lt.f32.partialorder %v9828, %v10067
    %vm10076 = vcmp.lt.f32.partialorder %v9831, %v10068
    %vm10077 = vcmp.lt.f32.partialorder %v9834, %v10069
    %vm10078 = vcmp.lt.f32.partialorder %v9837, %v10070
    %v10079 = vld [vmem:[#allocation7] sm:$0xff]
    %v10080 = vld [vmem:[#allocation7 + $0x8] sm:$0xff]
    %v10081 = vld [vmem:[#allocation7 + $0x10] sm:$0xff]
    %v10082 = vld [vmem:[#allocation7 + $0x18] sm:$0xff]
    %v10083 = vld [vmem:[#allocation7 + $0x20] sm:$0xff]
    %v10084 = vld [vmem:[#allocation7 + $0x28] sm:$0xff]
    %v10085 = vld [vmem:[#allocation7 + $0x30] sm:$0xff]
    %v10086 = vld [vmem:[#allocation7 + $0x38] sm:$0xff]
    %v10087 = vsel %vm10071, 1, 0
    %v10088 = vsel %vm10072, 1, 0
    %v10089 = vsel %vm10073, 1, 0
    %v10090 = vsel %vm10074, 1, 0
    %v10091 = vsel %vm10075, 1, 0
    %v10092 = vsel %vm10076, 1, 0
    %v10093 = vsel %vm10077, 1, 0
    %v10094 = vsel %vm10078, 1, 0
    %10095 = vset.pattern.permute.xlu0 0
    %10096 = vperm.xlu0 %10095, %v10087
    %v10097 = vpop.permute.xlu0 %10096
    %10098 = vset.pattern.permute.xlu0 0
    %10099 = vperm.xlu0 %10098, %v10088
    %v10100 = vpop.permute.xlu0 %10099
    %10101 = vset.pattern.permute.xlu0 0
    %10102 = vperm.xlu0 %10101, %v10089
    %v10103 = vpop.permute.xlu0 %10102
    %10104 = vset.pattern.permute.xlu0 0
    %10105 = vperm.xlu0 %10104, %v10090
    %v10106 = vpop.permute.xlu0 %10105
    %10107 = vset.pattern.permute.xlu0 0
    %10108 = vperm.xlu0 %10107, %v10091
    %v10109 = vpop.permute.xlu0 %10108
    %10110 = vset.pattern.permute.xlu0 0
    %10111 = vperm.xlu0 %10110, %v10092
    %v10112 = vpop.permute.xlu0 %10111
    %10113 = vset.pattern.permute.xlu0 0
    %10114 = vperm.xlu0 %10113, %v10093
    %v10115 = vpop.permute.xlu0 %10114
    %10116 = vset.pattern.permute.xlu0 0
    %10117 = vperm.xlu0 %10116, %v10094
    %v10118 = vpop.permute.xlu0 %10117
    %vm10119 = vcmp.eq.s32.totalorder %v10097, 1
    %vm10120 = vcmp.eq.s32.totalorder %v10100, 1
    %vm10121 = vcmp.eq.s32.totalorder %v10103, 1
    %vm10122 = vcmp.eq.s32.totalorder %v10106, 1
    %vm10123 = vcmp.eq.s32.totalorder %v10109, 1
    %vm10124 = vcmp.eq.s32.totalorder %v10112, 1
    %vm10125 = vcmp.eq.s32.totalorder %v10115, 1
    %vm10126 = vcmp.eq.s32.totalorder %v10118, 1
    %v10127 = vsel %vm10119, %v10040, %v10079
    %v10128 = vsel %vm10120, %v10043, %v10080
    %v10129 = vsel %vm10121, %v10046, %v10081
    %v10130 = vsel %vm10122, %v10049, %v10082
    %v10131 = vsel %vm10123, %v10052, %v10083
    %v10132 = vsel %vm10124, %v10055, %v10084
    %v10133 = vsel %vm10125, %v10058, %v10085
    %v10134 = vsel %vm10126, %v10061, %v10086
    %10135 = vst [vmem:[#allocation7] sm:$0xff] %v10127
    %10136 = vst [vmem:[#allocation7 + $0x8] sm:$0xff] %v10128
    %10137 = vst [vmem:[#allocation7 + $0x10] sm:$0xff] %v10129
    %10138 = vst [vmem:[#allocation7 + $0x18] sm:$0xff] %v10130
    %10139 = vst [vmem:[#allocation7 + $0x20] sm:$0xff] %v10131
    %10140 = vst [vmem:[#allocation7 + $0x28] sm:$0xff] %v10132
    %10141 = vst [vmem:[#allocation7 + $0x30] sm:$0xff] %v10133
    %10142 = vst [vmem:[#allocation7 + $0x38] sm:$0xff] %v10134
    %v10143 = vld [vmem:[#allocation2] sm:$0xff]
    %v10144 = vld [vmem:[#allocation2 + $0x8] sm:$0xff]
    %v10145 = vld [vmem:[#allocation2 + $0x10] sm:$0xff]
    %v10146 = vld [vmem:[#allocation2 + $0x18] sm:$0xff]
    %v10147 = vld [vmem:[#allocation2 + $0x20] sm:$0xff]
    %v10148 = vld [vmem:[#allocation2 + $0x28] sm:$0xff]
    %v10149 = vld [vmem:[#allocation2 + $0x30] sm:$0xff]
    %v10150 = vld [vmem:[#allocation2 + $0x38] sm:$0xff]
    %v10151 = vsel %vm10071, %v9816, %v10143
    %v10152 = vsel %vm10072, %v9819, %v10144
    %v10153 = vsel %vm10073, %v9822, %v10145
    %v10154 = vsel %vm10074, %v9825, %v10146
    %v10155 = vsel %vm10075, %v9828, %v10147
    %v10156 = vsel %vm10076, %v9831, %v10148
    %v10157 = vsel %vm10077, %v9834, %v10149
    %v10158 = vsel %vm10078, %v9837, %v10150
    %vm10159 = vcmask 7168
    %10160 = vst.msk [vmem:[#allocation2] sm:$0xff] %vm10159, %v10151
    %10161 = vst.msk [vmem:[#allocation2 + $0x8] sm:$0xff] %vm10159, %v10152
    %10162 = vst.msk [vmem:[#allocation2 + $0x10] sm:$0xff] %vm10159, %v10153
    %10163 = vst.msk [vmem:[#allocation2 + $0x18] sm:$0xff] %vm10159, %v10154
    %10164 = vst.msk [vmem:[#allocation2 + $0x20] sm:$0xff] %vm10159, %v10155
    %10165 = vst.msk [vmem:[#allocation2 + $0x28] sm:$0xff] %vm10159, %v10156
    %10166 = vst.msk [vmem:[#allocation2 + $0x30] sm:$0xff] %vm10159, %v10157
    %10167 = vst.msk [vmem:[#allocation2 + $0x38] sm:$0xff] %vm10159, %v10158
    // Predicated region
    $region62: #{vqvae_mlp_forward.1} parent=1 // pred_check
      _
    $region63: #{vqvae_mlp_forward.1} parent=1 // pred_check_branch
      %10169 = sbr.rel (0) target = $region65
    $region64: #{vqvae_mlp_forward.1} parent=1 // pred_region
      _
    $region65: #{vqvae_mlp_forward.1} parent=1 // pred_fallthru
      _
    // Predicated region
    $region66: #{vqvae_mlp_forward.1} parent=1 // pred_check
      _
    $region67: #{vqvae_mlp_forward.1} parent=1 // pred_check_branch
      %10171 = sbr.rel (0) target = $region69
    $region68: #{vqvae_mlp_forward.1} parent=1 // pred_region
      %10173 = vsyncadd [#allocation4], 0
      %s10174 = sshll.u32 [#allocation3], 4
      %s10175 = int_to_ptr.vmem [resolvable:$true] %s10174
      %s10176 = sshll.u32 %s15, 4
      %s10177 = int_to_ptr.hbm [resolvable:$true] %s10176
      %10182 = dma.vmem_to_hbm [thread:$0]  %s10175, 256, %s10177, [#allocation4], 128, 128, 8
    $region69: #{vqvae_mlp_forward.1} parent=1 // pred_fallthru
      _
    // Predicated region
    $region70: #{vqvae_mlp_forward.1} parent=1 // pred_check
      _
    $region71: #{vqvae_mlp_forward.1} parent=1 // pred_check_branch
      %10184 = sbr.rel (0) target = $region73
    $region72: #{vqvae_mlp_forward.1} parent=1 // pred_region
      %10186 = vsyncadd [#allocation6], 0
      %s10187 = sshll.u32 [#allocation5], 4
      %s10188 = int_to_ptr.vmem [resolvable:$true] %s10187
      %s10189 = sshll.u32 %s16, 4
      %s10190 = int_to_ptr.hbm [resolvable:$true] %s10189
      %10195 = dma.vmem_to_hbm [thread:$0]  %s10188, 256, %s10190, [#allocation6], 128, 128, 8
    $region73: #{vqvae_mlp_forward.1} parent=1 // pred_fallthru
      _
    // Predicated region
    $region74: #{vqvae_mlp_forward.1} parent=1 // pred_check
      _
    $region75: #{vqvae_mlp_forward.1} parent=1 // pred_check_branch
      %10197 = sbr.rel (0) target = $region77
    $region76: #{vqvae_mlp_forward.1} parent=1 // pred_region
      %10199 = vsyncadd [#allocation6], 0
      %s10200 = sshll.u32 [#allocation7], 4
      %s10201 = int_to_ptr.vmem [resolvable:$true] %s10200
      %s10202 = sshll.u32 %s17, 4
      %s10203 = int_to_ptr.hbm [resolvable:$true] %s10202
      %10208 = dma.vmem_to_hbm [thread:$0]  %s10201, 1024, %s10203, [#allocation6], 128, 128, 8
    $region77: #{vqvae_mlp_forward.1} parent=1 // pred_fallthru
      _
    // Predicated region
    $region78: #{vqvae_mlp_forward.1} parent=1 // pred_check
      _
    $region79: #{vqvae_mlp_forward.1} parent=1 // pred_check_branch
      %10210 = sbr.rel (0) target = $region81
    $region80: #{vqvae_mlp_forward.1} parent=1 // pred_region
      _
    $region81: #{vqvae_mlp_forward.1} parent=1 // pred_fallthru
      _
    // Predicated region
    $region82: #{vqvae_mlp_forward.1} parent=1 // pred_check
      _
    $region83: #{vqvae_mlp_forward.1} parent=1 // pred_check_branch
      %10212 = sbr.rel (0) target = $region85
    $region84: #{vqvae_mlp_forward.1} parent=1 // pred_region
      %10214 = dma.done [#allocation4], 256
    $region85: #{vqvae_mlp_forward.1} parent=1 // pred_fallthru
      _
    // Predicated region
    $region86: #{vqvae_mlp_forward.1} parent=1 // pred_check
      _
    $region87: #{vqvae_mlp_forward.1} parent=1 // pred_check_branch
      %10216 = sbr.rel (0) target = $region89
    $region88: #{vqvae_mlp_forward.1} parent=1 // pred_region
      %10218 = dma.done [#allocation6], 256
    $region89: #{vqvae_mlp_forward.1} parent=1 // pred_fallthru
      _
    // Predicated region
    $region90: #{vqvae_mlp_forward.1} parent=1 // pred_check
      _
    $region91: #{vqvae_mlp_forward.1} parent=1 // pred_check_branch
      %10220 = sbr.rel (0) target = $region93
    $region92: #{vqvae_mlp_forward.1} parent=1 // pred_region
      %10222 = dma.done [#allocation6], 1024
    $region93: #{vqvae_mlp_forward.1} parent=1 // pred_fallthru
      _
    %10223 = vsyncpa [#allocation4], 1
    %10224 = vsyncpa [#allocation6], 1

</llo_original>
